<compile_context>
chip_gen: v6e
topology: v6e:2x2x1
jax: 0.10.0
libtpu: 0.0.40
codegen_flags: <defaults>
</compile_context>

<pallas_src>
import numpy as np
import jax
import jax.numpy as jnp
from jax import lax
from jax.experimental import pallas as pl
from jax.experimental.pallas import tpu as pltpu

BN_EPS = 1e-5
LANE = 128      # lane-dense width of the fused head output slab
KSIZE = 5       # conv kernel size
STRIDE = 2      # conv stride


def _vmem():
    return pl.BlockSpec(memory_space=pltpu.MemorySpace.VMEM)


# ----------------------------------------------------------------------------
# In-kernel building block: Conv2d(k=5, s=2, bias dropped) + training-mode BN,
# expressed purely with 2-D matmuls + elementwise ops.
# ----------------------------------------------------------------------------
def _conv_bn_block(a, s_ref, m_ref, gb_ref, p_ref, pt_ref):
    # a      : [N*H,  W*Cin ]  f32 activation (rows = (n, h), cols = (w, c))
    # s_ref  : [5, N*Ho, N*H ] 0/1 row-selection matrices (one per kernel row dy)
    # m_ref  : [5, W*Cin, Wo*Cout] fused column-selection x channel-mix matrices
    # gb_ref : [2, Cout]       gamma / beta
    # p_ref  : [Wo*Cout, Cout] column -> channel pooling matrix (0/1)
    # pt_ref : [Cout, Wo*Cout] its transpose (channel -> tiled column vector)
    # returns: [N*Ho, Wo*Cout] f32, which is exactly the next layer's `a`.
    y = None
    for dy in range(s_ref.shape[0]):
        r = jnp.dot(s_ref[dy], a, preferred_element_type=jnp.float32)       # row gather
        t = jnp.dot(r, m_ref[dy], preferred_element_type=jnp.float32)       # dx gather + C mix
        y = t if y is None else y + t

    p = p_ref[...]
    pt = pt_ref[...]
    gb = gb_ref[...]
    cout = p.shape[1]
    count = y.shape[0] * (y.shape[1] // cout)          # N * Ho * Wo elements per channel
    inv_count = 1.0 / count

    # Two-pass (centered) batch statistics. Conv bias is omitted: BN's batch-mean
    # subtraction cancels a per-channel constant shift exactly.
    ch_mean = jnp.dot(jnp.sum(y, axis=0, keepdims=True), p,
                      preferred_element_type=jnp.float32) * inv_count        # [1, Cout]
    centered = y - jnp.dot(ch_mean, pt, preferred_element_type=jnp.float32)
    ch_var = jnp.dot(jnp.sum(centered * centered, axis=0, keepdims=True), p,
                     preferred_element_type=jnp.float32) * inv_count         # [1, Cout]
    scale = gb[0:1, :] * lax.rsqrt(ch_var + BN_EPS)                          # [1, Cout]
    scale_col = jnp.dot(scale, pt, preferred_element_type=jnp.float32)       # [1, Wo*Cout]
    beta_col = jnp.dot(gb[1:2, :], pt, preferred_element_type=jnp.float32)   # [1, Wo*Cout]
    return centered * scale_col + beta_col


# ----------------------------------------------------------------------------
# The single fused kernel: 3x conv+BN, then both MLP heads.
# ----------------------------------------------------------------------------
def _actor_critic_kernel(x_ref,
                         s1, m1, gb1, p1, pt1,
                         s2, m2, gb2, p2, pt2,
                         s3, m3, gb3, p3, pt3,
                         g_ref, w1_ref, b1_ref, w2_ref, b2_ref,
                         o_ref):
    a = x_ref[...]                                   # [N*H0, W0*C0] f32
    a = _conv_bn_block(a, s1, m1, gb1, p1, pt1)      # [N*H1, W1*16]
    a = _conv_bn_block(a, s2, m2, gb2, p2, pt2)      # [N*H2, W2*32]
    a = _conv_bn_block(a, s3, m3, gb3, p3, pt3)      # [N*H3, W3*32]

    # Heads. The torch .view(N, -1) flatten is folded into the host-side row
    # permutation of W1; the [N*H3, W3*C3] -> [N, feat] regrouping is expressed with
    # row-selection matmuls G_r (one per spatial row r of the last feature map).
    h = None
    for r in range(g_ref.shape[0]):
        fr = jnp.dot(g_ref[r], a, preferred_element_type=jnp.float32)        # [N, W3*C3]
        t = jnp.dot(fr, w1_ref[r], preferred_element_type=jnp.float32)       # [N, 128]
        h = t if h is None else h + t
    h = jnp.maximum(h + b1_ref[...], 0.0)
    o_ref[...] = jnp.dot(h, w2_ref[...], preferred_element_type=jnp.float32) + b2_ref[...]


def _fused_forward(x2d, p, batch):
    args = [x2d]
    for layer in p['convs']:
        args.extend(layer)
    args.extend([p['g'], p['w1'], p['b1'], p['w2'], p['b2']])
    return pl.pallas_call(
        _actor_critic_kernel,
        out_shape=jax.ShapeDtypeStruct((batch, LANE), jnp.float32),
        in_specs=[_vmem()] * len(args),
        out_specs=_vmem(),
    )(*args)


def actor_critic_forward(x_nchw, p, num_outputs):
    n, c, h, w = x_nchw.shape
    # One cheap XLA op: NCHW -> row-major [N*H, W*C] (NHWC) matrix for the kernel.
    x2d = jnp.transpose(x_nchw, (0, 2, 3, 1)).reshape(n * h, w * c).astype(jnp.float32)
    out = _fused_forward(x2d, p, n)                  # [N, 128] lane-dense slab
    value = out[:, :1]
    mu = out[:, 1:1 + num_outputs]
    std = jnp.broadcast_to(p['std'], mu.shape)       # exp(log_std).expand_as(mu)
    return (mu, std), value


# ----------------------------------------------------------------------------
# One-time host-side weight preparation: selection matrices, fused conv matrices,
# head fusion / flatten permutation / lane padding, std = exp(log_std).
# ----------------------------------------------------------------------------
def _conv_out(x, k=KSIZE, s=STRIDE):
    return (x - k) // s + 1


def prepare_params(params, num_inputs, num_outputs, hidden_size, batch):
    H0, W0, C0 = num_inputs
    dims = [(H0, W0, C0)]
    for (wt, *_rest) in params['convs']:
        h, w, _ = dims[-1]
        dims.append((_conv_out(h), _conv_out(w), wt.shape[0]))
    assert dims[-1][0] >= 1 and dims[-1][1] >= 1
    assert 2 * hidden_size <= LANE and 1 + num_outputs <= LANE

    convs = []
    for li, (wt, _bias, g, beta) in enumerate(params['convs']):
        # _bias is intentionally dropped (exactly cancelled by training-mode BN).
        H, W, Cin = dims[li]
        Ho, Wo, Cout = dims[li + 1]
        wtn = np.asarray(wt, np.float32)                      # torch OIHW [Cout,Cin,5,5]

        S = np.zeros((KSIZE, batch * Ho, batch * H), np.float32)
        for dy in range(KSIZE):
            for n in range(batch):
                for i in range(Ho):
                    S[dy, n * Ho + i, n * H + STRIDE * i + dy] = 1.0

        M = np.zeros((KSIZE, W * Cin, Wo * Cout), np.float32)
        for dy in range(KSIZE):
            for j in range(Wo):
                for dx in range(KSIZE):
                    wi = STRIDE * j + dx
                    M[dy, wi * Cin:(wi + 1) * Cin, j * Cout:(j + 1) * Cout] = wtn[:, :, dy, dx].T

        P = np.zeros((Wo * Cout, Cout), np.float32)
        for j in range(Wo):
            P[j * Cout:(j + 1) * Cout, :] = np.eye(Cout, dtype=np.float32)

        gb = np.stack([np.asarray(g, np.float32), np.asarray(beta, np.float32)], axis=0)

        convs.append((jnp.asarray(S), jnp.asarray(M), jnp.asarray(gb),
                      jnp.asarray(P), jnp.asarray(np.ascontiguousarray(P.T))))

    H3, W3, C3 = dims[-1]
    feat = H3 * W3 * C3
    wc1, bc1, wc2, bc2, wa1, ba1, wa2, ba2, log_std = params['heads']

    # Row-selection matrices for the head flatten (pick feature-map row r of sample n).
    G = np.zeros((H3, batch, batch * H3), np.float32)
    for r in range(H3):
        for n in range(batch):
            G[r, n, n * H3 + r] = 1.0

    # Fused first head layer: [critic | actor | zero pad] columns, rows re-indexed from
    # torch NCHW-flatten order (c*H3*W3 + r*W3 + w) to the kernel's (r, w*C3 + c) order.
    w1cat = np.zeros((feat, LANE), np.float32)
    w1cat[:, :hidden_size] = np.asarray(wc1, np.float32)
    w1cat[:, hidden_size:2 * hidden_size] = np.asarray(wa1, np.float32)
    W1p = np.zeros((H3, W3 * C3, LANE), np.float32)
    for r in range(H3):
        for ww in range(W3):
            for c in range(C3):
                W1p[r, ww * C3 + c, :] = w1cat[c * H3 * W3 + r * W3 + ww, :]

    b1 = np.zeros((1, LANE), np.float32)
    b1[0, :hidden_size] = np.asarray(bc1, np.float32)[0]
    b1[0, hidden_size:2 * hidden_size] = np.asarray(ba1, np.float32)[0]

    # Block-diagonal second head layer into a 128-lane output slab:
    # col 0 <- value, cols 1..num_outputs <- mu, rest zero.
    W2p = np.zeros((LANE, LANE), np.float32)
    W2p[:hidden_size, 0:1] = np.asarray(wc2, np.float32)
    W2p[hidden_size:2 * hidden_size, 1:1 + num_outputs] = np.asarray(wa2, np.float32)
    b2 = np.zeros((1, LANE), np.float32)
    b2[0, 0] = np.asarray(bc2, np.float32)[0, 0]
    b2[0, 1:1 + num_outputs] = np.asarray(ba2, np.float32)[0]

    return {'convs': convs,
            'g': jnp.asarray(G), 'w1': jnp.asarray(W1p), 'b1': jnp.asarray(b1),
            'w2': jnp.asarray(W2p), 'b2': jnp.asarray(b2),
            'std': jnp.exp(jnp.asarray(log_std, jnp.float32))}


# ----------------------------------------------------------------------------
# Deterministic parameter init (shapes from the PyTorch __init__, torch layout)
# ----------------------------------------------------------------------------
def init_params(key, num_inputs, num_outputs, hidden_size, std=0.0):
    h, w, c_in = num_inputs
    keys = jax.random.split(key, 16)
    ki = 0

    def rnd(shape, scale=0.05):
        nonlocal ki
        v = jax.random.normal(keys[ki], shape, jnp.float32) * scale
        ki += 1
        return v

    convs = []
    for cin, cout in [(c_in, 16), (16, 32), (32, 32)]:
        convs.append((rnd((cout, cin, KSIZE, KSIZE)), rnd((cout,)),
                      jnp.ones((cout,), jnp.float32), jnp.zeros((cout,), jnp.float32)))

    ho, wo = h, w
    for _ in range(3):
        ho, wo = _conv_out(ho), _conv_out(wo)
    feat = 32 * ho * wo

    wc1, bc1 = rnd((feat, hidden_size)), rnd((1, hidden_size))
    wc2, bc2 = rnd((hidden_size, 1)), rnd((1, 1))
    wa1, ba1 = rnd((feat, hidden_size)), rnd((1, hidden_size))
    wa2, ba2 = rnd((hidden_size, num_outputs)), rnd((1, num_outputs))
    log_std = jnp.full((1, num_outputs), std, jnp.float32)
    return {'convs': convs,
            'heads': (wc1, bc1, wc2, bc2, wa1, ba1, wa2, ba2, log_std)}


# ----------------------------------------------------------------------------
# Pure-JAX f32 reference (mirrors the PyTorch forward, conv bias included) for check
# ----------------------------------------------------------------------------
def reference_forward(x_nchw, params):
    hp = lax.Precision.HIGHEST
    x = x_nchw.astype(jnp.float32)
    for (w, b, g, beta) in params['convs']:
        x = lax.conv_general_dilated(x, w, (STRIDE, STRIDE), 'VALID',
                                     dimension_numbers=('NCHW', 'OIHW', 'NCHW'),
                                     precision=hp)
        x = x + b[None, :, None, None]
        m = jnp.mean(x, axis=(0, 2, 3), keepdims=True)
        v = jnp.mean((x - m) ** 2, axis=(0, 2, 3), keepdims=True)
        x = (x - m) * lax.rsqrt(v + BN_EPS) * g[None, :, None, None] + beta[None, :, None, None]
    feat = x.reshape(x.shape[0], -1)
    wc1, bc1, wc2, bc2, wa1, ba1, wa2, ba2, log_std = params['heads']
    hc = jnp.maximum(jnp.dot(feat, wc1, precision=hp) + bc1, 0.0)
    value = jnp.dot(hc, wc2, precision=hp) + bc2
    ha = jnp.maximum(jnp.dot(feat, wa1, precision=hp) + ba1, 0.0)
    mu = jnp.dot(ha, wa2, precision=hp) + ba2
    std_out = jnp.exp(log_std) * jnp.ones_like(mu)
    return (mu, std_out), value


if __name__ == "__main__":
    # (H, W, C) — smallest spatial that survives three 5x5 stride-2 convs is 29; use 48.
    num_inputs = (48, 48, 4)
    num_outputs = 6
    hidden_size = 32
    batch = 2

    key = jax.random.PRNGKey(0)
    pkey, xkey = jax.random.split(key)
    params = init_params(pkey, num_inputs, num_outputs, hidden_size, std=0.0)
    prepped = prepare_params(params, num_inputs, num_outputs, hidden_size, batch)

    # PyTorch-convention NCHW input
    x = jax.random.normal(xkey, (batch, num_inputs[2], num_inputs[0], num_inputs[1]),
                          jnp.float32)

    fwd = jax.jit(actor_critic_forward, static_argnums=(2,))
    (mu, std), value = jax.block_until_ready(fwd(x, prepped, num_outputs))

    (mu_r, std_r), value_r = reference_forward(x, params)
    # Default-precision MXU matmuls (bf16-operand passes, f32 accumulation) vs. the
    # f32/HIGHEST reference -> 2e-2 tolerance.
    np.testing.assert_allclose(np.asarray(mu), np.asarray(mu_r), rtol=2e-2, atol=2e-2)
    np.testing.assert_allclose(np.asarray(std), np.asarray(std_r), rtol=2e-2, atol=2e-2)
    np.testing.assert_allclose(np.asarray(value), np.asarray(value_r), rtol=2e-2, atol=2e-2)

    print("KERNEL_OK")
</pallas_src>

<mosaic_0001>
module attributes {stable_mosaic.version = 11 : i64} {
  func.func @_actor_critic_kernel(%arg0: memref<96x192xf32, #tpu.memory_space<vmem>>, %arg1: memref<5x44x96xf32, #tpu.memory_space<vmem>>, %arg2: memref<5x192x352xf32, #tpu.memory_space<vmem>>, %arg3: memref<2x16xf32, #tpu.memory_space<vmem>>, %arg4: memref<352x16xf32, #tpu.memory_space<vmem>>, %arg5: memref<16x352xf32, #tpu.memory_space<vmem>>, %arg6: memref<5x18x44xf32, #tpu.memory_space<vmem>>, %arg7: memref<5x352x288xf32, #tpu.memory_space<vmem>>, %arg8: memref<2x32xf32, #tpu.memory_space<vmem>>, %arg9: memref<288x32xf32, #tpu.memory_space<vmem>>, %arg10: memref<32x288xf32, #tpu.memory_space<vmem>>, %arg11: memref<5x6x18xf32, #tpu.memory_space<vmem>>, %arg12: memref<5x288x96xf32, #tpu.memory_space<vmem>>, %arg13: memref<2x32xf32, #tpu.memory_space<vmem>>, %arg14: memref<96x32xf32, #tpu.memory_space<vmem>>, %arg15: memref<32x96xf32, #tpu.memory_space<vmem>>, %arg16: memref<3x2x6xf32, #tpu.memory_space<vmem>>, %arg17: memref<3x96x128xf32, #tpu.memory_space<vmem>>, %arg18: memref<1x128xf32, #tpu.memory_space<vmem>>, %arg19: memref<128x128xf32, #tpu.memory_space<vmem>>, %arg20: memref<1x128xf32, #tpu.memory_space<vmem>>, %arg21: memref<2x128xf32, #tpu.memory_space<vmem>>) attributes {dimension_semantics = [], scalar_prefetch = 0 : i64, scratch_operands = 0 : i64, tpu.core_type = #tpu.core_type<tc>} {
    %c0 = arith.constant 0 : index
    %c0_0 = arith.constant 0 : index
    %0 = vector.load %arg0[%c0, %c0_0] : memref<96x192xf32, #tpu.memory_space<vmem>>, vector<96x192xf32>
    %c0_1 = arith.constant 0 : index
    %c0_2 = arith.constant 0 : index
    %c0_3 = arith.constant 0 : index
    %1 = vector.load %arg1[%c0_1, %c0_2, %c0_3] : memref<5x44x96xf32, #tpu.memory_space<vmem>>, vector<1x44x96xf32>
    %2 = vector.shape_cast %1 : vector<1x44x96xf32> to vector<44x96xf32>
    %cst = arith.constant dense<0.000000e+00> : vector<44x192xf32>
    %3 = tpu.matmul %2, %0, %cst {dimension_numbers = #tpu.dot_dimension_numbers<[1], [0], [0], [1], [0, 0, 1, 1], [], []>} : vector<44x96xf32>, vector<96x192xf32>, vector<44x192xf32> -> vector<44x192xf32>
    %c0_4 = arith.constant 0 : index
    %c0_5 = arith.constant 0 : index
    %c0_6 = arith.constant 0 : index
    %4 = vector.load %arg2[%c0_4, %c0_5, %c0_6] : memref<5x192x352xf32, #tpu.memory_space<vmem>>, vector<1x192x352xf32>
    %5 = vector.shape_cast %4 : vector<1x192x352xf32> to vector<192x352xf32>
    %cst_7 = arith.constant dense<0.000000e+00> : vector<44x352xf32>
    %6 = tpu.matmul %3, %5, %cst_7 {dimension_numbers = #tpu.dot_dimension_numbers<[1], [0], [0], [1], [0, 0, 1, 1], [], []>} : vector<44x192xf32>, vector<192x352xf32>, vector<44x352xf32> -> vector<44x352xf32>
    %c1 = arith.constant 1 : index
    %c0_8 = arith.constant 0 : index
    %c0_9 = arith.constant 0 : index
    %7 = vector.load %arg1[%c1, %c0_8, %c0_9] : memref<5x44x96xf32, #tpu.memory_space<vmem>>, vector<1x44x96xf32>
    %8 = vector.shape_cast %7 : vector<1x44x96xf32> to vector<44x96xf32>
    %cst_10 = arith.constant dense<0.000000e+00> : vector<44x192xf32>
    %9 = tpu.matmul %8, %0, %cst_10 {dimension_numbers = #tpu.dot_dimension_numbers<[1], [0], [0], [1], [0, 0, 1, 1], [], []>} : vector<44x96xf32>, vector<96x192xf32>, vector<44x192xf32> -> vector<44x192xf32>
    %c1_11 = arith.constant 1 : index
    %c0_12 = arith.constant 0 : index
    %c0_13 = arith.constant 0 : index
    %10 = vector.load %arg2[%c1_11, %c0_12, %c0_13] : memref<5x192x352xf32, #tpu.memory_space<vmem>>, vector<1x192x352xf32>
    %11 = vector.shape_cast %10 : vector<1x192x352xf32> to vector<192x352xf32>
    %cst_14 = arith.constant dense<0.000000e+00> : vector<44x352xf32>
    %12 = tpu.matmul %9, %11, %cst_14 {dimension_numbers = #tpu.dot_dimension_numbers<[1], [0], [0], [1], [0, 0, 1, 1], [], []>} : vector<44x192xf32>, vector<192x352xf32>, vector<44x352xf32> -> vector<44x352xf32>
    %13 = arith.addf %6, %12 : vector<44x352xf32>
    %c2 = arith.constant 2 : index
    %c0_15 = arith.constant 0 : index
    %c0_16 = arith.constant 0 : index
    %14 = vector.load %arg1[%c2, %c0_15, %c0_16] : memref<5x44x96xf32, #tpu.memory_space<vmem>>, vector<1x44x96xf32>
    %15 = vector.shape_cast %14 : vector<1x44x96xf32> to vector<44x96xf32>
    %cst_17 = arith.constant dense<0.000000e+00> : vector<44x192xf32>
    %16 = tpu.matmul %15, %0, %cst_17 {dimension_numbers = #tpu.dot_dimension_numbers<[1], [0], [0], [1], [0, 0, 1, 1], [], []>} : vector<44x96xf32>, vector<96x192xf32>, vector<44x192xf32> -> vector<44x192xf32>
    %c2_18 = arith.constant 2 : index
    %c0_19 = arith.constant 0 : index
    %c0_20 = arith.constant 0 : index
    %17 = vector.load %arg2[%c2_18, %c0_19, %c0_20] : memref<5x192x352xf32, #tpu.memory_space<vmem>>, vector<1x192x352xf32>
    %18 = vector.shape_cast %17 : vector<1x192x352xf32> to vector<192x352xf32>
    %cst_21 = arith.constant dense<0.000000e+00> : vector<44x352xf32>
    %19 = tpu.matmul %16, %18, %cst_21 {dimension_numbers = #tpu.dot_dimension_numbers<[1], [0], [0], [1], [0, 0, 1, 1], [], []>} : vector<44x192xf32>, vector<192x352xf32>, vector<44x352xf32> -> vector<44x352xf32>
    %20 = arith.addf %13, %19 : vector<44x352xf32>
    %c3 = arith.constant 3 : index
    %c0_22 = arith.constant 0 : index
    %c0_23 = arith.constant 0 : index
    %21 = vector.load %arg1[%c3, %c0_22, %c0_23] : memref<5x44x96xf32, #tpu.memory_space<vmem>>, vector<1x44x96xf32>
    %22 = vector.shape_cast %21 : vector<1x44x96xf32> to vector<44x96xf32>
    %cst_24 = arith.constant dense<0.000000e+00> : vector<44x192xf32>
    %23 = tpu.matmul %22, %0, %cst_24 {dimension_numbers = #tpu.dot_dimension_numbers<[1], [0], [0], [1], [0, 0, 1, 1], [], []>} : vector<44x96xf32>, vector<96x192xf32>, vector<44x192xf32> -> vector<44x192xf32>
    %c3_25 = arith.constant 3 : index
    %c0_26 = arith.constant 0 : index
    %c0_27 = arith.constant 0 : index
    %24 = vector.load %arg2[%c3_25, %c0_26, %c0_27] : memref<5x192x352xf32, #tpu.memory_space<vmem>>, vector<1x192x352xf32>
    %25 = vector.shape_cast %24 : vector<1x192x352xf32> to vector<192x352xf32>
    %cst_28 = arith.constant dense<0.000000e+00> : vector<44x352xf32>
    %26 = tpu.matmul %23, %25, %cst_28 {dimension_numbers = #tpu.dot_dimension_numbers<[1], [0], [0], [1], [0, 0, 1, 1], [], []>} : vector<44x192xf32>, vector<192x352xf32>, vector<44x352xf32> -> vector<44x352xf32>
    %27 = arith.addf %20, %26 : vector<44x352xf32>
    %c4 = arith.constant 4 : index
    %c0_29 = arith.constant 0 : index
    %c0_30 = arith.constant 0 : index
    %28 = vector.load %arg1[%c4, %c0_29, %c0_30] : memref<5x44x96xf32, #tpu.memory_space<vmem>>, vector<1x44x96xf32>
    %29 = vector.shape_cast %28 : vector<1x44x96xf32> to vector<44x96xf32>
    %cst_31 = arith.constant dense<0.000000e+00> : vector<44x192xf32>
    %30 = tpu.matmul %29, %0, %cst_31 {dimension_numbers = #tpu.dot_dimension_numbers<[1], [0], [0], [1], [0, 0, 1, 1], [], []>} : vector<44x96xf32>, vector<96x192xf32>, vector<44x192xf32> -> vector<44x192xf32>
    %c4_32 = arith.constant 4 : index
    %c0_33 = arith.constant 0 : index
    %c0_34 = arith.constant 0 : index
    %31 = vector.load %arg2[%c4_32, %c0_33, %c0_34] : memref<5x192x352xf32, #tpu.memory_space<vmem>>, vector<1x192x352xf32>
    %32 = vector.shape_cast %31 : vector<1x192x352xf32> to vector<192x352xf32>
    %cst_35 = arith.constant dense<0.000000e+00> : vector<44x352xf32>
    %33 = tpu.matmul %30, %32, %cst_35 {dimension_numbers = #tpu.dot_dimension_numbers<[1], [0], [0], [1], [0, 0, 1, 1], [], []>} : vector<44x192xf32>, vector<192x352xf32>, vector<44x352xf32> -> vector<44x352xf32>
    %34 = arith.addf %27, %33 : vector<44x352xf32>
    %c0_36 = arith.constant 0 : index
    %c0_37 = arith.constant 0 : index
    %35 = vector.load %arg4[%c0_36, %c0_37] : memref<352x16xf32, #tpu.memory_space<vmem>>, vector<352x16xf32>
    %c0_38 = arith.constant 0 : index
    %c0_39 = arith.constant 0 : index
    %36 = vector.load %arg5[%c0_38, %c0_39] : memref<16x352xf32, #tpu.memory_space<vmem>>, vector<16x352xf32>
    %c0_40 = arith.constant 0 : index
    %c0_41 = arith.constant 0 : index
    %37 = vector.load %arg3[%c0_40, %c0_41] : memref<2x16xf32, #tpu.memory_space<vmem>>, vector<2x16xf32>
    %cst_42 = arith.constant dense<0.000000e+00> : vector<352xf32>
    %38 = vector.multi_reduction <add>, %34, %cst_42 [0] : vector<44x352xf32> to vector<352xf32>
    %39 = vector.shape_cast %38 : vector<352xf32> to vector<1x352xf32>
    %cst_43 = arith.constant dense<0.000000e+00> : vector<1x16xf32>
    %40 = tpu.matmul %39, %35, %cst_43 {dimension_numbers = #tpu.dot_dimension_numbers<[1], [0], [0], [1], [0, 0, 1, 1], [], []>} : vector<1x352xf32>, vector<352x16xf32>, vector<1x16xf32> -> vector<1x16xf32>
    %cst_44 = arith.constant 0.00103305781 : f32
    %41 = vector.broadcast %cst_44 : f32 to vector<1x16xf32>
    %42 = arith.mulf %40, %41 : vector<1x16xf32>
    %cst_45 = arith.constant dense<0.000000e+00> : vector<1x352xf32>
    %43 = tpu.matmul %42, %36, %cst_45 {dimension_numbers = #tpu.dot_dimension_numbers<[1], [0], [0], [1], [0, 0, 1, 1], [], []>} : vector<1x16xf32>, vector<16x352xf32>, vector<1x352xf32> -> vector<1x352xf32>
    %44 = vector.broadcast %43 : vector<1x352xf32> to vector<44x352xf32>
    %45 = arith.subf %34, %44 : vector<44x352xf32>
    %46 = arith.mulf %45, %45 : vector<44x352xf32>
    %cst_46 = arith.constant dense<0.000000e+00> : vector<352xf32>
    %47 = vector.multi_reduction <add>, %46, %cst_46 [0] : vector<44x352xf32> to vector<352xf32>
    %48 = vector.shape_cast %47 : vector<352xf32> to vector<1x352xf32>
    %cst_47 = arith.constant dense<0.000000e+00> : vector<1x16xf32>
    %49 = tpu.matmul %48, %35, %cst_47 {dimension_numbers = #tpu.dot_dimension_numbers<[1], [0], [0], [1], [0, 0, 1, 1], [], []>} : vector<1x352xf32>, vector<352x16xf32>, vector<1x16xf32> -> vector<1x16xf32>
    %cst_48 = arith.constant 0.00103305781 : f32
    %50 = vector.broadcast %cst_48 : f32 to vector<1x16xf32>
    %51 = arith.mulf %49, %50 : vector<1x16xf32>
    %52 = vector.extract_strided_slice %37 {offsets = [0, 0], sizes = [1, 16], strides = [1, 1]} : vector<2x16xf32> to vector<1x16xf32>
    %cst_49 = arith.constant 9.99999974E-6 : f32
    %53 = vector.broadcast %cst_49 : f32 to vector<1x16xf32>
    %54 = arith.addf %51, %53 : vector<1x16xf32>
    %55 = math.rsqrt %54 : vector<1x16xf32>
    %56 = arith.mulf %52, %55 : vector<1x16xf32>
    %cst_50 = arith.constant dense<0.000000e+00> : vector<1x352xf32>
    %57 = tpu.matmul %56, %36, %cst_50 {dimension_numbers = #tpu.dot_dimension_numbers<[1], [0], [0], [1], [0, 0, 1, 1], [], []>} : vector<1x16xf32>, vector<16x352xf32>, vector<1x352xf32> -> vector<1x352xf32>
    %58 = vector.extract_strided_slice %37 {offsets = [1, 0], sizes = [1, 16], strides = [1, 1]} : vector<2x16xf32> to vector<1x16xf32>
    %cst_51 = arith.constant dense<0.000000e+00> : vector<1x352xf32>
    %59 = tpu.matmul %58, %36, %cst_51 {dimension_numbers = #tpu.dot_dimension_numbers<[1], [0], [0], [1], [0, 0, 1, 1], [], []>} : vector<1x16xf32>, vector<16x352xf32>, vector<1x352xf32> -> vector<1x352xf32>
    %60 = vector.broadcast %57 : vector<1x352xf32> to vector<44x352xf32>
    %61 = arith.mulf %45, %60 : vector<44x352xf32>
    %62 = vector.broadcast %59 : vector<1x352xf32> to vector<44x352xf32>
    %63 = arith.addf %61, %62 : vector<44x352xf32>
    %c0_52 = arith.constant 0 : index
    %c0_53 = arith.constant 0 : index
    %c0_54 = arith.constant 0 : index
    %64 = vector.load %arg6[%c0_52, %c0_53, %c0_54] : memref<5x18x44xf32, #tpu.memory_space<vmem>>, vector<1x18x44xf32>
    %65 = vector.shape_cast %64 : vector<1x18x44xf32> to vector<18x44xf32>
    %cst_55 = arith.constant dense<0.000000e+00> : vector<18x352xf32>
    %66 = tpu.matmul %65, %63, %cst_55 {dimension_numbers = #tpu.dot_dimension_numbers<[1], [0], [0], [1], [0, 0, 1, 1], [], []>} : vector<18x44xf32>, vector<44x352xf32>, vector<18x352xf32> -> vector<18x352xf32>
    %c0_56 = arith.constant 0 : index
    %c0_57 = arith.constant 0 : index
    %c0_58 = arith.constant 0 : index
    %67 = vector.load %arg7[%c0_56, %c0_57, %c0_58] : memref<5x352x288xf32, #tpu.memory_space<vmem>>, vector<1x352x288xf32>
    %68 = vector.shape_cast %67 : vector<1x352x288xf32> to vector<352x288xf32>
    %cst_59 = arith.constant dense<0.000000e+00> : vector<18x288xf32>
    %69 = tpu.matmul %66, %68, %cst_59 {dimension_numbers = #tpu.dot_dimension_numbers<[1], [0], [0], [1], [0, 0, 1, 1], [], []>} : vector<18x352xf32>, vector<352x288xf32>, vector<18x288xf32> -> vector<18x288xf32>
    %c1_60 = arith.constant 1 : index
    %c0_61 = arith.constant 0 : index
    %c0_62 = arith.constant 0 : index
    %70 = vector.load %arg6[%c1_60, %c0_61, %c0_62] : memref<5x18x44xf32, #tpu.memory_space<vmem>>, vector<1x18x44xf32>
    %71 = vector.shape_cast %70 : vector<1x18x44xf32> to vector<18x44xf32>
    %cst_63 = arith.constant dense<0.000000e+00> : vector<18x352xf32>
    %72 = tpu.matmul %71, %63, %cst_63 {dimension_numbers = #tpu.dot_dimension_numbers<[1], [0], [0], [1], [0, 0, 1, 1], [], []>} : vector<18x44xf32>, vector<44x352xf32>, vector<18x352xf32> -> vector<18x352xf32>
    %c1_64 = arith.constant 1 : index
    %c0_65 = arith.constant 0 : index
    %c0_66 = arith.constant 0 : index
    %73 = vector.load %arg7[%c1_64, %c0_65, %c0_66] : memref<5x352x288xf32, #tpu.memory_space<vmem>>, vector<1x352x288xf32>
    %74 = vector.shape_cast %73 : vector<1x352x288xf32> to vector<352x288xf32>
    %cst_67 = arith.constant dense<0.000000e+00> : vector<18x288xf32>
    %75 = tpu.matmul %72, %74, %cst_67 {dimension_numbers = #tpu.dot_dimension_numbers<[1], [0], [0], [1], [0, 0, 1, 1], [], []>} : vector<18x352xf32>, vector<352x288xf32>, vector<18x288xf32> -> vector<18x288xf32>
    %76 = arith.addf %69, %75 : vector<18x288xf32>
    %c2_68 = arith.constant 2 : index
    %c0_69 = arith.constant 0 : index
    %c0_70 = arith.constant 0 : index
    %77 = vector.load %arg6[%c2_68, %c0_69, %c0_70] : memref<5x18x44xf32, #tpu.memory_space<vmem>>, vector<1x18x44xf32>
    %78 = vector.shape_cast %77 : vector<1x18x44xf32> to vector<18x44xf32>
    %cst_71 = arith.constant dense<0.000000e+00> : vector<18x352xf32>
    %79 = tpu.matmul %78, %63, %cst_71 {dimension_numbers = #tpu.dot_dimension_numbers<[1], [0], [0], [1], [0, 0, 1, 1], [], []>} : vector<18x44xf32>, vector<44x352xf32>, vector<18x352xf32> -> vector<18x352xf32>
    %c2_72 = arith.constant 2 : index
    %c0_73 = arith.constant 0 : index
    %c0_74 = arith.constant 0 : index
    %80 = vector.load %arg7[%c2_72, %c0_73, %c0_74] : memref<5x352x288xf32, #tpu.memory_space<vmem>>, vector<1x352x288xf32>
    %81 = vector.shape_cast %80 : vector<1x352x288xf32> to vector<352x288xf32>
    %cst_75 = arith.constant dense<0.000000e+00> : vector<18x288xf32>
    %82 = tpu.matmul %79, %81, %cst_75 {dimension_numbers = #tpu.dot_dimension_numbers<[1], [0], [0], [1], [0, 0, 1, 1], [], []>} : vector<18x352xf32>, vector<352x288xf32>, vector<18x288xf32> -> vector<18x288xf32>
    %83 = arith.addf %76, %82 : vector<18x288xf32>
    %c3_76 = arith.constant 3 : index
    %c0_77 = arith.constant 0 : index
    %c0_78 = arith.constant 0 : index
    %84 = vector.load %arg6[%c3_76, %c0_77, %c0_78] : memref<5x18x44xf32, #tpu.memory_space<vmem>>, vector<1x18x44xf32>
    %85 = vector.shape_cast %84 : vector<1x18x44xf32> to vector<18x44xf32>
    %cst_79 = arith.constant dense<0.000000e+00> : vector<18x352xf32>
    %86 = tpu.matmul %85, %63, %cst_79 {dimension_numbers = #tpu.dot_dimension_numbers<[1], [0], [0], [1], [0, 0, 1, 1], [], []>} : vector<18x44xf32>, vector<44x352xf32>, vector<18x352xf32> -> vector<18x352xf32>
    %c3_80 = arith.constant 3 : index
    %c0_81 = arith.constant 0 : index
    %c0_82 = arith.constant 0 : index
    %87 = vector.load %arg7[%c3_80, %c0_81, %c0_82] : memref<5x352x288xf32, #tpu.memory_space<vmem>>, vector<1x352x288xf32>
    %88 = vector.shape_cast %87 : vector<1x352x288xf32> to vector<352x288xf32>
    %cst_83 = arith.constant dense<0.000000e+00> : vector<18x288xf32>
    %89 = tpu.matmul %86, %88, %cst_83 {dimension_numbers = #tpu.dot_dimension_numbers<[1], [0], [0], [1], [0, 0, 1, 1], [], []>} : vector<18x352xf32>, vector<352x288xf32>, vector<18x288xf32> -> vector<18x288xf32>
    %90 = arith.addf %83, %89 : vector<18x288xf32>
    %c4_84 = arith.constant 4 : index
    %c0_85 = arith.constant 0 : index
    %c0_86 = arith.constant 0 : index
    %91 = vector.load %arg6[%c4_84, %c0_85, %c0_86] : memref<5x18x44xf32, #tpu.memory_space<vmem>>, vector<1x18x44xf32>
    %92 = vector.shape_cast %91 : vector<1x18x44xf32> to vector<18x44xf32>
    %cst_87 = arith.constant dense<0.000000e+00> : vector<18x352xf32>
    %93 = tpu.matmul %92, %63, %cst_87 {dimension_numbers = #tpu.dot_dimension_numbers<[1], [0], [0], [1], [0, 0, 1, 1], [], []>} : vector<18x44xf32>, vector<44x352xf32>, vector<18x352xf32> -> vector<18x352xf32>
    %c4_88 = arith.constant 4 : index
    %c0_89 = arith.constant 0 : index
    %c0_90 = arith.constant 0 : index
    %94 = vector.load %arg7[%c4_88, %c0_89, %c0_90] : memref<5x352x288xf32, #tpu.memory_space<vmem>>, vector<1x352x288xf32>
    %95 = vector.shape_cast %94 : vector<1x352x288xf32> to vector<352x288xf32>
    %cst_91 = arith.constant dense<0.000000e+00> : vector<18x288xf32>
    %96 = tpu.matmul %93, %95, %cst_91 {dimension_numbers = #tpu.dot_dimension_numbers<[1], [0], [0], [1], [0, 0, 1, 1], [], []>} : vector<18x352xf32>, vector<352x288xf32>, vector<18x288xf32> -> vector<18x288xf32>
    %97 = arith.addf %90, %96 : vector<18x288xf32>
    %c0_92 = arith.constant 0 : index
    %c0_93 = arith.constant 0 : index
    %98 = vector.load %arg9[%c0_92, %c0_93] : memref<288x32xf32, #tpu.memory_space<vmem>>, vector<288x32xf32>
    %c0_94 = arith.constant 0 : index
    %c0_95 = arith.constant 0 : index
    %99 = vector.load %arg10[%c0_94, %c0_95] : memref<32x288xf32, #tpu.memory_space<vmem>>, vector<32x288xf32>
    %c0_96 = arith.constant 0 : index
    %c0_97 = arith.constant 0 : index
    %100 = vector.load %arg8[%c0_96, %c0_97] : memref<2x32xf32, #tpu.memory_space<vmem>>, vector<2x32xf32>
    %cst_98 = arith.constant dense<0.000000e+00> : vector<288xf32>
    %101 = vector.multi_reduction <add>, %97, %cst_98 [0] : vector<18x288xf32> to vector<288xf32>
    %102 = vector.shape_cast %101 : vector<288xf32> to vector<1x288xf32>
    %cst_99 = arith.constant dense<0.000000e+00> : vector<1x32xf32>
    %103 = tpu.matmul %102, %98, %cst_99 {dimension_numbers = #tpu.dot_dimension_numbers<[1], [0], [0], [1], [0, 0, 1, 1], [], []>} : vector<1x288xf32>, vector<288x32xf32>, vector<1x32xf32> -> vector<1x32xf32>
    %cst_100 = arith.constant 0.00617283955 : f32
    %104 = vector.broadcast %cst_100 : f32 to vector<1x32xf32>
    %105 = arith.mulf %103, %104 : vector<1x32xf32>
    %cst_101 = arith.constant dense<0.000000e+00> : vector<1x288xf32>
    %106 = tpu.matmul %105, %99, %cst_101 {dimension_numbers = #tpu.dot_dimension_numbers<[1], [0], [0], [1], [0, 0, 1, 1], [], []>} : vector<1x32xf32>, vector<32x288xf32>, vector<1x288xf32> -> vector<1x288xf32>
    %107 = vector.broadcast %106 : vector<1x288xf32> to vector<18x288xf32>
    %108 = arith.subf %97, %107 : vector<18x288xf32>
    %109 = arith.mulf %108, %108 : vector<18x288xf32>
    %cst_102 = arith.constant dense<0.000000e+00> : vector<288xf32>
    %110 = vector.multi_reduction <add>, %109, %cst_102 [0] : vector<18x288xf32> to vector<288xf32>
    %111 = vector.shape_cast %110 : vector<288xf32> to vector<1x288xf32>
    %cst_103 = arith.constant dense<0.000000e+00> : vector<1x32xf32>
    %112 = tpu.matmul %111, %98, %cst_103 {dimension_numbers = #tpu.dot_dimension_numbers<[1], [0], [0], [1], [0, 0, 1, 1], [], []>} : vector<1x288xf32>, vector<288x32xf32>, vector<1x32xf32> -> vector<1x32xf32>
    %cst_104 = arith.constant 0.00617283955 : f32
    %113 = vector.broadcast %cst_104 : f32 to vector<1x32xf32>
    %114 = arith.mulf %112, %113 : vector<1x32xf32>
    %115 = vector.extract_strided_slice %100 {offsets = [0, 0], sizes = [1, 32], strides = [1, 1]} : vector<2x32xf32> to vector<1x32xf32>
    %cst_105 = arith.constant 9.99999974E-6 : f32
    %116 = vector.broadcast %cst_105 : f32 to vector<1x32xf32>
    %117 = arith.addf %114, %116 : vector<1x32xf32>
    %118 = math.rsqrt %117 : vector<1x32xf32>
    %119 = arith.mulf %115, %118 : vector<1x32xf32>
    %cst_106 = arith.constant dense<0.000000e+00> : vector<1x288xf32>
    %120 = tpu.matmul %119, %99, %cst_106 {dimension_numbers = #tpu.dot_dimension_numbers<[1], [0], [0], [1], [0, 0, 1, 1], [], []>} : vector<1x32xf32>, vector<32x288xf32>, vector<1x288xf32> -> vector<1x288xf32>
    %121 = vector.extract_strided_slice %100 {offsets = [1, 0], sizes = [1, 32], strides = [1, 1]} : vector<2x32xf32> to vector<1x32xf32>
    %cst_107 = arith.constant dense<0.000000e+00> : vector<1x288xf32>
    %122 = tpu.matmul %121, %99, %cst_107 {dimension_numbers = #tpu.dot_dimension_numbers<[1], [0], [0], [1], [0, 0, 1, 1], [], []>} : vector<1x32xf32>, vector<32x288xf32>, vector<1x288xf32> -> vector<1x288xf32>
    %123 = vector.broadcast %120 : vector<1x288xf32> to vector<18x288xf32>
    %124 = arith.mulf %108, %123 : vector<18x288xf32>
    %125 = vector.broadcast %122 : vector<1x288xf32> to vector<18x288xf32>
    %126 = arith.addf %124, %125 : vector<18x288xf32>
    %c0_108 = arith.constant 0 : index
    %c0_109 = arith.constant 0 : index
    %c0_110 = arith.constant 0 : index
    %127 = vector.load %arg11[%c0_108, %c0_109, %c0_110] : memref<5x6x18xf32, #tpu.memory_space<vmem>>, vector<1x6x18xf32>
    %128 = vector.shape_cast %127 : vector<1x6x18xf32> to vector<6x18xf32>
    %cst_111 = arith.constant dense<0.000000e+00> : vector<6x288xf32>
    %129 = tpu.matmul %128, %126, %cst_111 {dimension_numbers = #tpu.dot_dimension_numbers<[1], [0], [0], [1], [0, 0, 1, 1], [], []>} : vector<6x18xf32>, vector<18x288xf32>, vector<6x288xf32> -> vector<6x288xf32>
    %c0_112 = arith.constant 0 : index
    %c0_113 = arith.constant 0 : index
    %c0_114 = arith.constant 0 : index
    %130 = vector.load %arg12[%c0_112, %c0_113, %c0_114] : memref<5x288x96xf32, #tpu.memory_space<vmem>>, vector<1x288x96xf32>
    %131 = vector.shape_cast %130 : vector<1x288x96xf32> to vector<288x96xf32>
    %cst_115 = arith.constant dense<0.000000e+00> : vector<6x96xf32>
    %132 = tpu.matmul %129, %131, %cst_115 {dimension_numbers = #tpu.dot_dimension_numbers<[1], [0], [0], [1], [0, 0, 1, 1], [], []>} : vector<6x288xf32>, vector<288x96xf32>, vector<6x96xf32> -> vector<6x96xf32>
    %c1_116 = arith.constant 1 : index
    %c0_117 = arith.constant 0 : index
    %c0_118 = arith.constant 0 : index
    %133 = vector.load %arg11[%c1_116, %c0_117, %c0_118] : memref<5x6x18xf32, #tpu.memory_space<vmem>>, vector<1x6x18xf32>
    %134 = vector.shape_cast %133 : vector<1x6x18xf32> to vector<6x18xf32>
    %cst_119 = arith.constant dense<0.000000e+00> : vector<6x288xf32>
    %135 = tpu.matmul %134, %126, %cst_119 {dimension_numbers = #tpu.dot_dimension_numbers<[1], [0], [0], [1], [0, 0, 1, 1], [], []>} : vector<6x18xf32>, vector<18x288xf32>, vector<6x288xf32> -> vector<6x288xf32>
    %c1_120 = arith.constant 1 : index
    %c0_121 = arith.constant 0 : index
    %c0_122 = arith.constant 0 : index
    %136 = vector.load %arg12[%c1_120, %c0_121, %c0_122] : memref<5x288x96xf32, #tpu.memory_space<vmem>>, vector<1x288x96xf32>
    %137 = vector.shape_cast %136 : vector<1x288x96xf32> to vector<288x96xf32>
    %cst_123 = arith.constant dense<0.000000e+00> : vector<6x96xf32>
    %138 = tpu.matmul %135, %137, %cst_123 {dimension_numbers = #tpu.dot_dimension_numbers<[1], [0], [0], [1], [0, 0, 1, 1], [], []>} : vector<6x288xf32>, vector<288x96xf32>, vector<6x96xf32> -> vector<6x96xf32>
    %139 = arith.addf %132, %138 : vector<6x96xf32>
    %c2_124 = arith.constant 2 : index
    %c0_125 = arith.constant 0 : index
    %c0_126 = arith.constant 0 : index
    %140 = vector.load %arg11[%c2_124, %c0_125, %c0_126] : memref<5x6x18xf32, #tpu.memory_space<vmem>>, vector<1x6x18xf32>
    %141 = vector.shape_cast %140 : vector<1x6x18xf32> to vector<6x18xf32>
    %cst_127 = arith.constant dense<0.000000e+00> : vector<6x288xf32>
    %142 = tpu.matmul %141, %126, %cst_127 {dimension_numbers = #tpu.dot_dimension_numbers<[1], [0], [0], [1], [0, 0, 1, 1], [], []>} : vector<6x18xf32>, vector<18x288xf32>, vector<6x288xf32> -> vector<6x288xf32>
    %c2_128 = arith.constant 2 : index
    %c0_129 = arith.constant 0 : index
    %c0_130 = arith.constant 0 : index
    %143 = vector.load %arg12[%c2_128, %c0_129, %c0_130] : memref<5x288x96xf32, #tpu.memory_space<vmem>>, vector<1x288x96xf32>
    %144 = vector.shape_cast %143 : vector<1x288x96xf32> to vector<288x96xf32>
    %cst_131 = arith.constant dense<0.000000e+00> : vector<6x96xf32>
    %145 = tpu.matmul %142, %144, %cst_131 {dimension_numbers = #tpu.dot_dimension_numbers<[1], [0], [0], [1], [0, 0, 1, 1], [], []>} : vector<6x288xf32>, vector<288x96xf32>, vector<6x96xf32> -> vector<6x96xf32>
    %146 = arith.addf %139, %145 : vector<6x96xf32>
    %c3_132 = arith.constant 3 : index
    %c0_133 = arith.constant 0 : index
    %c0_134 = arith.constant 0 : index
    %147 = vector.load %arg11[%c3_132, %c0_133, %c0_134] : memref<5x6x18xf32, #tpu.memory_space<vmem>>, vector<1x6x18xf32>
    %148 = vector.shape_cast %147 : vector<1x6x18xf32> to vector<6x18xf32>
    %cst_135 = arith.constant dense<0.000000e+00> : vector<6x288xf32>
    %149 = tpu.matmul %148, %126, %cst_135 {dimension_numbers = #tpu.dot_dimension_numbers<[1], [0], [0], [1], [0, 0, 1, 1], [], []>} : vector<6x18xf32>, vector<18x288xf32>, vector<6x288xf32> -> vector<6x288xf32>
    %c3_136 = arith.constant 3 : index
    %c0_137 = arith.constant 0 : index
    %c0_138 = arith.constant 0 : index
    %150 = vector.load %arg12[%c3_136, %c0_137, %c0_138] : memref<5x288x96xf32, #tpu.memory_space<vmem>>, vector<1x288x96xf32>
    %151 = vector.shape_cast %150 : vector<1x288x96xf32> to vector<288x96xf32>
    %cst_139 = arith.constant dense<0.000000e+00> : vector<6x96xf32>
    %152 = tpu.matmul %149, %151, %cst_139 {dimension_numbers = #tpu.dot_dimension_numbers<[1], [0], [0], [1], [0, 0, 1, 1], [], []>} : vector<6x288xf32>, vector<288x96xf32>, vector<6x96xf32> -> vector<6x96xf32>
    %153 = arith.addf %146, %152 : vector<6x96xf32>
    %c4_140 = arith.constant 4 : index
    %c0_141 = arith.constant 0 : index
    %c0_142 = arith.constant 0 : index
    %154 = vector.load %arg11[%c4_140, %c0_141, %c0_142] : memref<5x6x18xf32, #tpu.memory_space<vmem>>, vector<1x6x18xf32>
    %155 = vector.shape_cast %154 : vector<1x6x18xf32> to vector<6x18xf32>
    %cst_143 = arith.constant dense<0.000000e+00> : vector<6x288xf32>
    %156 = tpu.matmul %155, %126, %cst_143 {dimension_numbers = #tpu.dot_dimension_numbers<[1], [0], [0], [1], [0, 0, 1, 1], [], []>} : vector<6x18xf32>, vector<18x288xf32>, vector<6x288xf32> -> vector<6x288xf32>
    %c4_144 = arith.constant 4 : index
    %c0_145 = arith.constant 0 : index
    %c0_146 = arith.constant 0 : index
    %157 = vector.load %arg12[%c4_144, %c0_145, %c0_146] : memref<5x288x96xf32, #tpu.memory_space<vmem>>, vector<1x288x96xf32>
    %158 = vector.shape_cast %157 : vector<1x288x96xf32> to vector<288x96xf32>
    %cst_147 = arith.constant dense<0.000000e+00> : vector<6x96xf32>
    %159 = tpu.matmul %156, %158, %cst_147 {dimension_numbers = #tpu.dot_dimension_numbers<[1], [0], [0], [1], [0, 0, 1, 1], [], []>} : vector<6x288xf32>, vector<288x96xf32>, vector<6x96xf32> -> vector<6x96xf32>
    %160 = arith.addf %153, %159 : vector<6x96xf32>
    %c0_148 = arith.constant 0 : index
    %c0_149 = arith.constant 0 : index
    %161 = vector.load %arg14[%c0_148, %c0_149] : memref<96x32xf32, #tpu.memory_space<vmem>>, vector<96x32xf32>
    %c0_150 = arith.constant 0 : index
    %c0_151 = arith.constant 0 : index
    %162 = vector.load %arg15[%c0_150, %c0_151] : memref<32x96xf32, #tpu.memory_space<vmem>>, vector<32x96xf32>
    %c0_152 = arith.constant 0 : index
    %c0_153 = arith.constant 0 : index
    %163 = vector.load %arg13[%c0_152, %c0_153] : memref<2x32xf32, #tpu.memory_space<vmem>>, vector<2x32xf32>
    %cst_154 = arith.constant dense<0.000000e+00> : vector<96xf32>
    %164 = vector.multi_reduction <add>, %160, %cst_154 [0] : vector<6x96xf32> to vector<96xf32>
    %165 = vector.shape_cast %164 : vector<96xf32> to vector<1x96xf32>
    %cst_155 = arith.constant dense<0.000000e+00> : vector<1x32xf32>
    %166 = tpu.matmul %165, %161, %cst_155 {dimension_numbers = #tpu.dot_dimension_numbers<[1], [0], [0], [1], [0, 0, 1, 1], [], []>} : vector<1x96xf32>, vector<96x32xf32>, vector<1x32xf32> -> vector<1x32xf32>
    %cst_156 = arith.constant 0.055555556 : f32
    %167 = vector.broadcast %cst_156 : f32 to vector<1x32xf32>
    %168 = arith.mulf %166, %167 : vector<1x32xf32>
    %cst_157 = arith.constant dense<0.000000e+00> : vector<1x96xf32>
    %169 = tpu.matmul %168, %162, %cst_157 {dimension_numbers = #tpu.dot_dimension_numbers<[1], [0], [0], [1], [0, 0, 1, 1], [], []>} : vector<1x32xf32>, vector<32x96xf32>, vector<1x96xf32> -> vector<1x96xf32>
    %170 = vector.broadcast %169 : vector<1x96xf32> to vector<6x96xf32>
    %171 = arith.subf %160, %170 : vector<6x96xf32>
    %172 = arith.mulf %171, %171 : vector<6x96xf32>
    %cst_158 = arith.constant dense<0.000000e+00> : vector<96xf32>
    %173 = vector.multi_reduction <add>, %172, %cst_158 [0] : vector<6x96xf32> to vector<96xf32>
    %174 = vector.shape_cast %173 : vector<96xf32> to vector<1x96xf32>
    %cst_159 = arith.constant dense<0.000000e+00> : vector<1x32xf32>
    %175 = tpu.matmul %174, %161, %cst_159 {dimension_numbers = #tpu.dot_dimension_numbers<[1], [0], [0], [1], [0, 0, 1, 1], [], []>} : vector<1x96xf32>, vector<96x32xf32>, vector<1x32xf32> -> vector<1x32xf32>
    %cst_160 = arith.constant 0.055555556 : f32
    %176 = vector.broadcast %cst_160 : f32 to vector<1x32xf32>
    %177 = arith.mulf %175, %176 : vector<1x32xf32>
    %178 = vector.extract_strided_slice %163 {offsets = [0, 0], sizes = [1, 32], strides = [1, 1]} : vector<2x32xf32> to vector<1x32xf32>
    %cst_161 = arith.constant 9.99999974E-6 : f32
    %179 = vector.broadcast %cst_161 : f32 to vector<1x32xf32>
    %180 = arith.addf %177, %179 : vector<1x32xf32>
    %181 = math.rsqrt %180 : vector<1x32xf32>
    %182 = arith.mulf %178, %181 : vector<1x32xf32>
    %cst_162 = arith.constant dense<0.000000e+00> : vector<1x96xf32>
    %183 = tpu.matmul %182, %162, %cst_162 {dimension_numbers = #tpu.dot_dimension_numbers<[1], [0], [0], [1], [0, 0, 1, 1], [], []>} : vector<1x32xf32>, vector<32x96xf32>, vector<1x96xf32> -> vector<1x96xf32>
    %184 = vector.extract_strided_slice %163 {offsets = [1, 0], sizes = [1, 32], strides = [1, 1]} : vector<2x32xf32> to vector<1x32xf32>
    %cst_163 = arith.constant dense<0.000000e+00> : vector<1x96xf32>
    %185 = tpu.matmul %184, %162, %cst_163 {dimension_numbers = #tpu.dot_dimension_numbers<[1], [0], [0], [1], [0, 0, 1, 1], [], []>} : vector<1x32xf32>, vector<32x96xf32>, vector<1x96xf32> -> vector<1x96xf32>
    %186 = vector.broadcast %183 : vector<1x96xf32> to vector<6x96xf32>
    %187 = arith.mulf %171, %186 : vector<6x96xf32>
    %188 = vector.broadcast %185 : vector<1x96xf32> to vector<6x96xf32>
    %189 = arith.addf %187, %188 : vector<6x96xf32>
    %c0_164 = arith.constant 0 : index
    %c0_165 = arith.constant 0 : index
    %c0_166 = arith.constant 0 : index
    %190 = vector.load %arg16[%c0_164, %c0_165, %c0_166] : memref<3x2x6xf32, #tpu.memory_space<vmem>>, vector<1x2x6xf32>
    %191 = vector.shape_cast %190 : vector<1x2x6xf32> to vector<2x6xf32>
    %cst_167 = arith.constant dense<0.000000e+00> : vector<2x96xf32>
    %192 = tpu.matmul %191, %189, %cst_167 {dimension_numbers = #tpu.dot_dimension_numbers<[1], [0], [0], [1], [0, 0, 1, 1], [], []>} : vector<2x6xf32>, vector<6x96xf32>, vector<2x96xf32> -> vector<2x96xf32>
    %c0_168 = arith.constant 0 : index
    %c0_169 = arith.constant 0 : index
    %c0_170 = arith.constant 0 : index
    %193 = vector.load %arg17[%c0_168, %c0_169, %c0_170] : memref<3x96x128xf32, #tpu.memory_space<vmem>>, vector<1x96x128xf32>
    %194 = vector.shape_cast %193 : vector<1x96x128xf32> to vector<96x128xf32>
    %cst_171 = arith.constant dense<0.000000e+00> : vector<2x128xf32>
    %195 = tpu.matmul %192, %194, %cst_171 {dimension_numbers = #tpu.dot_dimension_numbers<[1], [0], [0], [1], [0, 0, 1, 1], [], []>} : vector<2x96xf32>, vector<96x128xf32>, vector<2x128xf32> -> vector<2x128xf32>
    %c1_172 = arith.constant 1 : index
    %c0_173 = arith.constant 0 : index
    %c0_174 = arith.constant 0 : index
    %196 = vector.load %arg16[%c1_172, %c0_173, %c0_174] : memref<3x2x6xf32, #tpu.memory_space<vmem>>, vector<1x2x6xf32>
    %197 = vector.shape_cast %196 : vector<1x2x6xf32> to vector<2x6xf32>
    %cst_175 = arith.constant dense<0.000000e+00> : vector<2x96xf32>
    %198 = tpu.matmul %197, %189, %cst_175 {dimension_numbers = #tpu.dot_dimension_numbers<[1], [0], [0], [1], [0, 0, 1, 1], [], []>} : vector<2x6xf32>, vector<6x96xf32>, vector<2x96xf32> -> vector<2x96xf32>
    %c1_176 = arith.constant 1 : index
    %c0_177 = arith.constant 0 : index
    %c0_178 = arith.constant 0 : index
    %199 = vector.load %arg17[%c1_176, %c0_177, %c0_178] : memref<3x96x128xf32, #tpu.memory_space<vmem>>, vector<1x96x128xf32>
    %200 = vector.shape_cast %199 : vector<1x96x128xf32> to vector<96x128xf32>
    %cst_179 = arith.constant dense<0.000000e+00> : vector<2x128xf32>
    %201 = tpu.matmul %198, %200, %cst_179 {dimension_numbers = #tpu.dot_dimension_numbers<[1], [0], [0], [1], [0, 0, 1, 1], [], []>} : vector<2x96xf32>, vector<96x128xf32>, vector<2x128xf32> -> vector<2x128xf32>
    %202 = arith.addf %195, %201 : vector<2x128xf32>
    %c2_180 = arith.constant 2 : index
    %c0_181 = arith.constant 0 : index
    %c0_182 = arith.constant 0 : index
    %203 = vector.load %arg16[%c2_180, %c0_181, %c0_182] : memref<3x2x6xf32, #tpu.memory_space<vmem>>, vector<1x2x6xf32>
    %204 = vector.shape_cast %203 : vector<1x2x6xf32> to vector<2x6xf32>
    %cst_183 = arith.constant dense<0.000000e+00> : vector<2x96xf32>
    %205 = tpu.matmul %204, %189, %cst_183 {dimension_numbers = #tpu.dot_dimension_numbers<[1], [0], [0], [1], [0, 0, 1, 1], [], []>} : vector<2x6xf32>, vector<6x96xf32>, vector<2x96xf32> -> vector<2x96xf32>
    %c2_184 = arith.constant 2 : index
    %c0_185 = arith.constant 0 : index
    %c0_186 = arith.constant 0 : index
    %206 = vector.load %arg17[%c2_184, %c0_185, %c0_186] : memref<3x96x128xf32, #tpu.memory_space<vmem>>, vector<1x96x128xf32>
    %207 = vector.shape_cast %206 : vector<1x96x128xf32> to vector<96x128xf32>
    %cst_187 = arith.constant dense<0.000000e+00> : vector<2x128xf32>
    %208 = tpu.matmul %205, %207, %cst_187 {dimension_numbers = #tpu.dot_dimension_numbers<[1], [0], [0], [1], [0, 0, 1, 1], [], []>} : vector<2x96xf32>, vector<96x128xf32>, vector<2x128xf32> -> vector<2x128xf32>
    %209 = arith.addf %202, %208 : vector<2x128xf32>
    %c0_188 = arith.constant 0 : index
    %c0_189 = arith.constant 0 : index
    %210 = vector.load %arg18[%c0_188, %c0_189] : memref<1x128xf32, #tpu.memory_space<vmem>>, vector<1x128xf32>
    %211 = vector.broadcast %210 : vector<1x128xf32> to vector<2x128xf32>
    %212 = arith.addf %209, %211 : vector<2x128xf32>
    %cst_190 = arith.constant 0.000000e+00 : f32
    %213 = vector.broadcast %cst_190 : f32 to vector<2x128xf32>
    %214 = arith.maximumf %212, %213 : vector<2x128xf32>
    %c0_191 = arith.constant 0 : index
    %c0_192 = arith.constant 0 : index
    %215 = vector.load %arg19[%c0_191, %c0_192] : memref<128x128xf32, #tpu.memory_space<vmem>>, vector<128x128xf32>
    %cst_193 = arith.constant dense<0.000000e+00> : vector<2x128xf32>
    %216 = tpu.matmul %214, %215, %cst_193 {dimension_numbers = #tpu.dot_dimension_numbers<[1], [0], [0], [1], [0, 0, 1, 1], [], []>} : vector<2x128xf32>, vector<128x128xf32>, vector<2x128xf32> -> vector<2x128xf32>
    %c0_194 = arith.constant 0 : index
    %c0_195 = arith.constant 0 : index
    %217 = vector.load %arg20[%c0_194, %c0_195] : memref<1x128xf32, #tpu.memory_space<vmem>>, vector<1x128xf32>
    %218 = vector.broadcast %217 : vector<1x128xf32> to vector<2x128xf32>
    %219 = arith.addf %216, %218 : vector<2x128xf32>
    %c0_196 = arith.constant 0 : index
    %c0_197 = arith.constant 0 : index
    %220 = vector.load %arg21[%c0_196, %c0_197] : memref<2x128xf32, #tpu.memory_space<vmem>>, vector<2x128xf32>
    tpu.vector_store %arg21[%c0_196, %c0_197], %219 {strides = array<i32>} : memref<2x128xf32, #tpu.memory_space<vmem>>, vector<2x128xf32>,
    return
  }
}

</mosaic_0001>

<llo_original>
// kernel: actor_critic_forward.1
$region0: #{actor_critic_forward.1}
  #allocation0 [shape = 'u32[]', space=smem, size = 0x4, offset = 0x4, fixed_abs, tag = 'smem constant byte address 0x4 - core index']
  #allocation1 [shape = 'u32[144,128]{1,0:T(1,128)}', space=vmem, size = 0x12000, scoped, tag = 'internal scratch']
  %s0 = inlined_call_operand.vmem [shape: f32[96,192], index: 0, kind: input, shape index: {}]
  %s1 = inlined_call_operand.vmem [shape: f32[5,44,96], index: 1, kind: input, shape index: {}]
  %s2 = inlined_call_operand.vmem [shape: f32[5,192,352], index: 2, kind: input, shape index: {}]
  %s3 = inlined_call_operand.vmem [shape: f32[2,16], index: 3, kind: input, shape index: {}]
  %s4 = inlined_call_operand.vmem [shape: f32[352,16], index: 4, kind: input, shape index: {}]
  %s5 = inlined_call_operand.vmem [shape: f32[16,352], index: 5, kind: input, shape index: {}]
  %s6 = inlined_call_operand.vmem [shape: f32[5,18,44], index: 6, kind: input, shape index: {}]
  %s7 = inlined_call_operand.vmem [shape: f32[5,352,288], index: 7, kind: input, shape index: {}]
  %s8 = inlined_call_operand.vmem [shape: f32[2,32], index: 8, kind: input, shape index: {}]
  %s9 = inlined_call_operand.vmem [shape: f32[288,32], index: 9, kind: input, shape index: {}]
  %s10 = inlined_call_operand.vmem [shape: f32[32,288], index: 10, kind: input, shape index: {}]
  %s11 = inlined_call_operand.vmem [shape: f32[5,6,18], index: 11, kind: input, shape index: {}]
  %s12 = inlined_call_operand.vmem [shape: f32[5,288,96], index: 12, kind: input, shape index: {}]
  %s13 = inlined_call_operand.vmem [shape: f32[2,32], index: 13, kind: input, shape index: {}]
  %s14 = inlined_call_operand.vmem [shape: f32[96,32], index: 14, kind: input, shape index: {}]
  %s15 = inlined_call_operand.vmem [shape: f32[32,96], index: 15, kind: input, shape index: {}]
  %s16 = inlined_call_operand.vmem [shape: f32[3,2,6], index: 16, kind: input, shape index: {}]
  %s17 = inlined_call_operand.vmem [shape: f32[3,96,128], index: 17, kind: input, shape index: {}]
  %s18 = inlined_call_operand.vmem [shape: f32[1,128], index: 18, kind: input, shape index: {}]
  %s19 = inlined_call_operand.vmem [shape: f32[128,128], index: 19, kind: input, shape index: {}]
  %s20 = inlined_call_operand.vmem [shape: f32[1,128], index: 20, kind: input, shape index: {}]
  %s21 = inlined_call_operand.vmem [shape: f32[2,128], index: 21, kind: output, shape index: {}]
  %s22 = sld [smem:[#allocation0]]
  $region94: #{actor_critic_forward.1} parent=0
    _
  %s24 = ssub.s32 1, %s22
  %s25 = scalar_select 0, %s24, %s22
  // Predicated region
  $region2: #{actor_critic_forward.1} parent=0 // pred_check
    _
  $region3: #{actor_critic_forward.1} parent=0 // pred_check_branch
    %27 = sbr.rel (0) target = $region5
  $region4: #{actor_critic_forward.1} parent=0 // pred_region
    _
  $region5: #{actor_critic_forward.1} parent=0 // pred_fallthru
    _
  // Predicated region
  $region6: #{actor_critic_forward.1} parent=0 // pred_check
    _
  $region7: #{actor_critic_forward.1} parent=0 // pred_check_branch
    %29 = sbr.rel (0) target = $region9
  $region8: #{actor_critic_forward.1} parent=0 // pred_region
    _
  $region9: #{actor_critic_forward.1} parent=0 // pred_fallthru
    _
  // Predicated region
  $region10: #{actor_critic_forward.1} parent=0 // pred_check
    _
  $region11: #{actor_critic_forward.1} parent=0 // pred_check_branch
    %31 = sbr.rel (0) target = $region13
  $region12: #{actor_critic_forward.1} parent=0 // pred_region
    _
  $region13: #{actor_critic_forward.1} parent=0 // pred_fallthru
    _
  // Predicated region
  $region14: #{actor_critic_forward.1} parent=0 // pred_check
    _
  $region15: #{actor_critic_forward.1} parent=0 // pred_check_branch
    %33 = sbr.rel (0) target = $region17
  $region16: #{actor_critic_forward.1} parent=0 // pred_region
    _
  $region17: #{actor_critic_forward.1} parent=0 // pred_fallthru
    _
  // Predicated region
  $region18: #{actor_critic_forward.1} parent=0 // pred_check
    _
  $region19: #{actor_critic_forward.1} parent=0 // pred_check_branch
    %35 = sbr.rel (0) target = $region21
  $region20: #{actor_critic_forward.1} parent=0 // pred_region
    _
  $region21: #{actor_critic_forward.1} parent=0 // pred_fallthru
    _
  // Predicated region
  $region22: #{actor_critic_forward.1} parent=0 // pred_check
    _
  $region23: #{actor_critic_forward.1} parent=0 // pred_check_branch
    %37 = sbr.rel (0) target = $region25
  $region24: #{actor_critic_forward.1} parent=0 // pred_region
    _
  $region25: #{actor_critic_forward.1} parent=0 // pred_fallthru
    _
  // Predicated region
  $region26: #{actor_critic_forward.1} parent=0 // pred_check
    _
  $region27: #{actor_critic_forward.1} parent=0 // pred_check_branch
    %39 = sbr.rel (0) target = $region29
  $region28: #{actor_critic_forward.1} parent=0 // pred_region
    _
  $region29: #{actor_critic_forward.1} parent=0 // pred_fallthru
    _
  // Predicated region
  $region30: #{actor_critic_forward.1} parent=0 // pred_check
    _
  $region31: #{actor_critic_forward.1} parent=0 // pred_check_branch
    %41 = sbr.rel (0) target = $region33
  $region32: #{actor_critic_forward.1} parent=0 // pred_region
    _
  $region33: #{actor_critic_forward.1} parent=0 // pred_fallthru
    _
  // Predicated region
  $region34: #{actor_critic_forward.1} parent=0 // pred_check
    _
  $region35: #{actor_critic_forward.1} parent=0 // pred_check_branch
    %43 = sbr.rel (0) target = $region37
  $region36: #{actor_critic_forward.1} parent=0 // pred_region
    _
  $region37: #{actor_critic_forward.1} parent=0 // pred_fallthru
    _
  // Predicated region
  $region38: #{actor_critic_forward.1} parent=0 // pred_check
    _
  $region39: #{actor_critic_forward.1} parent=0 // pred_check_branch
    %45 = sbr.rel (0) target = $region41
  $region40: #{actor_critic_forward.1} parent=0 // pred_region
    _
  $region41: #{actor_critic_forward.1} parent=0 // pred_fallthru
    _
  // Predicated region
  $region42: #{actor_critic_forward.1} parent=0 // pred_check
    _
  $region43: #{actor_critic_forward.1} parent=0 // pred_check_branch
    %47 = sbr.rel (0) target = $region45
  $region44: #{actor_critic_forward.1} parent=0 // pred_region
    _
  $region45: #{actor_critic_forward.1} parent=0 // pred_fallthru
    _
  // Predicated region
  $region46: #{actor_critic_forward.1} parent=0 // pred_check
    _
  $region47: #{actor_critic_forward.1} parent=0 // pred_check_branch
    %49 = sbr.rel (0) target = $region49
  $region48: #{actor_critic_forward.1} parent=0 // pred_region
    _
  $region49: #{actor_critic_forward.1} parent=0 // pred_fallthru
    _
  // Predicated region
  $region50: #{actor_critic_forward.1} parent=0 // pred_check
    _
  $region51: #{actor_critic_forward.1} parent=0 // pred_check_branch
    %51 = sbr.rel (0) target = $region53
  $region52: #{actor_critic_forward.1} parent=0 // pred_region
    _
  $region53: #{actor_critic_forward.1} parent=0 // pred_fallthru
    _
  // Predicated region
  $region54: #{actor_critic_forward.1} parent=0 // pred_check
    _
  $region55: #{actor_critic_forward.1} parent=0 // pred_check_branch
    %53 = sbr.rel (0) target = $region57
  $region56: #{actor_critic_forward.1} parent=0 // pred_region
    _
  $region57: #{actor_critic_forward.1} parent=0 // pred_fallthru
    _
  // Predicated region
  $region58: #{actor_critic_forward.1} parent=0 // pred_check
    _
  $region59: #{actor_critic_forward.1} parent=0 // pred_check_branch
    %55 = sbr.rel (0) target = $region61
  $region60: #{actor_critic_forward.1} parent=0 // pred_region
    _
  $region61: #{actor_critic_forward.1} parent=0 // pred_fallthru
    _
  // Predicated region
  $region62: #{actor_critic_forward.1} parent=0 // pred_check
    _
  $region63: #{actor_critic_forward.1} parent=0 // pred_check_branch
    %57 = sbr.rel (0) target = $region65
  $region64: #{actor_critic_forward.1} parent=0 // pred_region
    _
  $region65: #{actor_critic_forward.1} parent=0 // pred_fallthru
    _
  // Predicated region
  $region66: #{actor_critic_forward.1} parent=0 // pred_check
    _
  $region67: #{actor_critic_forward.1} parent=0 // pred_check_branch
    %59 = sbr.rel (0) target = $region69
  $region68: #{actor_critic_forward.1} parent=0 // pred_region
    _
  $region69: #{actor_critic_forward.1} parent=0 // pred_fallthru
    _
  // Predicated region
  $region70: #{actor_critic_forward.1} parent=0 // pred_check
    _
  $region71: #{actor_critic_forward.1} parent=0 // pred_check_branch
    %61 = sbr.rel (0) target = $region73
  $region72: #{actor_critic_forward.1} parent=0 // pred_region
    _
  $region73: #{actor_critic_forward.1} parent=0 // pred_fallthru
    _
  // Predicated region
  $region74: #{actor_critic_forward.1} parent=0 // pred_check
    _
  $region75: #{actor_critic_forward.1} parent=0 // pred_check_branch
    %63 = sbr.rel (0) target = $region77
  $region76: #{actor_critic_forward.1} parent=0 // pred_region
    _
  $region77: #{actor_critic_forward.1} parent=0 // pred_fallthru
    _
  // Predicated region
  $region78: #{actor_critic_forward.1} parent=0 // pred_check
    _
  $region79: #{actor_critic_forward.1} parent=0 // pred_check_branch
    %65 = sbr.rel (0) target = $region81
  $region80: #{actor_critic_forward.1} parent=0 // pred_region
    _
  $region81: #{actor_critic_forward.1} parent=0 // pred_fallthru
    _
  // Predicated region
  $region82: #{actor_critic_forward.1} parent=0 // pred_check
    _
  $region83: #{actor_critic_forward.1} parent=0 // pred_check_branch
    %67 = sbr.rel (0) target = $region85
  $region84: #{actor_critic_forward.1} parent=0 // pred_region
    _
  $region85: #{actor_critic_forward.1} parent=0 // pred_fallthru
    _
  %v68 = vld [vmem:[%s0] sm:$0xff]
  %v69 = vld [vmem:[%s0 + $0x8] sm:$0xff]
  %v70 = vld [vmem:[%s0 + $0x10] sm:$0xff]
  %v71 = vld [vmem:[%s0 + $0x18] sm:$0xff]
  %v72 = vld [vmem:[%s0 + $0x20] sm:$0xff]
  %v73 = vld [vmem:[%s0 + $0x28] sm:$0xff]
  %v74 = vld [vmem:[%s0 + $0x30] sm:$0xff]
  %v75 = vld [vmem:[%s0 + $0x38] sm:$0xff]
  %v76 = vld [vmem:[%s0 + $0x40] sm:$0xff]
  %v77 = vld [vmem:[%s0 + $0x48] sm:$0xff]
  %v78 = vld [vmem:[%s0 + $0x50] sm:$0xff]
  %v79 = vld [vmem:[%s0 + $0x58] sm:$0xff]
  %v80 = vld [vmem:[%s0 + $0x60] sm:$0xff]
  %v81 = vld [vmem:[%s0 + $0x68] sm:$0xff]
  %v82 = vld [vmem:[%s0 + $0x70] sm:$0xff]
  %v83 = vld [vmem:[%s0 + $0x78] sm:$0xff]
  %v84 = vld [vmem:[%s0 + $0x80] sm:$0xff]
  %v85 = vld [vmem:[%s0 + $0x88] sm:$0xff]
  %v86 = vld [vmem:[%s0 + $0x90] sm:$0xff]
  %v87 = vld [vmem:[%s0 + $0x98] sm:$0xff]
  %v88 = vld [vmem:[%s0 + $0xa0] sm:$0xff]
  %v89 = vld [vmem:[%s0 + $0xa8] sm:$0xff]
  %v90 = vld [vmem:[%s0 + $0xb0] sm:$0xff]
  %v91 = vld [vmem:[%s0 + $0xb8] sm:$0xff]
  %v92 = vld [vmem:[%s1] sm:$0xff]
  %v93 = vld [vmem:[%s1 + $0x8] sm:$0xff]
  %v94 = vld [vmem:[%s1 + $0x10] sm:$0xff]
  %v95 = vld [vmem:[%s1 + $0x18] sm:$0xff]
  %v96 = vld [vmem:[%s1 + $0x20] sm:$0xff]
  %v97 = vld [vmem:[%s1 + $0x28] sm:$0xf]
  %vm98 = vcmask 785408
  %v100 = vsel %vm98, %v92, 0
  %v103 = vsel %vm98, %v93, 0
  %v106 = vsel %vm98, %v94, 0
  %v109 = vsel %vm98, %v95, 0
  %v112 = vsel %vm98, %v96, 0
  %v115 = vsel %vm98, %v97, 0
  %117 = vmatprep.subr.mxu0 0.0
  %118 = vmatpush1.msra.mxu0 0.0
  %119 = vmatprep.subr.mxu0 0.0
  %120 = vmatpush1.msra.mxu0 0.0
  %121 = vmatprep.subr.mxu0 0.0
  %122 = vmatpush1.msra.mxu0 0.0
  %123 = vmatprep.subr.mxu0 0.0
  %124 = vmatpush1.msra.mxu0 0.0
  %125 = vmatprep.subr.mxu0 %v91
  %126 = vmatpush1.msra.mxu0 %v90
  %127 = vmatprep.subr.mxu0 %v89
  %128 = vmatpush1.msra.mxu0 %v88
  %129 = vmatprep.subr.mxu0 %v87
  %130 = vmatpush1.msra.mxu0 %v86
  %131 = vmatprep.subr.mxu0 %v85
  %132 = vmatpush1.msra.mxu0 %v84
  %133 = vmatprep.subr.mxu0 %v83
  %134 = vmatpush1.msra.mxu0 %v82
  %135 = vmatprep.subr.mxu0 %v81
  %136 = vmatpush1.msra.mxu0 %v80
  %137 = vmatprep.subr.mxu0 %v79
  %138 = vmatpush1.msra.mxu0 %v78
  %139 = vmatprep.subr.mxu0 %v77
  %140 = vmatpush1.msra.mxu0 %v76
  %141 = vmatprep.subr.mxu0 %v75
  %142 = vmatpush1.msra.mxu0 %v74
  %143 = vmatprep.subr.mxu0 %v73
  %144 = vmatpush1.msra.mxu0 %v72
  %145 = vmatprep.subr.mxu0 %v71
  %146 = vmatpush1.msra.mxu0 %v70
  %147 = vmatprep.subr.mxu0 %v69
  %148 = vmatpush1.msra.mxu0 %v68
  %149 = vmatprep.subr.mxu0 0.0
  %150 = vmatpush2.msra.mxu0 0.0
  %151 = vmatprep.subr.mxu0 0.0
  %152 = vmatpush2.msra.mxu0 0.0
  %153 = vmatprep.subr.mxu0 0.0
  %154 = vmatpush2.msra.mxu0 0.0
  %155 = vmatprep.subr.mxu0 0.0
  %156 = vmatpush2.msra.mxu0 0.0
  %157 = vmatprep.subr.mxu0 0.0
  %158 = vmatpush2.msra.mxu0 0.0
  %159 = vmatprep.subr.mxu0 0.0
  %160 = vmatpush2.msra.mxu0 0.0
  %161 = vmatprep.subr.mxu0 0.0
  %162 = vmatpush2.msra.mxu0 0.0
  %163 = vmatprep.subr.mxu0 0.0
  %164 = vmatpush2.msra.mxu0 0.0
  %165 = vmatprep.subr.mxu0 0.0
  %166 = vmatpush2.msra.mxu0 0.0
  %167 = vmatprep.subr.mxu0 0.0
  %168 = vmatpush2.msra.mxu0 0.0
  %169 = vmatprep.subr.mxu0 0.0
  %170 = vmatpush2.msra.mxu0 0.0
  %171 = vmatprep.subr.mxu0 0.0
  %172 = vmatpush2.msra.mxu0 0.0
  %173 = vmatprep.subr.mxu0 0.0
  %174 = vmatpush2.msra.mxu0 0.0
  %175 = vmatprep.subr.mxu0 0.0
  %176 = vmatpush2.msra.mxu0 0.0
  %177 = vmatprep.subr.mxu0 0.0
  %178 = vmatpush2.msra.mxu0 0.0
  %179 = vmatprep.subr.mxu0 0.0
  %180 = vmatpush2.msra.mxu0 0.0
  %181 = vmatprep.mubr.f32.mxu0 0.0
  %182 = vmatmul.mubr.f32.gmra.mxu0 %v100
  %v183 = vpop.f32.mrf.mxu0
  %v184 = vadd.f32 0.0, %v183
  %v185 = vpop.f32.mrf.mxu0
  %v186 = vadd.f32 0.0, %v185
  %187 = vmatprep.mubr.f32.mxu0 0.0
  %188 = vmatmul.mubr.f32.gmra.mxu0 %v103
  %v189 = vpop.f32.mrf.mxu0
  %v190 = vadd.f32 0.0, %v189
  %v191 = vpop.f32.mrf.mxu0
  %v192 = vadd.f32 0.0, %v191
  %193 = vmatprep.mubr.f32.mxu0 0.0
  %194 = vmatmul.mubr.f32.gmra.mxu0 %v106
  %v195 = vpop.f32.mrf.mxu0
  %v196 = vadd.f32 0.0, %v195
  %v197 = vpop.f32.mrf.mxu0
  %v198 = vadd.f32 0.0, %v197
  %199 = vmatprep.mubr.f32.mxu0 0.0
  %200 = vmatmul.mubr.f32.gmra.mxu0 %v109
  %v201 = vpop.f32.mrf.mxu0
  %v202 = vadd.f32 0.0, %v201
  %v203 = vpop.f32.mrf.mxu0
  %v204 = vadd.f32 0.0, %v203
  %205 = vmatprep.mubr.f32.mxu0 0.0
  %206 = vmatmul.mubr.f32.gmra.mxu0 %v112
  %v207 = vpop.f32.mrf.mxu0
  %v208 = vadd.f32 0.0, %v207
  %v209 = vpop.f32.mrf.mxu0
  %v210 = vadd.f32 0.0, %v209
  %211 = vmatprep.mubr.f32.mxu0 0.0
  %212 = vmatmul.mubr.f32.gmra.mxu0 %v115
  %v213 = vpop.f32.mrf.mxu0
  %v214 = vadd.f32 0.0, %v213
  %v215 = vpop.f32.mrf.mxu0
  %v216 = vadd.f32 0.0, %v215
  %217 = vdwg.mxu0
  %v218 = vld [vmem:[%s2] sm:$0xff]
  %v219 = vld [vmem:[%s2 + $0x8] sm:$0xff]
  %v220 = vld [vmem:[%s2 + $0x10] sm:$0xff]
  %v221 = vld [vmem:[%s2 + $0x18] sm:$0xff]
  %v222 = vld [vmem:[%s2 + $0x20] sm:$0xff]
  %v223 = vld [vmem:[%s2 + $0x28] sm:$0xff]
  %v224 = vld [vmem:[%s2 + $0x30] sm:$0xff]
  %v225 = vld [vmem:[%s2 + $0x38] sm:$0xff]
  %v226 = vld [vmem:[%s2 + $0x40] sm:$0xff]
  %v227 = vld [vmem:[%s2 + $0x48] sm:$0xff]
  %v228 = vld [vmem:[%s2 + $0x50] sm:$0xff]
  %v229 = vld [vmem:[%s2 + $0x58] sm:$0xff]
  %v230 = vld [vmem:[%s2 + $0x60] sm:$0xff]
  %v231 = vld [vmem:[%s2 + $0x68] sm:$0xff]
  %v232 = vld [vmem:[%s2 + $0x70] sm:$0xff]
  %v233 = vld [vmem:[%s2 + $0x78] sm:$0xff]
  %v234 = vld [vmem:[%s2 + $0x80] sm:$0xff]
  %v235 = vld [vmem:[%s2 + $0x88] sm:$0xff]
  %v236 = vld [vmem:[%s2 + $0x90] sm:$0xff]
  %v237 = vld [vmem:[%s2 + $0x98] sm:$0xff]
  %v238 = vld [vmem:[%s2 + $0xa0] sm:$0xff]
  %v239 = vld [vmem:[%s2 + $0xa8] sm:$0xff]
  %v240 = vld [vmem:[%s2 + $0xb0] sm:$0xff]
  %v241 = vld [vmem:[%s2 + $0xb8] sm:$0xff]
  %v242 = vld [vmem:[%s2 + $0xc0] sm:$0xff]
  %v243 = vld [vmem:[%s2 + $0xc8] sm:$0xff]
  %v244 = vld [vmem:[%s2 + $0xd0] sm:$0xff]
  %v245 = vld [vmem:[%s2 + $0xd8] sm:$0xff]
  %v246 = vld [vmem:[%s2 + $0xe0] sm:$0xff]
  %v247 = vld [vmem:[%s2 + $0xe8] sm:$0xff]
  %v248 = vld [vmem:[%s2 + $0xf0] sm:$0xff]
  %v249 = vld [vmem:[%s2 + $0xf8] sm:$0xff]
  %v250 = vld [vmem:[%s2 + $0x100] sm:$0xff]
  %v251 = vld [vmem:[%s2 + $0x108] sm:$0xff]
  %v252 = vld [vmem:[%s2 + $0x110] sm:$0xff]
  %v253 = vld [vmem:[%s2 + $0x118] sm:$0xff]
  %v254 = vld [vmem:[%s2 + $0x120] sm:$0xff]
  %v255 = vld [vmem:[%s2 + $0x128] sm:$0xff]
  %v256 = vld [vmem:[%s2 + $0x130] sm:$0xff]
  %v257 = vld [vmem:[%s2 + $0x138] sm:$0xff]
  %v258 = vld [vmem:[%s2 + $0x140] sm:$0xff]
  %v259 = vld [vmem:[%s2 + $0x148] sm:$0xff]
  %v260 = vld [vmem:[%s2 + $0x150] sm:$0xff]
  %v261 = vld [vmem:[%s2 + $0x158] sm:$0xff]
  %v262 = vld [vmem:[%s2 + $0x160] sm:$0xff]
  %v263 = vld [vmem:[%s2 + $0x168] sm:$0xff]
  %v264 = vld [vmem:[%s2 + $0x170] sm:$0xff]
  %v265 = vld [vmem:[%s2 + $0x178] sm:$0xff]
  %v266 = vld [vmem:[%s2 + $0x180] sm:$0xff]
  %v267 = vld [vmem:[%s2 + $0x188] sm:$0xff]
  %v268 = vld [vmem:[%s2 + $0x190] sm:$0xff]
  %v269 = vld [vmem:[%s2 + $0x198] sm:$0xff]
  %v270 = vld [vmem:[%s2 + $0x1a0] sm:$0xff]
  %v271 = vld [vmem:[%s2 + $0x1a8] sm:$0xff]
  %v272 = vld [vmem:[%s2 + $0x1b0] sm:$0xff]
  %v273 = vld [vmem:[%s2 + $0x1b8] sm:$0xff]
  %v274 = vld [vmem:[%s2 + $0x1c0] sm:$0xff]
  %v275 = vld [vmem:[%s2 + $0x1c8] sm:$0xff]
  %v276 = vld [vmem:[%s2 + $0x1d0] sm:$0xff]
  %v277 = vld [vmem:[%s2 + $0x1d8] sm:$0xff]
  %v278 = vld [vmem:[%s2 + $0x1e0] sm:$0xff]
  %v279 = vld [vmem:[%s2 + $0x1e8] sm:$0xff]
  %v280 = vld [vmem:[%s2 + $0x1f0] sm:$0xff]
  %v281 = vld [vmem:[%s2 + $0x1f8] sm:$0xff]
  %v282 = vld [vmem:[%s2 + $0x200] sm:$0xff]
  %v283 = vld [vmem:[%s2 + $0x208] sm:$0xff]
  %v284 = vld [vmem:[%s2 + $0x210] sm:$0xff]
  %v285 = vld [vmem:[%s2 + $0x218] sm:$0xff]
  %v286 = vld [vmem:[%s2 + $0x220] sm:$0xff]
  %v287 = vld [vmem:[%s2 + $0x228] sm:$0xff]
  %v288 = vld [vmem:[%s2 + $0x230] sm:$0xff]
  %v289 = vld [vmem:[%s2 + $0x238] sm:$0xff]
  %s290 = scalar_lea.vmem %s1, 48
  %v291 = vld [vmem:[%s290] sm:$0xff]
  %v292 = vld [vmem:[%s290 + $0x8] sm:$0xff]
  %v293 = vld [vmem:[%s290 + $0x10] sm:$0xff]
  %v294 = vld [vmem:[%s290 + $0x18] sm:$0xff]
  %v295 = vld [vmem:[%s290 + $0x20] sm:$0xff]
  %v296 = vld [vmem:[%s290 + $0x28] sm:$0xf]
  %v298 = vsel %vm98, %v291, 0
  %v301 = vsel %vm98, %v292, 0
  %v304 = vsel %vm98, %v293, 0
  %v307 = vsel %vm98, %v294, 0
  %v310 = vsel %vm98, %v295, 0
  %v313 = vsel %vm98, %v296, 0
  %315 = vmatprep.subr.mxu0 0.0
  %316 = vmatpush1.msra.mxu0 0.0
  %317 = vmatprep.subr.mxu0 0.0
  %318 = vmatpush1.msra.mxu0 0.0
  %319 = vmatprep.subr.mxu0 0.0
  %320 = vmatpush1.msra.mxu0 0.0
  %321 = vmatprep.subr.mxu0 0.0
  %322 = vmatpush1.msra.mxu0 0.0
  %323 = vmatprep.subr.mxu0 %v91
  %324 = vmatpush1.msra.mxu0 %v90
  %325 = vmatprep.subr.mxu0 %v89
  %326 = vmatpush1.msra.mxu0 %v88
  %327 = vmatprep.subr.mxu0 %v87
  %328 = vmatpush1.msra.mxu0 %v86
  %329 = vmatprep.subr.mxu0 %v85
  %330 = vmatpush1.msra.mxu0 %v84
  %331 = vmatprep.subr.mxu0 %v83
  %332 = vmatpush1.msra.mxu0 %v82
  %333 = vmatprep.subr.mxu0 %v81
  %334 = vmatpush1.msra.mxu0 %v80
  %335 = vmatprep.subr.mxu0 %v79
  %336 = vmatpush1.msra.mxu0 %v78
  %337 = vmatprep.subr.mxu0 %v77
  %338 = vmatpush1.msra.mxu0 %v76
  %339 = vmatprep.subr.mxu0 %v75
  %340 = vmatpush1.msra.mxu0 %v74
  %341 = vmatprep.subr.mxu0 %v73
  %342 = vmatpush1.msra.mxu0 %v72
  %343 = vmatprep.subr.mxu0 %v71
  %344 = vmatpush1.msra.mxu0 %v70
  %345 = vmatprep.subr.mxu0 %v69
  %346 = vmatpush1.msra.mxu0 %v68
  %347 = vmatprep.subr.mxu0 0.0
  %348 = vmatpush2.msra.mxu0 0.0
  %349 = vmatprep.subr.mxu0 0.0
  %350 = vmatpush2.msra.mxu0 0.0
  %351 = vmatprep.subr.mxu0 0.0
  %352 = vmatpush2.msra.mxu0 0.0
  %353 = vmatprep.subr.mxu0 0.0
  %354 = vmatpush2.msra.mxu0 0.0
  %355 = vmatprep.subr.mxu0 0.0
  %356 = vmatpush2.msra.mxu0 0.0
  %357 = vmatprep.subr.mxu0 0.0
  %358 = vmatpush2.msra.mxu0 0.0
  %359 = vmatprep.subr.mxu0 0.0
  %360 = vmatpush2.msra.mxu0 0.0
  %361 = vmatprep.subr.mxu0 0.0
  %362 = vmatpush2.msra.mxu0 0.0
  %363 = vmatprep.subr.mxu0 0.0
  %364 = vmatpush2.msra.mxu0 0.0
  %365 = vmatprep.subr.mxu0 0.0
  %366 = vmatpush2.msra.mxu0 0.0
  %367 = vmatprep.subr.mxu0 0.0
  %368 = vmatpush2.msra.mxu0 0.0
  %369 = vmatprep.subr.mxu0 0.0
  %370 = vmatpush2.msra.mxu0 0.0
  %371 = vmatprep.subr.mxu0 0.0
  %372 = vmatpush2.msra.mxu0 0.0
  %373 = vmatprep.subr.mxu0 0.0
  %374 = vmatpush2.msra.mxu0 0.0
  %375 = vmatprep.subr.mxu0 0.0
  %376 = vmatpush2.msra.mxu0 0.0
  %377 = vmatprep.subr.mxu0 0.0
  %378 = vmatpush2.msra.mxu0 0.0
  %379 = vmatprep.mubr.f32.mxu0 0.0
  %380 = vmatmul.mubr.f32.gmra.mxu0 %v298
  %v381 = vpop.f32.mrf.mxu0
  %v382 = vadd.f32 0.0, %v381
  %v383 = vpop.f32.mrf.mxu0
  %v384 = vadd.f32 0.0, %v383
  %385 = vmatprep.mubr.f32.mxu0 0.0
  %386 = vmatmul.mubr.f32.gmra.mxu0 %v301
  %v387 = vpop.f32.mrf.mxu0
  %v388 = vadd.f32 0.0, %v387
  %v389 = vpop.f32.mrf.mxu0
  %v390 = vadd.f32 0.0, %v389
  %391 = vmatprep.mubr.f32.mxu0 0.0
  %392 = vmatmul.mubr.f32.gmra.mxu0 %v304
  %v393 = vpop.f32.mrf.mxu0
  %v394 = vadd.f32 0.0, %v393
  %v395 = vpop.f32.mrf.mxu0
  %v396 = vadd.f32 0.0, %v395
  %397 = vmatprep.mubr.f32.mxu0 0.0
  %398 = vmatmul.mubr.f32.gmra.mxu0 %v307
  %v399 = vpop.f32.mrf.mxu0
  %v400 = vadd.f32 0.0, %v399
  %v401 = vpop.f32.mrf.mxu0
  %v402 = vadd.f32 0.0, %v401
  %403 = vmatprep.mubr.f32.mxu0 0.0
  %404 = vmatmul.mubr.f32.gmra.mxu0 %v310
  %v405 = vpop.f32.mrf.mxu0
  %v406 = vadd.f32 0.0, %v405
  %v407 = vpop.f32.mrf.mxu0
  %v408 = vadd.f32 0.0, %v407
  %409 = vmatprep.mubr.f32.mxu0 0.0
  %410 = vmatmul.mubr.f32.gmra.mxu0 %v313
  %v411 = vpop.f32.mrf.mxu0
  %v412 = vadd.f32 0.0, %v411
  %v413 = vpop.f32.mrf.mxu0
  %v414 = vadd.f32 0.0, %v413
  %415 = vdwg.mxu0
  %s416 = scalar_lea.vmem %s2, 576
  %v417 = vld [vmem:[%s416] sm:$0xff]
  %v418 = vld [vmem:[%s416 + $0x8] sm:$0xff]
  %v419 = vld [vmem:[%s416 + $0x10] sm:$0xff]
  %v420 = vld [vmem:[%s416 + $0x18] sm:$0xff]
  %v421 = vld [vmem:[%s416 + $0x20] sm:$0xff]
  %v422 = vld [vmem:[%s416 + $0x28] sm:$0xff]
  %v423 = vld [vmem:[%s416 + $0x30] sm:$0xff]
  %v424 = vld [vmem:[%s416 + $0x38] sm:$0xff]
  %v425 = vld [vmem:[%s416 + $0x40] sm:$0xff]
  %v426 = vld [vmem:[%s416 + $0x48] sm:$0xff]
  %v427 = vld [vmem:[%s416 + $0x50] sm:$0xff]
  %v428 = vld [vmem:[%s416 + $0x58] sm:$0xff]
  %v429 = vld [vmem:[%s416 + $0x60] sm:$0xff]
  %v430 = vld [vmem:[%s416 + $0x68] sm:$0xff]
  %v431 = vld [vmem:[%s416 + $0x70] sm:$0xff]
  %v432 = vld [vmem:[%s416 + $0x78] sm:$0xff]
  %v433 = vld [vmem:[%s416 + $0x80] sm:$0xff]
  %v434 = vld [vmem:[%s416 + $0x88] sm:$0xff]
  %v435 = vld [vmem:[%s416 + $0x90] sm:$0xff]
  %v436 = vld [vmem:[%s416 + $0x98] sm:$0xff]
  %v437 = vld [vmem:[%s416 + $0xa0] sm:$0xff]
  %v438 = vld [vmem:[%s416 + $0xa8] sm:$0xff]
  %v439 = vld [vmem:[%s416 + $0xb0] sm:$0xff]
  %v440 = vld [vmem:[%s416 + $0xb8] sm:$0xff]
  %v441 = vld [vmem:[%s416 + $0xc0] sm:$0xff]
  %v442 = vld [vmem:[%s416 + $0xc8] sm:$0xff]
  %v443 = vld [vmem:[%s416 + $0xd0] sm:$0xff]
  %v444 = vld [vmem:[%s416 + $0xd8] sm:$0xff]
  %v445 = vld [vmem:[%s416 + $0xe0] sm:$0xff]
  %v446 = vld [vmem:[%s416 + $0xe8] sm:$0xff]
  %v447 = vld [vmem:[%s416 + $0xf0] sm:$0xff]
  %v448 = vld [vmem:[%s416 + $0xf8] sm:$0xff]
  %v449 = vld [vmem:[%s416 + $0x100] sm:$0xff]
  %v450 = vld [vmem:[%s416 + $0x108] sm:$0xff]
  %v451 = vld [vmem:[%s416 + $0x110] sm:$0xff]
  %v452 = vld [vmem:[%s416 + $0x118] sm:$0xff]
  %v453 = vld [vmem:[%s416 + $0x120] sm:$0xff]
  %v454 = vld [vmem:[%s416 + $0x128] sm:$0xff]
  %v455 = vld [vmem:[%s416 + $0x130] sm:$0xff]
  %v456 = vld [vmem:[%s416 + $0x138] sm:$0xff]
  %v457 = vld [vmem:[%s416 + $0x140] sm:$0xff]
  %v458 = vld [vmem:[%s416 + $0x148] sm:$0xff]
  %v459 = vld [vmem:[%s416 + $0x150] sm:$0xff]
  %v460 = vld [vmem:[%s416 + $0x158] sm:$0xff]
  %v461 = vld [vmem:[%s416 + $0x160] sm:$0xff]
  %v462 = vld [vmem:[%s416 + $0x168] sm:$0xff]
  %v463 = vld [vmem:[%s416 + $0x170] sm:$0xff]
  %v464 = vld [vmem:[%s416 + $0x178] sm:$0xff]
  %v465 = vld [vmem:[%s416 + $0x180] sm:$0xff]
  %v466 = vld [vmem:[%s416 + $0x188] sm:$0xff]
  %v467 = vld [vmem:[%s416 + $0x190] sm:$0xff]
  %v468 = vld [vmem:[%s416 + $0x198] sm:$0xff]
  %v469 = vld [vmem:[%s416 + $0x1a0] sm:$0xff]
  %v470 = vld [vmem:[%s416 + $0x1a8] sm:$0xff]
  %v471 = vld [vmem:[%s416 + $0x1b0] sm:$0xff]
  %v472 = vld [vmem:[%s416 + $0x1b8] sm:$0xff]
  %v473 = vld [vmem:[%s416 + $0x1c0] sm:$0xff]
  %v474 = vld [vmem:[%s416 + $0x1c8] sm:$0xff]
  %v475 = vld [vmem:[%s416 + $0x1d0] sm:$0xff]
  %v476 = vld [vmem:[%s416 + $0x1d8] sm:$0xff]
  %v477 = vld [vmem:[%s416 + $0x1e0] sm:$0xff]
  %v478 = vld [vmem:[%s416 + $0x1e8] sm:$0xff]
  %v479 = vld [vmem:[%s416 + $0x1f0] sm:$0xff]
  %v480 = vld [vmem:[%s416 + $0x1f8] sm:$0xff]
  %v481 = vld [vmem:[%s416 + $0x200] sm:$0xff]
  %v482 = vld [vmem:[%s416 + $0x208] sm:$0xff]
  %v483 = vld [vmem:[%s416 + $0x210] sm:$0xff]
  %v484 = vld [vmem:[%s416 + $0x218] sm:$0xff]
  %v485 = vld [vmem:[%s416 + $0x220] sm:$0xff]
  %v486 = vld [vmem:[%s416 + $0x228] sm:$0xff]
  %v487 = vld [vmem:[%s416 + $0x230] sm:$0xff]
  %v488 = vld [vmem:[%s416 + $0x238] sm:$0xff]
  %vm489 = vcmask 523264
  %v491 = vsel %vm489, %v384, 0
  %v494 = vsel %vm489, %v390, 0
  %v497 = vsel %vm489, %v396, 0
  %v500 = vsel %vm489, %v402, 0
  %v503 = vsel %vm489, %v408, 0
  %v506 = vsel %vm489, %v414, 0
  %508 = vmatprep.subr.mxu0 %v463
  %509 = vmatpush1.msra.mxu0 %v462
  %510 = vmatprep.subr.mxu0 %v460
  %511 = vmatpush1.msra.mxu0 %v459
  %512 = vmatprep.subr.mxu0 %v457
  %513 = vmatpush1.msra.mxu0 %v456
  %514 = vmatprep.subr.mxu0 %v454
  %515 = vmatpush1.msra.mxu0 %v453
  %516 = vmatprep.subr.mxu0 %v451
  %517 = vmatpush1.msra.mxu0 %v450
  %518 = vmatprep.subr.mxu0 %v448
  %519 = vmatpush1.msra.mxu0 %v447
  %520 = vmatprep.subr.mxu0 %v445
  %521 = vmatpush1.msra.mxu0 %v444
  %522 = vmatprep.subr.mxu0 %v442
  %523 = vmatpush1.msra.mxu0 %v441
  %524 = vmatprep.subr.mxu0 %v439
  %525 = vmatpush1.msra.mxu0 %v438
  %526 = vmatprep.subr.mxu0 %v436
  %527 = vmatpush1.msra.mxu0 %v435
  %528 = vmatprep.subr.mxu0 %v433
  %529 = vmatpush1.msra.mxu0 %v432
  %530 = vmatprep.subr.mxu0 %v430
  %531 = vmatpush1.msra.mxu0 %v429
  %532 = vmatprep.subr.mxu0 %v427
  %533 = vmatpush1.msra.mxu0 %v426
  %534 = vmatprep.subr.mxu0 %v424
  %535 = vmatpush1.msra.mxu0 %v423
  %536 = vmatprep.subr.mxu0 %v421
  %537 = vmatpush1.msra.mxu0 %v420
  %538 = vmatprep.subr.mxu0 %v418
  %539 = vmatpush1.msra.mxu0 %v417
  %540 = vmatprep.subr.mxu0 0.0
  %541 = vmatpush2.msra.mxu0 0.0
  %542 = vmatprep.subr.mxu0 0.0
  %543 = vmatpush2.msra.mxu0 0.0
  %544 = vmatprep.subr.mxu0 0.0
  %545 = vmatpush2.msra.mxu0 0.0
  %546 = vmatprep.subr.mxu0 0.0
  %547 = vmatpush2.msra.mxu0 0.0
  %548 = vmatprep.subr.mxu0 0.0
  %549 = vmatpush2.msra.mxu0 0.0
  %550 = vmatprep.subr.mxu0 0.0
  %551 = vmatpush2.msra.mxu0 0.0
  %552 = vmatprep.subr.mxu0 0.0
  %553 = vmatpush2.msra.mxu0 0.0
  %554 = vmatprep.subr.mxu0 0.0
  %555 = vmatpush2.msra.mxu0 0.0
  %556 = vmatprep.subr.mxu0 %v487
  %557 = vmatpush2.msra.mxu0 %v486
  %558 = vmatprep.subr.mxu0 %v484
  %559 = vmatpush2.msra.mxu0 %v483
  %560 = vmatprep.subr.mxu0 %v481
  %561 = vmatpush2.msra.mxu0 %v480
  %562 = vmatprep.subr.mxu0 %v478
  %563 = vmatpush2.msra.mxu0 %v477
  %564 = vmatprep.subr.mxu0 %v475
  %565 = vmatpush2.msra.mxu0 %v474
  %566 = vmatprep.subr.mxu0 %v472
  %567 = vmatpush2.msra.mxu0 %v471
  %568 = vmatprep.subr.mxu0 %v469
  %569 = vmatpush2.msra.mxu0 %v468
  %570 = vmatprep.subr.mxu0 %v466
  %571 = vmatpush2.msra.mxu0 %v465
  %572 = vmatprep.mubr.f32.mxu0 %v491
  %573 = vmatmul.mubr.f32.gmra.mxu0 %v382
  %v574 = vpop.f32.mrf.mxu0
  %v575 = vadd.f32 0.0, %v574
  %v576 = vpop.f32.mrf.mxu0
  %v577 = vadd.f32 0.0, %v576
  %578 = vmatprep.mubr.f32.mxu0 %v494
  %579 = vmatmul.mubr.f32.gmra.mxu0 %v388
  %v580 = vpop.f32.mrf.mxu0
  %v581 = vadd.f32 0.0, %v580
  %v582 = vpop.f32.mrf.mxu0
  %v583 = vadd.f32 0.0, %v582
  %584 = vmatprep.mubr.f32.mxu0 %v497
  %585 = vmatmul.mubr.f32.gmra.mxu0 %v394
  %v586 = vpop.f32.mrf.mxu0
  %v587 = vadd.f32 0.0, %v586
  %v588 = vpop.f32.mrf.mxu0
  %v589 = vadd.f32 0.0, %v588
  %590 = vmatprep.mubr.f32.mxu0 %v500
  %591 = vmatmul.mubr.f32.gmra.mxu0 %v400
  %v592 = vpop.f32.mrf.mxu0
  %v593 = vadd.f32 0.0, %v592
  %v594 = vpop.f32.mrf.mxu0
  %v595 = vadd.f32 0.0, %v594
  %596 = vmatprep.mubr.f32.mxu0 %v503
  %597 = vmatmul.mubr.f32.gmra.mxu0 %v406
  %v598 = vpop.f32.mrf.mxu0
  %v599 = vadd.f32 0.0, %v598
  %v600 = vpop.f32.mrf.mxu0
  %v601 = vadd.f32 0.0, %v600
  %602 = vmatprep.mubr.f32.mxu0 %v506
  %603 = vmatmul.mubr.f32.gmra.mxu0 %v412
  %v604 = vpop.f32.mrf.mxu0
  %v605 = vadd.f32 0.0, %v604
  %v606 = vpop.f32.mrf.mxu0
  %v607 = vadd.f32 0.0, %v606
  %608 = vdwg.mxu0
  %609 = vmatprep.subr.mxu0 0.0
  %610 = vmatpush1.msra.mxu0 %v464
  %611 = vmatprep.subr.mxu0 0.0
  %612 = vmatpush1.msra.mxu0 %v461
  %613 = vmatprep.subr.mxu0 0.0
  %614 = vmatpush1.msra.mxu0 %v458
  %615 = vmatprep.subr.mxu0 0.0
  %616 = vmatpush1.msra.mxu0 %v455
  %617 = vmatprep.subr.mxu0 0.0
  %618 = vmatpush1.msra.mxu0 %v452
  %619 = vmatprep.subr.mxu0 0.0
  %620 = vmatpush1.msra.mxu0 %v449
  %621 = vmatprep.subr.mxu0 0.0
  %622 = vmatpush1.msra.mxu0 %v446
  %623 = vmatprep.subr.mxu0 0.0
  %624 = vmatpush1.msra.mxu0 %v443
  %625 = vmatprep.subr.mxu0 0.0
  %626 = vmatpush1.msra.mxu0 %v440
  %627 = vmatprep.subr.mxu0 0.0
  %628 = vmatpush1.msra.mxu0 %v437
  %629 = vmatprep.subr.mxu0 0.0
  %630 = vmatpush1.msra.mxu0 %v434
  %631 = vmatprep.subr.mxu0 0.0
  %632 = vmatpush1.msra.mxu0 %v431
  %633 = vmatprep.subr.mxu0 0.0
  %634 = vmatpush1.msra.mxu0 %v428
  %635 = vmatprep.subr.mxu0 0.0
  %636 = vmatpush1.msra.mxu0 %v425
  %637 = vmatprep.subr.mxu0 0.0
  %638 = vmatpush1.msra.mxu0 %v422
  %639 = vmatprep.subr.mxu0 0.0
  %640 = vmatpush1.msra.mxu0 %v419
  %641 = vmatprep.subr.mxu0 0.0
  %642 = vmatpush2.msra.mxu0 0.0
  %643 = vmatprep.subr.mxu0 0.0
  %644 = vmatpush2.msra.mxu0 0.0
  %645 = vmatprep.subr.mxu0 0.0
  %646 = vmatpush2.msra.mxu0 0.0
  %647 = vmatprep.subr.mxu0 0.0
  %648 = vmatpush2.msra.mxu0 0.0
  %649 = vmatprep.subr.mxu0 0.0
  %650 = vmatpush2.msra.mxu0 0.0
  %651 = vmatprep.subr.mxu0 0.0
  %652 = vmatpush2.msra.mxu0 0.0
  %653 = vmatprep.subr.mxu0 0.0
  %654 = vmatpush2.msra.mxu0 0.0
  %655 = vmatprep.subr.mxu0 0.0
  %656 = vmatpush2.msra.mxu0 0.0
  %657 = vmatprep.subr.mxu0 0.0
  %658 = vmatpush2.msra.mxu0 %v488
  %659 = vmatprep.subr.mxu0 0.0
  %660 = vmatpush2.msra.mxu0 %v485
  %661 = vmatprep.subr.mxu0 0.0
  %662 = vmatpush2.msra.mxu0 %v482
  %663 = vmatprep.subr.mxu0 0.0
  %664 = vmatpush2.msra.mxu0 %v479
  %665 = vmatprep.subr.mxu0 0.0
  %666 = vmatpush2.msra.mxu0 %v476
  %667 = vmatprep.subr.mxu0 0.0
  %668 = vmatpush2.msra.mxu0 %v473
  %669 = vmatprep.subr.mxu0 0.0
  %670 = vmatpush2.msra.mxu0 %v470
  %671 = vmatprep.subr.mxu0 0.0
  %672 = vmatpush2.msra.mxu0 %v467
  %673 = vmatprep.mubr.f32.mxu0 %v491
  %674 = vmatmul.mubr.f32.gmra.mxu0 %v382
  %v675 = vpop.f32.mrf.mxu0
  %v676 = vadd.f32 0.0, %v675
  %v677 = vpop.f32.mrf.mxu0
  %678 = vmatprep.mubr.f32.mxu0 %v494
  %679 = vmatmul.mubr.f32.gmra.mxu0 %v388
  %v680 = vpop.f32.mrf.mxu0
  %v681 = vadd.f32 0.0, %v680
  %v682 = vpop.f32.mrf.mxu0
  %683 = vmatprep.mubr.f32.mxu0 %v497
  %684 = vmatmul.mubr.f32.gmra.mxu0 %v394
  %v685 = vpop.f32.mrf.mxu0
  %v686 = vadd.f32 0.0, %v685
  %v687 = vpop.f32.mrf.mxu0
  %688 = vmatprep.mubr.f32.mxu0 %v500
  %689 = vmatmul.mubr.f32.gmra.mxu0 %v400
  %v690 = vpop.f32.mrf.mxu0
  %v691 = vadd.f32 0.0, %v690
  %v692 = vpop.f32.mrf.mxu0
  %693 = vmatprep.mubr.f32.mxu0 %v503
  %694 = vmatmul.mubr.f32.gmra.mxu0 %v406
  %v695 = vpop.f32.mrf.mxu0
  %v696 = vadd.f32 0.0, %v695
  %v697 = vpop.f32.mrf.mxu0
  %698 = vmatprep.mubr.f32.mxu0 %v506
  %699 = vmatmul.mubr.f32.gmra.mxu0 %v412
  %v700 = vpop.f32.mrf.mxu0
  %v701 = vadd.f32 0.0, %v700
  %v702 = vpop.f32.mrf.mxu0
  %703 = vdwg.mxu0
  %v705 = vsel %vm489, %v186, 0
  %v708 = vsel %vm489, %v192, 0
  %v711 = vsel %vm489, %v198, 0
  %v714 = vsel %vm489, %v204, 0
  %v717 = vsel %vm489, %v210, 0
  %v720 = vsel %vm489, %v216, 0
  %722 = vmatprep.subr.mxu0 %v264
  %723 = vmatpush1.msra.mxu0 %v263
  %724 = vmatprep.subr.mxu0 %v261
  %725 = vmatpush1.msra.mxu0 %v260
  %726 = vmatprep.subr.mxu0 %v258
  %727 = vmatpush1.msra.mxu0 %v257
  %728 = vmatprep.subr.mxu0 %v255
  %729 = vmatpush1.msra.mxu0 %v254
  %730 = vmatprep.subr.mxu0 %v252
  %731 = vmatpush1.msra.mxu0 %v251
  %732 = vmatprep.subr.mxu0 %v249
  %733 = vmatpush1.msra.mxu0 %v248
  %734 = vmatprep.subr.mxu0 %v246
  %735 = vmatpush1.msra.mxu0 %v245
  %736 = vmatprep.subr.mxu0 %v243
  %737 = vmatpush1.msra.mxu0 %v242
  %738 = vmatprep.subr.mxu0 %v240
  %739 = vmatpush1.msra.mxu0 %v239
  %740 = vmatprep.subr.mxu0 %v237
  %741 = vmatpush1.msra.mxu0 %v236
  %742 = vmatprep.subr.mxu0 %v234
  %743 = vmatpush1.msra.mxu0 %v233
  %744 = vmatprep.subr.mxu0 %v231
  %745 = vmatpush1.msra.mxu0 %v230
  %746 = vmatprep.subr.mxu0 %v228
  %747 = vmatpush1.msra.mxu0 %v227
  %748 = vmatprep.subr.mxu0 %v225
  %749 = vmatpush1.msra.mxu0 %v224
  %750 = vmatprep.subr.mxu0 %v222
  %751 = vmatpush1.msra.mxu0 %v221
  %752 = vmatprep.subr.mxu0 %v219
  %753 = vmatpush1.msra.mxu0 %v218
  %754 = vmatprep.subr.mxu0 0.0
  %755 = vmatpush2.msra.mxu0 0.0
  %756 = vmatprep.subr.mxu0 0.0
  %757 = vmatpush2.msra.mxu0 0.0
  %758 = vmatprep.subr.mxu0 0.0
  %759 = vmatpush2.msra.mxu0 0.0
  %760 = vmatprep.subr.mxu0 0.0
  %761 = vmatpush2.msra.mxu0 0.0
  %762 = vmatprep.subr.mxu0 0.0
  %763 = vmatpush2.msra.mxu0 0.0
  %764 = vmatprep.subr.mxu0 0.0
  %765 = vmatpush2.msra.mxu0 0.0
  %766 = vmatprep.subr.mxu0 0.0
  %767 = vmatpush2.msra.mxu0 0.0
  %768 = vmatprep.subr.mxu0 0.0
  %769 = vmatpush2.msra.mxu0 0.0
  %770 = vmatprep.subr.mxu0 %v288
  %771 = vmatpush2.msra.mxu0 %v287
  %772 = vmatprep.subr.mxu0 %v285
  %773 = vmatpush2.msra.mxu0 %v284
  %774 = vmatprep.subr.mxu0 %v282
  %775 = vmatpush2.msra.mxu0 %v281
  %776 = vmatprep.subr.mxu0 %v279
  %777 = vmatpush2.msra.mxu0 %v278
  %778 = vmatprep.subr.mxu0 %v276
  %779 = vmatpush2.msra.mxu0 %v275
  %780 = vmatprep.subr.mxu0 %v273
  %781 = vmatpush2.msra.mxu0 %v272
  %782 = vmatprep.subr.mxu0 %v270
  %783 = vmatpush2.msra.mxu0 %v269
  %784 = vmatprep.subr.mxu0 %v267
  %785 = vmatpush2.msra.mxu0 %v266
  %786 = vmatprep.mubr.f32.mxu0 %v705
  %787 = vmatmul.mubr.f32.gmra.mxu0 %v184
  %v788 = vpop.f32.mrf.mxu0
  %v789 = vadd.f32 %v575, %v788
  %v790 = vpop.f32.mrf.mxu0
  %v791 = vadd.f32 %v577, %v790
  %792 = vmatprep.mubr.f32.mxu0 %v708
  %793 = vmatmul.mubr.f32.gmra.mxu0 %v190
  %v794 = vpop.f32.mrf.mxu0
  %v795 = vadd.f32 %v581, %v794
  %v796 = vpop.f32.mrf.mxu0
  %v797 = vadd.f32 %v583, %v796
  %798 = vmatprep.mubr.f32.mxu0 %v711
  %799 = vmatmul.mubr.f32.gmra.mxu0 %v196
  %v800 = vpop.f32.mrf.mxu0
  %v801 = vadd.f32 %v587, %v800
  %v802 = vpop.f32.mrf.mxu0
  %v803 = vadd.f32 %v589, %v802
  %804 = vmatprep.mubr.f32.mxu0 %v714
  %805 = vmatmul.mubr.f32.gmra.mxu0 %v202
  %v806 = vpop.f32.mrf.mxu0
  %v807 = vadd.f32 %v593, %v806
  %v808 = vpop.f32.mrf.mxu0
  %v809 = vadd.f32 %v595, %v808
  %810 = vmatprep.mubr.f32.mxu0 %v717
  %811 = vmatmul.mubr.f32.gmra.mxu0 %v208
  %v812 = vpop.f32.mrf.mxu0
  %v813 = vadd.f32 %v599, %v812
  %v814 = vpop.f32.mrf.mxu0
  %v815 = vadd.f32 %v601, %v814
  %816 = vmatprep.mubr.f32.mxu0 %v720
  %817 = vmatmul.mubr.f32.gmra.mxu0 %v214
  %v818 = vpop.f32.mrf.mxu0
  %v819 = vadd.f32 %v605, %v818
  %v820 = vpop.f32.mrf.mxu0
  %v821 = vadd.f32 %v607, %v820
  %822 = vdwg.mxu0
  %823 = vmatprep.subr.mxu0 0.0
  %824 = vmatpush1.msra.mxu0 %v265
  %825 = vmatprep.subr.mxu0 0.0
  %826 = vmatpush1.msra.mxu0 %v262
  %827 = vmatprep.subr.mxu0 0.0
  %828 = vmatpush1.msra.mxu0 %v259
  %829 = vmatprep.subr.mxu0 0.0
  %830 = vmatpush1.msra.mxu0 %v256
  %831 = vmatprep.subr.mxu0 0.0
  %832 = vmatpush1.msra.mxu0 %v253
  %833 = vmatprep.subr.mxu0 0.0
  %834 = vmatpush1.msra.mxu0 %v250
  %835 = vmatprep.subr.mxu0 0.0
  %836 = vmatpush1.msra.mxu0 %v247
  %837 = vmatprep.subr.mxu0 0.0
  %838 = vmatpush1.msra.mxu0 %v244
  %839 = vmatprep.subr.mxu0 0.0
  %840 = vmatpush1.msra.mxu0 %v241
  %841 = vmatprep.subr.mxu0 0.0
  %842 = vmatpush1.msra.mxu0 %v238
  %843 = vmatprep.subr.mxu0 0.0
  %844 = vmatpush1.msra.mxu0 %v235
  %845 = vmatprep.subr.mxu0 0.0
  %846 = vmatpush1.msra.mxu0 %v232
  %847 = vmatprep.subr.mxu0 0.0
  %848 = vmatpush1.msra.mxu0 %v229
  %849 = vmatprep.subr.mxu0 0.0
  %850 = vmatpush1.msra.mxu0 %v226
  %851 = vmatprep.subr.mxu0 0.0
  %852 = vmatpush1.msra.mxu0 %v223
  %853 = vmatprep.subr.mxu0 0.0
  %854 = vmatpush1.msra.mxu0 %v220
  %855 = vmatprep.subr.mxu0 0.0
  %856 = vmatpush2.msra.mxu0 0.0
  %857 = vmatprep.subr.mxu0 0.0
  %858 = vmatpush2.msra.mxu0 0.0
  %859 = vmatprep.subr.mxu0 0.0
  %860 = vmatpush2.msra.mxu0 0.0
  %861 = vmatprep.subr.mxu0 0.0
  %862 = vmatpush2.msra.mxu0 0.0
  %863 = vmatprep.subr.mxu0 0.0
  %864 = vmatpush2.msra.mxu0 0.0
  %865 = vmatprep.subr.mxu0 0.0
  %866 = vmatpush2.msra.mxu0 0.0
  %867 = vmatprep.subr.mxu0 0.0
  %868 = vmatpush2.msra.mxu0 0.0
  %869 = vmatprep.subr.mxu0 0.0
  %870 = vmatpush2.msra.mxu0 0.0
  %871 = vmatprep.subr.mxu0 0.0
  %872 = vmatpush2.msra.mxu0 %v289
  %873 = vmatprep.subr.mxu0 0.0
  %874 = vmatpush2.msra.mxu0 %v286
  %875 = vmatprep.subr.mxu0 0.0
  %876 = vmatpush2.msra.mxu0 %v283
  %877 = vmatprep.subr.mxu0 0.0
  %878 = vmatpush2.msra.mxu0 %v280
  %879 = vmatprep.subr.mxu0 0.0
  %880 = vmatpush2.msra.mxu0 %v277
  %881 = vmatprep.subr.mxu0 0.0
  %882 = vmatpush2.msra.mxu0 %v274
  %883 = vmatprep.subr.mxu0 0.0
  %884 = vmatpush2.msra.mxu0 %v271
  %885 = vmatprep.subr.mxu0 0.0
  %886 = vmatpush2.msra.mxu0 %v268
  %887 = vmatprep.mubr.f32.mxu0 %v705
  %888 = vmatmul.mubr.f32.gmra.mxu0 %v184
  %v889 = vpop.f32.mrf.mxu0
  %v890 = vadd.f32 %v676, %v889
  %v891 = vpop.f32.mrf.mxu0
  %892 = vmatprep.mubr.f32.mxu0 %v708
  %893 = vmatmul.mubr.f32.gmra.mxu0 %v190
  %v894 = vpop.f32.mrf.mxu0
  %v895 = vadd.f32 %v681, %v894
  %v896 = vpop.f32.mrf.mxu0
  %897 = vmatprep.mubr.f32.mxu0 %v711
  %898 = vmatmul.mubr.f32.gmra.mxu0 %v196
  %v899 = vpop.f32.mrf.mxu0
  %v900 = vadd.f32 %v686, %v899
  %v901 = vpop.f32.mrf.mxu0
  %902 = vmatprep.mubr.f32.mxu0 %v714
  %903 = vmatmul.mubr.f32.gmra.mxu0 %v202
  %v904 = vpop.f32.mrf.mxu0
  %v905 = vadd.f32 %v691, %v904
  %v906 = vpop.f32.mrf.mxu0
  %907 = vmatprep.mubr.f32.mxu0 %v717
  %908 = vmatmul.mubr.f32.gmra.mxu0 %v208
  %v909 = vpop.f32.mrf.mxu0
  %v910 = vadd.f32 %v696, %v909
  %v911 = vpop.f32.mrf.mxu0
  %912 = vmatprep.mubr.f32.mxu0 %v720
  %913 = vmatmul.mubr.f32.gmra.mxu0 %v214
  %v914 = vpop.f32.mrf.mxu0
  %v915 = vadd.f32 %v701, %v914
  %v916 = vpop.f32.mrf.mxu0
  %917 = vdwg.mxu0
  %s918 = scalar_lea.vmem %s1, 96
  %v919 = vld [vmem:[%s918] sm:$0xff]
  %v920 = vld [vmem:[%s918 + $0x8] sm:$0xff]
  %v921 = vld [vmem:[%s918 + $0x10] sm:$0xff]
  %v922 = vld [vmem:[%s918 + $0x18] sm:$0xff]
  %v923 = vld [vmem:[%s918 + $0x20] sm:$0xff]
  %v924 = vld [vmem:[%s918 + $0x28] sm:$0xf]
  %v926 = vsel %vm98, %v919, 0
  %v929 = vsel %vm98, %v920, 0
  %v932 = vsel %vm98, %v921, 0
  %v935 = vsel %vm98, %v922, 0
  %v938 = vsel %vm98, %v923, 0
  %v941 = vsel %vm98, %v924, 0
  %943 = vmatprep.subr.mxu0 0.0
  %944 = vmatpush1.msra.mxu0 0.0
  %945 = vmatprep.subr.mxu0 0.0
  %946 = vmatpush1.msra.mxu0 0.0
  %947 = vmatprep.subr.mxu0 0.0
  %948 = vmatpush1.msra.mxu0 0.0
  %949 = vmatprep.subr.mxu0 0.0
  %950 = vmatpush1.msra.mxu0 0.0
  %951 = vmatprep.subr.mxu0 %v91
  %952 = vmatpush1.msra.mxu0 %v90
  %953 = vmatprep.subr.mxu0 %v89
  %954 = vmatpush1.msra.mxu0 %v88
  %955 = vmatprep.subr.mxu0 %v87
  %956 = vmatpush1.msra.mxu0 %v86
  %957 = vmatprep.subr.mxu0 %v85
  %958 = vmatpush1.msra.mxu0 %v84
  %959 = vmatprep.subr.mxu0 %v83
  %960 = vmatpush1.msra.mxu0 %v82
  %961 = vmatprep.subr.mxu0 %v81
  %962 = vmatpush1.msra.mxu0 %v80
  %963 = vmatprep.subr.mxu0 %v79
  %964 = vmatpush1.msra.mxu0 %v78
  %965 = vmatprep.subr.mxu0 %v77
  %966 = vmatpush1.msra.mxu0 %v76
  %967 = vmatprep.subr.mxu0 %v75
  %968 = vmatpush1.msra.mxu0 %v74
  %969 = vmatprep.subr.mxu0 %v73
  %970 = vmatpush1.msra.mxu0 %v72
  %971 = vmatprep.subr.mxu0 %v71
  %972 = vmatpush1.msra.mxu0 %v70
  %973 = vmatprep.subr.mxu0 %v69
  %974 = vmatpush1.msra.mxu0 %v68
  %975 = vmatprep.subr.mxu0 0.0
  %976 = vmatpush2.msra.mxu0 0.0
  %977 = vmatprep.subr.mxu0 0.0
  %978 = vmatpush2.msra.mxu0 0.0
  %979 = vmatprep.subr.mxu0 0.0
  %980 = vmatpush2.msra.mxu0 0.0
  %981 = vmatprep.subr.mxu0 0.0
  %982 = vmatpush2.msra.mxu0 0.0
  %983 = vmatprep.subr.mxu0 0.0
  %984 = vmatpush2.msra.mxu0 0.0
  %985 = vmatprep.subr.mxu0 0.0
  %986 = vmatpush2.msra.mxu0 0.0
  %987 = vmatprep.subr.mxu0 0.0
  %988 = vmatpush2.msra.mxu0 0.0
  %989 = vmatprep.subr.mxu0 0.0
  %990 = vmatpush2.msra.mxu0 0.0
  %991 = vmatprep.subr.mxu0 0.0
  %992 = vmatpush2.msra.mxu0 0.0
  %993 = vmatprep.subr.mxu0 0.0
  %994 = vmatpush2.msra.mxu0 0.0
  %995 = vmatprep.subr.mxu0 0.0
  %996 = vmatpush2.msra.mxu0 0.0
  %997 = vmatprep.subr.mxu0 0.0
  %998 = vmatpush2.msra.mxu0 0.0
  %999 = vmatprep.subr.mxu0 0.0
  %1000 = vmatpush2.msra.mxu0 0.0
  %1001 = vmatprep.subr.mxu0 0.0
  %1002 = vmatpush2.msra.mxu0 0.0
  %1003 = vmatprep.subr.mxu0 0.0
  %1004 = vmatpush2.msra.mxu0 0.0
  %1005 = vmatprep.subr.mxu0 0.0
  %1006 = vmatpush2.msra.mxu0 0.0
  %1007 = vmatprep.mubr.f32.mxu0 0.0
  %1008 = vmatmul.mubr.f32.gmra.mxu0 %v926
  %v1009 = vpop.f32.mrf.mxu0
  %v1010 = vadd.f32 0.0, %v1009
  %v1011 = vpop.f32.mrf.mxu0
  %v1012 = vadd.f32 0.0, %v1011
  %1013 = vmatprep.mubr.f32.mxu0 0.0
  %1014 = vmatmul.mubr.f32.gmra.mxu0 %v929
  %v1015 = vpop.f32.mrf.mxu0
  %v1016 = vadd.f32 0.0, %v1015
  %v1017 = vpop.f32.mrf.mxu0
  %v1018 = vadd.f32 0.0, %v1017
  %1019 = vmatprep.mubr.f32.mxu0 0.0
  %1020 = vmatmul.mubr.f32.gmra.mxu0 %v932
  %v1021 = vpop.f32.mrf.mxu0
  %v1022 = vadd.f32 0.0, %v1021
  %v1023 = vpop.f32.mrf.mxu0
  %v1024 = vadd.f32 0.0, %v1023
  %1025 = vmatprep.mubr.f32.mxu0 0.0
  %1026 = vmatmul.mubr.f32.gmra.mxu0 %v935
  %v1027 = vpop.f32.mrf.mxu0
  %v1028 = vadd.f32 0.0, %v1027
  %v1029 = vpop.f32.mrf.mxu0
  %v1030 = vadd.f32 0.0, %v1029
  %1031 = vmatprep.mubr.f32.mxu0 0.0
  %1032 = vmatmul.mubr.f32.gmra.mxu0 %v938
  %v1033 = vpop.f32.mrf.mxu0
  %v1034 = vadd.f32 0.0, %v1033
  %v1035 = vpop.f32.mrf.mxu0
  %v1036 = vadd.f32 0.0, %v1035
  %1037 = vmatprep.mubr.f32.mxu0 0.0
  %1038 = vmatmul.mubr.f32.gmra.mxu0 %v941
  %v1039 = vpop.f32.mrf.mxu0
  %v1040 = vadd.f32 0.0, %v1039
  %v1041 = vpop.f32.mrf.mxu0
  %v1042 = vadd.f32 0.0, %v1041
  %1043 = vdwg.mxu0
  %s1044 = scalar_lea.vmem %s2, 1152
  %v1045 = vld [vmem:[%s1044] sm:$0xff]
  %v1046 = vld [vmem:[%s1044 + $0x8] sm:$0xff]
  %v1047 = vld [vmem:[%s1044 + $0x10] sm:$0xff]
  %v1048 = vld [vmem:[%s1044 + $0x18] sm:$0xff]
  %v1049 = vld [vmem:[%s1044 + $0x20] sm:$0xff]
  %v1050 = vld [vmem:[%s1044 + $0x28] sm:$0xff]
  %v1051 = vld [vmem:[%s1044 + $0x30] sm:$0xff]
  %v1052 = vld [vmem:[%s1044 + $0x38] sm:$0xff]
  %v1053 = vld [vmem:[%s1044 + $0x40] sm:$0xff]
  %v1054 = vld [vmem:[%s1044 + $0x48] sm:$0xff]
  %v1055 = vld [vmem:[%s1044 + $0x50] sm:$0xff]
  %v1056 = vld [vmem:[%s1044 + $0x58] sm:$0xff]
  %v1057 = vld [vmem:[%s1044 + $0x60] sm:$0xff]
  %v1058 = vld [vmem:[%s1044 + $0x68] sm:$0xff]
  %v1059 = vld [vmem:[%s1044 + $0x70] sm:$0xff]
  %v1060 = vld [vmem:[%s1044 + $0x78] sm:$0xff]
  %v1061 = vld [vmem:[%s1044 + $0x80] sm:$0xff]
  %v1062 = vld [vmem:[%s1044 + $0x88] sm:$0xff]
  %v1063 = vld [vmem:[%s1044 + $0x90] sm:$0xff]
  %v1064 = vld [vmem:[%s1044 + $0x98] sm:$0xff]
  %v1065 = vld [vmem:[%s1044 + $0xa0] sm:$0xff]
  %v1066 = vld [vmem:[%s1044 + $0xa8] sm:$0xff]
  %v1067 = vld [vmem:[%s1044 + $0xb0] sm:$0xff]
  %v1068 = vld [vmem:[%s1044 + $0xb8] sm:$0xff]
  %v1069 = vld [vmem:[%s1044 + $0xc0] sm:$0xff]
  %v1070 = vld [vmem:[%s1044 + $0xc8] sm:$0xff]
  %v1071 = vld [vmem:[%s1044 + $0xd0] sm:$0xff]
  %v1072 = vld [vmem:[%s1044 + $0xd8] sm:$0xff]
  %v1073 = vld [vmem:[%s1044 + $0xe0] sm:$0xff]
  %v1074 = vld [vmem:[%s1044 + $0xe8] sm:$0xff]
  %v1075 = vld [vmem:[%s1044 + $0xf0] sm:$0xff]
  %v1076 = vld [vmem:[%s1044 + $0xf8] sm:$0xff]
  %v1077 = vld [vmem:[%s1044 + $0x100] sm:$0xff]
  %v1078 = vld [vmem:[%s1044 + $0x108] sm:$0xff]
  %v1079 = vld [vmem:[%s1044 + $0x110] sm:$0xff]
  %v1080 = vld [vmem:[%s1044 + $0x118] sm:$0xff]
  %v1081 = vld [vmem:[%s1044 + $0x120] sm:$0xff]
  %v1082 = vld [vmem:[%s1044 + $0x128] sm:$0xff]
  %v1083 = vld [vmem:[%s1044 + $0x130] sm:$0xff]
  %v1084 = vld [vmem:[%s1044 + $0x138] sm:$0xff]
  %v1085 = vld [vmem:[%s1044 + $0x140] sm:$0xff]
  %v1086 = vld [vmem:[%s1044 + $0x148] sm:$0xff]
  %v1087 = vld [vmem:[%s1044 + $0x150] sm:$0xff]
  %v1088 = vld [vmem:[%s1044 + $0x158] sm:$0xff]
  %v1089 = vld [vmem:[%s1044 + $0x160] sm:$0xff]
  %v1090 = vld [vmem:[%s1044 + $0x168] sm:$0xff]
  %v1091 = vld [vmem:[%s1044 + $0x170] sm:$0xff]
  %v1092 = vld [vmem:[%s1044 + $0x178] sm:$0xff]
  %v1093 = vld [vmem:[%s1044 + $0x180] sm:$0xff]
  %v1094 = vld [vmem:[%s1044 + $0x188] sm:$0xff]
  %v1095 = vld [vmem:[%s1044 + $0x190] sm:$0xff]
  %v1096 = vld [vmem:[%s1044 + $0x198] sm:$0xff]
  %v1097 = vld [vmem:[%s1044 + $0x1a0] sm:$0xff]
  %v1098 = vld [vmem:[%s1044 + $0x1a8] sm:$0xff]
  %v1099 = vld [vmem:[%s1044 + $0x1b0] sm:$0xff]
  %v1100 = vld [vmem:[%s1044 + $0x1b8] sm:$0xff]
  %v1101 = vld [vmem:[%s1044 + $0x1c0] sm:$0xff]
  %v1102 = vld [vmem:[%s1044 + $0x1c8] sm:$0xff]
  %v1103 = vld [vmem:[%s1044 + $0x1d0] sm:$0xff]
  %v1104 = vld [vmem:[%s1044 + $0x1d8] sm:$0xff]
  %v1105 = vld [vmem:[%s1044 + $0x1e0] sm:$0xff]
  %v1106 = vld [vmem:[%s1044 + $0x1e8] sm:$0xff]
  %v1107 = vld [vmem:[%s1044 + $0x1f0] sm:$0xff]
  %v1108 = vld [vmem:[%s1044 + $0x1f8] sm:$0xff]
  %v1109 = vld [vmem:[%s1044 + $0x200] sm:$0xff]
  %v1110 = vld [vmem:[%s1044 + $0x208] sm:$0xff]
  %v1111 = vld [vmem:[%s1044 + $0x210] sm:$0xff]
  %v1112 = vld [vmem:[%s1044 + $0x218] sm:$0xff]
  %v1113 = vld [vmem:[%s1044 + $0x220] sm:$0xff]
  %v1114 = vld [vmem:[%s1044 + $0x228] sm:$0xff]
  %v1115 = vld [vmem:[%s1044 + $0x230] sm:$0xff]
  %v1116 = vld [vmem:[%s1044 + $0x238] sm:$0xff]
  %v1118 = vsel %vm489, %v1012, 0
  %v1121 = vsel %vm489, %v1018, 0
  %v1124 = vsel %vm489, %v1024, 0
  %v1127 = vsel %vm489, %v1030, 0
  %v1130 = vsel %vm489, %v1036, 0
  %v1133 = vsel %vm489, %v1042, 0
  %1135 = vmatprep.subr.mxu0 %v1091
  %1136 = vmatpush1.msra.mxu0 %v1090
  %1137 = vmatprep.subr.mxu0 %v1088
  %1138 = vmatpush1.msra.mxu0 %v1087
  %1139 = vmatprep.subr.mxu0 %v1085
  %1140 = vmatpush1.msra.mxu0 %v1084
  %1141 = vmatprep.subr.mxu0 %v1082
  %1142 = vmatpush1.msra.mxu0 %v1081
  %1143 = vmatprep.subr.mxu0 %v1079
  %1144 = vmatpush1.msra.mxu0 %v1078
  %1145 = vmatprep.subr.mxu0 %v1076
  %1146 = vmatpush1.msra.mxu0 %v1075
  %1147 = vmatprep.subr.mxu0 %v1073
  %1148 = vmatpush1.msra.mxu0 %v1072
  %1149 = vmatprep.subr.mxu0 %v1070
  %1150 = vmatpush1.msra.mxu0 %v1069
  %1151 = vmatprep.subr.mxu0 %v1067
  %1152 = vmatpush1.msra.mxu0 %v1066
  %1153 = vmatprep.subr.mxu0 %v1064
  %1154 = vmatpush1.msra.mxu0 %v1063
  %1155 = vmatprep.subr.mxu0 %v1061
  %1156 = vmatpush1.msra.mxu0 %v1060
  %1157 = vmatprep.subr.mxu0 %v1058
  %1158 = vmatpush1.msra.mxu0 %v1057
  %1159 = vmatprep.subr.mxu0 %v1055
  %1160 = vmatpush1.msra.mxu0 %v1054
  %1161 = vmatprep.subr.mxu0 %v1052
  %1162 = vmatpush1.msra.mxu0 %v1051
  %1163 = vmatprep.subr.mxu0 %v1049
  %1164 = vmatpush1.msra.mxu0 %v1048
  %1165 = vmatprep.subr.mxu0 %v1046
  %1166 = vmatpush1.msra.mxu0 %v1045
  %1167 = vmatprep.subr.mxu0 0.0
  %1168 = vmatpush2.msra.mxu0 0.0
  %1169 = vmatprep.subr.mxu0 0.0
  %1170 = vmatpush2.msra.mxu0 0.0
  %1171 = vmatprep.subr.mxu0 0.0
  %1172 = vmatpush2.msra.mxu0 0.0
  %1173 = vmatprep.subr.mxu0 0.0
  %1174 = vmatpush2.msra.mxu0 0.0
  %1175 = vmatprep.subr.mxu0 0.0
  %1176 = vmatpush2.msra.mxu0 0.0
  %1177 = vmatprep.subr.mxu0 0.0
  %1178 = vmatpush2.msra.mxu0 0.0
  %1179 = vmatprep.subr.mxu0 0.0
  %1180 = vmatpush2.msra.mxu0 0.0
  %1181 = vmatprep.subr.mxu0 0.0
  %1182 = vmatpush2.msra.mxu0 0.0
  %1183 = vmatprep.subr.mxu0 %v1115
  %1184 = vmatpush2.msra.mxu0 %v1114
  %1185 = vmatprep.subr.mxu0 %v1112
  %1186 = vmatpush2.msra.mxu0 %v1111
  %1187 = vmatprep.subr.mxu0 %v1109
  %1188 = vmatpush2.msra.mxu0 %v1108
  %1189 = vmatprep.subr.mxu0 %v1106
  %1190 = vmatpush2.msra.mxu0 %v1105
  %1191 = vmatprep.subr.mxu0 %v1103
  %1192 = vmatpush2.msra.mxu0 %v1102
  %1193 = vmatprep.subr.mxu0 %v1100
  %1194 = vmatpush2.msra.mxu0 %v1099
  %1195 = vmatprep.subr.mxu0 %v1097
  %1196 = vmatpush2.msra.mxu0 %v1096
  %1197 = vmatprep.subr.mxu0 %v1094
  %1198 = vmatpush2.msra.mxu0 %v1093
  %1199 = vmatprep.mubr.f32.mxu0 %v1118
  %1200 = vmatmul.mubr.f32.gmra.mxu0 %v1010
  %v1201 = vpop.f32.mrf.mxu0
  %v1202 = vadd.f32 0.0, %v1201
  %v1203 = vpop.f32.mrf.mxu0
  %v1204 = vadd.f32 0.0, %v1203
  %1205 = vmatprep.mubr.f32.mxu0 %v1121
  %1206 = vmatmul.mubr.f32.gmra.mxu0 %v1016
  %v1207 = vpop.f32.mrf.mxu0
  %v1208 = vadd.f32 0.0, %v1207
  %v1209 = vpop.f32.mrf.mxu0
  %v1210 = vadd.f32 0.0, %v1209
  %1211 = vmatprep.mubr.f32.mxu0 %v1124
  %1212 = vmatmul.mubr.f32.gmra.mxu0 %v1022
  %v1213 = vpop.f32.mrf.mxu0
  %v1214 = vadd.f32 0.0, %v1213
  %v1215 = vpop.f32.mrf.mxu0
  %v1216 = vadd.f32 0.0, %v1215
  %1217 = vmatprep.mubr.f32.mxu0 %v1127
  %1218 = vmatmul.mubr.f32.gmra.mxu0 %v1028
  %v1219 = vpop.f32.mrf.mxu0
  %v1220 = vadd.f32 0.0, %v1219
  %v1221 = vpop.f32.mrf.mxu0
  %v1222 = vadd.f32 0.0, %v1221
  %1223 = vmatprep.mubr.f32.mxu0 %v1130
  %1224 = vmatmul.mubr.f32.gmra.mxu0 %v1034
  %v1225 = vpop.f32.mrf.mxu0
  %v1226 = vadd.f32 0.0, %v1225
  %v1227 = vpop.f32.mrf.mxu0
  %v1228 = vadd.f32 0.0, %v1227
  %1229 = vmatprep.mubr.f32.mxu0 %v1133
  %1230 = vmatmul.mubr.f32.gmra.mxu0 %v1040
  %v1231 = vpop.f32.mrf.mxu0
  %v1232 = vadd.f32 0.0, %v1231
  %v1233 = vpop.f32.mrf.mxu0
  %v1234 = vadd.f32 0.0, %v1233
  %1235 = vdwg.mxu0
  %1236 = vmatprep.subr.mxu0 0.0
  %1237 = vmatpush1.msra.mxu0 %v1092
  %1238 = vmatprep.subr.mxu0 0.0
  %1239 = vmatpush1.msra.mxu0 %v1089
  %1240 = vmatprep.subr.mxu0 0.0
  %1241 = vmatpush1.msra.mxu0 %v1086
  %1242 = vmatprep.subr.mxu0 0.0
  %1243 = vmatpush1.msra.mxu0 %v1083
  %1244 = vmatprep.subr.mxu0 0.0
  %1245 = vmatpush1.msra.mxu0 %v1080
  %1246 = vmatprep.subr.mxu0 0.0
  %1247 = vmatpush1.msra.mxu0 %v1077
  %1248 = vmatprep.subr.mxu0 0.0
  %1249 = vmatpush1.msra.mxu0 %v1074
  %1250 = vmatprep.subr.mxu0 0.0
  %1251 = vmatpush1.msra.mxu0 %v1071
  %1252 = vmatprep.subr.mxu0 0.0
  %1253 = vmatpush1.msra.mxu0 %v1068
  %1254 = vmatprep.subr.mxu0 0.0
  %1255 = vmatpush1.msra.mxu0 %v1065
  %1256 = vmatprep.subr.mxu0 0.0
  %1257 = vmatpush1.msra.mxu0 %v1062
  %1258 = vmatprep.subr.mxu0 0.0
  %1259 = vmatpush1.msra.mxu0 %v1059
  %1260 = vmatprep.subr.mxu0 0.0
  %1261 = vmatpush1.msra.mxu0 %v1056
  %1262 = vmatprep.subr.mxu0 0.0
  %1263 = vmatpush1.msra.mxu0 %v1053
  %1264 = vmatprep.subr.mxu0 0.0
  %1265 = vmatpush1.msra.mxu0 %v1050
  %1266 = vmatprep.subr.mxu0 0.0
  %1267 = vmatpush1.msra.mxu0 %v1047
  %1268 = vmatprep.subr.mxu0 0.0
  %1269 = vmatpush2.msra.mxu0 0.0
  %1270 = vmatprep.subr.mxu0 0.0
  %1271 = vmatpush2.msra.mxu0 0.0
  %1272 = vmatprep.subr.mxu0 0.0
  %1273 = vmatpush2.msra.mxu0 0.0
  %1274 = vmatprep.subr.mxu0 0.0
  %1275 = vmatpush2.msra.mxu0 0.0
  %1276 = vmatprep.subr.mxu0 0.0
  %1277 = vmatpush2.msra.mxu0 0.0
  %1278 = vmatprep.subr.mxu0 0.0
  %1279 = vmatpush2.msra.mxu0 0.0
  %1280 = vmatprep.subr.mxu0 0.0
  %1281 = vmatpush2.msra.mxu0 0.0
  %1282 = vmatprep.subr.mxu0 0.0
  %1283 = vmatpush2.msra.mxu0 0.0
  %1284 = vmatprep.subr.mxu0 0.0
  %1285 = vmatpush2.msra.mxu0 %v1116
  %1286 = vmatprep.subr.mxu0 0.0
  %1287 = vmatpush2.msra.mxu0 %v1113
  %1288 = vmatprep.subr.mxu0 0.0
  %1289 = vmatpush2.msra.mxu0 %v1110
  %1290 = vmatprep.subr.mxu0 0.0
  %1291 = vmatpush2.msra.mxu0 %v1107
  %1292 = vmatprep.subr.mxu0 0.0
  %1293 = vmatpush2.msra.mxu0 %v1104
  %1294 = vmatprep.subr.mxu0 0.0
  %1295 = vmatpush2.msra.mxu0 %v1101
  %1296 = vmatprep.subr.mxu0 0.0
  %1297 = vmatpush2.msra.mxu0 %v1098
  %1298 = vmatprep.subr.mxu0 0.0
  %1299 = vmatpush2.msra.mxu0 %v1095
  %1300 = vmatprep.mubr.f32.mxu0 %v1118
  %1301 = vmatmul.mubr.f32.gmra.mxu0 %v1010
  %v1302 = vpop.f32.mrf.mxu0
  %v1303 = vadd.f32 0.0, %v1302
  %v1304 = vpop.f32.mrf.mxu0
  %1305 = vmatprep.mubr.f32.mxu0 %v1121
  %1306 = vmatmul.mubr.f32.gmra.mxu0 %v1016
  %v1307 = vpop.f32.mrf.mxu0
  %v1308 = vadd.f32 0.0, %v1307
  %v1309 = vpop.f32.mrf.mxu0
  %1310 = vmatprep.mubr.f32.mxu0 %v1124
  %1311 = vmatmul.mubr.f32.gmra.mxu0 %v1022
  %v1312 = vpop.f32.mrf.mxu0
  %v1313 = vadd.f32 0.0, %v1312
  %v1314 = vpop.f32.mrf.mxu0
  %1315 = vmatprep.mubr.f32.mxu0 %v1127
  %1316 = vmatmul.mubr.f32.gmra.mxu0 %v1028
  %v1317 = vpop.f32.mrf.mxu0
  %v1318 = vadd.f32 0.0, %v1317
  %v1319 = vpop.f32.mrf.mxu0
  %1320 = vmatprep.mubr.f32.mxu0 %v1130
  %1321 = vmatmul.mubr.f32.gmra.mxu0 %v1034
  %v1322 = vpop.f32.mrf.mxu0
  %v1323 = vadd.f32 0.0, %v1322
  %v1324 = vpop.f32.mrf.mxu0
  %1325 = vmatprep.mubr.f32.mxu0 %v1133
  %1326 = vmatmul.mubr.f32.gmra.mxu0 %v1040
  %v1327 = vpop.f32.mrf.mxu0
  %v1328 = vadd.f32 0.0, %v1327
  %v1329 = vpop.f32.mrf.mxu0
  %1330 = vdwg.mxu0
  %v1331 = vadd.f32 %v789, %v1202
  %v1332 = vadd.f32 %v791, %v1204
  %v1333 = vadd.f32 %v890, %v1303
  %v1334 = vadd.f32 %v795, %v1208
  %v1335 = vadd.f32 %v797, %v1210
  %v1336 = vadd.f32 %v895, %v1308
  %v1337 = vadd.f32 %v801, %v1214
  %v1338 = vadd.f32 %v803, %v1216
  %v1339 = vadd.f32 %v900, %v1313
  %v1340 = vadd.f32 %v807, %v1220
  %v1341 = vadd.f32 %v809, %v1222
  %v1342 = vadd.f32 %v905, %v1318
  %v1343 = vadd.f32 %v813, %v1226
  %v1344 = vadd.f32 %v815, %v1228
  %v1345 = vadd.f32 %v910, %v1323
  %v1346 = vadd.f32 %v819, %v1232
  %v1347 = vadd.f32 %v821, %v1234
  %v1348 = vadd.f32 %v915, %v1328
  %s1349 = scalar_lea.vmem %s1, 144
  %v1350 = vld [vmem:[%s1349] sm:$0xff]
  %v1351 = vld [vmem:[%s1349 + $0x8] sm:$0xff]
  %v1352 = vld [vmem:[%s1349 + $0x10] sm:$0xff]
  %v1353 = vld [vmem:[%s1349 + $0x18] sm:$0xff]
  %v1354 = vld [vmem:[%s1349 + $0x20] sm:$0xff]
  %v1355 = vld [vmem:[%s1349 + $0x28] sm:$0xf]
  %v1357 = vsel %vm98, %v1350, 0
  %v1360 = vsel %vm98, %v1351, 0
  %v1363 = vsel %vm98, %v1352, 0
  %v1366 = vsel %vm98, %v1353, 0
  %v1369 = vsel %vm98, %v1354, 0
  %v1372 = vsel %vm98, %v1355, 0
  %1374 = vmatprep.subr.mxu0 0.0
  %1375 = vmatpush1.msra.mxu0 0.0
  %1376 = vmatprep.subr.mxu0 0.0
  %1377 = vmatpush1.msra.mxu0 0.0
  %1378 = vmatprep.subr.mxu0 0.0
  %1379 = vmatpush1.msra.mxu0 0.0
  %1380 = vmatprep.subr.mxu0 0.0
  %1381 = vmatpush1.msra.mxu0 0.0
  %1382 = vmatprep.subr.mxu0 %v91
  %1383 = vmatpush1.msra.mxu0 %v90
  %1384 = vmatprep.subr.mxu0 %v89
  %1385 = vmatpush1.msra.mxu0 %v88
  %1386 = vmatprep.subr.mxu0 %v87
  %1387 = vmatpush1.msra.mxu0 %v86
  %1388 = vmatprep.subr.mxu0 %v85
  %1389 = vmatpush1.msra.mxu0 %v84
  %1390 = vmatprep.subr.mxu0 %v83
  %1391 = vmatpush1.msra.mxu0 %v82
  %1392 = vmatprep.subr.mxu0 %v81
  %1393 = vmatpush1.msra.mxu0 %v80
  %1394 = vmatprep.subr.mxu0 %v79
  %1395 = vmatpush1.msra.mxu0 %v78
  %1396 = vmatprep.subr.mxu0 %v77
  %1397 = vmatpush1.msra.mxu0 %v76
  %1398 = vmatprep.subr.mxu0 %v75
  %1399 = vmatpush1.msra.mxu0 %v74
  %1400 = vmatprep.subr.mxu0 %v73
  %1401 = vmatpush1.msra.mxu0 %v72
  %1402 = vmatprep.subr.mxu0 %v71
  %1403 = vmatpush1.msra.mxu0 %v70
  %1404 = vmatprep.subr.mxu0 %v69
  %1405 = vmatpush1.msra.mxu0 %v68
  %1406 = vmatprep.subr.mxu0 0.0
  %1407 = vmatpush2.msra.mxu0 0.0
  %1408 = vmatprep.subr.mxu0 0.0
  %1409 = vmatpush2.msra.mxu0 0.0
  %1410 = vmatprep.subr.mxu0 0.0
  %1411 = vmatpush2.msra.mxu0 0.0
  %1412 = vmatprep.subr.mxu0 0.0
  %1413 = vmatpush2.msra.mxu0 0.0
  %1414 = vmatprep.subr.mxu0 0.0
  %1415 = vmatpush2.msra.mxu0 0.0
  %1416 = vmatprep.subr.mxu0 0.0
  %1417 = vmatpush2.msra.mxu0 0.0
  %1418 = vmatprep.subr.mxu0 0.0
  %1419 = vmatpush2.msra.mxu0 0.0
  %1420 = vmatprep.subr.mxu0 0.0
  %1421 = vmatpush2.msra.mxu0 0.0
  %1422 = vmatprep.subr.mxu0 0.0
  %1423 = vmatpush2.msra.mxu0 0.0
  %1424 = vmatprep.subr.mxu0 0.0
  %1425 = vmatpush2.msra.mxu0 0.0
  %1426 = vmatprep.subr.mxu0 0.0
  %1427 = vmatpush2.msra.mxu0 0.0
  %1428 = vmatprep.subr.mxu0 0.0
  %1429 = vmatpush2.msra.mxu0 0.0
  %1430 = vmatprep.subr.mxu0 0.0
  %1431 = vmatpush2.msra.mxu0 0.0
  %1432 = vmatprep.subr.mxu0 0.0
  %1433 = vmatpush2.msra.mxu0 0.0
  %1434 = vmatprep.subr.mxu0 0.0
  %1435 = vmatpush2.msra.mxu0 0.0
  %1436 = vmatprep.subr.mxu0 0.0
  %1437 = vmatpush2.msra.mxu0 0.0
  %1438 = vmatprep.mubr.f32.mxu0 0.0
  %1439 = vmatmul.mubr.f32.gmra.mxu0 %v1357
  %v1440 = vpop.f32.mrf.mxu0
  %v1441 = vadd.f32 0.0, %v1440
  %v1442 = vpop.f32.mrf.mxu0
  %v1443 = vadd.f32 0.0, %v1442
  %1444 = vmatprep.mubr.f32.mxu0 0.0
  %1445 = vmatmul.mubr.f32.gmra.mxu0 %v1360
  %v1446 = vpop.f32.mrf.mxu0
  %v1447 = vadd.f32 0.0, %v1446
  %v1448 = vpop.f32.mrf.mxu0
  %v1449 = vadd.f32 0.0, %v1448
  %1450 = vmatprep.mubr.f32.mxu0 0.0
  %1451 = vmatmul.mubr.f32.gmra.mxu0 %v1363
  %v1452 = vpop.f32.mrf.mxu0
  %v1453 = vadd.f32 0.0, %v1452
  %v1454 = vpop.f32.mrf.mxu0
  %v1455 = vadd.f32 0.0, %v1454
  %1456 = vmatprep.mubr.f32.mxu0 0.0
  %1457 = vmatmul.mubr.f32.gmra.mxu0 %v1366
  %v1458 = vpop.f32.mrf.mxu0
  %v1459 = vadd.f32 0.0, %v1458
  %v1460 = vpop.f32.mrf.mxu0
  %v1461 = vadd.f32 0.0, %v1460
  %1462 = vmatprep.mubr.f32.mxu0 0.0
  %1463 = vmatmul.mubr.f32.gmra.mxu0 %v1369
  %v1464 = vpop.f32.mrf.mxu0
  %v1465 = vadd.f32 0.0, %v1464
  %v1466 = vpop.f32.mrf.mxu0
  %v1467 = vadd.f32 0.0, %v1466
  %1468 = vmatprep.mubr.f32.mxu0 0.0
  %1469 = vmatmul.mubr.f32.gmra.mxu0 %v1372
  %v1470 = vpop.f32.mrf.mxu0
  %v1471 = vadd.f32 0.0, %v1470
  %v1472 = vpop.f32.mrf.mxu0
  %v1473 = vadd.f32 0.0, %v1472
  %1474 = vdwg.mxu0
  %s1475 = scalar_lea.vmem %s2, 1728
  %v1476 = vld [vmem:[%s1475] sm:$0xff]
  %v1477 = vld [vmem:[%s1475 + $0x8] sm:$0xff]
  %v1478 = vld [vmem:[%s1475 + $0x10] sm:$0xff]
  %v1479 = vld [vmem:[%s1475 + $0x18] sm:$0xff]
  %v1480 = vld [vmem:[%s1475 + $0x20] sm:$0xff]
  %v1481 = vld [vmem:[%s1475 + $0x28] sm:$0xff]
  %v1482 = vld [vmem:[%s1475 + $0x30] sm:$0xff]
  %v1483 = vld [vmem:[%s1475 + $0x38] sm:$0xff]
  %v1484 = vld [vmem:[%s1475 + $0x40] sm:$0xff]
  %v1485 = vld [vmem:[%s1475 + $0x48] sm:$0xff]
  %v1486 = vld [vmem:[%s1475 + $0x50] sm:$0xff]
  %v1487 = vld [vmem:[%s1475 + $0x58] sm:$0xff]
  %v1488 = vld [vmem:[%s1475 + $0x60] sm:$0xff]
  %v1489 = vld [vmem:[%s1475 + $0x68] sm:$0xff]
  %v1490 = vld [vmem:[%s1475 + $0x70] sm:$0xff]
  %v1491 = vld [vmem:[%s1475 + $0x78] sm:$0xff]
  %v1492 = vld [vmem:[%s1475 + $0x80] sm:$0xff]
  %v1493 = vld [vmem:[%s1475 + $0x88] sm:$0xff]
  %v1494 = vld [vmem:[%s1475 + $0x90] sm:$0xff]
  %v1495 = vld [vmem:[%s1475 + $0x98] sm:$0xff]
  %v1496 = vld [vmem:[%s1475 + $0xa0] sm:$0xff]
  %v1497 = vld [vmem:[%s1475 + $0xa8] sm:$0xff]
  %v1498 = vld [vmem:[%s1475 + $0xb0] sm:$0xff]
  %v1499 = vld [vmem:[%s1475 + $0xb8] sm:$0xff]
  %v1500 = vld [vmem:[%s1475 + $0xc0] sm:$0xff]
  %v1501 = vld [vmem:[%s1475 + $0xc8] sm:$0xff]
  %v1502 = vld [vmem:[%s1475 + $0xd0] sm:$0xff]
  %v1503 = vld [vmem:[%s1475 + $0xd8] sm:$0xff]
  %v1504 = vld [vmem:[%s1475 + $0xe0] sm:$0xff]
  %v1505 = vld [vmem:[%s1475 + $0xe8] sm:$0xff]
  %v1506 = vld [vmem:[%s1475 + $0xf0] sm:$0xff]
  %v1507 = vld [vmem:[%s1475 + $0xf8] sm:$0xff]
  %v1508 = vld [vmem:[%s1475 + $0x100] sm:$0xff]
  %v1509 = vld [vmem:[%s1475 + $0x108] sm:$0xff]
  %v1510 = vld [vmem:[%s1475 + $0x110] sm:$0xff]
  %v1511 = vld [vmem:[%s1475 + $0x118] sm:$0xff]
  %v1512 = vld [vmem:[%s1475 + $0x120] sm:$0xff]
  %v1513 = vld [vmem:[%s1475 + $0x128] sm:$0xff]
  %v1514 = vld [vmem:[%s1475 + $0x130] sm:$0xff]
  %v1515 = vld [vmem:[%s1475 + $0x138] sm:$0xff]
  %v1516 = vld [vmem:[%s1475 + $0x140] sm:$0xff]
  %v1517 = vld [vmem:[%s1475 + $0x148] sm:$0xff]
  %v1518 = vld [vmem:[%s1475 + $0x150] sm:$0xff]
  %v1519 = vld [vmem:[%s1475 + $0x158] sm:$0xff]
  %v1520 = vld [vmem:[%s1475 + $0x160] sm:$0xff]
  %v1521 = vld [vmem:[%s1475 + $0x168] sm:$0xff]
  %v1522 = vld [vmem:[%s1475 + $0x170] sm:$0xff]
  %v1523 = vld [vmem:[%s1475 + $0x178] sm:$0xff]
  %v1524 = vld [vmem:[%s1475 + $0x180] sm:$0xff]
  %v1525 = vld [vmem:[%s1475 + $0x188] sm:$0xff]
  %v1526 = vld [vmem:[%s1475 + $0x190] sm:$0xff]
  %v1527 = vld [vmem:[%s1475 + $0x198] sm:$0xff]
  %v1528 = vld [vmem:[%s1475 + $0x1a0] sm:$0xff]
  %v1529 = vld [vmem:[%s1475 + $0x1a8] sm:$0xff]
  %v1530 = vld [vmem:[%s1475 + $0x1b0] sm:$0xff]
  %v1531 = vld [vmem:[%s1475 + $0x1b8] sm:$0xff]
  %v1532 = vld [vmem:[%s1475 + $0x1c0] sm:$0xff]
  %v1533 = vld [vmem:[%s1475 + $0x1c8] sm:$0xff]
  %v1534 = vld [vmem:[%s1475 + $0x1d0] sm:$0xff]
  %v1535 = vld [vmem:[%s1475 + $0x1d8] sm:$0xff]
  %v1536 = vld [vmem:[%s1475 + $0x1e0] sm:$0xff]
  %v1537 = vld [vmem:[%s1475 + $0x1e8] sm:$0xff]
  %v1538 = vld [vmem:[%s1475 + $0x1f0] sm:$0xff]
  %v1539 = vld [vmem:[%s1475 + $0x1f8] sm:$0xff]
  %v1540 = vld [vmem:[%s1475 + $0x200] sm:$0xff]
  %v1541 = vld [vmem:[%s1475 + $0x208] sm:$0xff]
  %v1542 = vld [vmem:[%s1475 + $0x210] sm:$0xff]
  %v1543 = vld [vmem:[%s1475 + $0x218] sm:$0xff]
  %v1544 = vld [vmem:[%s1475 + $0x220] sm:$0xff]
  %v1545 = vld [vmem:[%s1475 + $0x228] sm:$0xff]
  %v1546 = vld [vmem:[%s1475 + $0x230] sm:$0xff]
  %v1547 = vld [vmem:[%s1475 + $0x238] sm:$0xff]
  %v1549 = vsel %vm489, %v1443, 0
  %v1552 = vsel %vm489, %v1449, 0
  %v1555 = vsel %vm489, %v1455, 0
  %v1558 = vsel %vm489, %v1461, 0
  %v1561 = vsel %vm489, %v1467, 0
  %v1564 = vsel %vm489, %v1473, 0
  %1566 = vmatprep.subr.mxu0 %v1522
  %1567 = vmatpush1.msra.mxu0 %v1521
  %1568 = vmatprep.subr.mxu0 %v1519
  %1569 = vmatpush1.msra.mxu0 %v1518
  %1570 = vmatprep.subr.mxu0 %v1516
  %1571 = vmatpush1.msra.mxu0 %v1515
  %1572 = vmatprep.subr.mxu0 %v1513
  %1573 = vmatpush1.msra.mxu0 %v1512
  %1574 = vmatprep.subr.mxu0 %v1510
  %1575 = vmatpush1.msra.mxu0 %v1509
  %1576 = vmatprep.subr.mxu0 %v1507
  %1577 = vmatpush1.msra.mxu0 %v1506
  %1578 = vmatprep.subr.mxu0 %v1504
  %1579 = vmatpush1.msra.mxu0 %v1503
  %1580 = vmatprep.subr.mxu0 %v1501
  %1581 = vmatpush1.msra.mxu0 %v1500
  %1582 = vmatprep.subr.mxu0 %v1498
  %1583 = vmatpush1.msra.mxu0 %v1497
  %1584 = vmatprep.subr.mxu0 %v1495
  %1585 = vmatpush1.msra.mxu0 %v1494
  %1586 = vmatprep.subr.mxu0 %v1492
  %1587 = vmatpush1.msra.mxu0 %v1491
  %1588 = vmatprep.subr.mxu0 %v1489
  %1589 = vmatpush1.msra.mxu0 %v1488
  %1590 = vmatprep.subr.mxu0 %v1486
  %1591 = vmatpush1.msra.mxu0 %v1485
  %1592 = vmatprep.subr.mxu0 %v1483
  %1593 = vmatpush1.msra.mxu0 %v1482
  %1594 = vmatprep.subr.mxu0 %v1480
  %1595 = vmatpush1.msra.mxu0 %v1479
  %1596 = vmatprep.subr.mxu0 %v1477
  %1597 = vmatpush1.msra.mxu0 %v1476
  %1598 = vmatprep.subr.mxu0 0.0
  %1599 = vmatpush2.msra.mxu0 0.0
  %1600 = vmatprep.subr.mxu0 0.0
  %1601 = vmatpush2.msra.mxu0 0.0
  %1602 = vmatprep.subr.mxu0 0.0
  %1603 = vmatpush2.msra.mxu0 0.0
  %1604 = vmatprep.subr.mxu0 0.0
  %1605 = vmatpush2.msra.mxu0 0.0
  %1606 = vmatprep.subr.mxu0 0.0
  %1607 = vmatpush2.msra.mxu0 0.0
  %1608 = vmatprep.subr.mxu0 0.0
  %1609 = vmatpush2.msra.mxu0 0.0
  %1610 = vmatprep.subr.mxu0 0.0
  %1611 = vmatpush2.msra.mxu0 0.0
  %1612 = vmatprep.subr.mxu0 0.0
  %1613 = vmatpush2.msra.mxu0 0.0
  %1614 = vmatprep.subr.mxu0 %v1546
  %1615 = vmatpush2.msra.mxu0 %v1545
  %1616 = vmatprep.subr.mxu0 %v1543
  %1617 = vmatpush2.msra.mxu0 %v1542
  %1618 = vmatprep.subr.mxu0 %v1540
  %1619 = vmatpush2.msra.mxu0 %v1539
  %1620 = vmatprep.subr.mxu0 %v1537
  %1621 = vmatpush2.msra.mxu0 %v1536
  %1622 = vmatprep.subr.mxu0 %v1534
  %1623 = vmatpush2.msra.mxu0 %v1533
  %1624 = vmatprep.subr.mxu0 %v1531
  %1625 = vmatpush2.msra.mxu0 %v1530
  %1626 = vmatprep.subr.mxu0 %v1528
  %1627 = vmatpush2.msra.mxu0 %v1527
  %1628 = vmatprep.subr.mxu0 %v1525
  %1629 = vmatpush2.msra.mxu0 %v1524
  %1630 = vmatprep.mubr.f32.mxu0 %v1549
  %1631 = vmatmul.mubr.f32.gmra.mxu0 %v1441
  %v1632 = vpop.f32.mrf.mxu0
  %v1633 = vadd.f32 0.0, %v1632
  %v1634 = vpop.f32.mrf.mxu0
  %v1635 = vadd.f32 0.0, %v1634
  %1636 = vmatprep.mubr.f32.mxu0 %v1552
  %1637 = vmatmul.mubr.f32.gmra.mxu0 %v1447
  %v1638 = vpop.f32.mrf.mxu0
  %v1639 = vadd.f32 0.0, %v1638
  %v1640 = vpop.f32.mrf.mxu0
  %v1641 = vadd.f32 0.0, %v1640
  %1642 = vmatprep.mubr.f32.mxu0 %v1555
  %1643 = vmatmul.mubr.f32.gmra.mxu0 %v1453
  %v1644 = vpop.f32.mrf.mxu0
  %v1645 = vadd.f32 0.0, %v1644
  %v1646 = vpop.f32.mrf.mxu0
  %v1647 = vadd.f32 0.0, %v1646
  %1648 = vmatprep.mubr.f32.mxu0 %v1558
  %1649 = vmatmul.mubr.f32.gmra.mxu0 %v1459
  %v1650 = vpop.f32.mrf.mxu0
  %v1651 = vadd.f32 0.0, %v1650
  %v1652 = vpop.f32.mrf.mxu0
  %v1653 = vadd.f32 0.0, %v1652
  %1654 = vmatprep.mubr.f32.mxu0 %v1561
  %1655 = vmatmul.mubr.f32.gmra.mxu0 %v1465
  %v1656 = vpop.f32.mrf.mxu0
  %v1657 = vadd.f32 0.0, %v1656
  %v1658 = vpop.f32.mrf.mxu0
  %v1659 = vadd.f32 0.0, %v1658
  %1660 = vmatprep.mubr.f32.mxu0 %v1564
  %1661 = vmatmul.mubr.f32.gmra.mxu0 %v1471
  %v1662 = vpop.f32.mrf.mxu0
  %v1663 = vadd.f32 0.0, %v1662
  %v1664 = vpop.f32.mrf.mxu0
  %v1665 = vadd.f32 0.0, %v1664
  %1666 = vdwg.mxu0
  %1667 = vmatprep.subr.mxu0 0.0
  %1668 = vmatpush1.msra.mxu0 %v1523
  %1669 = vmatprep.subr.mxu0 0.0
  %1670 = vmatpush1.msra.mxu0 %v1520
  %1671 = vmatprep.subr.mxu0 0.0
  %1672 = vmatpush1.msra.mxu0 %v1517
  %1673 = vmatprep.subr.mxu0 0.0
  %1674 = vmatpush1.msra.mxu0 %v1514
  %1675 = vmatprep.subr.mxu0 0.0
  %1676 = vmatpush1.msra.mxu0 %v1511
  %1677 = vmatprep.subr.mxu0 0.0
  %1678 = vmatpush1.msra.mxu0 %v1508
  %1679 = vmatprep.subr.mxu0 0.0
  %1680 = vmatpush1.msra.mxu0 %v1505
  %1681 = vmatprep.subr.mxu0 0.0
  %1682 = vmatpush1.msra.mxu0 %v1502
  %1683 = vmatprep.subr.mxu0 0.0
  %1684 = vmatpush1.msra.mxu0 %v1499
  %1685 = vmatprep.subr.mxu0 0.0
  %1686 = vmatpush1.msra.mxu0 %v1496
  %1687 = vmatprep.subr.mxu0 0.0
  %1688 = vmatpush1.msra.mxu0 %v1493
  %1689 = vmatprep.subr.mxu0 0.0
  %1690 = vmatpush1.msra.mxu0 %v1490
  %1691 = vmatprep.subr.mxu0 0.0
  %1692 = vmatpush1.msra.mxu0 %v1487
  %1693 = vmatprep.subr.mxu0 0.0
  %1694 = vmatpush1.msra.mxu0 %v1484
  %1695 = vmatprep.subr.mxu0 0.0
  %1696 = vmatpush1.msra.mxu0 %v1481
  %1697 = vmatprep.subr.mxu0 0.0
  %1698 = vmatpush1.msra.mxu0 %v1478
  %1699 = vmatprep.subr.mxu0 0.0
  %1700 = vmatpush2.msra.mxu0 0.0
  %1701 = vmatprep.subr.mxu0 0.0
  %1702 = vmatpush2.msra.mxu0 0.0
  %1703 = vmatprep.subr.mxu0 0.0
  %1704 = vmatpush2.msra.mxu0 0.0
  %1705 = vmatprep.subr.mxu0 0.0
  %1706 = vmatpush2.msra.mxu0 0.0
  %1707 = vmatprep.subr.mxu0 0.0
  %1708 = vmatpush2.msra.mxu0 0.0
  %1709 = vmatprep.subr.mxu0 0.0
  %1710 = vmatpush2.msra.mxu0 0.0
  %1711 = vmatprep.subr.mxu0 0.0
  %1712 = vmatpush2.msra.mxu0 0.0
  %1713 = vmatprep.subr.mxu0 0.0
  %1714 = vmatpush2.msra.mxu0 0.0
  %1715 = vmatprep.subr.mxu0 0.0
  %1716 = vmatpush2.msra.mxu0 %v1547
  %1717 = vmatprep.subr.mxu0 0.0
  %1718 = vmatpush2.msra.mxu0 %v1544
  %1719 = vmatprep.subr.mxu0 0.0
  %1720 = vmatpush2.msra.mxu0 %v1541
  %1721 = vmatprep.subr.mxu0 0.0
  %1722 = vmatpush2.msra.mxu0 %v1538
  %1723 = vmatprep.subr.mxu0 0.0
  %1724 = vmatpush2.msra.mxu0 %v1535
  %1725 = vmatprep.subr.mxu0 0.0
  %1726 = vmatpush2.msra.mxu0 %v1532
  %1727 = vmatprep.subr.mxu0 0.0
  %1728 = vmatpush2.msra.mxu0 %v1529
  %1729 = vmatprep.subr.mxu0 0.0
  %1730 = vmatpush2.msra.mxu0 %v1526
  %1731 = vmatprep.mubr.f32.mxu0 %v1549
  %1732 = vmatmul.mubr.f32.gmra.mxu0 %v1441
  %v1733 = vpop.f32.mrf.mxu0
  %v1734 = vadd.f32 0.0, %v1733
  %v1735 = vpop.f32.mrf.mxu0
  %1736 = vmatprep.mubr.f32.mxu0 %v1552
  %1737 = vmatmul.mubr.f32.gmra.mxu0 %v1447
  %v1738 = vpop.f32.mrf.mxu0
  %v1739 = vadd.f32 0.0, %v1738
  %v1740 = vpop.f32.mrf.mxu0
  %1741 = vmatprep.mubr.f32.mxu0 %v1555
  %1742 = vmatmul.mubr.f32.gmra.mxu0 %v1453
  %v1743 = vpop.f32.mrf.mxu0
  %v1744 = vadd.f32 0.0, %v1743
  %v1745 = vpop.f32.mrf.mxu0
  %1746 = vmatprep.mubr.f32.mxu0 %v1558
  %1747 = vmatmul.mubr.f32.gmra.mxu0 %v1459
  %v1748 = vpop.f32.mrf.mxu0
  %v1749 = vadd.f32 0.0, %v1748
  %v1750 = vpop.f32.mrf.mxu0
  %1751 = vmatprep.mubr.f32.mxu0 %v1561
  %1752 = vmatmul.mubr.f32.gmra.mxu0 %v1465
  %v1753 = vpop.f32.mrf.mxu0
  %v1754 = vadd.f32 0.0, %v1753
  %v1755 = vpop.f32.mrf.mxu0
  %1756 = vmatprep.mubr.f32.mxu0 %v1564
  %1757 = vmatmul.mubr.f32.gmra.mxu0 %v1471
  %v1758 = vpop.f32.mrf.mxu0
  %v1759 = vadd.f32 0.0, %v1758
  %v1760 = vpop.f32.mrf.mxu0
  %1761 = vdwg.mxu0
  %v1762 = vadd.f32 %v1331, %v1633
  %v1763 = vadd.f32 %v1332, %v1635
  %v1764 = vadd.f32 %v1333, %v1734
  %v1765 = vadd.f32 %v1334, %v1639
  %v1766 = vadd.f32 %v1335, %v1641
  %v1767 = vadd.f32 %v1336, %v1739
  %v1768 = vadd.f32 %v1337, %v1645
  %v1769 = vadd.f32 %v1338, %v1647
  %v1770 = vadd.f32 %v1339, %v1744
  %v1771 = vadd.f32 %v1340, %v1651
  %v1772 = vadd.f32 %v1341, %v1653
  %v1773 = vadd.f32 %v1342, %v1749
  %v1774 = vadd.f32 %v1343, %v1657
  %v1775 = vadd.f32 %v1344, %v1659
  %v1776 = vadd.f32 %v1345, %v1754
  %v1777 = vadd.f32 %v1346, %v1663
  %v1778 = vadd.f32 %v1347, %v1665
  %v1779 = vadd.f32 %v1348, %v1759
  %s1780 = scalar_lea.vmem %s1, 192
  %v1781 = vld [vmem:[%s1780] sm:$0xff]
  %v1782 = vld [vmem:[%s1780 + $0x8] sm:$0xff]
  %v1783 = vld [vmem:[%s1780 + $0x10] sm:$0xff]
  %v1784 = vld [vmem:[%s1780 + $0x18] sm:$0xff]
  %v1785 = vld [vmem:[%s1780 + $0x20] sm:$0xff]
  %v1786 = vld [vmem:[%s1780 + $0x28] sm:$0xf]
  %v1788 = vsel %vm98, %v1781, 0
  %v1791 = vsel %vm98, %v1782, 0
  %v1794 = vsel %vm98, %v1783, 0
  %v1797 = vsel %vm98, %v1784, 0
  %v1800 = vsel %vm98, %v1785, 0
  %v1803 = vsel %vm98, %v1786, 0
  %1805 = vmatprep.subr.mxu0 0.0
  %1806 = vmatpush1.msra.mxu0 0.0
  %1807 = vmatprep.subr.mxu0 0.0
  %1808 = vmatpush1.msra.mxu0 0.0
  %1809 = vmatprep.subr.mxu0 0.0
  %1810 = vmatpush1.msra.mxu0 0.0
  %1811 = vmatprep.subr.mxu0 0.0
  %1812 = vmatpush1.msra.mxu0 0.0
  %1813 = vmatprep.subr.mxu0 %v91
  %1814 = vmatpush1.msra.mxu0 %v90
  %1815 = vmatprep.subr.mxu0 %v89
  %1816 = vmatpush1.msra.mxu0 %v88
  %1817 = vmatprep.subr.mxu0 %v87
  %1818 = vmatpush1.msra.mxu0 %v86
  %1819 = vmatprep.subr.mxu0 %v85
  %1820 = vmatpush1.msra.mxu0 %v84
  %1821 = vmatprep.subr.mxu0 %v83
  %1822 = vmatpush1.msra.mxu0 %v82
  %1823 = vmatprep.subr.mxu0 %v81
  %1824 = vmatpush1.msra.mxu0 %v80
  %1825 = vmatprep.subr.mxu0 %v79
  %1826 = vmatpush1.msra.mxu0 %v78
  %1827 = vmatprep.subr.mxu0 %v77
  %1828 = vmatpush1.msra.mxu0 %v76
  %1829 = vmatprep.subr.mxu0 %v75
  %1830 = vmatpush1.msra.mxu0 %v74
  %1831 = vmatprep.subr.mxu0 %v73
  %1832 = vmatpush1.msra.mxu0 %v72
  %1833 = vmatprep.subr.mxu0 %v71
  %1834 = vmatpush1.msra.mxu0 %v70
  %1835 = vmatprep.subr.mxu0 %v69
  %1836 = vmatpush1.msra.mxu0 %v68
  %1837 = vmatprep.subr.mxu0 0.0
  %1838 = vmatpush2.msra.mxu0 0.0
  %1839 = vmatprep.subr.mxu0 0.0
  %1840 = vmatpush2.msra.mxu0 0.0
  %1841 = vmatprep.subr.mxu0 0.0
  %1842 = vmatpush2.msra.mxu0 0.0
  %1843 = vmatprep.subr.mxu0 0.0
  %1844 = vmatpush2.msra.mxu0 0.0
  %1845 = vmatprep.subr.mxu0 0.0
  %1846 = vmatpush2.msra.mxu0 0.0
  %1847 = vmatprep.subr.mxu0 0.0
  %1848 = vmatpush2.msra.mxu0 0.0
  %1849 = vmatprep.subr.mxu0 0.0
  %1850 = vmatpush2.msra.mxu0 0.0
  %1851 = vmatprep.subr.mxu0 0.0
  %1852 = vmatpush2.msra.mxu0 0.0
  %1853 = vmatprep.subr.mxu0 0.0
  %1854 = vmatpush2.msra.mxu0 0.0
  %1855 = vmatprep.subr.mxu0 0.0
  %1856 = vmatpush2.msra.mxu0 0.0
  %1857 = vmatprep.subr.mxu0 0.0
  %1858 = vmatpush2.msra.mxu0 0.0
  %1859 = vmatprep.subr.mxu0 0.0
  %1860 = vmatpush2.msra.mxu0 0.0
  %1861 = vmatprep.subr.mxu0 0.0
  %1862 = vmatpush2.msra.mxu0 0.0
  %1863 = vmatprep.subr.mxu0 0.0
  %1864 = vmatpush2.msra.mxu0 0.0
  %1865 = vmatprep.subr.mxu0 0.0
  %1866 = vmatpush2.msra.mxu0 0.0
  %1867 = vmatprep.subr.mxu0 0.0
  %1868 = vmatpush2.msra.mxu0 0.0
  %1869 = vmatprep.mubr.f32.mxu0 0.0
  %1870 = vmatmul.mubr.f32.gmra.mxu0 %v1788
  %v1871 = vpop.f32.mrf.mxu0
  %v1872 = vadd.f32 0.0, %v1871
  %v1873 = vpop.f32.mrf.mxu0
  %v1874 = vadd.f32 0.0, %v1873
  %1875 = vmatprep.mubr.f32.mxu0 0.0
  %1876 = vmatmul.mubr.f32.gmra.mxu0 %v1791
  %v1877 = vpop.f32.mrf.mxu0
  %v1878 = vadd.f32 0.0, %v1877
  %v1879 = vpop.f32.mrf.mxu0
  %v1880 = vadd.f32 0.0, %v1879
  %1881 = vmatprep.mubr.f32.mxu0 0.0
  %1882 = vmatmul.mubr.f32.gmra.mxu0 %v1794
  %v1883 = vpop.f32.mrf.mxu0
  %v1884 = vadd.f32 0.0, %v1883
  %v1885 = vpop.f32.mrf.mxu0
  %v1886 = vadd.f32 0.0, %v1885
  %1887 = vmatprep.mubr.f32.mxu0 0.0
  %1888 = vmatmul.mubr.f32.gmra.mxu0 %v1797
  %v1889 = vpop.f32.mrf.mxu0
  %v1890 = vadd.f32 0.0, %v1889
  %v1891 = vpop.f32.mrf.mxu0
  %v1892 = vadd.f32 0.0, %v1891
  %1893 = vmatprep.mubr.f32.mxu0 0.0
  %1894 = vmatmul.mubr.f32.gmra.mxu0 %v1800
  %v1895 = vpop.f32.mrf.mxu0
  %v1896 = vadd.f32 0.0, %v1895
  %v1897 = vpop.f32.mrf.mxu0
  %v1898 = vadd.f32 0.0, %v1897
  %1899 = vmatprep.mubr.f32.mxu0 0.0
  %1900 = vmatmul.mubr.f32.gmra.mxu0 %v1803
  %v1901 = vpop.f32.mrf.mxu0
  %v1902 = vadd.f32 0.0, %v1901
  %v1903 = vpop.f32.mrf.mxu0
  %v1904 = vadd.f32 0.0, %v1903
  %1905 = vdwg.mxu0
  %s1906 = scalar_lea.vmem %s2, 2304
  %v1907 = vld [vmem:[%s1906] sm:$0xff]
  %v1908 = vld [vmem:[%s1906 + $0x8] sm:$0xff]
  %v1909 = vld [vmem:[%s1906 + $0x10] sm:$0xff]
  %v1910 = vld [vmem:[%s1906 + $0x18] sm:$0xff]
  %v1911 = vld [vmem:[%s1906 + $0x20] sm:$0xff]
  %v1912 = vld [vmem:[%s1906 + $0x28] sm:$0xff]
  %v1913 = vld [vmem:[%s1906 + $0x30] sm:$0xff]
  %v1914 = vld [vmem:[%s1906 + $0x38] sm:$0xff]
  %v1915 = vld [vmem:[%s1906 + $0x40] sm:$0xff]
  %v1916 = vld [vmem:[%s1906 + $0x48] sm:$0xff]
  %v1917 = vld [vmem:[%s1906 + $0x50] sm:$0xff]
  %v1918 = vld [vmem:[%s1906 + $0x58] sm:$0xff]
  %v1919 = vld [vmem:[%s1906 + $0x60] sm:$0xff]
  %v1920 = vld [vmem:[%s1906 + $0x68] sm:$0xff]
  %v1921 = vld [vmem:[%s1906 + $0x70] sm:$0xff]
  %v1922 = vld [vmem:[%s1906 + $0x78] sm:$0xff]
  %v1923 = vld [vmem:[%s1906 + $0x80] sm:$0xff]
  %v1924 = vld [vmem:[%s1906 + $0x88] sm:$0xff]
  %v1925 = vld [vmem:[%s1906 + $0x90] sm:$0xff]
  %v1926 = vld [vmem:[%s1906 + $0x98] sm:$0xff]
  %v1927 = vld [vmem:[%s1906 + $0xa0] sm:$0xff]
  %v1928 = vld [vmem:[%s1906 + $0xa8] sm:$0xff]
  %v1929 = vld [vmem:[%s1906 + $0xb0] sm:$0xff]
  %v1930 = vld [vmem:[%s1906 + $0xb8] sm:$0xff]
  %v1931 = vld [vmem:[%s1906 + $0xc0] sm:$0xff]
  %v1932 = vld [vmem:[%s1906 + $0xc8] sm:$0xff]
  %v1933 = vld [vmem:[%s1906 + $0xd0] sm:$0xff]
  %v1934 = vld [vmem:[%s1906 + $0xd8] sm:$0xff]
  %v1935 = vld [vmem:[%s1906 + $0xe0] sm:$0xff]
  %v1936 = vld [vmem:[%s1906 + $0xe8] sm:$0xff]
  %v1937 = vld [vmem:[%s1906 + $0xf0] sm:$0xff]
  %v1938 = vld [vmem:[%s1906 + $0xf8] sm:$0xff]
  %v1939 = vld [vmem:[%s1906 + $0x100] sm:$0xff]
  %v1940 = vld [vmem:[%s1906 + $0x108] sm:$0xff]
  %v1941 = vld [vmem:[%s1906 + $0x110] sm:$0xff]
  %v1942 = vld [vmem:[%s1906 + $0x118] sm:$0xff]
  %v1943 = vld [vmem:[%s1906 + $0x120] sm:$0xff]
  %v1944 = vld [vmem:[%s1906 + $0x128] sm:$0xff]
  %v1945 = vld [vmem:[%s1906 + $0x130] sm:$0xff]
  %v1946 = vld [vmem:[%s1906 + $0x138] sm:$0xff]
  %v1947 = vld [vmem:[%s1906 + $0x140] sm:$0xff]
  %v1948 = vld [vmem:[%s1906 + $0x148] sm:$0xff]
  %v1949 = vld [vmem:[%s1906 + $0x150] sm:$0xff]
  %v1950 = vld [vmem:[%s1906 + $0x158] sm:$0xff]
  %v1951 = vld [vmem:[%s1906 + $0x160] sm:$0xff]
  %v1952 = vld [vmem:[%s1906 + $0x168] sm:$0xff]
  %v1953 = vld [vmem:[%s1906 + $0x170] sm:$0xff]
  %v1954 = vld [vmem:[%s1906 + $0x178] sm:$0xff]
  %v1955 = vld [vmem:[%s1906 + $0x180] sm:$0xff]
  %v1956 = vld [vmem:[%s1906 + $0x188] sm:$0xff]
  %v1957 = vld [vmem:[%s1906 + $0x190] sm:$0xff]
  %v1958 = vld [vmem:[%s1906 + $0x198] sm:$0xff]
  %v1959 = vld [vmem:[%s1906 + $0x1a0] sm:$0xff]
  %v1960 = vld [vmem:[%s1906 + $0x1a8] sm:$0xff]
  %v1961 = vld [vmem:[%s1906 + $0x1b0] sm:$0xff]
  %v1962 = vld [vmem:[%s1906 + $0x1b8] sm:$0xff]
  %v1963 = vld [vmem:[%s1906 + $0x1c0] sm:$0xff]
  %v1964 = vld [vmem:[%s1906 + $0x1c8] sm:$0xff]
  %v1965 = vld [vmem:[%s1906 + $0x1d0] sm:$0xff]
  %v1966 = vld [vmem:[%s1906 + $0x1d8] sm:$0xff]
  %v1967 = vld [vmem:[%s1906 + $0x1e0] sm:$0xff]
  %v1968 = vld [vmem:[%s1906 + $0x1e8] sm:$0xff]
  %v1969 = vld [vmem:[%s1906 + $0x1f0] sm:$0xff]
  %v1970 = vld [vmem:[%s1906 + $0x1f8] sm:$0xff]
  %v1971 = vld [vmem:[%s1906 + $0x200] sm:$0xff]
  %v1972 = vld [vmem:[%s1906 + $0x208] sm:$0xff]
  %v1973 = vld [vmem:[%s1906 + $0x210] sm:$0xff]
  %v1974 = vld [vmem:[%s1906 + $0x218] sm:$0xff]
  %v1975 = vld [vmem:[%s1906 + $0x220] sm:$0xff]
  %v1976 = vld [vmem:[%s1906 + $0x228] sm:$0xff]
  %v1977 = vld [vmem:[%s1906 + $0x230] sm:$0xff]
  %v1978 = vld [vmem:[%s1906 + $0x238] sm:$0xff]
  %v1980 = vsel %vm489, %v1874, 0
  %v1983 = vsel %vm489, %v1880, 0
  %v1986 = vsel %vm489, %v1886, 0
  %v1989 = vsel %vm489, %v1892, 0
  %v1992 = vsel %vm489, %v1898, 0
  %v1995 = vsel %vm489, %v1904, 0
  %1997 = vmatprep.subr.mxu0 %v1953
  %1998 = vmatpush1.msra.mxu0 %v1952
  %1999 = vmatprep.subr.mxu0 %v1950
  %2000 = vmatpush1.msra.mxu0 %v1949
  %2001 = vmatprep.subr.mxu0 %v1947
  %2002 = vmatpush1.msra.mxu0 %v1946
  %2003 = vmatprep.subr.mxu0 %v1944
  %2004 = vmatpush1.msra.mxu0 %v1943
  %2005 = vmatprep.subr.mxu0 %v1941
  %2006 = vmatpush1.msra.mxu0 %v1940
  %2007 = vmatprep.subr.mxu0 %v1938
  %2008 = vmatpush1.msra.mxu0 %v1937
  %2009 = vmatprep.subr.mxu0 %v1935
  %2010 = vmatpush1.msra.mxu0 %v1934
  %2011 = vmatprep.subr.mxu0 %v1932
  %2012 = vmatpush1.msra.mxu0 %v1931
  %2013 = vmatprep.subr.mxu0 %v1929
  %2014 = vmatpush1.msra.mxu0 %v1928
  %2015 = vmatprep.subr.mxu0 %v1926
  %2016 = vmatpush1.msra.mxu0 %v1925
  %2017 = vmatprep.subr.mxu0 %v1923
  %2018 = vmatpush1.msra.mxu0 %v1922
  %2019 = vmatprep.subr.mxu0 %v1920
  %2020 = vmatpush1.msra.mxu0 %v1919
  %2021 = vmatprep.subr.mxu0 %v1917
  %2022 = vmatpush1.msra.mxu0 %v1916
  %2023 = vmatprep.subr.mxu0 %v1914
  %2024 = vmatpush1.msra.mxu0 %v1913
  %2025 = vmatprep.subr.mxu0 %v1911
  %2026 = vmatpush1.msra.mxu0 %v1910
  %2027 = vmatprep.subr.mxu0 %v1908
  %2028 = vmatpush1.msra.mxu0 %v1907
  %2029 = vmatprep.subr.mxu0 0.0
  %2030 = vmatpush2.msra.mxu0 0.0
  %2031 = vmatprep.subr.mxu0 0.0
  %2032 = vmatpush2.msra.mxu0 0.0
  %2033 = vmatprep.subr.mxu0 0.0
  %2034 = vmatpush2.msra.mxu0 0.0
  %2035 = vmatprep.subr.mxu0 0.0
  %2036 = vmatpush2.msra.mxu0 0.0
  %2037 = vmatprep.subr.mxu0 0.0
  %2038 = vmatpush2.msra.mxu0 0.0
  %2039 = vmatprep.subr.mxu0 0.0
  %2040 = vmatpush2.msra.mxu0 0.0
  %2041 = vmatprep.subr.mxu0 0.0
  %2042 = vmatpush2.msra.mxu0 0.0
  %2043 = vmatprep.subr.mxu0 0.0
  %2044 = vmatpush2.msra.mxu0 0.0
  %2045 = vmatprep.subr.mxu0 %v1977
  %2046 = vmatpush2.msra.mxu0 %v1976
  %2047 = vmatprep.subr.mxu0 %v1974
  %2048 = vmatpush2.msra.mxu0 %v1973
  %2049 = vmatprep.subr.mxu0 %v1971
  %2050 = vmatpush2.msra.mxu0 %v1970
  %2051 = vmatprep.subr.mxu0 %v1968
  %2052 = vmatpush2.msra.mxu0 %v1967
  %2053 = vmatprep.subr.mxu0 %v1965
  %2054 = vmatpush2.msra.mxu0 %v1964
  %2055 = vmatprep.subr.mxu0 %v1962
  %2056 = vmatpush2.msra.mxu0 %v1961
  %2057 = vmatprep.subr.mxu0 %v1959
  %2058 = vmatpush2.msra.mxu0 %v1958
  %2059 = vmatprep.subr.mxu0 %v1956
  %2060 = vmatpush2.msra.mxu0 %v1955
  %2061 = vmatprep.mubr.f32.mxu0 %v1980
  %2062 = vmatmul.mubr.f32.gmra.mxu0 %v1872
  %v2063 = vpop.f32.mrf.mxu0
  %v2064 = vadd.f32 0.0, %v2063
  %v2065 = vpop.f32.mrf.mxu0
  %v2066 = vadd.f32 0.0, %v2065
  %2067 = vmatprep.mubr.f32.mxu0 %v1983
  %2068 = vmatmul.mubr.f32.gmra.mxu0 %v1878
  %v2069 = vpop.f32.mrf.mxu0
  %v2070 = vadd.f32 0.0, %v2069
  %v2071 = vpop.f32.mrf.mxu0
  %v2072 = vadd.f32 0.0, %v2071
  %2073 = vmatprep.mubr.f32.mxu0 %v1986
  %2074 = vmatmul.mubr.f32.gmra.mxu0 %v1884
  %v2075 = vpop.f32.mrf.mxu0
  %v2076 = vadd.f32 0.0, %v2075
  %v2077 = vpop.f32.mrf.mxu0
  %v2078 = vadd.f32 0.0, %v2077
  %2079 = vmatprep.mubr.f32.mxu0 %v1989
  %2080 = vmatmul.mubr.f32.gmra.mxu0 %v1890
  %v2081 = vpop.f32.mrf.mxu0
  %v2082 = vadd.f32 0.0, %v2081
  %v2083 = vpop.f32.mrf.mxu0
  %v2084 = vadd.f32 0.0, %v2083
  %2085 = vmatprep.mubr.f32.mxu0 %v1992
  %2086 = vmatmul.mubr.f32.gmra.mxu0 %v1896
  %v2087 = vpop.f32.mrf.mxu0
  %v2088 = vadd.f32 0.0, %v2087
  %v2089 = vpop.f32.mrf.mxu0
  %v2090 = vadd.f32 0.0, %v2089
  %2091 = vmatprep.mubr.f32.mxu0 %v1995
  %2092 = vmatmul.mubr.f32.gmra.mxu0 %v1902
  %v2093 = vpop.f32.mrf.mxu0
  %v2094 = vadd.f32 0.0, %v2093
  %v2095 = vpop.f32.mrf.mxu0
  %v2096 = vadd.f32 0.0, %v2095
  %2097 = vdwg.mxu0
  %2098 = vmatprep.subr.mxu0 0.0
  %2099 = vmatpush1.msra.mxu0 %v1954
  %2100 = vmatprep.subr.mxu0 0.0
  %2101 = vmatpush1.msra.mxu0 %v1951
  %2102 = vmatprep.subr.mxu0 0.0
  %2103 = vmatpush1.msra.mxu0 %v1948
  %2104 = vmatprep.subr.mxu0 0.0
  %2105 = vmatpush1.msra.mxu0 %v1945
  %2106 = vmatprep.subr.mxu0 0.0
  %2107 = vmatpush1.msra.mxu0 %v1942
  %2108 = vmatprep.subr.mxu0 0.0
  %2109 = vmatpush1.msra.mxu0 %v1939
  %2110 = vmatprep.subr.mxu0 0.0
  %2111 = vmatpush1.msra.mxu0 %v1936
  %2112 = vmatprep.subr.mxu0 0.0
  %2113 = vmatpush1.msra.mxu0 %v1933
  %2114 = vmatprep.subr.mxu0 0.0
  %2115 = vmatpush1.msra.mxu0 %v1930
  %2116 = vmatprep.subr.mxu0 0.0
  %2117 = vmatpush1.msra.mxu0 %v1927
  %2118 = vmatprep.subr.mxu0 0.0
  %2119 = vmatpush1.msra.mxu0 %v1924
  %2120 = vmatprep.subr.mxu0 0.0
  %2121 = vmatpush1.msra.mxu0 %v1921
  %2122 = vmatprep.subr.mxu0 0.0
  %2123 = vmatpush1.msra.mxu0 %v1918
  %2124 = vmatprep.subr.mxu0 0.0
  %2125 = vmatpush1.msra.mxu0 %v1915
  %2126 = vmatprep.subr.mxu0 0.0
  %2127 = vmatpush1.msra.mxu0 %v1912
  %2128 = vmatprep.subr.mxu0 0.0
  %2129 = vmatpush1.msra.mxu0 %v1909
  %2130 = vmatprep.subr.mxu0 0.0
  %2131 = vmatpush2.msra.mxu0 0.0
  %2132 = vmatprep.subr.mxu0 0.0
  %2133 = vmatpush2.msra.mxu0 0.0
  %2134 = vmatprep.subr.mxu0 0.0
  %2135 = vmatpush2.msra.mxu0 0.0
  %2136 = vmatprep.subr.mxu0 0.0
  %2137 = vmatpush2.msra.mxu0 0.0
  %2138 = vmatprep.subr.mxu0 0.0
  %2139 = vmatpush2.msra.mxu0 0.0
  %2140 = vmatprep.subr.mxu0 0.0
  %2141 = vmatpush2.msra.mxu0 0.0
  %2142 = vmatprep.subr.mxu0 0.0
  %2143 = vmatpush2.msra.mxu0 0.0
  %2144 = vmatprep.subr.mxu0 0.0
  %2145 = vmatpush2.msra.mxu0 0.0
  %2146 = vmatprep.subr.mxu0 0.0
  %2147 = vmatpush2.msra.mxu0 %v1978
  %2148 = vmatprep.subr.mxu0 0.0
  %2149 = vmatpush2.msra.mxu0 %v1975
  %2150 = vmatprep.subr.mxu0 0.0
  %2151 = vmatpush2.msra.mxu0 %v1972
  %2152 = vmatprep.subr.mxu0 0.0
  %2153 = vmatpush2.msra.mxu0 %v1969
  %2154 = vmatprep.subr.mxu0 0.0
  %2155 = vmatpush2.msra.mxu0 %v1966
  %2156 = vmatprep.subr.mxu0 0.0
  %2157 = vmatpush2.msra.mxu0 %v1963
  %2158 = vmatprep.subr.mxu0 0.0
  %2159 = vmatpush2.msra.mxu0 %v1960
  %2160 = vmatprep.subr.mxu0 0.0
  %2161 = vmatpush2.msra.mxu0 %v1957
  %2162 = vmatprep.mubr.f32.mxu0 %v1980
  %2163 = vmatmul.mubr.f32.gmra.mxu0 %v1872
  %v2164 = vpop.f32.mrf.mxu0
  %v2165 = vadd.f32 0.0, %v2164
  %v2166 = vpop.f32.mrf.mxu0
  %2167 = vmatprep.mubr.f32.mxu0 %v1983
  %2168 = vmatmul.mubr.f32.gmra.mxu0 %v1878
  %v2169 = vpop.f32.mrf.mxu0
  %v2170 = vadd.f32 0.0, %v2169
  %v2171 = vpop.f32.mrf.mxu0
  %2172 = vmatprep.mubr.f32.mxu0 %v1986
  %2173 = vmatmul.mubr.f32.gmra.mxu0 %v1884
  %v2174 = vpop.f32.mrf.mxu0
  %v2175 = vadd.f32 0.0, %v2174
  %v2176 = vpop.f32.mrf.mxu0
  %2177 = vmatprep.mubr.f32.mxu0 %v1989
  %2178 = vmatmul.mubr.f32.gmra.mxu0 %v1890
  %v2179 = vpop.f32.mrf.mxu0
  %v2180 = vadd.f32 0.0, %v2179
  %v2181 = vpop.f32.mrf.mxu0
  %2182 = vmatprep.mubr.f32.mxu0 %v1992
  %2183 = vmatmul.mubr.f32.gmra.mxu0 %v1896
  %v2184 = vpop.f32.mrf.mxu0
  %v2185 = vadd.f32 0.0, %v2184
  %v2186 = vpop.f32.mrf.mxu0
  %2187 = vmatprep.mubr.f32.mxu0 %v1995
  %2188 = vmatmul.mubr.f32.gmra.mxu0 %v1902
  %v2189 = vpop.f32.mrf.mxu0
  %v2190 = vadd.f32 0.0, %v2189
  %v2191 = vpop.f32.mrf.mxu0
  %2192 = vdwg.mxu0
  %v2193 = vadd.f32 %v1762, %v2064
  %v2194 = vadd.f32 %v1763, %v2066
  %v2195 = vadd.f32 %v1764, %v2165
  %v2196 = vadd.f32 %v1765, %v2070
  %v2197 = vadd.f32 %v1766, %v2072
  %v2198 = vadd.f32 %v1767, %v2170
  %v2199 = vadd.f32 %v1768, %v2076
  %v2200 = vadd.f32 %v1769, %v2078
  %v2201 = vadd.f32 %v1770, %v2175
  %v2202 = vadd.f32 %v1771, %v2082
  %v2203 = vadd.f32 %v1772, %v2084
  %v2204 = vadd.f32 %v1773, %v2180
  %v2205 = vadd.f32 %v1774, %v2088
  %v2206 = vadd.f32 %v1775, %v2090
  %v2207 = vadd.f32 %v1776, %v2185
  %v2208 = vadd.f32 %v1777, %v2094
  %v2209 = vadd.f32 %v1778, %v2096
  %v2210 = vadd.f32 %v1779, %v2190
  %v2211 = vld [vmem:[%s4] sm:$0xff]
  %v2212 = vld [vmem:[%s4 + $0x8] sm:$0xff]
  %v2213 = vld [vmem:[%s4 + $0x10] sm:$0xff]
  %v2214 = vld [vmem:[%s4 + $0x18] sm:$0xff]
  %v2215 = vld [vmem:[%s4 + $0x20] sm:$0xff]
  %v2216 = vld [vmem:[%s4 + $0x28] sm:$0xff]
  %v2217 = vld [vmem:[%s4 + $0x30] sm:$0xff]
  %v2218 = vld [vmem:[%s4 + $0x38] sm:$0xff]
  %v2219 = vld [vmem:[%s4 + $0x40] sm:$0xff]
  %v2220 = vld [vmem:[%s4 + $0x48] sm:$0xff]
  %v2221 = vld [vmem:[%s4 + $0x50] sm:$0xff]
  %v2222 = vld [vmem:[%s4 + $0x58] sm:$0xff]
  %v2223 = vld [vmem:[%s4 + $0x60] sm:$0xff]
  %v2224 = vld [vmem:[%s4 + $0x68] sm:$0xff]
  %v2225 = vld [vmem:[%s4 + $0x70] sm:$0xff]
  %v2226 = vld [vmem:[%s4 + $0x78] sm:$0xff]
  %v2227 = vld [vmem:[%s4 + $0x80] sm:$0xff]
  %v2228 = vld [vmem:[%s4 + $0x88] sm:$0xff]
  %v2229 = vld [vmem:[%s4 + $0x90] sm:$0xff]
  %v2230 = vld [vmem:[%s4 + $0x98] sm:$0xff]
  %v2231 = vld [vmem:[%s4 + $0xa0] sm:$0xff]
  %v2232 = vld [vmem:[%s4 + $0xa8] sm:$0xff]
  %v2233 = vld [vmem:[%s4 + $0xb0] sm:$0xff]
  %v2234 = vld [vmem:[%s4 + $0xb8] sm:$0xff]
  %v2235 = vld [vmem:[%s4 + $0xc0] sm:$0xff]
  %v2236 = vld [vmem:[%s4 + $0xc8] sm:$0xff]
  %v2237 = vld [vmem:[%s4 + $0xd0] sm:$0xff]
  %v2238 = vld [vmem:[%s4 + $0xd8] sm:$0xff]
  %v2239 = vld [vmem:[%s4 + $0xe0] sm:$0xff]
  %v2240 = vld [vmem:[%s4 + $0xe8] sm:$0xff]
  %v2241 = vld [vmem:[%s4 + $0xf0] sm:$0xff]
  %v2242 = vld [vmem:[%s4 + $0xf8] sm:$0xff]
  %v2243 = vld [vmem:[%s4 + $0x100] sm:$0xff]
  %v2244 = vld [vmem:[%s4 + $0x108] sm:$0xff]
  %v2245 = vld [vmem:[%s4 + $0x110] sm:$0xff]
  %v2246 = vld [vmem:[%s4 + $0x118] sm:$0xff]
  %v2247 = vld [vmem:[%s4 + $0x120] sm:$0xff]
  %v2248 = vld [vmem:[%s4 + $0x128] sm:$0xff]
  %v2249 = vld [vmem:[%s4 + $0x130] sm:$0xff]
  %v2250 = vld [vmem:[%s4 + $0x138] sm:$0xff]
  %v2251 = vld [vmem:[%s4 + $0x140] sm:$0xff]
  %v2252 = vld [vmem:[%s4 + $0x148] sm:$0xff]
  %v2253 = vld [vmem:[%s4 + $0x150] sm:$0xff]
  %v2254 = vld [vmem:[%s4 + $0x158] sm:$0xff]
  %v2255 = vld [vmem:[%s5] sm:$0xff]
  %v2256 = vld [vmem:[%s5 + $0x8] sm:$0xff]
  %v2257 = vld [vmem:[%s5 + $0x10] sm:$0xff]
  %v2258 = vld [vmem:[%s5 + $0x18] sm:$0xff]
  %v2259 = vld [vmem:[%s5 + $0x20] sm:$0xff]
  %v2260 = vld [vmem:[%s5 + $0x28] sm:$0xff]
  %v2261 = vld [vmem:[%s3] sm:$0x3]
  %v2262 = vadd.f32 %v2193, %v2196
  %v2263 = vadd.f32 %v2262, %v2199
  %v2264 = vadd.f32 %v2263, %v2202
  %v2265 = vadd.f32 %v2264, %v2205
  %vm2266 = vcmask 1043456
  %v2267 = vsel %vm2266, %v2208, 0.0
  %v2268 = vadd.f32 %v2265, %v2267
  %v2269 = vrot.slane %v2268, 4
  %v2270 = vadd.f32 %v2268, %v2269
  %v2271 = vrot.slane %v2270, 2
  %v2272 = vadd.f32 %v2270, %v2271
  %v2273 = vrot.slane %v2272, 1
  %v2274 = vadd.f32 %v2272, %v2273
  %v2275 = vadd.f32 %v2194, %v2197
  %v2276 = vadd.f32 %v2275, %v2200
  %v2277 = vadd.f32 %v2276, %v2203
  %v2278 = vadd.f32 %v2277, %v2206
  %v2279 = vsel %vm2266, %v2209, 0.0
  %v2280 = vadd.f32 %v2278, %v2279
  %v2281 = vrot.slane %v2280, 4
  %v2282 = vadd.f32 %v2280, %v2281
  %v2283 = vrot.slane %v2282, 2
  %v2284 = vadd.f32 %v2282, %v2283
  %v2285 = vrot.slane %v2284, 1
  %v2286 = vadd.f32 %v2284, %v2285
  %v2287 = vsel %vm98, %v2195, 0.0
  %v2288 = vsel %vm98, %v2198, 0.0
  %v2289 = vadd.f32 %v2287, %v2288
  %v2290 = vsel %vm98, %v2201, 0.0
  %v2291 = vadd.f32 %v2289, %v2290
  %v2292 = vsel %vm98, %v2204, 0.0
  %v2293 = vadd.f32 %v2291, %v2292
  %v2294 = vsel %vm98, %v2207, 0.0
  %v2295 = vadd.f32 %v2293, %v2294
  %vm2296 = vcmask 781312
  %v2297 = vsel %vm2296, %v2210, 0.0
  %v2298 = vadd.f32 %v2295, %v2297
  %v2299 = vrot.slane %v2298, 4
  %v2300 = vadd.f32 %v2298, %v2299
  %v2301 = vrot.slane %v2300, 2
  %v2302 = vadd.f32 %v2300, %v2301
  %v2303 = vrot.slane %v2302, 1
  %v2304 = vadd.f32 %v2302, %v2303
  %v2306 = vsel %vm98, %v2304, 0
  %2308 = vmatprep.subr.mxu0 0.0
  %2309 = vmatpush1.msra.mxu0 %v2226
  %2310 = vmatprep.subr.mxu0 0.0
  %2311 = vmatpush1.msra.mxu0 %v2225
  %2312 = vmatprep.subr.mxu0 0.0
  %2313 = vmatpush1.msra.mxu0 %v2224
  %2314 = vmatprep.subr.mxu0 0.0
  %2315 = vmatpush1.msra.mxu0 %v2223
  %2316 = vmatprep.subr.mxu0 0.0
  %2317 = vmatpush1.msra.mxu0 %v2222
  %2318 = vmatprep.subr.mxu0 0.0
  %2319 = vmatpush1.msra.mxu0 %v2221
  %2320 = vmatprep.subr.mxu0 0.0
  %2321 = vmatpush1.msra.mxu0 %v2220
  %2322 = vmatprep.subr.mxu0 0.0
  %2323 = vmatpush1.msra.mxu0 %v2219
  %2324 = vmatprep.subr.mxu0 0.0
  %2325 = vmatpush1.msra.mxu0 %v2218
  %2326 = vmatprep.subr.mxu0 0.0
  %2327 = vmatpush1.msra.mxu0 %v2217
  %2328 = vmatprep.subr.mxu0 0.0
  %2329 = vmatpush1.msra.mxu0 %v2216
  %2330 = vmatprep.subr.mxu0 0.0
  %2331 = vmatpush1.msra.mxu0 %v2215
  %2332 = vmatprep.subr.mxu0 0.0
  %2333 = vmatpush1.msra.mxu0 %v2214
  %2334 = vmatprep.subr.mxu0 0.0
  %2335 = vmatpush1.msra.mxu0 %v2213
  %2336 = vmatprep.subr.mxu0 0.0
  %2337 = vmatpush1.msra.mxu0 %v2212
  %2338 = vmatprep.subr.mxu0 0.0
  %2339 = vmatpush1.msra.mxu0 %v2211
  %2340 = vmatprep.subr.mxu0 0.0
  %2341 = vmatpush2.msra.mxu0 %v2242
  %2342 = vmatprep.subr.mxu0 0.0
  %2343 = vmatpush2.msra.mxu0 %v2241
  %2344 = vmatprep.subr.mxu0 0.0
  %2345 = vmatpush2.msra.mxu0 %v2240
  %2346 = vmatprep.subr.mxu0 0.0
  %2347 = vmatpush2.msra.mxu0 %v2239
  %2348 = vmatprep.subr.mxu0 0.0
  %2349 = vmatpush2.msra.mxu0 %v2238
  %2350 = vmatprep.subr.mxu0 0.0
  %2351 = vmatpush2.msra.mxu0 %v2237
  %2352 = vmatprep.subr.mxu0 0.0
  %2353 = vmatpush2.msra.mxu0 %v2236
  %2354 = vmatprep.subr.mxu0 0.0
  %2355 = vmatpush2.msra.mxu0 %v2235
  %2356 = vmatprep.subr.mxu0 0.0
  %2357 = vmatpush2.msra.mxu0 %v2234
  %2358 = vmatprep.subr.mxu0 0.0
  %2359 = vmatpush2.msra.mxu0 %v2233
  %2360 = vmatprep.subr.mxu0 0.0
  %2361 = vmatpush2.msra.mxu0 %v2232
  %2362 = vmatprep.subr.mxu0 0.0
  %2363 = vmatpush2.msra.mxu0 %v2231
  %2364 = vmatprep.subr.mxu0 0.0
  %2365 = vmatpush2.msra.mxu0 %v2230
  %2366 = vmatprep.subr.mxu0 0.0
  %2367 = vmatpush2.msra.mxu0 %v2229
  %2368 = vmatprep.subr.mxu0 0.0
  %2369 = vmatpush2.msra.mxu0 %v2228
  %2370 = vmatprep.subr.mxu0 0.0
  %2371 = vmatpush2.msra.mxu0 %v2227
  %2372 = vmatprep.mubr.f32.mxu0 %v2286
  %2373 = vmatmul.mubr.f32.gmra.mxu0 %v2274
  %v2374 = vpop.f32.mrf.mxu0
  %v2375 = vadd.f32 0.0, %v2374
  %v2376 = vpop.f32.mrf.mxu0
  %2377 = vdwg.mxu0
  %2378 = vmatprep.subr.mxu0 0.0
  %2379 = vmatpush1.msra.mxu0 0.0
  %2380 = vmatprep.subr.mxu0 0.0
  %2381 = vmatpush1.msra.mxu0 0.0
  %2382 = vmatprep.subr.mxu0 0.0
  %2383 = vmatpush1.msra.mxu0 0.0
  %2384 = vmatprep.subr.mxu0 0.0
  %2385 = vmatpush1.msra.mxu0 0.0
  %2386 = vmatprep.subr.mxu0 0.0
  %2387 = vmatpush1.msra.mxu0 %v2254
  %2388 = vmatprep.subr.mxu0 0.0
  %2389 = vmatpush1.msra.mxu0 %v2253
  %2390 = vmatprep.subr.mxu0 0.0
  %2391 = vmatpush1.msra.mxu0 %v2252
  %2392 = vmatprep.subr.mxu0 0.0
  %2393 = vmatpush1.msra.mxu0 %v2251
  %2394 = vmatprep.subr.mxu0 0.0
  %2395 = vmatpush1.msra.mxu0 %v2250
  %2396 = vmatprep.subr.mxu0 0.0
  %2397 = vmatpush1.msra.mxu0 %v2249
  %2398 = vmatprep.subr.mxu0 0.0
  %2399 = vmatpush1.msra.mxu0 %v2248
  %2400 = vmatprep.subr.mxu0 0.0
  %2401 = vmatpush1.msra.mxu0 %v2247
  %2402 = vmatprep.subr.mxu0 0.0
  %2403 = vmatpush1.msra.mxu0 %v2246
  %2404 = vmatprep.subr.mxu0 0.0
  %2405 = vmatpush1.msra.mxu0 %v2245
  %2406 = vmatprep.subr.mxu0 0.0
  %2407 = vmatpush1.msra.mxu0 %v2244
  %2408 = vmatprep.subr.mxu0 0.0
  %2409 = vmatpush1.msra.mxu0 %v2243
  %2410 = vmatprep.subr.mxu0 0.0
  %2411 = vmatpush2.msra.mxu0 0.0
  %2412 = vmatprep.subr.mxu0 0.0
  %2413 = vmatpush2.msra.mxu0 0.0
  %2414 = vmatprep.subr.mxu0 0.0
  %2415 = vmatpush2.msra.mxu0 0.0
  %2416 = vmatprep.subr.mxu0 0.0
  %2417 = vmatpush2.msra.mxu0 0.0
  %2418 = vmatprep.subr.mxu0 0.0
  %2419 = vmatpush2.msra.mxu0 0.0
  %2420 = vmatprep.subr.mxu0 0.0
  %2421 = vmatpush2.msra.mxu0 0.0
  %2422 = vmatprep.subr.mxu0 0.0
  %2423 = vmatpush2.msra.mxu0 0.0
  %2424 = vmatprep.subr.mxu0 0.0
  %2425 = vmatpush2.msra.mxu0 0.0
  %2426 = vmatprep.subr.mxu0 0.0
  %2427 = vmatpush2.msra.mxu0 0.0
  %2428 = vmatprep.subr.mxu0 0.0
  %2429 = vmatpush2.msra.mxu0 0.0
  %2430 = vmatprep.subr.mxu0 0.0
  %2431 = vmatpush2.msra.mxu0 0.0
  %2432 = vmatprep.subr.mxu0 0.0
  %2433 = vmatpush2.msra.mxu0 0.0
  %2434 = vmatprep.subr.mxu0 0.0
  %2435 = vmatpush2.msra.mxu0 0.0
  %2436 = vmatprep.subr.mxu0 0.0
  %2437 = vmatpush2.msra.mxu0 0.0
  %2438 = vmatprep.subr.mxu0 0.0
  %2439 = vmatpush2.msra.mxu0 0.0
  %2440 = vmatprep.subr.mxu0 0.0
  %2441 = vmatpush2.msra.mxu0 0.0
  %2442 = vmatprep.mubr.f32.mxu0 0.0
  %2443 = vmatmul.mubr.f32.gmra.mxu0 %v2306
  %v2444 = vpop.f32.mrf.mxu0
  %v2445 = vadd.f32 %v2375, %v2444
  %v2446 = vpop.f32.mrf.mxu0
  %2447 = vdwg.mxu0
  %v2448 = vmul.f32 %v2445, 0.0010330578
  %vm2449 = vcmask 130048
  %v2451 = vsel %vm2449, %v2448, 0
  %2453 = vmatprep.subr.mxu0 0.0
  %2454 = vmatpush1.msra.mxu0 0.0
  %2455 = vmatprep.subr.mxu0 0.0
  %2456 = vmatpush1.msra.mxu0 0.0
  %2457 = vmatprep.subr.mxu0 0.0
  %2458 = vmatpush1.msra.mxu0 0.0
  %2459 = vmatprep.subr.mxu0 0.0
  %2460 = vmatpush1.msra.mxu0 0.0
  %2461 = vmatprep.subr.mxu0 0.0
  %2462 = vmatpush1.msra.mxu0 0.0
  %2463 = vmatprep.subr.mxu0 0.0
  %2464 = vmatpush1.msra.mxu0 0.0
  %2465 = vmatprep.subr.mxu0 0.0
  %2466 = vmatpush1.msra.mxu0 0.0
  %2467 = vmatprep.subr.mxu0 0.0
  %2468 = vmatpush1.msra.mxu0 0.0
  %2469 = vmatprep.subr.mxu0 0.0
  %2470 = vmatpush1.msra.mxu0 0.0
  %2471 = vmatprep.subr.mxu0 0.0
  %2472 = vmatpush1.msra.mxu0 0.0
  %2473 = vmatprep.subr.mxu0 0.0
  %2474 = vmatpush1.msra.mxu0 0.0
  %2475 = vmatprep.subr.mxu0 0.0
  %2476 = vmatpush1.msra.mxu0 0.0
  %2477 = vmatprep.subr.mxu0 0.0
  %2478 = vmatpush1.msra.mxu0 0.0
  %2479 = vmatprep.subr.mxu0 0.0
  %2480 = vmatpush1.msra.mxu0 0.0
  %2481 = vmatprep.subr.mxu0 %v2259
  %2482 = vmatpush1.msra.mxu0 %v2258
  %2483 = vmatprep.subr.mxu0 %v2256
  %2484 = vmatpush1.msra.mxu0 %v2255
  %2485 = vmatprep.subr.mxu0 0.0
  %2486 = vmatpush2.msra.mxu0 0.0
  %2487 = vmatprep.subr.mxu0 0.0
  %2488 = vmatpush2.msra.mxu0 0.0
  %2489 = vmatprep.subr.mxu0 0.0
  %2490 = vmatpush2.msra.mxu0 0.0
  %2491 = vmatprep.subr.mxu0 0.0
  %2492 = vmatpush2.msra.mxu0 0.0
  %2493 = vmatprep.subr.mxu0 0.0
  %2494 = vmatpush2.msra.mxu0 0.0
  %2495 = vmatprep.subr.mxu0 0.0
  %2496 = vmatpush2.msra.mxu0 0.0
  %2497 = vmatprep.subr.mxu0 0.0
  %2498 = vmatpush2.msra.mxu0 0.0
  %2499 = vmatprep.subr.mxu0 0.0
  %2500 = vmatpush2.msra.mxu0 0.0
  %2501 = vmatprep.subr.mxu0 0.0
  %2502 = vmatpush2.msra.mxu0 0.0
  %2503 = vmatprep.subr.mxu0 0.0
  %2504 = vmatpush2.msra.mxu0 0.0
  %2505 = vmatprep.subr.mxu0 0.0
  %2506 = vmatpush2.msra.mxu0 0.0
  %2507 = vmatprep.subr.mxu0 0.0
  %2508 = vmatpush2.msra.mxu0 0.0
  %2509 = vmatprep.subr.mxu0 0.0
  %2510 = vmatpush2.msra.mxu0 0.0
  %2511 = vmatprep.subr.mxu0 0.0
  %2512 = vmatpush2.msra.mxu0 0.0
  %2513 = vmatprep.subr.mxu0 0.0
  %2514 = vmatpush2.msra.mxu0 0.0
  %2515 = vmatprep.subr.mxu0 0.0
  %2516 = vmatpush2.msra.mxu0 0.0
  %2517 = vmatprep.mubr.f32.mxu0 0.0
  %2518 = vmatmul.mubr.f32.gmra.mxu0 %v2451
  %v2519 = vpop.f32.mrf.mxu0
  %v2520 = vadd.f32 0.0, %v2519
  %v2521 = vpop.f32.mrf.mxu0
  %v2522 = vadd.f32 0.0, %v2521
  %2523 = vdwg.mxu0
  %2524 = vmatprep.subr.mxu0 0.0
  %2525 = vmatpush1.msra.mxu0 0.0
  %2526 = vmatprep.subr.mxu0 0.0
  %2527 = vmatpush1.msra.mxu0 0.0
  %2528 = vmatprep.subr.mxu0 0.0
  %2529 = vmatpush1.msra.mxu0 0.0
  %2530 = vmatprep.subr.mxu0 0.0
  %2531 = vmatpush1.msra.mxu0 0.0
  %2532 = vmatprep.subr.mxu0 0.0
  %2533 = vmatpush1.msra.mxu0 0.0
  %2534 = vmatprep.subr.mxu0 0.0
  %2535 = vmatpush1.msra.mxu0 0.0
  %2536 = vmatprep.subr.mxu0 0.0
  %2537 = vmatpush1.msra.mxu0 0.0
  %2538 = vmatprep.subr.mxu0 0.0
  %2539 = vmatpush1.msra.mxu0 0.0
  %2540 = vmatprep.subr.mxu0 0.0
  %2541 = vmatpush1.msra.mxu0 0.0
  %2542 = vmatprep.subr.mxu0 0.0
  %2543 = vmatpush1.msra.mxu0 0.0
  %2544 = vmatprep.subr.mxu0 0.0
  %2545 = vmatpush1.msra.mxu0 0.0
  %2546 = vmatprep.subr.mxu0 0.0
  %2547 = vmatpush1.msra.mxu0 0.0
  %2548 = vmatprep.subr.mxu0 0.0
  %2549 = vmatpush1.msra.mxu0 0.0
  %2550 = vmatprep.subr.mxu0 0.0
  %2551 = vmatpush1.msra.mxu0 0.0
  %2552 = vmatprep.subr.mxu0 0.0
  %2553 = vmatpush1.msra.mxu0 %v2260
  %2554 = vmatprep.subr.mxu0 0.0
  %2555 = vmatpush1.msra.mxu0 %v2257
  %2556 = vmatprep.subr.mxu0 0.0
  %2557 = vmatpush2.msra.mxu0 0.0
  %2558 = vmatprep.subr.mxu0 0.0
  %2559 = vmatpush2.msra.mxu0 0.0
  %2560 = vmatprep.subr.mxu0 0.0
  %2561 = vmatpush2.msra.mxu0 0.0
  %2562 = vmatprep.subr.mxu0 0.0
  %2563 = vmatpush2.msra.mxu0 0.0
  %2564 = vmatprep.subr.mxu0 0.0
  %2565 = vmatpush2.msra.mxu0 0.0
  %2566 = vmatprep.subr.mxu0 0.0
  %2567 = vmatpush2.msra.mxu0 0.0
  %2568 = vmatprep.subr.mxu0 0.0
  %2569 = vmatpush2.msra.mxu0 0.0
  %2570 = vmatprep.subr.mxu0 0.0
  %2571 = vmatpush2.msra.mxu0 0.0
  %2572 = vmatprep.subr.mxu0 0.0
  %2573 = vmatpush2.msra.mxu0 0.0
  %2574 = vmatprep.subr.mxu0 0.0
  %2575 = vmatpush2.msra.mxu0 0.0
  %2576 = vmatprep.subr.mxu0 0.0
  %2577 = vmatpush2.msra.mxu0 0.0
  %2578 = vmatprep.subr.mxu0 0.0
  %2579 = vmatpush2.msra.mxu0 0.0
  %2580 = vmatprep.subr.mxu0 0.0
  %2581 = vmatpush2.msra.mxu0 0.0
  %2582 = vmatprep.subr.mxu0 0.0
  %2583 = vmatpush2.msra.mxu0 0.0
  %2584 = vmatprep.subr.mxu0 0.0
  %2585 = vmatpush2.msra.mxu0 0.0
  %2586 = vmatprep.subr.mxu0 0.0
  %2587 = vmatpush2.msra.mxu0 0.0
  %2588 = vmatprep.mubr.f32.mxu0 0.0
  %2589 = vmatmul.mubr.f32.gmra.mxu0 %v2451
  %v2590 = vpop.f32.mrf.mxu0
  %v2591 = vadd.f32 0.0, %v2590
  %v2592 = vpop.f32.mrf.mxu0
  %2593 = vdwg.mxu0
  %v2594 = vlaneseq
  %v2595 = vshrl.u32 %v2594, 7
  %v2596 = vsub.s32 0, %v2595
  %v2597 = vrot.slane %v2520, %v2596
  %v2598 = vlaneseq
  %v2599 = vshrl.u32 %v2598, 7
  %v2600 = vsub.s32 0, %v2599
  %v2601 = vrot.slane %v2522, %v2600
  %v2602 = vlaneseq
  %v2603 = vshrl.u32 %v2602, 7
  %v2604 = vsub.s32 0, %v2603
  %v2605 = vrot.slane %v2591, %v2604
  %v2606 = vsub.f32 %v2193, %v2597
  %v2607 = vsub.f32 %v2194, %v2601
  %v2608 = vsub.f32 %v2195, %v2605
  %v2609 = vsub.f32 %v2196, %v2597
  %v2610 = vsub.f32 %v2197, %v2601
  %v2611 = vsub.f32 %v2198, %v2605
  %v2612 = vsub.f32 %v2199, %v2597
  %v2613 = vsub.f32 %v2200, %v2601
  %v2614 = vsub.f32 %v2201, %v2605
  %v2615 = vsub.f32 %v2202, %v2597
  %v2616 = vsub.f32 %v2203, %v2601
  %v2617 = vsub.f32 %v2204, %v2605
  %v2618 = vsub.f32 %v2205, %v2597
  %v2619 = vsub.f32 %v2206, %v2601
  %v2620 = vsub.f32 %v2207, %v2605
  %v2621 = vsub.f32 %v2208, %v2597
  %v2622 = vsub.f32 %v2209, %v2601
  %v2623 = vsub.f32 %v2210, %v2605
  %v2624 = vmul.f32 %v2606, %v2606
  %v2625 = vmul.f32 %v2607, %v2607
  %v2626 = vmul.f32 %v2608, %v2608
  %v2627 = vmul.f32 %v2609, %v2609
  %v2628 = vmul.f32 %v2610, %v2610
  %v2629 = vmul.f32 %v2611, %v2611
  %v2630 = vmul.f32 %v2612, %v2612
  %v2631 = vmul.f32 %v2613, %v2613
  %v2632 = vmul.f32 %v2614, %v2614
  %v2633 = vmul.f32 %v2615, %v2615
  %v2634 = vmul.f32 %v2616, %v2616
  %v2635 = vmul.f32 %v2617, %v2617
  %v2636 = vmul.f32 %v2618, %v2618
  %v2637 = vmul.f32 %v2619, %v2619
  %v2638 = vmul.f32 %v2620, %v2620
  %v2639 = vmul.f32 %v2621, %v2621
  %v2640 = vmul.f32 %v2622, %v2622
  %v2641 = vmul.f32 %v2623, %v2623
  %v2642 = vadd.f32 %v2624, %v2627
  %v2643 = vadd.f32 %v2642, %v2630
  %v2644 = vadd.f32 %v2643, %v2633
  %v2645 = vadd.f32 %v2644, %v2636
  %v2646 = vsel %vm2266, %v2639, 0.0
  %v2647 = vadd.f32 %v2645, %v2646
  %v2648 = vrot.slane %v2647, 4
  %v2649 = vadd.f32 %v2647, %v2648
  %v2650 = vrot.slane %v2649, 2
  %v2651 = vadd.f32 %v2649, %v2650
  %v2652 = vrot.slane %v2651, 1
  %v2653 = vadd.f32 %v2651, %v2652
  %v2654 = vadd.f32 %v2625, %v2628
  %v2655 = vadd.f32 %v2654, %v2631
  %v2656 = vadd.f32 %v2655, %v2634
  %v2657 = vadd.f32 %v2656, %v2637
  %v2658 = vsel %vm2266, %v2640, 0.0
  %v2659 = vadd.f32 %v2657, %v2658
  %v2660 = vrot.slane %v2659, 4
  %v2661 = vadd.f32 %v2659, %v2660
  %v2662 = vrot.slane %v2661, 2
  %v2663 = vadd.f32 %v2661, %v2662
  %v2664 = vrot.slane %v2663, 1
  %v2665 = vadd.f32 %v2663, %v2664
  %v2666 = vsel %vm98, %v2626, 0.0
  %v2667 = vsel %vm98, %v2629, 0.0
  %v2668 = vadd.f32 %v2666, %v2667
  %v2669 = vsel %vm98, %v2632, 0.0
  %v2670 = vadd.f32 %v2668, %v2669
  %v2671 = vsel %vm98, %v2635, 0.0
  %v2672 = vadd.f32 %v2670, %v2671
  %v2673 = vsel %vm98, %v2638, 0.0
  %v2674 = vadd.f32 %v2672, %v2673
  %v2675 = vsel %vm2296, %v2641, 0.0
  %v2676 = vadd.f32 %v2674, %v2675
  %v2677 = vrot.slane %v2676, 4
  %v2678 = vadd.f32 %v2676, %v2677
  %v2679 = vrot.slane %v2678, 2
  %v2680 = vadd.f32 %v2678, %v2679
  %v2681 = vrot.slane %v2680, 1
  %v2682 = vadd.f32 %v2680, %v2681
  %v2684 = vsel %vm98, %v2682, 0
  %2686 = vmatprep.subr.mxu0 0.0
  %2687 = vmatpush1.msra.mxu0 %v2226
  %2688 = vmatprep.subr.mxu0 0.0
  %2689 = vmatpush1.msra.mxu0 %v2225
  %2690 = vmatprep.subr.mxu0 0.0
  %2691 = vmatpush1.msra.mxu0 %v2224
  %2692 = vmatprep.subr.mxu0 0.0
  %2693 = vmatpush1.msra.mxu0 %v2223
  %2694 = vmatprep.subr.mxu0 0.0
  %2695 = vmatpush1.msra.mxu0 %v2222
  %2696 = vmatprep.subr.mxu0 0.0
  %2697 = vmatpush1.msra.mxu0 %v2221
  %2698 = vmatprep.subr.mxu0 0.0
  %2699 = vmatpush1.msra.mxu0 %v2220
  %2700 = vmatprep.subr.mxu0 0.0
  %2701 = vmatpush1.msra.mxu0 %v2219
  %2702 = vmatprep.subr.mxu0 0.0
  %2703 = vmatpush1.msra.mxu0 %v2218
  %2704 = vmatprep.subr.mxu0 0.0
  %2705 = vmatpush1.msra.mxu0 %v2217
  %2706 = vmatprep.subr.mxu0 0.0
  %2707 = vmatpush1.msra.mxu0 %v2216
  %2708 = vmatprep.subr.mxu0 0.0
  %2709 = vmatpush1.msra.mxu0 %v2215
  %2710 = vmatprep.subr.mxu0 0.0
  %2711 = vmatpush1.msra.mxu0 %v2214
  %2712 = vmatprep.subr.mxu0 0.0
  %2713 = vmatpush1.msra.mxu0 %v2213
  %2714 = vmatprep.subr.mxu0 0.0
  %2715 = vmatpush1.msra.mxu0 %v2212
  %2716 = vmatprep.subr.mxu0 0.0
  %2717 = vmatpush1.msra.mxu0 %v2211
  %2718 = vmatprep.subr.mxu0 0.0
  %2719 = vmatpush2.msra.mxu0 %v2242
  %2720 = vmatprep.subr.mxu0 0.0
  %2721 = vmatpush2.msra.mxu0 %v2241
  %2722 = vmatprep.subr.mxu0 0.0
  %2723 = vmatpush2.msra.mxu0 %v2240
  %2724 = vmatprep.subr.mxu0 0.0
  %2725 = vmatpush2.msra.mxu0 %v2239
  %2726 = vmatprep.subr.mxu0 0.0
  %2727 = vmatpush2.msra.mxu0 %v2238
  %2728 = vmatprep.subr.mxu0 0.0
  %2729 = vmatpush2.msra.mxu0 %v2237
  %2730 = vmatprep.subr.mxu0 0.0
  %2731 = vmatpush2.msra.mxu0 %v2236
  %2732 = vmatprep.subr.mxu0 0.0
  %2733 = vmatpush2.msra.mxu0 %v2235
  %2734 = vmatprep.subr.mxu0 0.0
  %2735 = vmatpush2.msra.mxu0 %v2234
  %2736 = vmatprep.subr.mxu0 0.0
  %2737 = vmatpush2.msra.mxu0 %v2233
  %2738 = vmatprep.subr.mxu0 0.0
  %2739 = vmatpush2.msra.mxu0 %v2232
  %2740 = vmatprep.subr.mxu0 0.0
  %2741 = vmatpush2.msra.mxu0 %v2231
  %2742 = vmatprep.subr.mxu0 0.0
  %2743 = vmatpush2.msra.mxu0 %v2230
  %2744 = vmatprep.subr.mxu0 0.0
  %2745 = vmatpush2.msra.mxu0 %v2229
  %2746 = vmatprep.subr.mxu0 0.0
  %2747 = vmatpush2.msra.mxu0 %v2228
  %2748 = vmatprep.subr.mxu0 0.0
  %2749 = vmatpush2.msra.mxu0 %v2227
  %2750 = vmatprep.mubr.f32.mxu0 %v2665
  %2751 = vmatmul.mubr.f32.gmra.mxu0 %v2653
  %v2752 = vpop.f32.mrf.mxu0
  %v2753 = vadd.f32 0.0, %v2752
  %v2754 = vpop.f32.mrf.mxu0
  %2755 = vdwg.mxu0
  %2756 = vmatprep.subr.mxu0 0.0
  %2757 = vmatpush1.msra.mxu0 0.0
  %2758 = vmatprep.subr.mxu0 0.0
  %2759 = vmatpush1.msra.mxu0 0.0
  %2760 = vmatprep.subr.mxu0 0.0
  %2761 = vmatpush1.msra.mxu0 0.0
  %2762 = vmatprep.subr.mxu0 0.0
  %2763 = vmatpush1.msra.mxu0 0.0
  %2764 = vmatprep.subr.mxu0 0.0
  %2765 = vmatpush1.msra.mxu0 %v2254
  %2766 = vmatprep.subr.mxu0 0.0
  %2767 = vmatpush1.msra.mxu0 %v2253
  %2768 = vmatprep.subr.mxu0 0.0
  %2769 = vmatpush1.msra.mxu0 %v2252
  %2770 = vmatprep.subr.mxu0 0.0
  %2771 = vmatpush1.msra.mxu0 %v2251
  %2772 = vmatprep.subr.mxu0 0.0
  %2773 = vmatpush1.msra.mxu0 %v2250
  %2774 = vmatprep.subr.mxu0 0.0
  %2775 = vmatpush1.msra.mxu0 %v2249
  %2776 = vmatprep.subr.mxu0 0.0
  %2777 = vmatpush1.msra.mxu0 %v2248
  %2778 = vmatprep.subr.mxu0 0.0
  %2779 = vmatpush1.msra.mxu0 %v2247
  %2780 = vmatprep.subr.mxu0 0.0
  %2781 = vmatpush1.msra.mxu0 %v2246
  %2782 = vmatprep.subr.mxu0 0.0
  %2783 = vmatpush1.msra.mxu0 %v2245
  %2784 = vmatprep.subr.mxu0 0.0
  %2785 = vmatpush1.msra.mxu0 %v2244
  %2786 = vmatprep.subr.mxu0 0.0
  %2787 = vmatpush1.msra.mxu0 %v2243
  %2788 = vmatprep.subr.mxu0 0.0
  %2789 = vmatpush2.msra.mxu0 0.0
  %2790 = vmatprep.subr.mxu0 0.0
  %2791 = vmatpush2.msra.mxu0 0.0
  %2792 = vmatprep.subr.mxu0 0.0
  %2793 = vmatpush2.msra.mxu0 0.0
  %2794 = vmatprep.subr.mxu0 0.0
  %2795 = vmatpush2.msra.mxu0 0.0
  %2796 = vmatprep.subr.mxu0 0.0
  %2797 = vmatpush2.msra.mxu0 0.0
  %2798 = vmatprep.subr.mxu0 0.0
  %2799 = vmatpush2.msra.mxu0 0.0
  %2800 = vmatprep.subr.mxu0 0.0
  %2801 = vmatpush2.msra.mxu0 0.0
  %2802 = vmatprep.subr.mxu0 0.0
  %2803 = vmatpush2.msra.mxu0 0.0
  %2804 = vmatprep.subr.mxu0 0.0
  %2805 = vmatpush2.msra.mxu0 0.0
  %2806 = vmatprep.subr.mxu0 0.0
  %2807 = vmatpush2.msra.mxu0 0.0
  %2808 = vmatprep.subr.mxu0 0.0
  %2809 = vmatpush2.msra.mxu0 0.0
  %2810 = vmatprep.subr.mxu0 0.0
  %2811 = vmatpush2.msra.mxu0 0.0
  %2812 = vmatprep.subr.mxu0 0.0
  %2813 = vmatpush2.msra.mxu0 0.0
  %2814 = vmatprep.subr.mxu0 0.0
  %2815 = vmatpush2.msra.mxu0 0.0
  %2816 = vmatprep.subr.mxu0 0.0
  %2817 = vmatpush2.msra.mxu0 0.0
  %2818 = vmatprep.subr.mxu0 0.0
  %2819 = vmatpush2.msra.mxu0 0.0
  %2820 = vmatprep.mubr.f32.mxu0 0.0
  %2821 = vmatmul.mubr.f32.gmra.mxu0 %v2684
  %v2822 = vpop.f32.mrf.mxu0
  %v2823 = vadd.f32 %v2753, %v2822
  %v2824 = vpop.f32.mrf.mxu0
  %2825 = vdwg.mxu0
  %v2826 = vmul.f32 %v2823, 0.0010330578
  %v2827 = vadd.f32 %v2826, 1e-05
  %v2828 = vrsqrt.pop %v2827
  %v2829 = vmul.f32 %v2261, %v2828
  %v2831 = vsel %vm2449, %v2829, 0
  %2833 = vmatprep.subr.mxu0 0.0
  %2834 = vmatpush1.msra.mxu0 0.0
  %2835 = vmatprep.subr.mxu0 0.0
  %2836 = vmatpush1.msra.mxu0 0.0
  %2837 = vmatprep.subr.mxu0 0.0
  %2838 = vmatpush1.msra.mxu0 0.0
  %2839 = vmatprep.subr.mxu0 0.0
  %2840 = vmatpush1.msra.mxu0 0.0
  %2841 = vmatprep.subr.mxu0 0.0
  %2842 = vmatpush1.msra.mxu0 0.0
  %2843 = vmatprep.subr.mxu0 0.0
  %2844 = vmatpush1.msra.mxu0 0.0
  %2845 = vmatprep.subr.mxu0 0.0
  %2846 = vmatpush1.msra.mxu0 0.0
  %2847 = vmatprep.subr.mxu0 0.0
  %2848 = vmatpush1.msra.mxu0 0.0
  %2849 = vmatprep.subr.mxu0 0.0
  %2850 = vmatpush1.msra.mxu0 0.0
  %2851 = vmatprep.subr.mxu0 0.0
  %2852 = vmatpush1.msra.mxu0 0.0
  %2853 = vmatprep.subr.mxu0 0.0
  %2854 = vmatpush1.msra.mxu0 0.0
  %2855 = vmatprep.subr.mxu0 0.0
  %2856 = vmatpush1.msra.mxu0 0.0
  %2857 = vmatprep.subr.mxu0 0.0
  %2858 = vmatpush1.msra.mxu0 0.0
  %2859 = vmatprep.subr.mxu0 0.0
  %2860 = vmatpush1.msra.mxu0 0.0
  %2861 = vmatprep.subr.mxu0 %v2259
  %2862 = vmatpush1.msra.mxu0 %v2258
  %2863 = vmatprep.subr.mxu0 %v2256
  %2864 = vmatpush1.msra.mxu0 %v2255
  %2865 = vmatprep.subr.mxu0 0.0
  %2866 = vmatpush2.msra.mxu0 0.0
  %2867 = vmatprep.subr.mxu0 0.0
  %2868 = vmatpush2.msra.mxu0 0.0
  %2869 = vmatprep.subr.mxu0 0.0
  %2870 = vmatpush2.msra.mxu0 0.0
  %2871 = vmatprep.subr.mxu0 0.0
  %2872 = vmatpush2.msra.mxu0 0.0
  %2873 = vmatprep.subr.mxu0 0.0
  %2874 = vmatpush2.msra.mxu0 0.0
  %2875 = vmatprep.subr.mxu0 0.0
  %2876 = vmatpush2.msra.mxu0 0.0
  %2877 = vmatprep.subr.mxu0 0.0
  %2878 = vmatpush2.msra.mxu0 0.0
  %2879 = vmatprep.subr.mxu0 0.0
  %2880 = vmatpush2.msra.mxu0 0.0
  %2881 = vmatprep.subr.mxu0 0.0
  %2882 = vmatpush2.msra.mxu0 0.0
  %2883 = vmatprep.subr.mxu0 0.0
  %2884 = vmatpush2.msra.mxu0 0.0
  %2885 = vmatprep.subr.mxu0 0.0
  %2886 = vmatpush2.msra.mxu0 0.0
  %2887 = vmatprep.subr.mxu0 0.0
  %2888 = vmatpush2.msra.mxu0 0.0
  %2889 = vmatprep.subr.mxu0 0.0
  %2890 = vmatpush2.msra.mxu0 0.0
  %2891 = vmatprep.subr.mxu0 0.0
  %2892 = vmatpush2.msra.mxu0 0.0
  %2893 = vmatprep.subr.mxu0 0.0
  %2894 = vmatpush2.msra.mxu0 0.0
  %2895 = vmatprep.subr.mxu0 0.0
  %2896 = vmatpush2.msra.mxu0 0.0
  %2897 = vmatprep.mubr.f32.mxu0 0.0
  %2898 = vmatmul.mubr.f32.gmra.mxu0 %v2831
  %v2899 = vpop.f32.mrf.mxu0
  %v2900 = vadd.f32 0.0, %v2899
  %v2901 = vpop.f32.mrf.mxu0
  %v2902 = vadd.f32 0.0, %v2901
  %2903 = vdwg.mxu0
  %2904 = vmatprep.subr.mxu0 0.0
  %2905 = vmatpush1.msra.mxu0 0.0
  %2906 = vmatprep.subr.mxu0 0.0
  %2907 = vmatpush1.msra.mxu0 0.0
  %2908 = vmatprep.subr.mxu0 0.0
  %2909 = vmatpush1.msra.mxu0 0.0
  %2910 = vmatprep.subr.mxu0 0.0
  %2911 = vmatpush1.msra.mxu0 0.0
  %2912 = vmatprep.subr.mxu0 0.0
  %2913 = vmatpush1.msra.mxu0 0.0
  %2914 = vmatprep.subr.mxu0 0.0
  %2915 = vmatpush1.msra.mxu0 0.0
  %2916 = vmatprep.subr.mxu0 0.0
  %2917 = vmatpush1.msra.mxu0 0.0
  %2918 = vmatprep.subr.mxu0 0.0
  %2919 = vmatpush1.msra.mxu0 0.0
  %2920 = vmatprep.subr.mxu0 0.0
  %2921 = vmatpush1.msra.mxu0 0.0
  %2922 = vmatprep.subr.mxu0 0.0
  %2923 = vmatpush1.msra.mxu0 0.0
  %2924 = vmatprep.subr.mxu0 0.0
  %2925 = vmatpush1.msra.mxu0 0.0
  %2926 = vmatprep.subr.mxu0 0.0
  %2927 = vmatpush1.msra.mxu0 0.0
  %2928 = vmatprep.subr.mxu0 0.0
  %2929 = vmatpush1.msra.mxu0 0.0
  %2930 = vmatprep.subr.mxu0 0.0
  %2931 = vmatpush1.msra.mxu0 0.0
  %2932 = vmatprep.subr.mxu0 0.0
  %2933 = vmatpush1.msra.mxu0 %v2260
  %2934 = vmatprep.subr.mxu0 0.0
  %2935 = vmatpush1.msra.mxu0 %v2257
  %2936 = vmatprep.subr.mxu0 0.0
  %2937 = vmatpush2.msra.mxu0 0.0
  %2938 = vmatprep.subr.mxu0 0.0
  %2939 = vmatpush2.msra.mxu0 0.0
  %2940 = vmatprep.subr.mxu0 0.0
  %2941 = vmatpush2.msra.mxu0 0.0
  %2942 = vmatprep.subr.mxu0 0.0
  %2943 = vmatpush2.msra.mxu0 0.0
  %2944 = vmatprep.subr.mxu0 0.0
  %2945 = vmatpush2.msra.mxu0 0.0
  %2946 = vmatprep.subr.mxu0 0.0
  %2947 = vmatpush2.msra.mxu0 0.0
  %2948 = vmatprep.subr.mxu0 0.0
  %2949 = vmatpush2.msra.mxu0 0.0
  %2950 = vmatprep.subr.mxu0 0.0
  %2951 = vmatpush2.msra.mxu0 0.0
  %2952 = vmatprep.subr.mxu0 0.0
  %2953 = vmatpush2.msra.mxu0 0.0
  %2954 = vmatprep.subr.mxu0 0.0
  %2955 = vmatpush2.msra.mxu0 0.0
  %2956 = vmatprep.subr.mxu0 0.0
  %2957 = vmatpush2.msra.mxu0 0.0
  %2958 = vmatprep.subr.mxu0 0.0
  %2959 = vmatpush2.msra.mxu0 0.0
  %2960 = vmatprep.subr.mxu0 0.0
  %2961 = vmatpush2.msra.mxu0 0.0
  %2962 = vmatprep.subr.mxu0 0.0
  %2963 = vmatpush2.msra.mxu0 0.0
  %2964 = vmatprep.subr.mxu0 0.0
  %2965 = vmatpush2.msra.mxu0 0.0
  %2966 = vmatprep.subr.mxu0 0.0
  %2967 = vmatpush2.msra.mxu0 0.0
  %2968 = vmatprep.mubr.f32.mxu0 0.0
  %2969 = vmatmul.mubr.f32.gmra.mxu0 %v2831
  %v2970 = vpop.f32.mrf.mxu0
  %v2971 = vadd.f32 0.0, %v2970
  %v2972 = vpop.f32.mrf.mxu0
  %2973 = vdwg.mxu0
  %v2975 = vrot.slane %v2261, 1
  %v2976 = vsel %vm2449, %v2975, 0
  %2978 = vmatprep.subr.mxu0 0.0
  %2979 = vmatpush1.msra.mxu0 0.0
  %2980 = vmatprep.subr.mxu0 0.0
  %2981 = vmatpush1.msra.mxu0 0.0
  %2982 = vmatprep.subr.mxu0 0.0
  %2983 = vmatpush1.msra.mxu0 0.0
  %2984 = vmatprep.subr.mxu0 0.0
  %2985 = vmatpush1.msra.mxu0 0.0
  %2986 = vmatprep.subr.mxu0 0.0
  %2987 = vmatpush1.msra.mxu0 0.0
  %2988 = vmatprep.subr.mxu0 0.0
  %2989 = vmatpush1.msra.mxu0 0.0
  %2990 = vmatprep.subr.mxu0 0.0
  %2991 = vmatpush1.msra.mxu0 0.0
  %2992 = vmatprep.subr.mxu0 0.0
  %2993 = vmatpush1.msra.mxu0 0.0
  %2994 = vmatprep.subr.mxu0 0.0
  %2995 = vmatpush1.msra.mxu0 0.0
  %2996 = vmatprep.subr.mxu0 0.0
  %2997 = vmatpush1.msra.mxu0 0.0
  %2998 = vmatprep.subr.mxu0 0.0
  %2999 = vmatpush1.msra.mxu0 0.0
  %3000 = vmatprep.subr.mxu0 0.0
  %3001 = vmatpush1.msra.mxu0 0.0
  %3002 = vmatprep.subr.mxu0 0.0
  %3003 = vmatpush1.msra.mxu0 0.0
  %3004 = vmatprep.subr.mxu0 0.0
  %3005 = vmatpush1.msra.mxu0 0.0
  %3006 = vmatprep.subr.mxu0 %v2259
  %3007 = vmatpush1.msra.mxu0 %v2258
  %3008 = vmatprep.subr.mxu0 %v2256
  %3009 = vmatpush1.msra.mxu0 %v2255
  %3010 = vmatprep.subr.mxu0 0.0
  %3011 = vmatpush2.msra.mxu0 0.0
  %3012 = vmatprep.subr.mxu0 0.0
  %3013 = vmatpush2.msra.mxu0 0.0
  %3014 = vmatprep.subr.mxu0 0.0
  %3015 = vmatpush2.msra.mxu0 0.0
  %3016 = vmatprep.subr.mxu0 0.0
  %3017 = vmatpush2.msra.mxu0 0.0
  %3018 = vmatprep.subr.mxu0 0.0
  %3019 = vmatpush2.msra.mxu0 0.0
  %3020 = vmatprep.subr.mxu0 0.0
  %3021 = vmatpush2.msra.mxu0 0.0
  %3022 = vmatprep.subr.mxu0 0.0
  %3023 = vmatpush2.msra.mxu0 0.0
  %3024 = vmatprep.subr.mxu0 0.0
  %3025 = vmatpush2.msra.mxu0 0.0
  %3026 = vmatprep.subr.mxu0 0.0
  %3027 = vmatpush2.msra.mxu0 0.0
  %3028 = vmatprep.subr.mxu0 0.0
  %3029 = vmatpush2.msra.mxu0 0.0
  %3030 = vmatprep.subr.mxu0 0.0
  %3031 = vmatpush2.msra.mxu0 0.0
  %3032 = vmatprep.subr.mxu0 0.0
  %3033 = vmatpush2.msra.mxu0 0.0
  %3034 = vmatprep.subr.mxu0 0.0
  %3035 = vmatpush2.msra.mxu0 0.0
  %3036 = vmatprep.subr.mxu0 0.0
  %3037 = vmatpush2.msra.mxu0 0.0
  %3038 = vmatprep.subr.mxu0 0.0
  %3039 = vmatpush2.msra.mxu0 0.0
  %3040 = vmatprep.subr.mxu0 0.0
  %3041 = vmatpush2.msra.mxu0 0.0
  %3042 = vmatprep.mubr.f32.mxu0 0.0
  %3043 = vmatmul.mubr.f32.gmra.mxu0 %v2976
  %v3044 = vpop.f32.mrf.mxu0
  %v3045 = vadd.f32 0.0, %v3044
  %v3046 = vpop.f32.mrf.mxu0
  %v3047 = vadd.f32 0.0, %v3046
  %3048 = vdwg.mxu0
  %3049 = vmatprep.subr.mxu0 0.0
  %3050 = vmatpush1.msra.mxu0 0.0
  %3051 = vmatprep.subr.mxu0 0.0
  %3052 = vmatpush1.msra.mxu0 0.0
  %3053 = vmatprep.subr.mxu0 0.0
  %3054 = vmatpush1.msra.mxu0 0.0
  %3055 = vmatprep.subr.mxu0 0.0
  %3056 = vmatpush1.msra.mxu0 0.0
  %3057 = vmatprep.subr.mxu0 0.0
  %3058 = vmatpush1.msra.mxu0 0.0
  %3059 = vmatprep.subr.mxu0 0.0
  %3060 = vmatpush1.msra.mxu0 0.0
  %3061 = vmatprep.subr.mxu0 0.0
  %3062 = vmatpush1.msra.mxu0 0.0
  %3063 = vmatprep.subr.mxu0 0.0
  %3064 = vmatpush1.msra.mxu0 0.0
  %3065 = vmatprep.subr.mxu0 0.0
  %3066 = vmatpush1.msra.mxu0 0.0
  %3067 = vmatprep.subr.mxu0 0.0
  %3068 = vmatpush1.msra.mxu0 0.0
  %3069 = vmatprep.subr.mxu0 0.0
  %3070 = vmatpush1.msra.mxu0 0.0
  %3071 = vmatprep.subr.mxu0 0.0
  %3072 = vmatpush1.msra.mxu0 0.0
  %3073 = vmatprep.subr.mxu0 0.0
  %3074 = vmatpush1.msra.mxu0 0.0
  %3075 = vmatprep.subr.mxu0 0.0
  %3076 = vmatpush1.msra.mxu0 0.0
  %3077 = vmatprep.subr.mxu0 0.0
  %3078 = vmatpush1.msra.mxu0 %v2260
  %3079 = vmatprep.subr.mxu0 0.0
  %3080 = vmatpush1.msra.mxu0 %v2257
  %3081 = vmatprep.subr.mxu0 0.0
  %3082 = vmatpush2.msra.mxu0 0.0
  %3083 = vmatprep.subr.mxu0 0.0
  %3084 = vmatpush2.msra.mxu0 0.0
  %3085 = vmatprep.subr.mxu0 0.0
  %3086 = vmatpush2.msra.mxu0 0.0
  %3087 = vmatprep.subr.mxu0 0.0
  %3088 = vmatpush2.msra.mxu0 0.0
  %3089 = vmatprep.subr.mxu0 0.0
  %3090 = vmatpush2.msra.mxu0 0.0
  %3091 = vmatprep.subr.mxu0 0.0
  %3092 = vmatpush2.msra.mxu0 0.0
  %3093 = vmatprep.subr.mxu0 0.0
  %3094 = vmatpush2.msra.mxu0 0.0
  %3095 = vmatprep.subr.mxu0 0.0
  %3096 = vmatpush2.msra.mxu0 0.0
  %3097 = vmatprep.subr.mxu0 0.0
  %3098 = vmatpush2.msra.mxu0 0.0
  %3099 = vmatprep.subr.mxu0 0.0
  %3100 = vmatpush2.msra.mxu0 0.0
  %3101 = vmatprep.subr.mxu0 0.0
  %3102 = vmatpush2.msra.mxu0 0.0
  %3103 = vmatprep.subr.mxu0 0.0
  %3104 = vmatpush2.msra.mxu0 0.0
  %3105 = vmatprep.subr.mxu0 0.0
  %3106 = vmatpush2.msra.mxu0 0.0
  %3107 = vmatprep.subr.mxu0 0.0
  %3108 = vmatpush2.msra.mxu0 0.0
  %3109 = vmatprep.subr.mxu0 0.0
  %3110 = vmatpush2.msra.mxu0 0.0
  %3111 = vmatprep.subr.mxu0 0.0
  %3112 = vmatpush2.msra.mxu0 0.0
  %3113 = vmatprep.mubr.f32.mxu0 0.0
  %3114 = vmatmul.mubr.f32.gmra.mxu0 %v2976
  %v3115 = vpop.f32.mrf.mxu0
  %v3116 = vadd.f32 0.0, %v3115
  %v3117 = vpop.f32.mrf.mxu0
  %3118 = vdwg.mxu0
  %v3119 = vlaneseq
  %v3120 = vshrl.u32 %v3119, 7
  %v3121 = vsub.s32 0, %v3120
  %v3122 = vrot.slane %v2900, %v3121
  %v3123 = vlaneseq
  %v3124 = vshrl.u32 %v3123, 7
  %v3125 = vsub.s32 0, %v3124
  %v3126 = vrot.slane %v2902, %v3125
  %v3127 = vlaneseq
  %v3128 = vshrl.u32 %v3127, 7
  %v3129 = vsub.s32 0, %v3128
  %v3130 = vrot.slane %v2971, %v3129
  %v3131 = vmul.f32 %v2606, %v3122
  %v3132 = vmul.f32 %v2607, %v3126
  %v3133 = vmul.f32 %v2608, %v3130
  %v3134 = vmul.f32 %v2609, %v3122
  %v3135 = vmul.f32 %v2610, %v3126
  %v3136 = vmul.f32 %v2611, %v3130
  %v3137 = vmul.f32 %v2612, %v3122
  %v3138 = vmul.f32 %v2613, %v3126
  %v3139 = vmul.f32 %v2614, %v3130
  %v3140 = vmul.f32 %v2615, %v3122
  %v3141 = vmul.f32 %v2616, %v3126
  %v3142 = vmul.f32 %v2617, %v3130
  %v3143 = vmul.f32 %v2618, %v3122
  %v3144 = vmul.f32 %v2619, %v3126
  %v3145 = vmul.f32 %v2620, %v3130
  %v3146 = vmul.f32 %v2621, %v3122
  %v3147 = vmul.f32 %v2622, %v3126
  %v3148 = vmul.f32 %v2623, %v3130
  %v3149 = vlaneseq
  %v3150 = vshrl.u32 %v3149, 7
  %v3151 = vsub.s32 0, %v3150
  %v3152 = vrot.slane %v3045, %v3151
  %v3153 = vlaneseq
  %v3154 = vshrl.u32 %v3153, 7
  %v3155 = vsub.s32 0, %v3154
  %v3156 = vrot.slane %v3047, %v3155
  %v3157 = vlaneseq
  %v3158 = vshrl.u32 %v3157, 7
  %v3159 = vsub.s32 0, %v3158
  %v3160 = vrot.slane %v3116, %v3159
  %v3161 = vadd.f32 %v3131, %v3152
  %v3162 = vadd.f32 %v3132, %v3156
  %v3163 = vadd.f32 %v3133, %v3160
  %v3164 = vadd.f32 %v3134, %v3152
  %v3165 = vadd.f32 %v3135, %v3156
  %v3166 = vadd.f32 %v3136, %v3160
  %v3167 = vadd.f32 %v3137, %v3152
  %v3168 = vadd.f32 %v3138, %v3156
  %v3169 = vadd.f32 %v3139, %v3160
  %v3170 = vadd.f32 %v3140, %v3152
  %v3171 = vadd.f32 %v3141, %v3156
  %v3172 = vadd.f32 %v3142, %v3160
  %v3173 = vadd.f32 %v3143, %v3152
  %v3174 = vadd.f32 %v3144, %v3156
  %v3175 = vadd.f32 %v3145, %v3160
  %v3176 = vadd.f32 %v3146, %v3152
  %v3177 = vadd.f32 %v3147, %v3156
  %v3178 = vadd.f32 %v3148, %v3160
  %v3179 = vld [vmem:[%s6] sm:$0xff]
  %v3180 = vld [vmem:[%s6 + $0x8] sm:$0xff]
  %v3181 = vld [vmem:[%s6 + $0x10] sm:$0x3]
  %vm3182 = vcmask 359424
  %v3184 = vsel %vm3182, %v3179, 0
  %v3187 = vsel %vm3182, %v3180, 0
  %v3190 = vsel %vm3182, %v3181, 0
  %v3193 = vsel %vm2266, %v3176, 0
  %v3196 = vsel %vm2266, %v3177, 0
  %v3199 = vsel %vm2266, %v3178, 0
  %3201 = vmatprep.subr.mxu0 0.0
  %3202 = vmatpush1.msra.mxu0 0.0
  %3203 = vmatprep.subr.mxu0 0.0
  %3204 = vmatpush1.msra.mxu0 0.0
  %3205 = vmatprep.subr.mxu0 0.0
  %3206 = vmatpush1.msra.mxu0 0.0
  %3207 = vmatprep.subr.mxu0 0.0
  %3208 = vmatpush1.msra.mxu0 0.0
  %3209 = vmatprep.subr.mxu0 0.0
  %3210 = vmatpush1.msra.mxu0 0.0
  %3211 = vmatprep.subr.mxu0 0.0
  %3212 = vmatpush1.msra.mxu0 0.0
  %3213 = vmatprep.subr.mxu0 0.0
  %3214 = vmatpush1.msra.mxu0 0.0
  %3215 = vmatprep.subr.mxu0 0.0
  %3216 = vmatpush1.msra.mxu0 0.0
  %3217 = vmatprep.subr.mxu0 0.0
  %3218 = vmatpush1.msra.mxu0 0.0
  %3219 = vmatprep.subr.mxu0 0.0
  %3220 = vmatpush1.msra.mxu0 0.0
  %3221 = vmatprep.subr.mxu0 %v3196
  %3222 = vmatpush1.msra.mxu0 %v3193
  %3223 = vmatprep.subr.mxu0 %v3174
  %3224 = vmatpush1.msra.mxu0 %v3173
  %3225 = vmatprep.subr.mxu0 %v3171
  %3226 = vmatpush1.msra.mxu0 %v3170
  %3227 = vmatprep.subr.mxu0 %v3168
  %3228 = vmatpush1.msra.mxu0 %v3167
  %3229 = vmatprep.subr.mxu0 %v3165
  %3230 = vmatpush1.msra.mxu0 %v3164
  %3231 = vmatprep.subr.mxu0 %v3162
  %3232 = vmatpush1.msra.mxu0 %v3161
  %3233 = vmatprep.subr.mxu0 0.0
  %3234 = vmatpush2.msra.mxu0 0.0
  %3235 = vmatprep.subr.mxu0 0.0
  %3236 = vmatpush2.msra.mxu0 0.0
  %3237 = vmatprep.subr.mxu0 0.0
  %3238 = vmatpush2.msra.mxu0 0.0
  %3239 = vmatprep.subr.mxu0 0.0
  %3240 = vmatpush2.msra.mxu0 0.0
  %3241 = vmatprep.subr.mxu0 0.0
  %3242 = vmatpush2.msra.mxu0 0.0
  %3243 = vmatprep.subr.mxu0 0.0
  %3244 = vmatpush2.msra.mxu0 0.0
  %3245 = vmatprep.subr.mxu0 0.0
  %3246 = vmatpush2.msra.mxu0 0.0
  %3247 = vmatprep.subr.mxu0 0.0
  %3248 = vmatpush2.msra.mxu0 0.0
  %3249 = vmatprep.subr.mxu0 0.0
  %3250 = vmatpush2.msra.mxu0 0.0
  %3251 = vmatprep.subr.mxu0 0.0
  %3252 = vmatpush2.msra.mxu0 0.0
  %3253 = vmatprep.subr.mxu0 0.0
  %3254 = vmatpush2.msra.mxu0 0.0
  %3255 = vmatprep.subr.mxu0 0.0
  %3256 = vmatpush2.msra.mxu0 0.0
  %3257 = vmatprep.subr.mxu0 0.0
  %3258 = vmatpush2.msra.mxu0 0.0
  %3259 = vmatprep.subr.mxu0 0.0
  %3260 = vmatpush2.msra.mxu0 0.0
  %3261 = vmatprep.subr.mxu0 0.0
  %3262 = vmatpush2.msra.mxu0 0.0
  %3263 = vmatprep.subr.mxu0 0.0
  %3264 = vmatpush2.msra.mxu0 0.0
  %3265 = vmatprep.mubr.f32.mxu0 0.0
  %3266 = vmatmul.mubr.f32.gmra.mxu0 %v3184
  %v3267 = vpop.f32.mrf.mxu0
  %v3268 = vadd.f32 0.0, %v3267
  %v3269 = vpop.f32.mrf.mxu0
  %v3270 = vadd.f32 0.0, %v3269
  %3271 = vmatprep.mubr.f32.mxu0 0.0
  %3272 = vmatmul.mubr.f32.gmra.mxu0 %v3187
  %v3273 = vpop.f32.mrf.mxu0
  %v3274 = vadd.f32 0.0, %v3273
  %v3275 = vpop.f32.mrf.mxu0
  %v3276 = vadd.f32 0.0, %v3275
  %3277 = vmatprep.mubr.f32.mxu0 0.0
  %3278 = vmatmul.mubr.f32.gmra.mxu0 %v3190
  %v3279 = vpop.f32.mrf.mxu0
  %v3280 = vadd.f32 0.0, %v3279
  %v3281 = vpop.f32.mrf.mxu0
  %v3282 = vadd.f32 0.0, %v3281
  %3283 = vdwg.mxu0
  %3284 = vmatprep.subr.mxu0 0.0
  %3285 = vmatpush1.msra.mxu0 0.0
  %3286 = vmatprep.subr.mxu0 0.0
  %3287 = vmatpush1.msra.mxu0 0.0
  %3288 = vmatprep.subr.mxu0 0.0
  %3289 = vmatpush1.msra.mxu0 0.0
  %3290 = vmatprep.subr.mxu0 0.0
  %3291 = vmatpush1.msra.mxu0 0.0
  %3292 = vmatprep.subr.mxu0 0.0
  %3293 = vmatpush1.msra.mxu0 0.0
  %3294 = vmatprep.subr.mxu0 0.0
  %3295 = vmatpush1.msra.mxu0 0.0
  %3296 = vmatprep.subr.mxu0 0.0
  %3297 = vmatpush1.msra.mxu0 0.0
  %3298 = vmatprep.subr.mxu0 0.0
  %3299 = vmatpush1.msra.mxu0 0.0
  %3300 = vmatprep.subr.mxu0 0.0
  %3301 = vmatpush1.msra.mxu0 0.0
  %3302 = vmatprep.subr.mxu0 0.0
  %3303 = vmatpush1.msra.mxu0 0.0
  %3304 = vmatprep.subr.mxu0 0.0
  %3305 = vmatpush1.msra.mxu0 %v3199
  %3306 = vmatprep.subr.mxu0 0.0
  %3307 = vmatpush1.msra.mxu0 %v3175
  %3308 = vmatprep.subr.mxu0 0.0
  %3309 = vmatpush1.msra.mxu0 %v3172
  %3310 = vmatprep.subr.mxu0 0.0
  %3311 = vmatpush1.msra.mxu0 %v3169
  %3312 = vmatprep.subr.mxu0 0.0
  %3313 = vmatpush1.msra.mxu0 %v3166
  %3314 = vmatprep.subr.mxu0 0.0
  %3315 = vmatpush1.msra.mxu0 %v3163
  %3316 = vmatprep.subr.mxu0 0.0
  %3317 = vmatpush2.msra.mxu0 0.0
  %3318 = vmatprep.subr.mxu0 0.0
  %3319 = vmatpush2.msra.mxu0 0.0
  %3320 = vmatprep.subr.mxu0 0.0
  %3321 = vmatpush2.msra.mxu0 0.0
  %3322 = vmatprep.subr.mxu0 0.0
  %3323 = vmatpush2.msra.mxu0 0.0
  %3324 = vmatprep.subr.mxu0 0.0
  %3325 = vmatpush2.msra.mxu0 0.0
  %3326 = vmatprep.subr.mxu0 0.0
  %3327 = vmatpush2.msra.mxu0 0.0
  %3328 = vmatprep.subr.mxu0 0.0
  %3329 = vmatpush2.msra.mxu0 0.0
  %3330 = vmatprep.subr.mxu0 0.0
  %3331 = vmatpush2.msra.mxu0 0.0
  %3332 = vmatprep.subr.mxu0 0.0
  %3333 = vmatpush2.msra.mxu0 0.0
  %3334 = vmatprep.subr.mxu0 0.0
  %3335 = vmatpush2.msra.mxu0 0.0
  %3336 = vmatprep.subr.mxu0 0.0
  %3337 = vmatpush2.msra.mxu0 0.0
  %3338 = vmatprep.subr.mxu0 0.0
  %3339 = vmatpush2.msra.mxu0 0.0
  %3340 = vmatprep.subr.mxu0 0.0
  %3341 = vmatpush2.msra.mxu0 0.0
  %3342 = vmatprep.subr.mxu0 0.0
  %3343 = vmatpush2.msra.mxu0 0.0
  %3344 = vmatprep.subr.mxu0 0.0
  %3345 = vmatpush2.msra.mxu0 0.0
  %3346 = vmatprep.subr.mxu0 0.0
  %3347 = vmatpush2.msra.mxu0 0.0
  %3348 = vmatprep.mubr.f32.mxu0 0.0
  %3349 = vmatmul.mubr.f32.gmra.mxu0 %v3184
  %v3350 = vpop.f32.mrf.mxu0
  %v3351 = vadd.f32 0.0, %v3350
  %v3352 = vpop.f32.mrf.mxu0
  %3353 = vmatprep.mubr.f32.mxu0 0.0
  %3354 = vmatmul.mubr.f32.gmra.mxu0 %v3187
  %v3355 = vpop.f32.mrf.mxu0
  %v3356 = vadd.f32 0.0, %v3355
  %v3357 = vpop.f32.mrf.mxu0
  %3358 = vmatprep.mubr.f32.mxu0 0.0
  %3359 = vmatmul.mubr.f32.gmra.mxu0 %v3190
  %v3360 = vpop.f32.mrf.mxu0
  %v3361 = vadd.f32 0.0, %v3360
  %v3362 = vpop.f32.mrf.mxu0
  %3363 = vdwg.mxu0
  %v3364 = vld [vmem:[%s7] sm:$0xff]
  %v3365 = vld [vmem:[%s7 + $0x8] sm:$0xff]
  %v3366 = vld [vmem:[%s7 + $0x10] sm:$0xff]
  %v3367 = vld [vmem:[%s7 + $0x18] sm:$0xff]
  %v3368 = vld [vmem:[%s7 + $0x20] sm:$0xff]
  %v3369 = vld [vmem:[%s7 + $0x28] sm:$0xff]
  %v3370 = vld [vmem:[%s7 + $0x30] sm:$0xff]
  %v3371 = vld [vmem:[%s7 + $0x38] sm:$0xff]
  %v3372 = vld [vmem:[%s7 + $0x40] sm:$0xff]
  %v3373 = vld [vmem:[%s7 + $0x48] sm:$0xff]
  %v3374 = vld [vmem:[%s7 + $0x50] sm:$0xff]
  %v3375 = vld [vmem:[%s7 + $0x58] sm:$0xff]
  %v3376 = vld [vmem:[%s7 + $0x60] sm:$0xff]
  %v3377 = vld [vmem:[%s7 + $0x68] sm:$0xff]
  %v3378 = vld [vmem:[%s7 + $0x70] sm:$0xff]
  %v3379 = vld [vmem:[%s7 + $0x78] sm:$0xff]
  %v3380 = vld [vmem:[%s7 + $0x80] sm:$0xff]
  %v3381 = vld [vmem:[%s7 + $0x88] sm:$0xff]
  %v3382 = vld [vmem:[%s7 + $0x90] sm:$0xff]
  %v3383 = vld [vmem:[%s7 + $0x98] sm:$0xff]
  %v3384 = vld [vmem:[%s7 + $0xa0] sm:$0xff]
  %v3385 = vld [vmem:[%s7 + $0xa8] sm:$0xff]
  %v3386 = vld [vmem:[%s7 + $0xb0] sm:$0xff]
  %v3387 = vld [vmem:[%s7 + $0xb8] sm:$0xff]
  %v3388 = vld [vmem:[%s7 + $0xc0] sm:$0xff]
  %v3389 = vld [vmem:[%s7 + $0xc8] sm:$0xff]
  %v3390 = vld [vmem:[%s7 + $0xd0] sm:$0xff]
  %v3391 = vld [vmem:[%s7 + $0xd8] sm:$0xff]
  %v3392 = vld [vmem:[%s7 + $0xe0] sm:$0xff]
  %v3393 = vld [vmem:[%s7 + $0xe8] sm:$0xff]
  %v3394 = vld [vmem:[%s7 + $0xf0] sm:$0xff]
  %v3395 = vld [vmem:[%s7 + $0xf8] sm:$0xff]
  %v3396 = vld [vmem:[%s7 + $0x100] sm:$0xff]
  %v3397 = vld [vmem:[%s7 + $0x108] sm:$0xff]
  %v3398 = vld [vmem:[%s7 + $0x110] sm:$0xff]
  %v3399 = vld [vmem:[%s7 + $0x118] sm:$0xff]
  %v3400 = vld [vmem:[%s7 + $0x120] sm:$0xff]
  %v3401 = vld [vmem:[%s7 + $0x128] sm:$0xff]
  %v3402 = vld [vmem:[%s7 + $0x130] sm:$0xff]
  %v3403 = vld [vmem:[%s7 + $0x138] sm:$0xff]
  %v3404 = vld [vmem:[%s7 + $0x140] sm:$0xff]
  %v3405 = vld [vmem:[%s7 + $0x148] sm:$0xff]
  %v3406 = vld [vmem:[%s7 + $0x150] sm:$0xff]
  %v3407 = vld [vmem:[%s7 + $0x158] sm:$0xff]
  %v3408 = vld [vmem:[%s7 + $0x160] sm:$0xff]
  %v3409 = vld [vmem:[%s7 + $0x168] sm:$0xff]
  %v3410 = vld [vmem:[%s7 + $0x170] sm:$0xff]
  %v3411 = vld [vmem:[%s7 + $0x178] sm:$0xff]
  %v3412 = vld [vmem:[%s7 + $0x180] sm:$0xff]
  %v3413 = vld [vmem:[%s7 + $0x188] sm:$0xff]
  %v3414 = vld [vmem:[%s7 + $0x190] sm:$0xff]
  %v3415 = vld [vmem:[%s7 + $0x198] sm:$0xff]
  %v3416 = vld [vmem:[%s7 + $0x1a0] sm:$0xff]
  %v3417 = vld [vmem:[%s7 + $0x1a8] sm:$0xff]
  %v3418 = vld [vmem:[%s7 + $0x1b0] sm:$0xff]
  %v3419 = vld [vmem:[%s7 + $0x1b8] sm:$0xff]
  %v3420 = vld [vmem:[%s7 + $0x1c0] sm:$0xff]
  %v3421 = vld [vmem:[%s7 + $0x1c8] sm:$0xff]
  %v3422 = vld [vmem:[%s7 + $0x1d0] sm:$0xff]
  %v3423 = vld [vmem:[%s7 + $0x1d8] sm:$0xff]
  %v3424 = vld [vmem:[%s7 + $0x1e0] sm:$0xff]
  %v3425 = vld [vmem:[%s7 + $0x1e8] sm:$0xff]
  %v3426 = vld [vmem:[%s7 + $0x1f0] sm:$0xff]
  %v3427 = vld [vmem:[%s7 + $0x1f8] sm:$0xff]
  %v3428 = vld [vmem:[%s7 + $0x200] sm:$0xff]
  %v3429 = vld [vmem:[%s7 + $0x208] sm:$0xff]
  %v3430 = vld [vmem:[%s7 + $0x210] sm:$0xff]
  %v3431 = vld [vmem:[%s7 + $0x218] sm:$0xff]
  %v3432 = vld [vmem:[%s7 + $0x220] sm:$0xff]
  %v3433 = vld [vmem:[%s7 + $0x228] sm:$0xff]
  %v3434 = vld [vmem:[%s7 + $0x230] sm:$0xff]
  %v3435 = vld [vmem:[%s7 + $0x238] sm:$0xff]
  %v3436 = vld [vmem:[%s7 + $0x240] sm:$0xff]
  %v3437 = vld [vmem:[%s7 + $0x248] sm:$0xff]
  %v3438 = vld [vmem:[%s7 + $0x250] sm:$0xff]
  %v3439 = vld [vmem:[%s7 + $0x258] sm:$0xff]
  %v3440 = vld [vmem:[%s7 + $0x260] sm:$0xff]
  %v3441 = vld [vmem:[%s7 + $0x268] sm:$0xff]
  %v3442 = vld [vmem:[%s7 + $0x270] sm:$0xff]
  %v3443 = vld [vmem:[%s7 + $0x278] sm:$0xff]
  %v3444 = vld [vmem:[%s7 + $0x280] sm:$0xff]
  %v3445 = vld [vmem:[%s7 + $0x288] sm:$0xff]
  %v3446 = vld [vmem:[%s7 + $0x290] sm:$0xff]
  %v3447 = vld [vmem:[%s7 + $0x298] sm:$0xff]
  %v3448 = vld [vmem:[%s7 + $0x2a0] sm:$0xff]
  %v3449 = vld [vmem:[%s7 + $0x2a8] sm:$0xff]
  %v3450 = vld [vmem:[%s7 + $0x2b0] sm:$0xff]
  %v3451 = vld [vmem:[%s7 + $0x2b8] sm:$0xff]
  %v3452 = vld [vmem:[%s7 + $0x2c0] sm:$0xff]
  %v3453 = vld [vmem:[%s7 + $0x2c8] sm:$0xff]
  %v3454 = vld [vmem:[%s7 + $0x2d0] sm:$0xff]
  %v3455 = vld [vmem:[%s7 + $0x2d8] sm:$0xff]
  %v3456 = vld [vmem:[%s7 + $0x2e0] sm:$0xff]
  %v3457 = vld [vmem:[%s7 + $0x2e8] sm:$0xff]
  %v3458 = vld [vmem:[%s7 + $0x2f0] sm:$0xff]
  %v3459 = vld [vmem:[%s7 + $0x2f8] sm:$0xff]
  %v3460 = vld [vmem:[%s7 + $0x300] sm:$0xff]
  %v3461 = vld [vmem:[%s7 + $0x308] sm:$0xff]
  %v3462 = vld [vmem:[%s7 + $0x310] sm:$0xff]
  %v3463 = vld [vmem:[%s7 + $0x318] sm:$0xff]
  %v3464 = vld [vmem:[%s7 + $0x320] sm:$0xff]
  %v3465 = vld [vmem:[%s7 + $0x328] sm:$0xff]
  %v3466 = vld [vmem:[%s7 + $0x330] sm:$0xff]
  %v3467 = vld [vmem:[%s7 + $0x338] sm:$0xff]
  %v3468 = vld [vmem:[%s7 + $0x340] sm:$0xff]
  %v3469 = vld [vmem:[%s7 + $0x348] sm:$0xff]
  %v3470 = vld [vmem:[%s7 + $0x350] sm:$0xff]
  %v3471 = vld [vmem:[%s7 + $0x358] sm:$0xff]
  %v3472 = vld [vmem:[%s7 + $0x360] sm:$0xff]
  %v3473 = vld [vmem:[%s7 + $0x368] sm:$0xff]
  %v3474 = vld [vmem:[%s7 + $0x370] sm:$0xff]
  %v3475 = vld [vmem:[%s7 + $0x378] sm:$0xff]
  %v3476 = vld [vmem:[%s7 + $0x380] sm:$0xff]
  %v3477 = vld [vmem:[%s7 + $0x388] sm:$0xff]
  %v3478 = vld [vmem:[%s7 + $0x390] sm:$0xff]
  %v3479 = vld [vmem:[%s7 + $0x398] sm:$0xff]
  %v3480 = vld [vmem:[%s7 + $0x3a0] sm:$0xff]
  %v3481 = vld [vmem:[%s7 + $0x3a8] sm:$0xff]
  %v3482 = vld [vmem:[%s7 + $0x3b0] sm:$0xff]
  %v3483 = vld [vmem:[%s7 + $0x3b8] sm:$0xff]
  %v3484 = vld [vmem:[%s7 + $0x3c0] sm:$0xff]
  %v3485 = vld [vmem:[%s7 + $0x3c8] sm:$0xff]
  %v3486 = vld [vmem:[%s7 + $0x3d0] sm:$0xff]
  %v3487 = vld [vmem:[%s7 + $0x3d8] sm:$0xff]
  %v3488 = vld [vmem:[%s7 + $0x3e0] sm:$0xff]
  %v3489 = vld [vmem:[%s7 + $0x3e8] sm:$0xff]
  %v3490 = vld [vmem:[%s7 + $0x3f0] sm:$0xff]
  %v3491 = vld [vmem:[%s7 + $0x3f8] sm:$0xff]
  %v3492 = vld [vmem:[%s7 + $0x400] sm:$0xff]
  %v3493 = vld [vmem:[%s7 + $0x408] sm:$0xff]
  %v3494 = vld [vmem:[%s7 + $0x410] sm:$0xff]
  %v3495 = vld [vmem:[%s7 + $0x418] sm:$0xff]
  %s3496 = scalar_lea.vmem %s6, 24
  %v3497 = vld [vmem:[%s3496] sm:$0xff]
  %v3498 = vld [vmem:[%s3496 + $0x8] sm:$0xff]
  %v3499 = vld [vmem:[%s3496 + $0x10] sm:$0x3]
  %v3501 = vsel %vm3182, %v3497, 0
  %v3504 = vsel %vm3182, %v3498, 0
  %v3507 = vsel %vm3182, %v3499, 0
  %3509 = vmatprep.subr.mxu0 0.0
  %3510 = vmatpush1.msra.mxu0 0.0
  %3511 = vmatprep.subr.mxu0 0.0
  %3512 = vmatpush1.msra.mxu0 0.0
  %3513 = vmatprep.subr.mxu0 0.0
  %3514 = vmatpush1.msra.mxu0 0.0
  %3515 = vmatprep.subr.mxu0 0.0
  %3516 = vmatpush1.msra.mxu0 0.0
  %3517 = vmatprep.subr.mxu0 0.0
  %3518 = vmatpush1.msra.mxu0 0.0
  %3519 = vmatprep.subr.mxu0 0.0
  %3520 = vmatpush1.msra.mxu0 0.0
  %3521 = vmatprep.subr.mxu0 0.0
  %3522 = vmatpush1.msra.mxu0 0.0
  %3523 = vmatprep.subr.mxu0 0.0
  %3524 = vmatpush1.msra.mxu0 0.0
  %3525 = vmatprep.subr.mxu0 0.0
  %3526 = vmatpush1.msra.mxu0 0.0
  %3527 = vmatprep.subr.mxu0 0.0
  %3528 = vmatpush1.msra.mxu0 0.0
  %3529 = vmatprep.subr.mxu0 %v3196
  %3530 = vmatpush1.msra.mxu0 %v3193
  %3531 = vmatprep.subr.mxu0 %v3174
  %3532 = vmatpush1.msra.mxu0 %v3173
  %3533 = vmatprep.subr.mxu0 %v3171
  %3534 = vmatpush1.msra.mxu0 %v3170
  %3535 = vmatprep.subr.mxu0 %v3168
  %3536 = vmatpush1.msra.mxu0 %v3167
  %3537 = vmatprep.subr.mxu0 %v3165
  %3538 = vmatpush1.msra.mxu0 %v3164
  %3539 = vmatprep.subr.mxu0 %v3162
  %3540 = vmatpush1.msra.mxu0 %v3161
  %3541 = vmatprep.subr.mxu0 0.0
  %3542 = vmatpush2.msra.mxu0 0.0
  %3543 = vmatprep.subr.mxu0 0.0
  %3544 = vmatpush2.msra.mxu0 0.0
  %3545 = vmatprep.subr.mxu0 0.0
  %3546 = vmatpush2.msra.mxu0 0.0
  %3547 = vmatprep.subr.mxu0 0.0
  %3548 = vmatpush2.msra.mxu0 0.0
  %3549 = vmatprep.subr.mxu0 0.0
  %3550 = vmatpush2.msra.mxu0 0.0
  %3551 = vmatprep.subr.mxu0 0.0
  %3552 = vmatpush2.msra.mxu0 0.0
  %3553 = vmatprep.subr.mxu0 0.0
  %3554 = vmatpush2.msra.mxu0 0.0
  %3555 = vmatprep.subr.mxu0 0.0
  %3556 = vmatpush2.msra.mxu0 0.0
  %3557 = vmatprep.subr.mxu0 0.0
  %3558 = vmatpush2.msra.mxu0 0.0
  %3559 = vmatprep.subr.mxu0 0.0
  %3560 = vmatpush2.msra.mxu0 0.0
  %3561 = vmatprep.subr.mxu0 0.0
  %3562 = vmatpush2.msra.mxu0 0.0
  %3563 = vmatprep.subr.mxu0 0.0
  %3564 = vmatpush2.msra.mxu0 0.0
  %3565 = vmatprep.subr.mxu0 0.0
  %3566 = vmatpush2.msra.mxu0 0.0
  %3567 = vmatprep.subr.mxu0 0.0
  %3568 = vmatpush2.msra.mxu0 0.0
  %3569 = vmatprep.subr.mxu0 0.0
  %3570 = vmatpush2.msra.mxu0 0.0
  %3571 = vmatprep.subr.mxu0 0.0
  %3572 = vmatpush2.msra.mxu0 0.0
  %3573 = vmatprep.mubr.f32.mxu0 0.0
  %3574 = vmatmul.mubr.f32.gmra.mxu0 %v3501
  %v3575 = vpop.f32.mrf.mxu0
  %v3576 = vadd.f32 0.0, %v3575
  %v3577 = vpop.f32.mrf.mxu0
  %v3578 = vadd.f32 0.0, %v3577
  %3579 = vmatprep.mubr.f32.mxu0 0.0
  %3580 = vmatmul.mubr.f32.gmra.mxu0 %v3504
  %v3581 = vpop.f32.mrf.mxu0
  %v3582 = vadd.f32 0.0, %v3581
  %v3583 = vpop.f32.mrf.mxu0
  %v3584 = vadd.f32 0.0, %v3583
  %3585 = vmatprep.mubr.f32.mxu0 0.0
  %3586 = vmatmul.mubr.f32.gmra.mxu0 %v3507
  %v3587 = vpop.f32.mrf.mxu0
  %v3588 = vadd.f32 0.0, %v3587
  %v3589 = vpop.f32.mrf.mxu0
  %v3590 = vadd.f32 0.0, %v3589
  %3591 = vdwg.mxu0
  %3592 = vmatprep.subr.mxu0 0.0
  %3593 = vmatpush1.msra.mxu0 0.0
  %3594 = vmatprep.subr.mxu0 0.0
  %3595 = vmatpush1.msra.mxu0 0.0
  %3596 = vmatprep.subr.mxu0 0.0
  %3597 = vmatpush1.msra.mxu0 0.0
  %3598 = vmatprep.subr.mxu0 0.0
  %3599 = vmatpush1.msra.mxu0 0.0
  %3600 = vmatprep.subr.mxu0 0.0
  %3601 = vmatpush1.msra.mxu0 0.0
  %3602 = vmatprep.subr.mxu0 0.0
  %3603 = vmatpush1.msra.mxu0 0.0
  %3604 = vmatprep.subr.mxu0 0.0
  %3605 = vmatpush1.msra.mxu0 0.0
  %3606 = vmatprep.subr.mxu0 0.0
  %3607 = vmatpush1.msra.mxu0 0.0
  %3608 = vmatprep.subr.mxu0 0.0
  %3609 = vmatpush1.msra.mxu0 0.0
  %3610 = vmatprep.subr.mxu0 0.0
  %3611 = vmatpush1.msra.mxu0 0.0
  %3612 = vmatprep.subr.mxu0 0.0
  %3613 = vmatpush1.msra.mxu0 %v3199
  %3614 = vmatprep.subr.mxu0 0.0
  %3615 = vmatpush1.msra.mxu0 %v3175
  %3616 = vmatprep.subr.mxu0 0.0
  %3617 = vmatpush1.msra.mxu0 %v3172
  %3618 = vmatprep.subr.mxu0 0.0
  %3619 = vmatpush1.msra.mxu0 %v3169
  %3620 = vmatprep.subr.mxu0 0.0
  %3621 = vmatpush1.msra.mxu0 %v3166
  %3622 = vmatprep.subr.mxu0 0.0
  %3623 = vmatpush1.msra.mxu0 %v3163
  %3624 = vmatprep.subr.mxu0 0.0
  %3625 = vmatpush2.msra.mxu0 0.0
  %3626 = vmatprep.subr.mxu0 0.0
  %3627 = vmatpush2.msra.mxu0 0.0
  %3628 = vmatprep.subr.mxu0 0.0
  %3629 = vmatpush2.msra.mxu0 0.0
  %3630 = vmatprep.subr.mxu0 0.0
  %3631 = vmatpush2.msra.mxu0 0.0
  %3632 = vmatprep.subr.mxu0 0.0
  %3633 = vmatpush2.msra.mxu0 0.0
  %3634 = vmatprep.subr.mxu0 0.0
  %3635 = vmatpush2.msra.mxu0 0.0
  %3636 = vmatprep.subr.mxu0 0.0
  %3637 = vmatpush2.msra.mxu0 0.0
  %3638 = vmatprep.subr.mxu0 0.0
  %3639 = vmatpush2.msra.mxu0 0.0
  %3640 = vmatprep.subr.mxu0 0.0
  %3641 = vmatpush2.msra.mxu0 0.0
  %3642 = vmatprep.subr.mxu0 0.0
  %3643 = vmatpush2.msra.mxu0 0.0
  %3644 = vmatprep.subr.mxu0 0.0
  %3645 = vmatpush2.msra.mxu0 0.0
  %3646 = vmatprep.subr.mxu0 0.0
  %3647 = vmatpush2.msra.mxu0 0.0
  %3648 = vmatprep.subr.mxu0 0.0
  %3649 = vmatpush2.msra.mxu0 0.0
  %3650 = vmatprep.subr.mxu0 0.0
  %3651 = vmatpush2.msra.mxu0 0.0
  %3652 = vmatprep.subr.mxu0 0.0
  %3653 = vmatpush2.msra.mxu0 0.0
  %3654 = vmatprep.subr.mxu0 0.0
  %3655 = vmatpush2.msra.mxu0 0.0
  %3656 = vmatprep.mubr.f32.mxu0 0.0
  %3657 = vmatmul.mubr.f32.gmra.mxu0 %v3501
  %v3658 = vpop.f32.mrf.mxu0
  %v3659 = vadd.f32 0.0, %v3658
  %v3660 = vpop.f32.mrf.mxu0
  %3661 = vmatprep.mubr.f32.mxu0 0.0
  %3662 = vmatmul.mubr.f32.gmra.mxu0 %v3504
  %v3663 = vpop.f32.mrf.mxu0
  %v3664 = vadd.f32 0.0, %v3663
  %v3665 = vpop.f32.mrf.mxu0
  %3666 = vmatprep.mubr.f32.mxu0 0.0
  %3667 = vmatmul.mubr.f32.gmra.mxu0 %v3507
  %v3668 = vpop.f32.mrf.mxu0
  %v3669 = vadd.f32 0.0, %v3668
  %v3670 = vpop.f32.mrf.mxu0
  %3671 = vdwg.mxu0
  %s3672 = scalar_lea.vmem %s7, 1056
  %v3673 = vld [vmem:[%s3672] sm:$0xff]
  %v3674 = vld [vmem:[%s3672 + $0x8] sm:$0xff]
  %v3675 = vld [vmem:[%s3672 + $0x10] sm:$0xff]
  %v3676 = vld [vmem:[%s3672 + $0x18] sm:$0xff]
  %v3677 = vld [vmem:[%s3672 + $0x20] sm:$0xff]
  %v3678 = vld [vmem:[%s3672 + $0x28] sm:$0xff]
  %v3679 = vld [vmem:[%s3672 + $0x30] sm:$0xff]
  %v3680 = vld [vmem:[%s3672 + $0x38] sm:$0xff]
  %v3681 = vld [vmem:[%s3672 + $0x40] sm:$0xff]
  %v3682 = vld [vmem:[%s3672 + $0x48] sm:$0xff]
  %v3683 = vld [vmem:[%s3672 + $0x50] sm:$0xff]
  %v3684 = vld [vmem:[%s3672 + $0x58] sm:$0xff]
  %v3685 = vld [vmem:[%s3672 + $0x60] sm:$0xff]
  %v3686 = vld [vmem:[%s3672 + $0x68] sm:$0xff]
  %v3687 = vld [vmem:[%s3672 + $0x70] sm:$0xff]
  %v3688 = vld [vmem:[%s3672 + $0x78] sm:$0xff]
  %v3689 = vld [vmem:[%s3672 + $0x80] sm:$0xff]
  %v3690 = vld [vmem:[%s3672 + $0x88] sm:$0xff]
  %v3691 = vld [vmem:[%s3672 + $0x90] sm:$0xff]
  %v3692 = vld [vmem:[%s3672 + $0x98] sm:$0xff]
  %v3693 = vld [vmem:[%s3672 + $0xa0] sm:$0xff]
  %v3694 = vld [vmem:[%s3672 + $0xa8] sm:$0xff]
  %v3695 = vld [vmem:[%s3672 + $0xb0] sm:$0xff]
  %v3696 = vld [vmem:[%s3672 + $0xb8] sm:$0xff]
  %v3697 = vld [vmem:[%s3672 + $0xc0] sm:$0xff]
  %v3698 = vld [vmem:[%s3672 + $0xc8] sm:$0xff]
  %v3699 = vld [vmem:[%s3672 + $0xd0] sm:$0xff]
  %v3700 = vld [vmem:[%s3672 + $0xd8] sm:$0xff]
  %v3701 = vld [vmem:[%s3672 + $0xe0] sm:$0xff]
  %v3702 = vld [vmem:[%s3672 + $0xe8] sm:$0xff]
  %v3703 = vld [vmem:[%s3672 + $0xf0] sm:$0xff]
  %v3704 = vld [vmem:[%s3672 + $0xf8] sm:$0xff]
  %v3705 = vld [vmem:[%s3672 + $0x100] sm:$0xff]
  %v3706 = vld [vmem:[%s3672 + $0x108] sm:$0xff]
  %v3707 = vld [vmem:[%s3672 + $0x110] sm:$0xff]
  %v3708 = vld [vmem:[%s3672 + $0x118] sm:$0xff]
  %v3709 = vld [vmem:[%s3672 + $0x120] sm:$0xff]
  %v3710 = vld [vmem:[%s3672 + $0x128] sm:$0xff]
  %v3711 = vld [vmem:[%s3672 + $0x130] sm:$0xff]
  %v3712 = vld [vmem:[%s3672 + $0x138] sm:$0xff]
  %v3713 = vld [vmem:[%s3672 + $0x140] sm:$0xff]
  %v3714 = vld [vmem:[%s3672 + $0x148] sm:$0xff]
  %v3715 = vld [vmem:[%s3672 + $0x150] sm:$0xff]
  %v3716 = vld [vmem:[%s3672 + $0x158] sm:$0xff]
  %v3717 = vld [vmem:[%s3672 + $0x160] sm:$0xff]
  %v3718 = vld [vmem:[%s3672 + $0x168] sm:$0xff]
  %v3719 = vld [vmem:[%s3672 + $0x170] sm:$0xff]
  %v3720 = vld [vmem:[%s3672 + $0x178] sm:$0xff]
  %v3721 = vld [vmem:[%s3672 + $0x180] sm:$0xff]
  %v3722 = vld [vmem:[%s3672 + $0x188] sm:$0xff]
  %v3723 = vld [vmem:[%s3672 + $0x190] sm:$0xff]
  %v3724 = vld [vmem:[%s3672 + $0x198] sm:$0xff]
  %v3725 = vld [vmem:[%s3672 + $0x1a0] sm:$0xff]
  %v3726 = vld [vmem:[%s3672 + $0x1a8] sm:$0xff]
  %v3727 = vld [vmem:[%s3672 + $0x1b0] sm:$0xff]
  %v3728 = vld [vmem:[%s3672 + $0x1b8] sm:$0xff]
  %v3729 = vld [vmem:[%s3672 + $0x1c0] sm:$0xff]
  %v3730 = vld [vmem:[%s3672 + $0x1c8] sm:$0xff]
  %v3731 = vld [vmem:[%s3672 + $0x1d0] sm:$0xff]
  %v3732 = vld [vmem:[%s3672 + $0x1d8] sm:$0xff]
  %v3733 = vld [vmem:[%s3672 + $0x1e0] sm:$0xff]
  %v3734 = vld [vmem:[%s3672 + $0x1e8] sm:$0xff]
  %v3735 = vld [vmem:[%s3672 + $0x1f0] sm:$0xff]
  %v3736 = vld [vmem:[%s3672 + $0x1f8] sm:$0xff]
  %v3737 = vld [vmem:[%s3672 + $0x200] sm:$0xff]
  %v3738 = vld [vmem:[%s3672 + $0x208] sm:$0xff]
  %v3739 = vld [vmem:[%s3672 + $0x210] sm:$0xff]
  %v3740 = vld [vmem:[%s3672 + $0x218] sm:$0xff]
  %v3741 = vld [vmem:[%s3672 + $0x220] sm:$0xff]
  %v3742 = vld [vmem:[%s3672 + $0x228] sm:$0xff]
  %v3743 = vld [vmem:[%s3672 + $0x230] sm:$0xff]
  %v3744 = vld [vmem:[%s3672 + $0x238] sm:$0xff]
  %v3745 = vld [vmem:[%s3672 + $0x240] sm:$0xff]
  %v3746 = vld [vmem:[%s3672 + $0x248] sm:$0xff]
  %v3747 = vld [vmem:[%s3672 + $0x250] sm:$0xff]
  %v3748 = vld [vmem:[%s3672 + $0x258] sm:$0xff]
  %v3749 = vld [vmem:[%s3672 + $0x260] sm:$0xff]
  %v3750 = vld [vmem:[%s3672 + $0x268] sm:$0xff]
  %v3751 = vld [vmem:[%s3672 + $0x270] sm:$0xff]
  %v3752 = vld [vmem:[%s3672 + $0x278] sm:$0xff]
  %v3753 = vld [vmem:[%s3672 + $0x280] sm:$0xff]
  %v3754 = vld [vmem:[%s3672 + $0x288] sm:$0xff]
  %v3755 = vld [vmem:[%s3672 + $0x290] sm:$0xff]
  %v3756 = vld [vmem:[%s3672 + $0x298] sm:$0xff]
  %v3757 = vld [vmem:[%s3672 + $0x2a0] sm:$0xff]
  %v3758 = vld [vmem:[%s3672 + $0x2a8] sm:$0xff]
  %v3759 = vld [vmem:[%s3672 + $0x2b0] sm:$0xff]
  %v3760 = vld [vmem:[%s3672 + $0x2b8] sm:$0xff]
  %v3761 = vld [vmem:[%s3672 + $0x2c0] sm:$0xff]
  %v3762 = vld [vmem:[%s3672 + $0x2c8] sm:$0xff]
  %v3763 = vld [vmem:[%s3672 + $0x2d0] sm:$0xff]
  %v3764 = vld [vmem:[%s3672 + $0x2d8] sm:$0xff]
  %v3765 = vld [vmem:[%s3672 + $0x2e0] sm:$0xff]
  %v3766 = vld [vmem:[%s3672 + $0x2e8] sm:$0xff]
  %v3767 = vld [vmem:[%s3672 + $0x2f0] sm:$0xff]
  %v3768 = vld [vmem:[%s3672 + $0x2f8] sm:$0xff]
  %v3769 = vld [vmem:[%s3672 + $0x300] sm:$0xff]
  %v3770 = vld [vmem:[%s3672 + $0x308] sm:$0xff]
  %v3771 = vld [vmem:[%s3672 + $0x310] sm:$0xff]
  %v3772 = vld [vmem:[%s3672 + $0x318] sm:$0xff]
  %v3773 = vld [vmem:[%s3672 + $0x320] sm:$0xff]
  %v3774 = vld [vmem:[%s3672 + $0x328] sm:$0xff]
  %v3775 = vld [vmem:[%s3672 + $0x330] sm:$0xff]
  %v3776 = vld [vmem:[%s3672 + $0x338] sm:$0xff]
  %v3777 = vld [vmem:[%s3672 + $0x340] sm:$0xff]
  %v3778 = vld [vmem:[%s3672 + $0x348] sm:$0xff]
  %v3779 = vld [vmem:[%s3672 + $0x350] sm:$0xff]
  %v3780 = vld [vmem:[%s3672 + $0x358] sm:$0xff]
  %v3781 = vld [vmem:[%s3672 + $0x360] sm:$0xff]
  %v3782 = vld [vmem:[%s3672 + $0x368] sm:$0xff]
  %v3783 = vld [vmem:[%s3672 + $0x370] sm:$0xff]
  %v3784 = vld [vmem:[%s3672 + $0x378] sm:$0xff]
  %v3785 = vld [vmem:[%s3672 + $0x380] sm:$0xff]
  %v3786 = vld [vmem:[%s3672 + $0x388] sm:$0xff]
  %v3787 = vld [vmem:[%s3672 + $0x390] sm:$0xff]
  %v3788 = vld [vmem:[%s3672 + $0x398] sm:$0xff]
  %v3789 = vld [vmem:[%s3672 + $0x3a0] sm:$0xff]
  %v3790 = vld [vmem:[%s3672 + $0x3a8] sm:$0xff]
  %v3791 = vld [vmem:[%s3672 + $0x3b0] sm:$0xff]
  %v3792 = vld [vmem:[%s3672 + $0x3b8] sm:$0xff]
  %v3793 = vld [vmem:[%s3672 + $0x3c0] sm:$0xff]
  %v3794 = vld [vmem:[%s3672 + $0x3c8] sm:$0xff]
  %v3795 = vld [vmem:[%s3672 + $0x3d0] sm:$0xff]
  %v3796 = vld [vmem:[%s3672 + $0x3d8] sm:$0xff]
  %v3797 = vld [vmem:[%s3672 + $0x3e0] sm:$0xff]
  %v3798 = vld [vmem:[%s3672 + $0x3e8] sm:$0xff]
  %v3799 = vld [vmem:[%s3672 + $0x3f0] sm:$0xff]
  %v3800 = vld [vmem:[%s3672 + $0x3f8] sm:$0xff]
  %v3801 = vld [vmem:[%s3672 + $0x400] sm:$0xff]
  %v3802 = vld [vmem:[%s3672 + $0x408] sm:$0xff]
  %v3803 = vld [vmem:[%s3672 + $0x410] sm:$0xff]
  %v3804 = vld [vmem:[%s3672 + $0x418] sm:$0xff]
  %v3806 = vsel %vm98, %v3659, 0
  %v3809 = vsel %vm98, %v3664, 0
  %v3812 = vsel %vm98, %v3669, 0
  %3814 = vmatprep.subr.mxu0 %v3719
  %3815 = vmatpush1.msra.mxu0 %v3718
  %3816 = vmatprep.subr.mxu0 %v3716
  %3817 = vmatpush1.msra.mxu0 %v3715
  %3818 = vmatprep.subr.mxu0 %v3713
  %3819 = vmatpush1.msra.mxu0 %v3712
  %3820 = vmatprep.subr.mxu0 %v3710
  %3821 = vmatpush1.msra.mxu0 %v3709
  %3822 = vmatprep.subr.mxu0 %v3707
  %3823 = vmatpush1.msra.mxu0 %v3706
  %3824 = vmatprep.subr.mxu0 %v3704
  %3825 = vmatpush1.msra.mxu0 %v3703
  %3826 = vmatprep.subr.mxu0 %v3701
  %3827 = vmatpush1.msra.mxu0 %v3700
  %3828 = vmatprep.subr.mxu0 %v3698
  %3829 = vmatpush1.msra.mxu0 %v3697
  %3830 = vmatprep.subr.mxu0 %v3695
  %3831 = vmatpush1.msra.mxu0 %v3694
  %3832 = vmatprep.subr.mxu0 %v3692
  %3833 = vmatpush1.msra.mxu0 %v3691
  %3834 = vmatprep.subr.mxu0 %v3689
  %3835 = vmatpush1.msra.mxu0 %v3688
  %3836 = vmatprep.subr.mxu0 %v3686
  %3837 = vmatpush1.msra.mxu0 %v3685
  %3838 = vmatprep.subr.mxu0 %v3683
  %3839 = vmatpush1.msra.mxu0 %v3682
  %3840 = vmatprep.subr.mxu0 %v3680
  %3841 = vmatpush1.msra.mxu0 %v3679
  %3842 = vmatprep.subr.mxu0 %v3677
  %3843 = vmatpush1.msra.mxu0 %v3676
  %3844 = vmatprep.subr.mxu0 %v3674
  %3845 = vmatpush1.msra.mxu0 %v3673
  %3846 = vmatprep.subr.mxu0 %v3767
  %3847 = vmatpush2.msra.mxu0 %v3766
  %3848 = vmatprep.subr.mxu0 %v3764
  %3849 = vmatpush2.msra.mxu0 %v3763
  %3850 = vmatprep.subr.mxu0 %v3761
  %3851 = vmatpush2.msra.mxu0 %v3760
  %3852 = vmatprep.subr.mxu0 %v3758
  %3853 = vmatpush2.msra.mxu0 %v3757
  %3854 = vmatprep.subr.mxu0 %v3755
  %3855 = vmatpush2.msra.mxu0 %v3754
  %3856 = vmatprep.subr.mxu0 %v3752
  %3857 = vmatpush2.msra.mxu0 %v3751
  %3858 = vmatprep.subr.mxu0 %v3749
  %3859 = vmatpush2.msra.mxu0 %v3748
  %3860 = vmatprep.subr.mxu0 %v3746
  %3861 = vmatpush2.msra.mxu0 %v3745
  %3862 = vmatprep.subr.mxu0 %v3743
  %3863 = vmatpush2.msra.mxu0 %v3742
  %3864 = vmatprep.subr.mxu0 %v3740
  %3865 = vmatpush2.msra.mxu0 %v3739
  %3866 = vmatprep.subr.mxu0 %v3737
  %3867 = vmatpush2.msra.mxu0 %v3736
  %3868 = vmatprep.subr.mxu0 %v3734
  %3869 = vmatpush2.msra.mxu0 %v3733
  %3870 = vmatprep.subr.mxu0 %v3731
  %3871 = vmatpush2.msra.mxu0 %v3730
  %3872 = vmatprep.subr.mxu0 %v3728
  %3873 = vmatpush2.msra.mxu0 %v3727
  %3874 = vmatprep.subr.mxu0 %v3725
  %3875 = vmatpush2.msra.mxu0 %v3724
  %3876 = vmatprep.subr.mxu0 %v3722
  %3877 = vmatpush2.msra.mxu0 %v3721
  %3878 = vmatprep.mubr.f32.mxu0 %v3578
  %3879 = vmatmul.mubr.f32.gmra.mxu0 %v3576
  %v3880 = vpop.f32.mrf.mxu0
  %v3881 = vadd.f32 0.0, %v3880
  %v3882 = vpop.f32.mrf.mxu0
  %v3883 = vadd.f32 0.0, %v3882
  %3884 = vmatprep.mubr.f32.mxu0 %v3584
  %3885 = vmatmul.mubr.f32.gmra.mxu0 %v3582
  %v3886 = vpop.f32.mrf.mxu0
  %v3887 = vadd.f32 0.0, %v3886
  %v3888 = vpop.f32.mrf.mxu0
  %v3889 = vadd.f32 0.0, %v3888
  %3890 = vmatprep.mubr.f32.mxu0 %v3590
  %3891 = vmatmul.mubr.f32.gmra.mxu0 %v3588
  %v3892 = vpop.f32.mrf.mxu0
  %v3893 = vadd.f32 0.0, %v3892
  %v3894 = vpop.f32.mrf.mxu0
  %v3895 = vadd.f32 0.0, %v3894
  %3896 = vdwg.mxu0
  %3897 = vmatprep.subr.mxu0 0.0
  %3898 = vmatpush1.msra.mxu0 0.0
  %3899 = vmatprep.subr.mxu0 0.0
  %3900 = vmatpush1.msra.mxu0 0.0
  %3901 = vmatprep.subr.mxu0 0.0
  %3902 = vmatpush1.msra.mxu0 0.0
  %3903 = vmatprep.subr.mxu0 0.0
  %3904 = vmatpush1.msra.mxu0 0.0
  %3905 = vmatprep.subr.mxu0 %v3803
  %3906 = vmatpush1.msra.mxu0 %v3802
  %3907 = vmatprep.subr.mxu0 %v3800
  %3908 = vmatpush1.msra.mxu0 %v3799
  %3909 = vmatprep.subr.mxu0 %v3797
  %3910 = vmatpush1.msra.mxu0 %v3796
  %3911 = vmatprep.subr.mxu0 %v3794
  %3912 = vmatpush1.msra.mxu0 %v3793
  %3913 = vmatprep.subr.mxu0 %v3791
  %3914 = vmatpush1.msra.mxu0 %v3790
  %3915 = vmatprep.subr.mxu0 %v3788
  %3916 = vmatpush1.msra.mxu0 %v3787
  %3917 = vmatprep.subr.mxu0 %v3785
  %3918 = vmatpush1.msra.mxu0 %v3784
  %3919 = vmatprep.subr.mxu0 %v3782
  %3920 = vmatpush1.msra.mxu0 %v3781
  %3921 = vmatprep.subr.mxu0 %v3779
  %3922 = vmatpush1.msra.mxu0 %v3778
  %3923 = vmatprep.subr.mxu0 %v3776
  %3924 = vmatpush1.msra.mxu0 %v3775
  %3925 = vmatprep.subr.mxu0 %v3773
  %3926 = vmatpush1.msra.mxu0 %v3772
  %3927 = vmatprep.subr.mxu0 %v3770
  %3928 = vmatpush1.msra.mxu0 %v3769
  %3929 = vmatprep.subr.mxu0 0.0
  %3930 = vmatpush2.msra.mxu0 0.0
  %3931 = vmatprep.subr.mxu0 0.0
  %3932 = vmatpush2.msra.mxu0 0.0
  %3933 = vmatprep.subr.mxu0 0.0
  %3934 = vmatpush2.msra.mxu0 0.0
  %3935 = vmatprep.subr.mxu0 0.0
  %3936 = vmatpush2.msra.mxu0 0.0
  %3937 = vmatprep.subr.mxu0 0.0
  %3938 = vmatpush2.msra.mxu0 0.0
  %3939 = vmatprep.subr.mxu0 0.0
  %3940 = vmatpush2.msra.mxu0 0.0
  %3941 = vmatprep.subr.mxu0 0.0
  %3942 = vmatpush2.msra.mxu0 0.0
  %3943 = vmatprep.subr.mxu0 0.0
  %3944 = vmatpush2.msra.mxu0 0.0
  %3945 = vmatprep.subr.mxu0 0.0
  %3946 = vmatpush2.msra.mxu0 0.0
  %3947 = vmatprep.subr.mxu0 0.0
  %3948 = vmatpush2.msra.mxu0 0.0
  %3949 = vmatprep.subr.mxu0 0.0
  %3950 = vmatpush2.msra.mxu0 0.0
  %3951 = vmatprep.subr.mxu0 0.0
  %3952 = vmatpush2.msra.mxu0 0.0
  %3953 = vmatprep.subr.mxu0 0.0
  %3954 = vmatpush2.msra.mxu0 0.0
  %3955 = vmatprep.subr.mxu0 0.0
  %3956 = vmatpush2.msra.mxu0 0.0
  %3957 = vmatprep.subr.mxu0 0.0
  %3958 = vmatpush2.msra.mxu0 0.0
  %3959 = vmatprep.subr.mxu0 0.0
  %3960 = vmatpush2.msra.mxu0 0.0
  %3961 = vmatprep.mubr.f32.mxu0 0.0
  %3962 = vmatmul.mubr.f32.gmra.mxu0 %v3806
  %v3963 = vpop.f32.mrf.mxu0
  %v3964 = vadd.f32 %v3881, %v3963
  %v3965 = vpop.f32.mrf.mxu0
  %v3966 = vadd.f32 %v3883, %v3965
  %3967 = vmatprep.mubr.f32.mxu0 0.0
  %3968 = vmatmul.mubr.f32.gmra.mxu0 %v3809
  %v3969 = vpop.f32.mrf.mxu0
  %v3970 = vadd.f32 %v3887, %v3969
  %v3971 = vpop.f32.mrf.mxu0
  %v3972 = vadd.f32 %v3889, %v3971
  %3973 = vmatprep.mubr.f32.mxu0 0.0
  %3974 = vmatmul.mubr.f32.gmra.mxu0 %v3812
  %v3975 = vpop.f32.mrf.mxu0
  %v3976 = vadd.f32 %v3893, %v3975
  %v3977 = vpop.f32.mrf.mxu0
  %v3978 = vadd.f32 %v3895, %v3977
  %3979 = vdwg.mxu0
  %3980 = vmatprep.subr.mxu0 0.0
  %3981 = vmatpush1.msra.mxu0 %v3720
  %3982 = vmatprep.subr.mxu0 0.0
  %3983 = vmatpush1.msra.mxu0 %v3717
  %3984 = vmatprep.subr.mxu0 0.0
  %3985 = vmatpush1.msra.mxu0 %v3714
  %3986 = vmatprep.subr.mxu0 0.0
  %3987 = vmatpush1.msra.mxu0 %v3711
  %3988 = vmatprep.subr.mxu0 0.0
  %3989 = vmatpush1.msra.mxu0 %v3708
  %3990 = vmatprep.subr.mxu0 0.0
  %3991 = vmatpush1.msra.mxu0 %v3705
  %3992 = vmatprep.subr.mxu0 0.0
  %3993 = vmatpush1.msra.mxu0 %v3702
  %3994 = vmatprep.subr.mxu0 0.0
  %3995 = vmatpush1.msra.mxu0 %v3699
  %3996 = vmatprep.subr.mxu0 0.0
  %3997 = vmatpush1.msra.mxu0 %v3696
  %3998 = vmatprep.subr.mxu0 0.0
  %3999 = vmatpush1.msra.mxu0 %v3693
  %4000 = vmatprep.subr.mxu0 0.0
  %4001 = vmatpush1.msra.mxu0 %v3690
  %4002 = vmatprep.subr.mxu0 0.0
  %4003 = vmatpush1.msra.mxu0 %v3687
  %4004 = vmatprep.subr.mxu0 0.0
  %4005 = vmatpush1.msra.mxu0 %v3684
  %4006 = vmatprep.subr.mxu0 0.0
  %4007 = vmatpush1.msra.mxu0 %v3681
  %4008 = vmatprep.subr.mxu0 0.0
  %4009 = vmatpush1.msra.mxu0 %v3678
  %4010 = vmatprep.subr.mxu0 0.0
  %4011 = vmatpush1.msra.mxu0 %v3675
  %4012 = vmatprep.subr.mxu0 0.0
  %4013 = vmatpush2.msra.mxu0 %v3768
  %4014 = vmatprep.subr.mxu0 0.0
  %4015 = vmatpush2.msra.mxu0 %v3765
  %4016 = vmatprep.subr.mxu0 0.0
  %4017 = vmatpush2.msra.mxu0 %v3762
  %4018 = vmatprep.subr.mxu0 0.0
  %4019 = vmatpush2.msra.mxu0 %v3759
  %4020 = vmatprep.subr.mxu0 0.0
  %4021 = vmatpush2.msra.mxu0 %v3756
  %4022 = vmatprep.subr.mxu0 0.0
  %4023 = vmatpush2.msra.mxu0 %v3753
  %4024 = vmatprep.subr.mxu0 0.0
  %4025 = vmatpush2.msra.mxu0 %v3750
  %4026 = vmatprep.subr.mxu0 0.0
  %4027 = vmatpush2.msra.mxu0 %v3747
  %4028 = vmatprep.subr.mxu0 0.0
  %4029 = vmatpush2.msra.mxu0 %v3744
  %4030 = vmatprep.subr.mxu0 0.0
  %4031 = vmatpush2.msra.mxu0 %v3741
  %4032 = vmatprep.subr.mxu0 0.0
  %4033 = vmatpush2.msra.mxu0 %v3738
  %4034 = vmatprep.subr.mxu0 0.0
  %4035 = vmatpush2.msra.mxu0 %v3735
  %4036 = vmatprep.subr.mxu0 0.0
  %4037 = vmatpush2.msra.mxu0 %v3732
  %4038 = vmatprep.subr.mxu0 0.0
  %4039 = vmatpush2.msra.mxu0 %v3729
  %4040 = vmatprep.subr.mxu0 0.0
  %4041 = vmatpush2.msra.mxu0 %v3726
  %4042 = vmatprep.subr.mxu0 0.0
  %4043 = vmatpush2.msra.mxu0 %v3723
  %4044 = vmatprep.mubr.f32.mxu0 %v3578
  %4045 = vmatmul.mubr.f32.gmra.mxu0 %v3576
  %v4046 = vpop.f32.mrf.mxu0
  %v4047 = vadd.f32 0.0, %v4046
  %v4048 = vpop.f32.mrf.mxu0
  %4049 = vmatprep.mubr.f32.mxu0 %v3584
  %4050 = vmatmul.mubr.f32.gmra.mxu0 %v3582
  %v4051 = vpop.f32.mrf.mxu0
  %v4052 = vadd.f32 0.0, %v4051
  %v4053 = vpop.f32.mrf.mxu0
  %4054 = vmatprep.mubr.f32.mxu0 %v3590
  %4055 = vmatmul.mubr.f32.gmra.mxu0 %v3588
  %v4056 = vpop.f32.mrf.mxu0
  %v4057 = vadd.f32 0.0, %v4056
  %v4058 = vpop.f32.mrf.mxu0
  %4059 = vdwg.mxu0
  %4060 = vmatprep.subr.mxu0 0.0
  %4061 = vmatpush1.msra.mxu0 0.0
  %4062 = vmatprep.subr.mxu0 0.0
  %4063 = vmatpush1.msra.mxu0 0.0
  %4064 = vmatprep.subr.mxu0 0.0
  %4065 = vmatpush1.msra.mxu0 0.0
  %4066 = vmatprep.subr.mxu0 0.0
  %4067 = vmatpush1.msra.mxu0 0.0
  %4068 = vmatprep.subr.mxu0 0.0
  %4069 = vmatpush1.msra.mxu0 %v3804
  %4070 = vmatprep.subr.mxu0 0.0
  %4071 = vmatpush1.msra.mxu0 %v3801
  %4072 = vmatprep.subr.mxu0 0.0
  %4073 = vmatpush1.msra.mxu0 %v3798
  %4074 = vmatprep.subr.mxu0 0.0
  %4075 = vmatpush1.msra.mxu0 %v3795
  %4076 = vmatprep.subr.mxu0 0.0
  %4077 = vmatpush1.msra.mxu0 %v3792
  %4078 = vmatprep.subr.mxu0 0.0
  %4079 = vmatpush1.msra.mxu0 %v3789
  %4080 = vmatprep.subr.mxu0 0.0
  %4081 = vmatpush1.msra.mxu0 %v3786
  %4082 = vmatprep.subr.mxu0 0.0
  %4083 = vmatpush1.msra.mxu0 %v3783
  %4084 = vmatprep.subr.mxu0 0.0
  %4085 = vmatpush1.msra.mxu0 %v3780
  %4086 = vmatprep.subr.mxu0 0.0
  %4087 = vmatpush1.msra.mxu0 %v3777
  %4088 = vmatprep.subr.mxu0 0.0
  %4089 = vmatpush1.msra.mxu0 %v3774
  %4090 = vmatprep.subr.mxu0 0.0
  %4091 = vmatpush1.msra.mxu0 %v3771
  %4092 = vmatprep.subr.mxu0 0.0
  %4093 = vmatpush2.msra.mxu0 0.0
  %4094 = vmatprep.subr.mxu0 0.0
  %4095 = vmatpush2.msra.mxu0 0.0
  %4096 = vmatprep.subr.mxu0 0.0
  %4097 = vmatpush2.msra.mxu0 0.0
  %4098 = vmatprep.subr.mxu0 0.0
  %4099 = vmatpush2.msra.mxu0 0.0
  %4100 = vmatprep.subr.mxu0 0.0
  %4101 = vmatpush2.msra.mxu0 0.0
  %4102 = vmatprep.subr.mxu0 0.0
  %4103 = vmatpush2.msra.mxu0 0.0
  %4104 = vmatprep.subr.mxu0 0.0
  %4105 = vmatpush2.msra.mxu0 0.0
  %4106 = vmatprep.subr.mxu0 0.0
  %4107 = vmatpush2.msra.mxu0 0.0
  %4108 = vmatprep.subr.mxu0 0.0
  %4109 = vmatpush2.msra.mxu0 0.0
  %4110 = vmatprep.subr.mxu0 0.0
  %4111 = vmatpush2.msra.mxu0 0.0
  %4112 = vmatprep.subr.mxu0 0.0
  %4113 = vmatpush2.msra.mxu0 0.0
  %4114 = vmatprep.subr.mxu0 0.0
  %4115 = vmatpush2.msra.mxu0 0.0
  %4116 = vmatprep.subr.mxu0 0.0
  %4117 = vmatpush2.msra.mxu0 0.0
  %4118 = vmatprep.subr.mxu0 0.0
  %4119 = vmatpush2.msra.mxu0 0.0
  %4120 = vmatprep.subr.mxu0 0.0
  %4121 = vmatpush2.msra.mxu0 0.0
  %4122 = vmatprep.subr.mxu0 0.0
  %4123 = vmatpush2.msra.mxu0 0.0
  %4124 = vmatprep.mubr.f32.mxu0 0.0
  %4125 = vmatmul.mubr.f32.gmra.mxu0 %v3806
  %v4126 = vpop.f32.mrf.mxu0
  %v4127 = vadd.f32 %v4047, %v4126
  %v4128 = vpop.f32.mrf.mxu0
  %4129 = vmatprep.mubr.f32.mxu0 0.0
  %4130 = vmatmul.mubr.f32.gmra.mxu0 %v3809
  %v4131 = vpop.f32.mrf.mxu0
  %v4132 = vadd.f32 %v4052, %v4131
  %v4133 = vpop.f32.mrf.mxu0
  %4134 = vmatprep.mubr.f32.mxu0 0.0
  %4135 = vmatmul.mubr.f32.gmra.mxu0 %v3812
  %v4136 = vpop.f32.mrf.mxu0
  %v4137 = vadd.f32 %v4057, %v4136
  %v4138 = vpop.f32.mrf.mxu0
  %4139 = vdwg.mxu0
  %v4141 = vsel %vm98, %v3351, 0
  %v4144 = vsel %vm98, %v3356, 0
  %v4147 = vsel %vm98, %v3361, 0
  %4149 = vmatprep.subr.mxu0 %v3410
  %4150 = vmatpush1.msra.mxu0 %v3409
  %4151 = vmatprep.subr.mxu0 %v3407
  %4152 = vmatpush1.msra.mxu0 %v3406
  %4153 = vmatprep.subr.mxu0 %v3404
  %4154 = vmatpush1.msra.mxu0 %v3403
  %4155 = vmatprep.subr.mxu0 %v3401
  %4156 = vmatpush1.msra.mxu0 %v3400
  %4157 = vmatprep.subr.mxu0 %v3398
  %4158 = vmatpush1.msra.mxu0 %v3397
  %4159 = vmatprep.subr.mxu0 %v3395
  %4160 = vmatpush1.msra.mxu0 %v3394
  %4161 = vmatprep.subr.mxu0 %v3392
  %4162 = vmatpush1.msra.mxu0 %v3391
  %4163 = vmatprep.subr.mxu0 %v3389
  %4164 = vmatpush1.msra.mxu0 %v3388
  %4165 = vmatprep.subr.mxu0 %v3386
  %4166 = vmatpush1.msra.mxu0 %v3385
  %4167 = vmatprep.subr.mxu0 %v3383
  %4168 = vmatpush1.msra.mxu0 %v3382
  %4169 = vmatprep.subr.mxu0 %v3380
  %4170 = vmatpush1.msra.mxu0 %v3379
  %4171 = vmatprep.subr.mxu0 %v3377
  %4172 = vmatpush1.msra.mxu0 %v3376
  %4173 = vmatprep.subr.mxu0 %v3374
  %4174 = vmatpush1.msra.mxu0 %v3373
  %4175 = vmatprep.subr.mxu0 %v3371
  %4176 = vmatpush1.msra.mxu0 %v3370
  %4177 = vmatprep.subr.mxu0 %v3368
  %4178 = vmatpush1.msra.mxu0 %v3367
  %4179 = vmatprep.subr.mxu0 %v3365
  %4180 = vmatpush1.msra.mxu0 %v3364
  %4181 = vmatprep.subr.mxu0 %v3458
  %4182 = vmatpush2.msra.mxu0 %v3457
  %4183 = vmatprep.subr.mxu0 %v3455
  %4184 = vmatpush2.msra.mxu0 %v3454
  %4185 = vmatprep.subr.mxu0 %v3452
  %4186 = vmatpush2.msra.mxu0 %v3451
  %4187 = vmatprep.subr.mxu0 %v3449
  %4188 = vmatpush2.msra.mxu0 %v3448
  %4189 = vmatprep.subr.mxu0 %v3446
  %4190 = vmatpush2.msra.mxu0 %v3445
  %4191 = vmatprep.subr.mxu0 %v3443
  %4192 = vmatpush2.msra.mxu0 %v3442
  %4193 = vmatprep.subr.mxu0 %v3440
  %4194 = vmatpush2.msra.mxu0 %v3439
  %4195 = vmatprep.subr.mxu0 %v3437
  %4196 = vmatpush2.msra.mxu0 %v3436
  %4197 = vmatprep.subr.mxu0 %v3434
  %4198 = vmatpush2.msra.mxu0 %v3433
  %4199 = vmatprep.subr.mxu0 %v3431
  %4200 = vmatpush2.msra.mxu0 %v3430
  %4201 = vmatprep.subr.mxu0 %v3428
  %4202 = vmatpush2.msra.mxu0 %v3427
  %4203 = vmatprep.subr.mxu0 %v3425
  %4204 = vmatpush2.msra.mxu0 %v3424
  %4205 = vmatprep.subr.mxu0 %v3422
  %4206 = vmatpush2.msra.mxu0 %v3421
  %4207 = vmatprep.subr.mxu0 %v3419
  %4208 = vmatpush2.msra.mxu0 %v3418
  %4209 = vmatprep.subr.mxu0 %v3416
  %4210 = vmatpush2.msra.mxu0 %v3415
  %4211 = vmatprep.subr.mxu0 %v3413
  %4212 = vmatpush2.msra.mxu0 %v3412
  %4213 = vmatprep.mubr.f32.mxu0 %v3270
  %4214 = vmatmul.mubr.f32.gmra.mxu0 %v3268
  %v4215 = vpop.f32.mrf.mxu0
  %v4216 = vadd.f32 %v3964, %v4215
  %v4217 = vpop.f32.mrf.mxu0
  %v4218 = vadd.f32 %v3966, %v4217
  %4219 = vmatprep.mubr.f32.mxu0 %v3276
  %4220 = vmatmul.mubr.f32.gmra.mxu0 %v3274
  %v4221 = vpop.f32.mrf.mxu0
  %v4222 = vadd.f32 %v3970, %v4221
  %v4223 = vpop.f32.mrf.mxu0
  %v4224 = vadd.f32 %v3972, %v4223
  %4225 = vmatprep.mubr.f32.mxu0 %v3282
  %4226 = vmatmul.mubr.f32.gmra.mxu0 %v3280
  %v4227 = vpop.f32.mrf.mxu0
  %v4228 = vadd.f32 %v3976, %v4227
  %v4229 = vpop.f32.mrf.mxu0
  %v4230 = vadd.f32 %v3978, %v4229
  %4231 = vdwg.mxu0
  %4232 = vmatprep.subr.mxu0 0.0
  %4233 = vmatpush1.msra.mxu0 0.0
  %4234 = vmatprep.subr.mxu0 0.0
  %4235 = vmatpush1.msra.mxu0 0.0
  %4236 = vmatprep.subr.mxu0 0.0
  %4237 = vmatpush1.msra.mxu0 0.0
  %4238 = vmatprep.subr.mxu0 0.0
  %4239 = vmatpush1.msra.mxu0 0.0
  %4240 = vmatprep.subr.mxu0 %v3494
  %4241 = vmatpush1.msra.mxu0 %v3493
  %4242 = vmatprep.subr.mxu0 %v3491
  %4243 = vmatpush1.msra.mxu0 %v3490
  %4244 = vmatprep.subr.mxu0 %v3488
  %4245 = vmatpush1.msra.mxu0 %v3487
  %4246 = vmatprep.subr.mxu0 %v3485
  %4247 = vmatpush1.msra.mxu0 %v3484
  %4248 = vmatprep.subr.mxu0 %v3482
  %4249 = vmatpush1.msra.mxu0 %v3481
  %4250 = vmatprep.subr.mxu0 %v3479
  %4251 = vmatpush1.msra.mxu0 %v3478
  %4252 = vmatprep.subr.mxu0 %v3476
  %4253 = vmatpush1.msra.mxu0 %v3475
  %4254 = vmatprep.subr.mxu0 %v3473
  %4255 = vmatpush1.msra.mxu0 %v3472
  %4256 = vmatprep.subr.mxu0 %v3470
  %4257 = vmatpush1.msra.mxu0 %v3469
  %4258 = vmatprep.subr.mxu0 %v3467
  %4259 = vmatpush1.msra.mxu0 %v3466
  %4260 = vmatprep.subr.mxu0 %v3464
  %4261 = vmatpush1.msra.mxu0 %v3463
  %4262 = vmatprep.subr.mxu0 %v3461
  %4263 = vmatpush1.msra.mxu0 %v3460
  %4264 = vmatprep.subr.mxu0 0.0
  %4265 = vmatpush2.msra.mxu0 0.0
  %4266 = vmatprep.subr.mxu0 0.0
  %4267 = vmatpush2.msra.mxu0 0.0
  %4268 = vmatprep.subr.mxu0 0.0
  %4269 = vmatpush2.msra.mxu0 0.0
  %4270 = vmatprep.subr.mxu0 0.0
  %4271 = vmatpush2.msra.mxu0 0.0
  %4272 = vmatprep.subr.mxu0 0.0
  %4273 = vmatpush2.msra.mxu0 0.0
  %4274 = vmatprep.subr.mxu0 0.0
  %4275 = vmatpush2.msra.mxu0 0.0
  %4276 = vmatprep.subr.mxu0 0.0
  %4277 = vmatpush2.msra.mxu0 0.0
  %4278 = vmatprep.subr.mxu0 0.0
  %4279 = vmatpush2.msra.mxu0 0.0
  %4280 = vmatprep.subr.mxu0 0.0
  %4281 = vmatpush2.msra.mxu0 0.0
  %4282 = vmatprep.subr.mxu0 0.0
  %4283 = vmatpush2.msra.mxu0 0.0
  %4284 = vmatprep.subr.mxu0 0.0
  %4285 = vmatpush2.msra.mxu0 0.0
  %4286 = vmatprep.subr.mxu0 0.0
  %4287 = vmatpush2.msra.mxu0 0.0
  %4288 = vmatprep.subr.mxu0 0.0
  %4289 = vmatpush2.msra.mxu0 0.0
  %4290 = vmatprep.subr.mxu0 0.0
  %4291 = vmatpush2.msra.mxu0 0.0
  %4292 = vmatprep.subr.mxu0 0.0
  %4293 = vmatpush2.msra.mxu0 0.0
  %4294 = vmatprep.subr.mxu0 0.0
  %4295 = vmatpush2.msra.mxu0 0.0
  %4296 = vmatprep.mubr.f32.mxu0 0.0
  %4297 = vmatmul.mubr.f32.gmra.mxu0 %v4141
  %v4298 = vpop.f32.mrf.mxu0
  %v4299 = vadd.f32 %v4216, %v4298
  %v4300 = vpop.f32.mrf.mxu0
  %v4301 = vadd.f32 %v4218, %v4300
  %4302 = vmatprep.mubr.f32.mxu0 0.0
  %4303 = vmatmul.mubr.f32.gmra.mxu0 %v4144
  %v4304 = vpop.f32.mrf.mxu0
  %v4305 = vadd.f32 %v4222, %v4304
  %v4306 = vpop.f32.mrf.mxu0
  %v4307 = vadd.f32 %v4224, %v4306
  %4308 = vmatprep.mubr.f32.mxu0 0.0
  %4309 = vmatmul.mubr.f32.gmra.mxu0 %v4147
  %v4310 = vpop.f32.mrf.mxu0
  %v4311 = vadd.f32 %v4228, %v4310
  %v4312 = vpop.f32.mrf.mxu0
  %v4313 = vadd.f32 %v4230, %v4312
  %4314 = vdwg.mxu0
  %4315 = vmatprep.subr.mxu0 0.0
  %4316 = vmatpush1.msra.mxu0 %v3411
  %4317 = vmatprep.subr.mxu0 0.0
  %4318 = vmatpush1.msra.mxu0 %v3408
  %4319 = vmatprep.subr.mxu0 0.0
  %4320 = vmatpush1.msra.mxu0 %v3405
  %4321 = vmatprep.subr.mxu0 0.0
  %4322 = vmatpush1.msra.mxu0 %v3402
  %4323 = vmatprep.subr.mxu0 0.0
  %4324 = vmatpush1.msra.mxu0 %v3399
  %4325 = vmatprep.subr.mxu0 0.0
  %4326 = vmatpush1.msra.mxu0 %v3396
  %4327 = vmatprep.subr.mxu0 0.0
  %4328 = vmatpush1.msra.mxu0 %v3393
  %4329 = vmatprep.subr.mxu0 0.0
  %4330 = vmatpush1.msra.mxu0 %v3390
  %4331 = vmatprep.subr.mxu0 0.0
  %4332 = vmatpush1.msra.mxu0 %v3387
  %4333 = vmatprep.subr.mxu0 0.0
  %4334 = vmatpush1.msra.mxu0 %v3384
  %4335 = vmatprep.subr.mxu0 0.0
  %4336 = vmatpush1.msra.mxu0 %v3381
  %4337 = vmatprep.subr.mxu0 0.0
  %4338 = vmatpush1.msra.mxu0 %v3378
  %4339 = vmatprep.subr.mxu0 0.0
  %4340 = vmatpush1.msra.mxu0 %v3375
  %4341 = vmatprep.subr.mxu0 0.0
  %4342 = vmatpush1.msra.mxu0 %v3372
  %4343 = vmatprep.subr.mxu0 0.0
  %4344 = vmatpush1.msra.mxu0 %v3369
  %4345 = vmatprep.subr.mxu0 0.0
  %4346 = vmatpush1.msra.mxu0 %v3366
  %4347 = vmatprep.subr.mxu0 0.0
  %4348 = vmatpush2.msra.mxu0 %v3459
  %4349 = vmatprep.subr.mxu0 0.0
  %4350 = vmatpush2.msra.mxu0 %v3456
  %4351 = vmatprep.subr.mxu0 0.0
  %4352 = vmatpush2.msra.mxu0 %v3453
  %4353 = vmatprep.subr.mxu0 0.0
  %4354 = vmatpush2.msra.mxu0 %v3450
  %4355 = vmatprep.subr.mxu0 0.0
  %4356 = vmatpush2.msra.mxu0 %v3447
  %4357 = vmatprep.subr.mxu0 0.0
  %4358 = vmatpush2.msra.mxu0 %v3444
  %4359 = vmatprep.subr.mxu0 0.0
  %4360 = vmatpush2.msra.mxu0 %v3441
  %4361 = vmatprep.subr.mxu0 0.0
  %4362 = vmatpush2.msra.mxu0 %v3438
  %4363 = vmatprep.subr.mxu0 0.0
  %4364 = vmatpush2.msra.mxu0 %v3435
  %4365 = vmatprep.subr.mxu0 0.0
  %4366 = vmatpush2.msra.mxu0 %v3432
  %4367 = vmatprep.subr.mxu0 0.0
  %4368 = vmatpush2.msra.mxu0 %v3429
  %4369 = vmatprep.subr.mxu0 0.0
  %4370 = vmatpush2.msra.mxu0 %v3426
  %4371 = vmatprep.subr.mxu0 0.0
  %4372 = vmatpush2.msra.mxu0 %v3423
  %4373 = vmatprep.subr.mxu0 0.0
  %4374 = vmatpush2.msra.mxu0 %v3420
  %4375 = vmatprep.subr.mxu0 0.0
  %4376 = vmatpush2.msra.mxu0 %v3417
  %4377 = vmatprep.subr.mxu0 0.0
  %4378 = vmatpush2.msra.mxu0 %v3414
  %4379 = vmatprep.mubr.f32.mxu0 %v3270
  %4380 = vmatmul.mubr.f32.gmra.mxu0 %v3268
  %v4381 = vpop.f32.mrf.mxu0
  %v4382 = vadd.f32 %v4127, %v4381
  %v4383 = vpop.f32.mrf.mxu0
  %4384 = vmatprep.mubr.f32.mxu0 %v3276
  %4385 = vmatmul.mubr.f32.gmra.mxu0 %v3274
  %v4386 = vpop.f32.mrf.mxu0
  %v4387 = vadd.f32 %v4132, %v4386
  %v4388 = vpop.f32.mrf.mxu0
  %4389 = vmatprep.mubr.f32.mxu0 %v3282
  %4390 = vmatmul.mubr.f32.gmra.mxu0 %v3280
  %v4391 = vpop.f32.mrf.mxu0
  %v4392 = vadd.f32 %v4137, %v4391
  %v4393 = vpop.f32.mrf.mxu0
  %4394 = vdwg.mxu0
  %4395 = vmatprep.subr.mxu0 0.0
  %4396 = vmatpush1.msra.mxu0 0.0
  %4397 = vmatprep.subr.mxu0 0.0
  %4398 = vmatpush1.msra.mxu0 0.0
  %4399 = vmatprep.subr.mxu0 0.0
  %4400 = vmatpush1.msra.mxu0 0.0
  %4401 = vmatprep.subr.mxu0 0.0
  %4402 = vmatpush1.msra.mxu0 0.0
  %4403 = vmatprep.subr.mxu0 0.0
  %4404 = vmatpush1.msra.mxu0 %v3495
  %4405 = vmatprep.subr.mxu0 0.0
  %4406 = vmatpush1.msra.mxu0 %v3492
  %4407 = vmatprep.subr.mxu0 0.0
  %4408 = vmatpush1.msra.mxu0 %v3489
  %4409 = vmatprep.subr.mxu0 0.0
  %4410 = vmatpush1.msra.mxu0 %v3486
  %4411 = vmatprep.subr.mxu0 0.0
  %4412 = vmatpush1.msra.mxu0 %v3483
  %4413 = vmatprep.subr.mxu0 0.0
  %4414 = vmatpush1.msra.mxu0 %v3480
  %4415 = vmatprep.subr.mxu0 0.0
  %4416 = vmatpush1.msra.mxu0 %v3477
  %4417 = vmatprep.subr.mxu0 0.0
  %4418 = vmatpush1.msra.mxu0 %v3474
  %4419 = vmatprep.subr.mxu0 0.0
  %4420 = vmatpush1.msra.mxu0 %v3471
  %4421 = vmatprep.subr.mxu0 0.0
  %4422 = vmatpush1.msra.mxu0 %v3468
  %4423 = vmatprep.subr.mxu0 0.0
  %4424 = vmatpush1.msra.mxu0 %v3465
  %4425 = vmatprep.subr.mxu0 0.0
  %4426 = vmatpush1.msra.mxu0 %v3462
  %4427 = vmatprep.subr.mxu0 0.0
  %4428 = vmatpush2.msra.mxu0 0.0
  %4429 = vmatprep.subr.mxu0 0.0
  %4430 = vmatpush2.msra.mxu0 0.0
  %4431 = vmatprep.subr.mxu0 0.0
  %4432 = vmatpush2.msra.mxu0 0.0
  %4433 = vmatprep.subr.mxu0 0.0
  %4434 = vmatpush2.msra.mxu0 0.0
  %4435 = vmatprep.subr.mxu0 0.0
  %4436 = vmatpush2.msra.mxu0 0.0
  %4437 = vmatprep.subr.mxu0 0.0
  %4438 = vmatpush2.msra.mxu0 0.0
  %4439 = vmatprep.subr.mxu0 0.0
  %4440 = vmatpush2.msra.mxu0 0.0
  %4441 = vmatprep.subr.mxu0 0.0
  %4442 = vmatpush2.msra.mxu0 0.0
  %4443 = vmatprep.subr.mxu0 0.0
  %4444 = vmatpush2.msra.mxu0 0.0
  %4445 = vmatprep.subr.mxu0 0.0
  %4446 = vmatpush2.msra.mxu0 0.0
  %4447 = vmatprep.subr.mxu0 0.0
  %4448 = vmatpush2.msra.mxu0 0.0
  %4449 = vmatprep.subr.mxu0 0.0
  %4450 = vmatpush2.msra.mxu0 0.0
  %4451 = vmatprep.subr.mxu0 0.0
  %4452 = vmatpush2.msra.mxu0 0.0
  %4453 = vmatprep.subr.mxu0 0.0
  %4454 = vmatpush2.msra.mxu0 0.0
  %4455 = vmatprep.subr.mxu0 0.0
  %4456 = vmatpush2.msra.mxu0 0.0
  %4457 = vmatprep.subr.mxu0 0.0
  %4458 = vmatpush2.msra.mxu0 0.0
  %4459 = vmatprep.mubr.f32.mxu0 0.0
  %4460 = vmatmul.mubr.f32.gmra.mxu0 %v4141
  %v4461 = vpop.f32.mrf.mxu0
  %v4462 = vadd.f32 %v4382, %v4461
  %v4463 = vpop.f32.mrf.mxu0
  %4464 = vmatprep.mubr.f32.mxu0 0.0
  %4465 = vmatmul.mubr.f32.gmra.mxu0 %v4144
  %v4466 = vpop.f32.mrf.mxu0
  %v4467 = vadd.f32 %v4387, %v4466
  %v4468 = vpop.f32.mrf.mxu0
  %4469 = vmatprep.mubr.f32.mxu0 0.0
  %4470 = vmatmul.mubr.f32.gmra.mxu0 %v4147
  %v4471 = vpop.f32.mrf.mxu0
  %v4472 = vadd.f32 %v4392, %v4471
  %v4473 = vpop.f32.mrf.mxu0
  %4474 = vdwg.mxu0
  %s4475 = scalar_lea.vmem %s6, 48
  %v4476 = vld [vmem:[%s4475] sm:$0xff]
  %v4477 = vld [vmem:[%s4475 + $0x8] sm:$0xff]
  %v4478 = vld [vmem:[%s4475 + $0x10] sm:$0x3]
  %v4480 = vsel %vm3182, %v4476, 0
  %v4483 = vsel %vm3182, %v4477, 0
  %v4486 = vsel %vm3182, %v4478, 0
  %4488 = vmatprep.subr.mxu0 0.0
  %4489 = vmatpush1.msra.mxu0 0.0
  %4490 = vmatprep.subr.mxu0 0.0
  %4491 = vmatpush1.msra.mxu0 0.0
  %4492 = vmatprep.subr.mxu0 0.0
  %4493 = vmatpush1.msra.mxu0 0.0
  %4494 = vmatprep.subr.mxu0 0.0
  %4495 = vmatpush1.msra.mxu0 0.0
  %4496 = vmatprep.subr.mxu0 0.0
  %4497 = vmatpush1.msra.mxu0 0.0
  %4498 = vmatprep.subr.mxu0 0.0
  %4499 = vmatpush1.msra.mxu0 0.0
  %4500 = vmatprep.subr.mxu0 0.0
  %4501 = vmatpush1.msra.mxu0 0.0
  %4502 = vmatprep.subr.mxu0 0.0
  %4503 = vmatpush1.msra.mxu0 0.0
  %4504 = vmatprep.subr.mxu0 0.0
  %4505 = vmatpush1.msra.mxu0 0.0
  %4506 = vmatprep.subr.mxu0 0.0
  %4507 = vmatpush1.msra.mxu0 0.0
  %4508 = vmatprep.subr.mxu0 %v3196
  %4509 = vmatpush1.msra.mxu0 %v3193
  %4510 = vmatprep.subr.mxu0 %v3174
  %4511 = vmatpush1.msra.mxu0 %v3173
  %4512 = vmatprep.subr.mxu0 %v3171
  %4513 = vmatpush1.msra.mxu0 %v3170
  %4514 = vmatprep.subr.mxu0 %v3168
  %4515 = vmatpush1.msra.mxu0 %v3167
  %4516 = vmatprep.subr.mxu0 %v3165
  %4517 = vmatpush1.msra.mxu0 %v3164
  %4518 = vmatprep.subr.mxu0 %v3162
  %4519 = vmatpush1.msra.mxu0 %v3161
  %4520 = vmatprep.subr.mxu0 0.0
  %4521 = vmatpush2.msra.mxu0 0.0
  %4522 = vmatprep.subr.mxu0 0.0
  %4523 = vmatpush2.msra.mxu0 0.0
  %4524 = vmatprep.subr.mxu0 0.0
  %4525 = vmatpush2.msra.mxu0 0.0
  %4526 = vmatprep.subr.mxu0 0.0
  %4527 = vmatpush2.msra.mxu0 0.0
  %4528 = vmatprep.subr.mxu0 0.0
  %4529 = vmatpush2.msra.mxu0 0.0
  %4530 = vmatprep.subr.mxu0 0.0
  %4531 = vmatpush2.msra.mxu0 0.0
  %4532 = vmatprep.subr.mxu0 0.0
  %4533 = vmatpush2.msra.mxu0 0.0
  %4534 = vmatprep.subr.mxu0 0.0
  %4535 = vmatpush2.msra.mxu0 0.0
  %4536 = vmatprep.subr.mxu0 0.0
  %4537 = vmatpush2.msra.mxu0 0.0
  %4538 = vmatprep.subr.mxu0 0.0
  %4539 = vmatpush2.msra.mxu0 0.0
  %4540 = vmatprep.subr.mxu0 0.0
  %4541 = vmatpush2.msra.mxu0 0.0
  %4542 = vmatprep.subr.mxu0 0.0
  %4543 = vmatpush2.msra.mxu0 0.0
  %4544 = vmatprep.subr.mxu0 0.0
  %4545 = vmatpush2.msra.mxu0 0.0
  %4546 = vmatprep.subr.mxu0 0.0
  %4547 = vmatpush2.msra.mxu0 0.0
  %4548 = vmatprep.subr.mxu0 0.0
  %4549 = vmatpush2.msra.mxu0 0.0
  %4550 = vmatprep.subr.mxu0 0.0
  %4551 = vmatpush2.msra.mxu0 0.0
  %4552 = vmatprep.mubr.f32.mxu0 0.0
  %4553 = vmatmul.mubr.f32.gmra.mxu0 %v4480
  %v4554 = vpop.f32.mrf.mxu0
  %v4555 = vadd.f32 0.0, %v4554
  %v4556 = vpop.f32.mrf.mxu0
  %v4557 = vadd.f32 0.0, %v4556
  %4558 = vmatprep.mubr.f32.mxu0 0.0
  %4559 = vmatmul.mubr.f32.gmra.mxu0 %v4483
  %v4560 = vpop.f32.mrf.mxu0
  %v4561 = vadd.f32 0.0, %v4560
  %v4562 = vpop.f32.mrf.mxu0
  %v4563 = vadd.f32 0.0, %v4562
  %4564 = vmatprep.mubr.f32.mxu0 0.0
  %4565 = vmatmul.mubr.f32.gmra.mxu0 %v4486
  %v4566 = vpop.f32.mrf.mxu0
  %v4567 = vadd.f32 0.0, %v4566
  %v4568 = vpop.f32.mrf.mxu0
  %v4569 = vadd.f32 0.0, %v4568
  %4570 = vdwg.mxu0
  %4571 = vmatprep.subr.mxu0 0.0
  %4572 = vmatpush1.msra.mxu0 0.0
  %4573 = vmatprep.subr.mxu0 0.0
  %4574 = vmatpush1.msra.mxu0 0.0
  %4575 = vmatprep.subr.mxu0 0.0
  %4576 = vmatpush1.msra.mxu0 0.0
  %4577 = vmatprep.subr.mxu0 0.0
  %4578 = vmatpush1.msra.mxu0 0.0
  %4579 = vmatprep.subr.mxu0 0.0
  %4580 = vmatpush1.msra.mxu0 0.0
  %4581 = vmatprep.subr.mxu0 0.0
  %4582 = vmatpush1.msra.mxu0 0.0
  %4583 = vmatprep.subr.mxu0 0.0
  %4584 = vmatpush1.msra.mxu0 0.0
  %4585 = vmatprep.subr.mxu0 0.0
  %4586 = vmatpush1.msra.mxu0 0.0
  %4587 = vmatprep.subr.mxu0 0.0
  %4588 = vmatpush1.msra.mxu0 0.0
  %4589 = vmatprep.subr.mxu0 0.0
  %4590 = vmatpush1.msra.mxu0 0.0
  %4591 = vmatprep.subr.mxu0 0.0
  %4592 = vmatpush1.msra.mxu0 %v3199
  %4593 = vmatprep.subr.mxu0 0.0
  %4594 = vmatpush1.msra.mxu0 %v3175
  %4595 = vmatprep.subr.mxu0 0.0
  %4596 = vmatpush1.msra.mxu0 %v3172
  %4597 = vmatprep.subr.mxu0 0.0
  %4598 = vmatpush1.msra.mxu0 %v3169
  %4599 = vmatprep.subr.mxu0 0.0
  %4600 = vmatpush1.msra.mxu0 %v3166
  %4601 = vmatprep.subr.mxu0 0.0
  %4602 = vmatpush1.msra.mxu0 %v3163
  %4603 = vmatprep.subr.mxu0 0.0
  %4604 = vmatpush2.msra.mxu0 0.0
  %4605 = vmatprep.subr.mxu0 0.0
  %4606 = vmatpush2.msra.mxu0 0.0
  %4607 = vmatprep.subr.mxu0 0.0
  %4608 = vmatpush2.msra.mxu0 0.0
  %4609 = vmatprep.subr.mxu0 0.0
  %4610 = vmatpush2.msra.mxu0 0.0
  %4611 = vmatprep.subr.mxu0 0.0
  %4612 = vmatpush2.msra.mxu0 0.0
  %4613 = vmatprep.subr.mxu0 0.0
  %4614 = vmatpush2.msra.mxu0 0.0
  %4615 = vmatprep.subr.mxu0 0.0
  %4616 = vmatpush2.msra.mxu0 0.0
  %4617 = vmatprep.subr.mxu0 0.0
  %4618 = vmatpush2.msra.mxu0 0.0
  %4619 = vmatprep.subr.mxu0 0.0
  %4620 = vmatpush2.msra.mxu0 0.0
  %4621 = vmatprep.subr.mxu0 0.0
  %4622 = vmatpush2.msra.mxu0 0.0
  %4623 = vmatprep.subr.mxu0 0.0
  %4624 = vmatpush2.msra.mxu0 0.0
  %4625 = vmatprep.subr.mxu0 0.0
  %4626 = vmatpush2.msra.mxu0 0.0
  %4627 = vmatprep.subr.mxu0 0.0
  %4628 = vmatpush2.msra.mxu0 0.0
  %4629 = vmatprep.subr.mxu0 0.0
  %4630 = vmatpush2.msra.mxu0 0.0
  %4631 = vmatprep.subr.mxu0 0.0
  %4632 = vmatpush2.msra.mxu0 0.0
  %4633 = vmatprep.subr.mxu0 0.0
  %4634 = vmatpush2.msra.mxu0 0.0
  %4635 = vmatprep.mubr.f32.mxu0 0.0
  %4636 = vmatmul.mubr.f32.gmra.mxu0 %v4480
  %v4637 = vpop.f32.mrf.mxu0
  %v4638 = vadd.f32 0.0, %v4637
  %v4639 = vpop.f32.mrf.mxu0
  %4640 = vmatprep.mubr.f32.mxu0 0.0
  %4641 = vmatmul.mubr.f32.gmra.mxu0 %v4483
  %v4642 = vpop.f32.mrf.mxu0
  %v4643 = vadd.f32 0.0, %v4642
  %v4644 = vpop.f32.mrf.mxu0
  %4645 = vmatprep.mubr.f32.mxu0 0.0
  %4646 = vmatmul.mubr.f32.gmra.mxu0 %v4486
  %v4647 = vpop.f32.mrf.mxu0
  %v4648 = vadd.f32 0.0, %v4647
  %v4649 = vpop.f32.mrf.mxu0
  %4650 = vdwg.mxu0
  %s4651 = scalar_lea.vmem %s7, 2112
  %v4652 = vld [vmem:[%s4651] sm:$0xff]
  %v4653 = vld [vmem:[%s4651 + $0x8] sm:$0xff]
  %v4654 = vld [vmem:[%s4651 + $0x10] sm:$0xff]
  %v4655 = vld [vmem:[%s4651 + $0x18] sm:$0xff]
  %v4656 = vld [vmem:[%s4651 + $0x20] sm:$0xff]
  %v4657 = vld [vmem:[%s4651 + $0x28] sm:$0xff]
  %v4658 = vld [vmem:[%s4651 + $0x30] sm:$0xff]
  %v4659 = vld [vmem:[%s4651 + $0x38] sm:$0xff]
  %v4660 = vld [vmem:[%s4651 + $0x40] sm:$0xff]
  %v4661 = vld [vmem:[%s4651 + $0x48] sm:$0xff]
  %v4662 = vld [vmem:[%s4651 + $0x50] sm:$0xff]
  %v4663 = vld [vmem:[%s4651 + $0x58] sm:$0xff]
  %v4664 = vld [vmem:[%s4651 + $0x60] sm:$0xff]
  %v4665 = vld [vmem:[%s4651 + $0x68] sm:$0xff]
  %v4666 = vld [vmem:[%s4651 + $0x70] sm:$0xff]
  %v4667 = vld [vmem:[%s4651 + $0x78] sm:$0xff]
  %v4668 = vld [vmem:[%s4651 + $0x80] sm:$0xff]
  %v4669 = vld [vmem:[%s4651 + $0x88] sm:$0xff]
  %v4670 = vld [vmem:[%s4651 + $0x90] sm:$0xff]
  %v4671 = vld [vmem:[%s4651 + $0x98] sm:$0xff]
  %v4672 = vld [vmem:[%s4651 + $0xa0] sm:$0xff]
  %v4673 = vld [vmem:[%s4651 + $0xa8] sm:$0xff]
  %v4674 = vld [vmem:[%s4651 + $0xb0] sm:$0xff]
  %v4675 = vld [vmem:[%s4651 + $0xb8] sm:$0xff]
  %v4676 = vld [vmem:[%s4651 + $0xc0] sm:$0xff]
  %v4677 = vld [vmem:[%s4651 + $0xc8] sm:$0xff]
  %v4678 = vld [vmem:[%s4651 + $0xd0] sm:$0xff]
  %v4679 = vld [vmem:[%s4651 + $0xd8] sm:$0xff]
  %v4680 = vld [vmem:[%s4651 + $0xe0] sm:$0xff]
  %v4681 = vld [vmem:[%s4651 + $0xe8] sm:$0xff]
  %v4682 = vld [vmem:[%s4651 + $0xf0] sm:$0xff]
  %v4683 = vld [vmem:[%s4651 + $0xf8] sm:$0xff]
  %v4684 = vld [vmem:[%s4651 + $0x100] sm:$0xff]
  %v4685 = vld [vmem:[%s4651 + $0x108] sm:$0xff]
  %v4686 = vld [vmem:[%s4651 + $0x110] sm:$0xff]
  %v4687 = vld [vmem:[%s4651 + $0x118] sm:$0xff]
  %v4688 = vld [vmem:[%s4651 + $0x120] sm:$0xff]
  %v4689 = vld [vmem:[%s4651 + $0x128] sm:$0xff]
  %v4690 = vld [vmem:[%s4651 + $0x130] sm:$0xff]
  %v4691 = vld [vmem:[%s4651 + $0x138] sm:$0xff]
  %v4692 = vld [vmem:[%s4651 + $0x140] sm:$0xff]
  %v4693 = vld [vmem:[%s4651 + $0x148] sm:$0xff]
  %v4694 = vld [vmem:[%s4651 + $0x150] sm:$0xff]
  %v4695 = vld [vmem:[%s4651 + $0x158] sm:$0xff]
  %v4696 = vld [vmem:[%s4651 + $0x160] sm:$0xff]
  %v4697 = vld [vmem:[%s4651 + $0x168] sm:$0xff]
  %v4698 = vld [vmem:[%s4651 + $0x170] sm:$0xff]
  %v4699 = vld [vmem:[%s4651 + $0x178] sm:$0xff]
  %v4700 = vld [vmem:[%s4651 + $0x180] sm:$0xff]
  %v4701 = vld [vmem:[%s4651 + $0x188] sm:$0xff]
  %v4702 = vld [vmem:[%s4651 + $0x190] sm:$0xff]
  %v4703 = vld [vmem:[%s4651 + $0x198] sm:$0xff]
  %v4704 = vld [vmem:[%s4651 + $0x1a0] sm:$0xff]
  %v4705 = vld [vmem:[%s4651 + $0x1a8] sm:$0xff]
  %v4706 = vld [vmem:[%s4651 + $0x1b0] sm:$0xff]
  %v4707 = vld [vmem:[%s4651 + $0x1b8] sm:$0xff]
  %v4708 = vld [vmem:[%s4651 + $0x1c0] sm:$0xff]
  %v4709 = vld [vmem:[%s4651 + $0x1c8] sm:$0xff]
  %v4710 = vld [vmem:[%s4651 + $0x1d0] sm:$0xff]
  %v4711 = vld [vmem:[%s4651 + $0x1d8] sm:$0xff]
  %v4712 = vld [vmem:[%s4651 + $0x1e0] sm:$0xff]
  %v4713 = vld [vmem:[%s4651 + $0x1e8] sm:$0xff]
  %v4714 = vld [vmem:[%s4651 + $0x1f0] sm:$0xff]
  %v4715 = vld [vmem:[%s4651 + $0x1f8] sm:$0xff]
  %v4716 = vld [vmem:[%s4651 + $0x200] sm:$0xff]
  %v4717 = vld [vmem:[%s4651 + $0x208] sm:$0xff]
  %v4718 = vld [vmem:[%s4651 + $0x210] sm:$0xff]
  %v4719 = vld [vmem:[%s4651 + $0x218] sm:$0xff]
  %v4720 = vld [vmem:[%s4651 + $0x220] sm:$0xff]
  %v4721 = vld [vmem:[%s4651 + $0x228] sm:$0xff]
  %v4722 = vld [vmem:[%s4651 + $0x230] sm:$0xff]
  %v4723 = vld [vmem:[%s4651 + $0x238] sm:$0xff]
  %v4724 = vld [vmem:[%s4651 + $0x240] sm:$0xff]
  %v4725 = vld [vmem:[%s4651 + $0x248] sm:$0xff]
  %v4726 = vld [vmem:[%s4651 + $0x250] sm:$0xff]
  %v4727 = vld [vmem:[%s4651 + $0x258] sm:$0xff]
  %v4728 = vld [vmem:[%s4651 + $0x260] sm:$0xff]
  %v4729 = vld [vmem:[%s4651 + $0x268] sm:$0xff]
  %v4730 = vld [vmem:[%s4651 + $0x270] sm:$0xff]
  %v4731 = vld [vmem:[%s4651 + $0x278] sm:$0xff]
  %v4732 = vld [vmem:[%s4651 + $0x280] sm:$0xff]
  %v4733 = vld [vmem:[%s4651 + $0x288] sm:$0xff]
  %v4734 = vld [vmem:[%s4651 + $0x290] sm:$0xff]
  %v4735 = vld [vmem:[%s4651 + $0x298] sm:$0xff]
  %v4736 = vld [vmem:[%s4651 + $0x2a0] sm:$0xff]
  %v4737 = vld [vmem:[%s4651 + $0x2a8] sm:$0xff]
  %v4738 = vld [vmem:[%s4651 + $0x2b0] sm:$0xff]
  %v4739 = vld [vmem:[%s4651 + $0x2b8] sm:$0xff]
  %v4740 = vld [vmem:[%s4651 + $0x2c0] sm:$0xff]
  %v4741 = vld [vmem:[%s4651 + $0x2c8] sm:$0xff]
  %v4742 = vld [vmem:[%s4651 + $0x2d0] sm:$0xff]
  %v4743 = vld [vmem:[%s4651 + $0x2d8] sm:$0xff]
  %v4744 = vld [vmem:[%s4651 + $0x2e0] sm:$0xff]
  %v4745 = vld [vmem:[%s4651 + $0x2e8] sm:$0xff]
  %v4746 = vld [vmem:[%s4651 + $0x2f0] sm:$0xff]
  %v4747 = vld [vmem:[%s4651 + $0x2f8] sm:$0xff]
  %v4748 = vld [vmem:[%s4651 + $0x300] sm:$0xff]
  %v4749 = vld [vmem:[%s4651 + $0x308] sm:$0xff]
  %v4750 = vld [vmem:[%s4651 + $0x310] sm:$0xff]
  %v4751 = vld [vmem:[%s4651 + $0x318] sm:$0xff]
  %v4752 = vld [vmem:[%s4651 + $0x320] sm:$0xff]
  %v4753 = vld [vmem:[%s4651 + $0x328] sm:$0xff]
  %v4754 = vld [vmem:[%s4651 + $0x330] sm:$0xff]
  %v4755 = vld [vmem:[%s4651 + $0x338] sm:$0xff]
  %v4756 = vld [vmem:[%s4651 + $0x340] sm:$0xff]
  %v4757 = vld [vmem:[%s4651 + $0x348] sm:$0xff]
  %v4758 = vld [vmem:[%s4651 + $0x350] sm:$0xff]
  %v4759 = vld [vmem:[%s4651 + $0x358] sm:$0xff]
  %v4760 = vld [vmem:[%s4651 + $0x360] sm:$0xff]
  %v4761 = vld [vmem:[%s4651 + $0x368] sm:$0xff]
  %v4762 = vld [vmem:[%s4651 + $0x370] sm:$0xff]
  %v4763 = vld [vmem:[%s4651 + $0x378] sm:$0xff]
  %v4764 = vld [vmem:[%s4651 + $0x380] sm:$0xff]
  %v4765 = vld [vmem:[%s4651 + $0x388] sm:$0xff]
  %v4766 = vld [vmem:[%s4651 + $0x390] sm:$0xff]
  %v4767 = vld [vmem:[%s4651 + $0x398] sm:$0xff]
  %v4768 = vld [vmem:[%s4651 + $0x3a0] sm:$0xff]
  %v4769 = vld [vmem:[%s4651 + $0x3a8] sm:$0xff]
  %v4770 = vld [vmem:[%s4651 + $0x3b0] sm:$0xff]
  %v4771 = vld [vmem:[%s4651 + $0x3b8] sm:$0xff]
  %v4772 = vld [vmem:[%s4651 + $0x3c0] sm:$0xff]
  %v4773 = vld [vmem:[%s4651 + $0x3c8] sm:$0xff]
  %v4774 = vld [vmem:[%s4651 + $0x3d0] sm:$0xff]
  %v4775 = vld [vmem:[%s4651 + $0x3d8] sm:$0xff]
  %v4776 = vld [vmem:[%s4651 + $0x3e0] sm:$0xff]
  %v4777 = vld [vmem:[%s4651 + $0x3e8] sm:$0xff]
  %v4778 = vld [vmem:[%s4651 + $0x3f0] sm:$0xff]
  %v4779 = vld [vmem:[%s4651 + $0x3f8] sm:$0xff]
  %v4780 = vld [vmem:[%s4651 + $0x400] sm:$0xff]
  %v4781 = vld [vmem:[%s4651 + $0x408] sm:$0xff]
  %v4782 = vld [vmem:[%s4651 + $0x410] sm:$0xff]
  %v4783 = vld [vmem:[%s4651 + $0x418] sm:$0xff]
  %v4785 = vsel %vm98, %v4638, 0
  %v4788 = vsel %vm98, %v4643, 0
  %v4791 = vsel %vm98, %v4648, 0
  %4793 = vmatprep.subr.mxu0 %v4698
  %4794 = vmatpush1.msra.mxu0 %v4697
  %4795 = vmatprep.subr.mxu0 %v4695
  %4796 = vmatpush1.msra.mxu0 %v4694
  %4797 = vmatprep.subr.mxu0 %v4692
  %4798 = vmatpush1.msra.mxu0 %v4691
  %4799 = vmatprep.subr.mxu0 %v4689
  %4800 = vmatpush1.msra.mxu0 %v4688
  %4801 = vmatprep.subr.mxu0 %v4686
  %4802 = vmatpush1.msra.mxu0 %v4685
  %4803 = vmatprep.subr.mxu0 %v4683
  %4804 = vmatpush1.msra.mxu0 %v4682
  %4805 = vmatprep.subr.mxu0 %v4680
  %4806 = vmatpush1.msra.mxu0 %v4679
  %4807 = vmatprep.subr.mxu0 %v4677
  %4808 = vmatpush1.msra.mxu0 %v4676
  %4809 = vmatprep.subr.mxu0 %v4674
  %4810 = vmatpush1.msra.mxu0 %v4673
  %4811 = vmatprep.subr.mxu0 %v4671
  %4812 = vmatpush1.msra.mxu0 %v4670
  %4813 = vmatprep.subr.mxu0 %v4668
  %4814 = vmatpush1.msra.mxu0 %v4667
  %4815 = vmatprep.subr.mxu0 %v4665
  %4816 = vmatpush1.msra.mxu0 %v4664
  %4817 = vmatprep.subr.mxu0 %v4662
  %4818 = vmatpush1.msra.mxu0 %v4661
  %4819 = vmatprep.subr.mxu0 %v4659
  %4820 = vmatpush1.msra.mxu0 %v4658
  %4821 = vmatprep.subr.mxu0 %v4656
  %4822 = vmatpush1.msra.mxu0 %v4655
  %4823 = vmatprep.subr.mxu0 %v4653
  %4824 = vmatpush1.msra.mxu0 %v4652
  %4825 = vmatprep.subr.mxu0 %v4746
  %4826 = vmatpush2.msra.mxu0 %v4745
  %4827 = vmatprep.subr.mxu0 %v4743
  %4828 = vmatpush2.msra.mxu0 %v4742
  %4829 = vmatprep.subr.mxu0 %v4740
  %4830 = vmatpush2.msra.mxu0 %v4739
  %4831 = vmatprep.subr.mxu0 %v4737
  %4832 = vmatpush2.msra.mxu0 %v4736
  %4833 = vmatprep.subr.mxu0 %v4734
  %4834 = vmatpush2.msra.mxu0 %v4733
  %4835 = vmatprep.subr.mxu0 %v4731
  %4836 = vmatpush2.msra.mxu0 %v4730
  %4837 = vmatprep.subr.mxu0 %v4728
  %4838 = vmatpush2.msra.mxu0 %v4727
  %4839 = vmatprep.subr.mxu0 %v4725
  %4840 = vmatpush2.msra.mxu0 %v4724
  %4841 = vmatprep.subr.mxu0 %v4722
  %4842 = vmatpush2.msra.mxu0 %v4721
  %4843 = vmatprep.subr.mxu0 %v4719
  %4844 = vmatpush2.msra.mxu0 %v4718
  %4845 = vmatprep.subr.mxu0 %v4716
  %4846 = vmatpush2.msra.mxu0 %v4715
  %4847 = vmatprep.subr.mxu0 %v4713
  %4848 = vmatpush2.msra.mxu0 %v4712
  %4849 = vmatprep.subr.mxu0 %v4710
  %4850 = vmatpush2.msra.mxu0 %v4709
  %4851 = vmatprep.subr.mxu0 %v4707
  %4852 = vmatpush2.msra.mxu0 %v4706
  %4853 = vmatprep.subr.mxu0 %v4704
  %4854 = vmatpush2.msra.mxu0 %v4703
  %4855 = vmatprep.subr.mxu0 %v4701
  %4856 = vmatpush2.msra.mxu0 %v4700
  %4857 = vmatprep.mubr.f32.mxu0 %v4557
  %4858 = vmatmul.mubr.f32.gmra.mxu0 %v4555
  %v4859 = vpop.f32.mrf.mxu0
  %v4860 = vadd.f32 0.0, %v4859
  %v4861 = vpop.f32.mrf.mxu0
  %v4862 = vadd.f32 0.0, %v4861
  %4863 = vmatprep.mubr.f32.mxu0 %v4563
  %4864 = vmatmul.mubr.f32.gmra.mxu0 %v4561
  %v4865 = vpop.f32.mrf.mxu0
  %v4866 = vadd.f32 0.0, %v4865
  %v4867 = vpop.f32.mrf.mxu0
  %v4868 = vadd.f32 0.0, %v4867
  %4869 = vmatprep.mubr.f32.mxu0 %v4569
  %4870 = vmatmul.mubr.f32.gmra.mxu0 %v4567
  %v4871 = vpop.f32.mrf.mxu0
  %v4872 = vadd.f32 0.0, %v4871
  %v4873 = vpop.f32.mrf.mxu0
  %v4874 = vadd.f32 0.0, %v4873
  %4875 = vdwg.mxu0
  %4876 = vmatprep.subr.mxu0 0.0
  %4877 = vmatpush1.msra.mxu0 0.0
  %4878 = vmatprep.subr.mxu0 0.0
  %4879 = vmatpush1.msra.mxu0 0.0
  %4880 = vmatprep.subr.mxu0 0.0
  %4881 = vmatpush1.msra.mxu0 0.0
  %4882 = vmatprep.subr.mxu0 0.0
  %4883 = vmatpush1.msra.mxu0 0.0
  %4884 = vmatprep.subr.mxu0 %v4782
  %4885 = vmatpush1.msra.mxu0 %v4781
  %4886 = vmatprep.subr.mxu0 %v4779
  %4887 = vmatpush1.msra.mxu0 %v4778
  %4888 = vmatprep.subr.mxu0 %v4776
  %4889 = vmatpush1.msra.mxu0 %v4775
  %4890 = vmatprep.subr.mxu0 %v4773
  %4891 = vmatpush1.msra.mxu0 %v4772
  %4892 = vmatprep.subr.mxu0 %v4770
  %4893 = vmatpush1.msra.mxu0 %v4769
  %4894 = vmatprep.subr.mxu0 %v4767
  %4895 = vmatpush1.msra.mxu0 %v4766
  %4896 = vmatprep.subr.mxu0 %v4764
  %4897 = vmatpush1.msra.mxu0 %v4763
  %4898 = vmatprep.subr.mxu0 %v4761
  %4899 = vmatpush1.msra.mxu0 %v4760
  %4900 = vmatprep.subr.mxu0 %v4758
  %4901 = vmatpush1.msra.mxu0 %v4757
  %4902 = vmatprep.subr.mxu0 %v4755
  %4903 = vmatpush1.msra.mxu0 %v4754
  %4904 = vmatprep.subr.mxu0 %v4752
  %4905 = vmatpush1.msra.mxu0 %v4751
  %4906 = vmatprep.subr.mxu0 %v4749
  %4907 = vmatpush1.msra.mxu0 %v4748
  %4908 = vmatprep.subr.mxu0 0.0
  %4909 = vmatpush2.msra.mxu0 0.0
  %4910 = vmatprep.subr.mxu0 0.0
  %4911 = vmatpush2.msra.mxu0 0.0
  %4912 = vmatprep.subr.mxu0 0.0
  %4913 = vmatpush2.msra.mxu0 0.0
  %4914 = vmatprep.subr.mxu0 0.0
  %4915 = vmatpush2.msra.mxu0 0.0
  %4916 = vmatprep.subr.mxu0 0.0
  %4917 = vmatpush2.msra.mxu0 0.0
  %4918 = vmatprep.subr.mxu0 0.0
  %4919 = vmatpush2.msra.mxu0 0.0
  %4920 = vmatprep.subr.mxu0 0.0
  %4921 = vmatpush2.msra.mxu0 0.0
  %4922 = vmatprep.subr.mxu0 0.0
  %4923 = vmatpush2.msra.mxu0 0.0
  %4924 = vmatprep.subr.mxu0 0.0
  %4925 = vmatpush2.msra.mxu0 0.0
  %4926 = vmatprep.subr.mxu0 0.0
  %4927 = vmatpush2.msra.mxu0 0.0
  %4928 = vmatprep.subr.mxu0 0.0
  %4929 = vmatpush2.msra.mxu0 0.0
  %4930 = vmatprep.subr.mxu0 0.0
  %4931 = vmatpush2.msra.mxu0 0.0
  %4932 = vmatprep.subr.mxu0 0.0
  %4933 = vmatpush2.msra.mxu0 0.0
  %4934 = vmatprep.subr.mxu0 0.0
  %4935 = vmatpush2.msra.mxu0 0.0
  %4936 = vmatprep.subr.mxu0 0.0
  %4937 = vmatpush2.msra.mxu0 0.0
  %4938 = vmatprep.subr.mxu0 0.0
  %4939 = vmatpush2.msra.mxu0 0.0
  %4940 = vmatprep.mubr.f32.mxu0 0.0
  %4941 = vmatmul.mubr.f32.gmra.mxu0 %v4785
  %v4942 = vpop.f32.mrf.mxu0
  %v4943 = vadd.f32 %v4860, %v4942
  %v4944 = vpop.f32.mrf.mxu0
  %v4945 = vadd.f32 %v4862, %v4944
  %4946 = vmatprep.mubr.f32.mxu0 0.0
  %4947 = vmatmul.mubr.f32.gmra.mxu0 %v4788
  %v4948 = vpop.f32.mrf.mxu0
  %v4949 = vadd.f32 %v4866, %v4948
  %v4950 = vpop.f32.mrf.mxu0
  %v4951 = vadd.f32 %v4868, %v4950
  %4952 = vmatprep.mubr.f32.mxu0 0.0
  %4953 = vmatmul.mubr.f32.gmra.mxu0 %v4791
  %v4954 = vpop.f32.mrf.mxu0
  %v4955 = vadd.f32 %v4872, %v4954
  %v4956 = vpop.f32.mrf.mxu0
  %v4957 = vadd.f32 %v4874, %v4956
  %4958 = vdwg.mxu0
  %4959 = vmatprep.subr.mxu0 0.0
  %4960 = vmatpush1.msra.mxu0 %v4699
  %4961 = vmatprep.subr.mxu0 0.0
  %4962 = vmatpush1.msra.mxu0 %v4696
  %4963 = vmatprep.subr.mxu0 0.0
  %4964 = vmatpush1.msra.mxu0 %v4693
  %4965 = vmatprep.subr.mxu0 0.0
  %4966 = vmatpush1.msra.mxu0 %v4690
  %4967 = vmatprep.subr.mxu0 0.0
  %4968 = vmatpush1.msra.mxu0 %v4687
  %4969 = vmatprep.subr.mxu0 0.0
  %4970 = vmatpush1.msra.mxu0 %v4684
  %4971 = vmatprep.subr.mxu0 0.0
  %4972 = vmatpush1.msra.mxu0 %v4681
  %4973 = vmatprep.subr.mxu0 0.0
  %4974 = vmatpush1.msra.mxu0 %v4678
  %4975 = vmatprep.subr.mxu0 0.0
  %4976 = vmatpush1.msra.mxu0 %v4675
  %4977 = vmatprep.subr.mxu0 0.0
  %4978 = vmatpush1.msra.mxu0 %v4672
  %4979 = vmatprep.subr.mxu0 0.0
  %4980 = vmatpush1.msra.mxu0 %v4669
  %4981 = vmatprep.subr.mxu0 0.0
  %4982 = vmatpush1.msra.mxu0 %v4666
  %4983 = vmatprep.subr.mxu0 0.0
  %4984 = vmatpush1.msra.mxu0 %v4663
  %4985 = vmatprep.subr.mxu0 0.0
  %4986 = vmatpush1.msra.mxu0 %v4660
  %4987 = vmatprep.subr.mxu0 0.0
  %4988 = vmatpush1.msra.mxu0 %v4657
  %4989 = vmatprep.subr.mxu0 0.0
  %4990 = vmatpush1.msra.mxu0 %v4654
  %4991 = vmatprep.subr.mxu0 0.0
  %4992 = vmatpush2.msra.mxu0 %v4747
  %4993 = vmatprep.subr.mxu0 0.0
  %4994 = vmatpush2.msra.mxu0 %v4744
  %4995 = vmatprep.subr.mxu0 0.0
  %4996 = vmatpush2.msra.mxu0 %v4741
  %4997 = vmatprep.subr.mxu0 0.0
  %4998 = vmatpush2.msra.mxu0 %v4738
  %4999 = vmatprep.subr.mxu0 0.0
  %5000 = vmatpush2.msra.mxu0 %v4735
  %5001 = vmatprep.subr.mxu0 0.0
  %5002 = vmatpush2.msra.mxu0 %v4732
  %5003 = vmatprep.subr.mxu0 0.0
  %5004 = vmatpush2.msra.mxu0 %v4729
  %5005 = vmatprep.subr.mxu0 0.0
  %5006 = vmatpush2.msra.mxu0 %v4726
  %5007 = vmatprep.subr.mxu0 0.0
  %5008 = vmatpush2.msra.mxu0 %v4723
  %5009 = vmatprep.subr.mxu0 0.0
  %5010 = vmatpush2.msra.mxu0 %v4720
  %5011 = vmatprep.subr.mxu0 0.0
  %5012 = vmatpush2.msra.mxu0 %v4717
  %5013 = vmatprep.subr.mxu0 0.0
  %5014 = vmatpush2.msra.mxu0 %v4714
  %5015 = vmatprep.subr.mxu0 0.0
  %5016 = vmatpush2.msra.mxu0 %v4711
  %5017 = vmatprep.subr.mxu0 0.0
  %5018 = vmatpush2.msra.mxu0 %v4708
  %5019 = vmatprep.subr.mxu0 0.0
  %5020 = vmatpush2.msra.mxu0 %v4705
  %5021 = vmatprep.subr.mxu0 0.0
  %5022 = vmatpush2.msra.mxu0 %v4702
  %5023 = vmatprep.mubr.f32.mxu0 %v4557
  %5024 = vmatmul.mubr.f32.gmra.mxu0 %v4555
  %v5025 = vpop.f32.mrf.mxu0
  %v5026 = vadd.f32 0.0, %v5025
  %v5027 = vpop.f32.mrf.mxu0
  %5028 = vmatprep.mubr.f32.mxu0 %v4563
  %5029 = vmatmul.mubr.f32.gmra.mxu0 %v4561
  %v5030 = vpop.f32.mrf.mxu0
  %v5031 = vadd.f32 0.0, %v5030
  %v5032 = vpop.f32.mrf.mxu0
  %5033 = vmatprep.mubr.f32.mxu0 %v4569
  %5034 = vmatmul.mubr.f32.gmra.mxu0 %v4567
  %v5035 = vpop.f32.mrf.mxu0
  %v5036 = vadd.f32 0.0, %v5035
  %v5037 = vpop.f32.mrf.mxu0
  %5038 = vdwg.mxu0
  %5039 = vmatprep.subr.mxu0 0.0
  %5040 = vmatpush1.msra.mxu0 0.0
  %5041 = vmatprep.subr.mxu0 0.0
  %5042 = vmatpush1.msra.mxu0 0.0
  %5043 = vmatprep.subr.mxu0 0.0
  %5044 = vmatpush1.msra.mxu0 0.0
  %5045 = vmatprep.subr.mxu0 0.0
  %5046 = vmatpush1.msra.mxu0 0.0
  %5047 = vmatprep.subr.mxu0 0.0
  %5048 = vmatpush1.msra.mxu0 %v4783
  %5049 = vmatprep.subr.mxu0 0.0
  %5050 = vmatpush1.msra.mxu0 %v4780
  %5051 = vmatprep.subr.mxu0 0.0
  %5052 = vmatpush1.msra.mxu0 %v4777
  %5053 = vmatprep.subr.mxu0 0.0
  %5054 = vmatpush1.msra.mxu0 %v4774
  %5055 = vmatprep.subr.mxu0 0.0
  %5056 = vmatpush1.msra.mxu0 %v4771
  %5057 = vmatprep.subr.mxu0 0.0
  %5058 = vmatpush1.msra.mxu0 %v4768
  %5059 = vmatprep.subr.mxu0 0.0
  %5060 = vmatpush1.msra.mxu0 %v4765
  %5061 = vmatprep.subr.mxu0 0.0
  %5062 = vmatpush1.msra.mxu0 %v4762
  %5063 = vmatprep.subr.mxu0 0.0
  %5064 = vmatpush1.msra.mxu0 %v4759
  %5065 = vmatprep.subr.mxu0 0.0
  %5066 = vmatpush1.msra.mxu0 %v4756
  %5067 = vmatprep.subr.mxu0 0.0
  %5068 = vmatpush1.msra.mxu0 %v4753
  %5069 = vmatprep.subr.mxu0 0.0
  %5070 = vmatpush1.msra.mxu0 %v4750
  %5071 = vmatprep.subr.mxu0 0.0
  %5072 = vmatpush2.msra.mxu0 0.0
  %5073 = vmatprep.subr.mxu0 0.0
  %5074 = vmatpush2.msra.mxu0 0.0
  %5075 = vmatprep.subr.mxu0 0.0
  %5076 = vmatpush2.msra.mxu0 0.0
  %5077 = vmatprep.subr.mxu0 0.0
  %5078 = vmatpush2.msra.mxu0 0.0
  %5079 = vmatprep.subr.mxu0 0.0
  %5080 = vmatpush2.msra.mxu0 0.0
  %5081 = vmatprep.subr.mxu0 0.0
  %5082 = vmatpush2.msra.mxu0 0.0
  %5083 = vmatprep.subr.mxu0 0.0
  %5084 = vmatpush2.msra.mxu0 0.0
  %5085 = vmatprep.subr.mxu0 0.0
  %5086 = vmatpush2.msra.mxu0 0.0
  %5087 = vmatprep.subr.mxu0 0.0
  %5088 = vmatpush2.msra.mxu0 0.0
  %5089 = vmatprep.subr.mxu0 0.0
  %5090 = vmatpush2.msra.mxu0 0.0
  %5091 = vmatprep.subr.mxu0 0.0
  %5092 = vmatpush2.msra.mxu0 0.0
  %5093 = vmatprep.subr.mxu0 0.0
  %5094 = vmatpush2.msra.mxu0 0.0
  %5095 = vmatprep.subr.mxu0 0.0
  %5096 = vmatpush2.msra.mxu0 0.0
  %5097 = vmatprep.subr.mxu0 0.0
  %5098 = vmatpush2.msra.mxu0 0.0
  %5099 = vmatprep.subr.mxu0 0.0
  %5100 = vmatpush2.msra.mxu0 0.0
  %5101 = vmatprep.subr.mxu0 0.0
  %5102 = vmatpush2.msra.mxu0 0.0
  %5103 = vmatprep.mubr.f32.mxu0 0.0
  %5104 = vmatmul.mubr.f32.gmra.mxu0 %v4785
  %v5105 = vpop.f32.mrf.mxu0
  %v5106 = vadd.f32 %v5026, %v5105
  %v5107 = vpop.f32.mrf.mxu0
  %5108 = vmatprep.mubr.f32.mxu0 0.0
  %5109 = vmatmul.mubr.f32.gmra.mxu0 %v4788
  %v5110 = vpop.f32.mrf.mxu0
  %v5111 = vadd.f32 %v5031, %v5110
  %v5112 = vpop.f32.mrf.mxu0
  %5113 = vmatprep.mubr.f32.mxu0 0.0
  %5114 = vmatmul.mubr.f32.gmra.mxu0 %v4791
  %v5115 = vpop.f32.mrf.mxu0
  %v5116 = vadd.f32 %v5036, %v5115
  %v5117 = vpop.f32.mrf.mxu0
  %5118 = vdwg.mxu0
  %v5119 = vadd.f32 %v4299, %v4943
  %v5120 = vadd.f32 %v4301, %v4945
  %v5121 = vadd.f32 %v4462, %v5106
  %v5122 = vadd.f32 %v4305, %v4949
  %v5123 = vadd.f32 %v4307, %v4951
  %v5124 = vadd.f32 %v4467, %v5111
  %v5125 = vadd.f32 %v4311, %v4955
  %v5126 = vadd.f32 %v4313, %v4957
  %v5127 = vadd.f32 %v4472, %v5116
  %s5128 = scalar_lea.vmem %s6, 72
  %v5129 = vld [vmem:[%s5128] sm:$0xff]
  %v5130 = vld [vmem:[%s5128 + $0x8] sm:$0xff]
  %v5131 = vld [vmem:[%s5128 + $0x10] sm:$0x3]
  %v5133 = vsel %vm3182, %v5129, 0
  %v5136 = vsel %vm3182, %v5130, 0
  %v5139 = vsel %vm3182, %v5131, 0
  %5141 = vmatprep.subr.mxu0 0.0
  %5142 = vmatpush1.msra.mxu0 0.0
  %5143 = vmatprep.subr.mxu0 0.0
  %5144 = vmatpush1.msra.mxu0 0.0
  %5145 = vmatprep.subr.mxu0 0.0
  %5146 = vmatpush1.msra.mxu0 0.0
  %5147 = vmatprep.subr.mxu0 0.0
  %5148 = vmatpush1.msra.mxu0 0.0
  %5149 = vmatprep.subr.mxu0 0.0
  %5150 = vmatpush1.msra.mxu0 0.0
  %5151 = vmatprep.subr.mxu0 0.0
  %5152 = vmatpush1.msra.mxu0 0.0
  %5153 = vmatprep.subr.mxu0 0.0
  %5154 = vmatpush1.msra.mxu0 0.0
  %5155 = vmatprep.subr.mxu0 0.0
  %5156 = vmatpush1.msra.mxu0 0.0
  %5157 = vmatprep.subr.mxu0 0.0
  %5158 = vmatpush1.msra.mxu0 0.0
  %5159 = vmatprep.subr.mxu0 0.0
  %5160 = vmatpush1.msra.mxu0 0.0
  %5161 = vmatprep.subr.mxu0 %v3196
  %5162 = vmatpush1.msra.mxu0 %v3193
  %5163 = vmatprep.subr.mxu0 %v3174
  %5164 = vmatpush1.msra.mxu0 %v3173
  %5165 = vmatprep.subr.mxu0 %v3171
  %5166 = vmatpush1.msra.mxu0 %v3170
  %5167 = vmatprep.subr.mxu0 %v3168
  %5168 = vmatpush1.msra.mxu0 %v3167
  %5169 = vmatprep.subr.mxu0 %v3165
  %5170 = vmatpush1.msra.mxu0 %v3164
  %5171 = vmatprep.subr.mxu0 %v3162
  %5172 = vmatpush1.msra.mxu0 %v3161
  %5173 = vmatprep.subr.mxu0 0.0
  %5174 = vmatpush2.msra.mxu0 0.0
  %5175 = vmatprep.subr.mxu0 0.0
  %5176 = vmatpush2.msra.mxu0 0.0
  %5177 = vmatprep.subr.mxu0 0.0
  %5178 = vmatpush2.msra.mxu0 0.0
  %5179 = vmatprep.subr.mxu0 0.0
  %5180 = vmatpush2.msra.mxu0 0.0
  %5181 = vmatprep.subr.mxu0 0.0
  %5182 = vmatpush2.msra.mxu0 0.0
  %5183 = vmatprep.subr.mxu0 0.0
  %5184 = vmatpush2.msra.mxu0 0.0
  %5185 = vmatprep.subr.mxu0 0.0
  %5186 = vmatpush2.msra.mxu0 0.0
  %5187 = vmatprep.subr.mxu0 0.0
  %5188 = vmatpush2.msra.mxu0 0.0
  %5189 = vmatprep.subr.mxu0 0.0
  %5190 = vmatpush2.msra.mxu0 0.0
  %5191 = vmatprep.subr.mxu0 0.0
  %5192 = vmatpush2.msra.mxu0 0.0
  %5193 = vmatprep.subr.mxu0 0.0
  %5194 = vmatpush2.msra.mxu0 0.0
  %5195 = vmatprep.subr.mxu0 0.0
  %5196 = vmatpush2.msra.mxu0 0.0
  %5197 = vmatprep.subr.mxu0 0.0
  %5198 = vmatpush2.msra.mxu0 0.0
  %5199 = vmatprep.subr.mxu0 0.0
  %5200 = vmatpush2.msra.mxu0 0.0
  %5201 = vmatprep.subr.mxu0 0.0
  %5202 = vmatpush2.msra.mxu0 0.0
  %5203 = vmatprep.subr.mxu0 0.0
  %5204 = vmatpush2.msra.mxu0 0.0
  %5205 = vmatprep.mubr.f32.mxu0 0.0
  %5206 = vmatmul.mubr.f32.gmra.mxu0 %v5133
  %v5207 = vpop.f32.mrf.mxu0
  %v5208 = vadd.f32 0.0, %v5207
  %v5209 = vpop.f32.mrf.mxu0
  %v5210 = vadd.f32 0.0, %v5209
  %5211 = vmatprep.mubr.f32.mxu0 0.0
  %5212 = vmatmul.mubr.f32.gmra.mxu0 %v5136
  %v5213 = vpop.f32.mrf.mxu0
  %v5214 = vadd.f32 0.0, %v5213
  %v5215 = vpop.f32.mrf.mxu0
  %v5216 = vadd.f32 0.0, %v5215
  %5217 = vmatprep.mubr.f32.mxu0 0.0
  %5218 = vmatmul.mubr.f32.gmra.mxu0 %v5139
  %v5219 = vpop.f32.mrf.mxu0
  %v5220 = vadd.f32 0.0, %v5219
  %v5221 = vpop.f32.mrf.mxu0
  %v5222 = vadd.f32 0.0, %v5221
  %5223 = vdwg.mxu0
  %5224 = vmatprep.subr.mxu0 0.0
  %5225 = vmatpush1.msra.mxu0 0.0
  %5226 = vmatprep.subr.mxu0 0.0
  %5227 = vmatpush1.msra.mxu0 0.0
  %5228 = vmatprep.subr.mxu0 0.0
  %5229 = vmatpush1.msra.mxu0 0.0
  %5230 = vmatprep.subr.mxu0 0.0
  %5231 = vmatpush1.msra.mxu0 0.0
  %5232 = vmatprep.subr.mxu0 0.0
  %5233 = vmatpush1.msra.mxu0 0.0
  %5234 = vmatprep.subr.mxu0 0.0
  %5235 = vmatpush1.msra.mxu0 0.0
  %5236 = vmatprep.subr.mxu0 0.0
  %5237 = vmatpush1.msra.mxu0 0.0
  %5238 = vmatprep.subr.mxu0 0.0
  %5239 = vmatpush1.msra.mxu0 0.0
  %5240 = vmatprep.subr.mxu0 0.0
  %5241 = vmatpush1.msra.mxu0 0.0
  %5242 = vmatprep.subr.mxu0 0.0
  %5243 = vmatpush1.msra.mxu0 0.0
  %5244 = vmatprep.subr.mxu0 0.0
  %5245 = vmatpush1.msra.mxu0 %v3199
  %5246 = vmatprep.subr.mxu0 0.0
  %5247 = vmatpush1.msra.mxu0 %v3175
  %5248 = vmatprep.subr.mxu0 0.0
  %5249 = vmatpush1.msra.mxu0 %v3172
  %5250 = vmatprep.subr.mxu0 0.0
  %5251 = vmatpush1.msra.mxu0 %v3169
  %5252 = vmatprep.subr.mxu0 0.0
  %5253 = vmatpush1.msra.mxu0 %v3166
  %5254 = vmatprep.subr.mxu0 0.0
  %5255 = vmatpush1.msra.mxu0 %v3163
  %5256 = vmatprep.subr.mxu0 0.0
  %5257 = vmatpush2.msra.mxu0 0.0
  %5258 = vmatprep.subr.mxu0 0.0
  %5259 = vmatpush2.msra.mxu0 0.0
  %5260 = vmatprep.subr.mxu0 0.0
  %5261 = vmatpush2.msra.mxu0 0.0
  %5262 = vmatprep.subr.mxu0 0.0
  %5263 = vmatpush2.msra.mxu0 0.0
  %5264 = vmatprep.subr.mxu0 0.0
  %5265 = vmatpush2.msra.mxu0 0.0
  %5266 = vmatprep.subr.mxu0 0.0
  %5267 = vmatpush2.msra.mxu0 0.0
  %5268 = vmatprep.subr.mxu0 0.0
  %5269 = vmatpush2.msra.mxu0 0.0
  %5270 = vmatprep.subr.mxu0 0.0
  %5271 = vmatpush2.msra.mxu0 0.0
  %5272 = vmatprep.subr.mxu0 0.0
  %5273 = vmatpush2.msra.mxu0 0.0
  %5274 = vmatprep.subr.mxu0 0.0
  %5275 = vmatpush2.msra.mxu0 0.0
  %5276 = vmatprep.subr.mxu0 0.0
  %5277 = vmatpush2.msra.mxu0 0.0
  %5278 = vmatprep.subr.mxu0 0.0
  %5279 = vmatpush2.msra.mxu0 0.0
  %5280 = vmatprep.subr.mxu0 0.0
  %5281 = vmatpush2.msra.mxu0 0.0
  %5282 = vmatprep.subr.mxu0 0.0
  %5283 = vmatpush2.msra.mxu0 0.0
  %5284 = vmatprep.subr.mxu0 0.0
  %5285 = vmatpush2.msra.mxu0 0.0
  %5286 = vmatprep.subr.mxu0 0.0
  %5287 = vmatpush2.msra.mxu0 0.0
  %5288 = vmatprep.mubr.f32.mxu0 0.0
  %5289 = vmatmul.mubr.f32.gmra.mxu0 %v5133
  %v5290 = vpop.f32.mrf.mxu0
  %v5291 = vadd.f32 0.0, %v5290
  %v5292 = vpop.f32.mrf.mxu0
  %5293 = vmatprep.mubr.f32.mxu0 0.0
  %5294 = vmatmul.mubr.f32.gmra.mxu0 %v5136
  %v5295 = vpop.f32.mrf.mxu0
  %v5296 = vadd.f32 0.0, %v5295
  %v5297 = vpop.f32.mrf.mxu0
  %5298 = vmatprep.mubr.f32.mxu0 0.0
  %5299 = vmatmul.mubr.f32.gmra.mxu0 %v5139
  %v5300 = vpop.f32.mrf.mxu0
  %v5301 = vadd.f32 0.0, %v5300
  %v5302 = vpop.f32.mrf.mxu0
  %5303 = vdwg.mxu0
  %s5304 = scalar_lea.vmem %s7, 3168
  %v5305 = vld [vmem:[%s5304] sm:$0xff]
  %v5306 = vld [vmem:[%s5304 + $0x8] sm:$0xff]
  %v5307 = vld [vmem:[%s5304 + $0x10] sm:$0xff]
  %v5308 = vld [vmem:[%s5304 + $0x18] sm:$0xff]
  %v5309 = vld [vmem:[%s5304 + $0x20] sm:$0xff]
  %v5310 = vld [vmem:[%s5304 + $0x28] sm:$0xff]
  %v5311 = vld [vmem:[%s5304 + $0x30] sm:$0xff]
  %v5312 = vld [vmem:[%s5304 + $0x38] sm:$0xff]
  %v5313 = vld [vmem:[%s5304 + $0x40] sm:$0xff]
  %v5314 = vld [vmem:[%s5304 + $0x48] sm:$0xff]
  %v5315 = vld [vmem:[%s5304 + $0x50] sm:$0xff]
  %v5316 = vld [vmem:[%s5304 + $0x58] sm:$0xff]
  %v5317 = vld [vmem:[%s5304 + $0x60] sm:$0xff]
  %v5318 = vld [vmem:[%s5304 + $0x68] sm:$0xff]
  %v5319 = vld [vmem:[%s5304 + $0x70] sm:$0xff]
  %v5320 = vld [vmem:[%s5304 + $0x78] sm:$0xff]
  %v5321 = vld [vmem:[%s5304 + $0x80] sm:$0xff]
  %v5322 = vld [vmem:[%s5304 + $0x88] sm:$0xff]
  %v5323 = vld [vmem:[%s5304 + $0x90] sm:$0xff]
  %v5324 = vld [vmem:[%s5304 + $0x98] sm:$0xff]
  %v5325 = vld [vmem:[%s5304 + $0xa0] sm:$0xff]
  %v5326 = vld [vmem:[%s5304 + $0xa8] sm:$0xff]
  %v5327 = vld [vmem:[%s5304 + $0xb0] sm:$0xff]
  %v5328 = vld [vmem:[%s5304 + $0xb8] sm:$0xff]
  %v5329 = vld [vmem:[%s5304 + $0xc0] sm:$0xff]
  %v5330 = vld [vmem:[%s5304 + $0xc8] sm:$0xff]
  %v5331 = vld [vmem:[%s5304 + $0xd0] sm:$0xff]
  %v5332 = vld [vmem:[%s5304 + $0xd8] sm:$0xff]
  %v5333 = vld [vmem:[%s5304 + $0xe0] sm:$0xff]
  %v5334 = vld [vmem:[%s5304 + $0xe8] sm:$0xff]
  %v5335 = vld [vmem:[%s5304 + $0xf0] sm:$0xff]
  %v5336 = vld [vmem:[%s5304 + $0xf8] sm:$0xff]
  %v5337 = vld [vmem:[%s5304 + $0x100] sm:$0xff]
  %v5338 = vld [vmem:[%s5304 + $0x108] sm:$0xff]
  %v5339 = vld [vmem:[%s5304 + $0x110] sm:$0xff]
  %v5340 = vld [vmem:[%s5304 + $0x118] sm:$0xff]
  %v5341 = vld [vmem:[%s5304 + $0x120] sm:$0xff]
  %v5342 = vld [vmem:[%s5304 + $0x128] sm:$0xff]
  %v5343 = vld [vmem:[%s5304 + $0x130] sm:$0xff]
  %v5344 = vld [vmem:[%s5304 + $0x138] sm:$0xff]
  %v5345 = vld [vmem:[%s5304 + $0x140] sm:$0xff]
  %v5346 = vld [vmem:[%s5304 + $0x148] sm:$0xff]
  %v5347 = vld [vmem:[%s5304 + $0x150] sm:$0xff]
  %v5348 = vld [vmem:[%s5304 + $0x158] sm:$0xff]
  %v5349 = vld [vmem:[%s5304 + $0x160] sm:$0xff]
  %v5350 = vld [vmem:[%s5304 + $0x168] sm:$0xff]
  %v5351 = vld [vmem:[%s5304 + $0x170] sm:$0xff]
  %v5352 = vld [vmem:[%s5304 + $0x178] sm:$0xff]
  %v5353 = vld [vmem:[%s5304 + $0x180] sm:$0xff]
  %v5354 = vld [vmem:[%s5304 + $0x188] sm:$0xff]
  %v5355 = vld [vmem:[%s5304 + $0x190] sm:$0xff]
  %v5356 = vld [vmem:[%s5304 + $0x198] sm:$0xff]
  %v5357 = vld [vmem:[%s5304 + $0x1a0] sm:$0xff]
  %v5358 = vld [vmem:[%s5304 + $0x1a8] sm:$0xff]
  %v5359 = vld [vmem:[%s5304 + $0x1b0] sm:$0xff]
  %v5360 = vld [vmem:[%s5304 + $0x1b8] sm:$0xff]
  %v5361 = vld [vmem:[%s5304 + $0x1c0] sm:$0xff]
  %v5362 = vld [vmem:[%s5304 + $0x1c8] sm:$0xff]
  %v5363 = vld [vmem:[%s5304 + $0x1d0] sm:$0xff]
  %v5364 = vld [vmem:[%s5304 + $0x1d8] sm:$0xff]
  %v5365 = vld [vmem:[%s5304 + $0x1e0] sm:$0xff]
  %v5366 = vld [vmem:[%s5304 + $0x1e8] sm:$0xff]
  %v5367 = vld [vmem:[%s5304 + $0x1f0] sm:$0xff]
  %v5368 = vld [vmem:[%s5304 + $0x1f8] sm:$0xff]
  %v5369 = vld [vmem:[%s5304 + $0x200] sm:$0xff]
  %v5370 = vld [vmem:[%s5304 + $0x208] sm:$0xff]
  %v5371 = vld [vmem:[%s5304 + $0x210] sm:$0xff]
  %v5372 = vld [vmem:[%s5304 + $0x218] sm:$0xff]
  %v5373 = vld [vmem:[%s5304 + $0x220] sm:$0xff]
  %v5374 = vld [vmem:[%s5304 + $0x228] sm:$0xff]
  %v5375 = vld [vmem:[%s5304 + $0x230] sm:$0xff]
  %v5376 = vld [vmem:[%s5304 + $0x238] sm:$0xff]
  %v5377 = vld [vmem:[%s5304 + $0x240] sm:$0xff]
  %v5378 = vld [vmem:[%s5304 + $0x248] sm:$0xff]
  %v5379 = vld [vmem:[%s5304 + $0x250] sm:$0xff]
  %v5380 = vld [vmem:[%s5304 + $0x258] sm:$0xff]
  %v5381 = vld [vmem:[%s5304 + $0x260] sm:$0xff]
  %v5382 = vld [vmem:[%s5304 + $0x268] sm:$0xff]
  %v5383 = vld [vmem:[%s5304 + $0x270] sm:$0xff]
  %v5384 = vld [vmem:[%s5304 + $0x278] sm:$0xff]
  %v5385 = vld [vmem:[%s5304 + $0x280] sm:$0xff]
  %v5386 = vld [vmem:[%s5304 + $0x288] sm:$0xff]
  %v5387 = vld [vmem:[%s5304 + $0x290] sm:$0xff]
  %v5388 = vld [vmem:[%s5304 + $0x298] sm:$0xff]
  %v5389 = vld [vmem:[%s5304 + $0x2a0] sm:$0xff]
  %v5390 = vld [vmem:[%s5304 + $0x2a8] sm:$0xff]
  %v5391 = vld [vmem:[%s5304 + $0x2b0] sm:$0xff]
  %v5392 = vld [vmem:[%s5304 + $0x2b8] sm:$0xff]
  %v5393 = vld [vmem:[%s5304 + $0x2c0] sm:$0xff]
  %v5394 = vld [vmem:[%s5304 + $0x2c8] sm:$0xff]
  %v5395 = vld [vmem:[%s5304 + $0x2d0] sm:$0xff]
  %v5396 = vld [vmem:[%s5304 + $0x2d8] sm:$0xff]
  %v5397 = vld [vmem:[%s5304 + $0x2e0] sm:$0xff]
  %v5398 = vld [vmem:[%s5304 + $0x2e8] sm:$0xff]
  %v5399 = vld [vmem:[%s5304 + $0x2f0] sm:$0xff]
  %v5400 = vld [vmem:[%s5304 + $0x2f8] sm:$0xff]
  %v5401 = vld [vmem:[%s5304 + $0x300] sm:$0xff]
  %v5402 = vld [vmem:[%s5304 + $0x308] sm:$0xff]
  %v5403 = vld [vmem:[%s5304 + $0x310] sm:$0xff]
  %v5404 = vld [vmem:[%s5304 + $0x318] sm:$0xff]
  %v5405 = vld [vmem:[%s5304 + $0x320] sm:$0xff]
  %v5406 = vld [vmem:[%s5304 + $0x328] sm:$0xff]
  %v5407 = vld [vmem:[%s5304 + $0x330] sm:$0xff]
  %v5408 = vld [vmem:[%s5304 + $0x338] sm:$0xff]
  %v5409 = vld [vmem:[%s5304 + $0x340] sm:$0xff]
  %v5410 = vld [vmem:[%s5304 + $0x348] sm:$0xff]
  %v5411 = vld [vmem:[%s5304 + $0x350] sm:$0xff]
  %v5412 = vld [vmem:[%s5304 + $0x358] sm:$0xff]
  %v5413 = vld [vmem:[%s5304 + $0x360] sm:$0xff]
  %v5414 = vld [vmem:[%s5304 + $0x368] sm:$0xff]
  %v5415 = vld [vmem:[%s5304 + $0x370] sm:$0xff]
  %v5416 = vld [vmem:[%s5304 + $0x378] sm:$0xff]
  %v5417 = vld [vmem:[%s5304 + $0x380] sm:$0xff]
  %v5418 = vld [vmem:[%s5304 + $0x388] sm:$0xff]
  %v5419 = vld [vmem:[%s5304 + $0x390] sm:$0xff]
  %v5420 = vld [vmem:[%s5304 + $0x398] sm:$0xff]
  %v5421 = vld [vmem:[%s5304 + $0x3a0] sm:$0xff]
  %v5422 = vld [vmem:[%s5304 + $0x3a8] sm:$0xff]
  %v5423 = vld [vmem:[%s5304 + $0x3b0] sm:$0xff]
  %v5424 = vld [vmem:[%s5304 + $0x3b8] sm:$0xff]
  %v5425 = vld [vmem:[%s5304 + $0x3c0] sm:$0xff]
  %v5426 = vld [vmem:[%s5304 + $0x3c8] sm:$0xff]
  %v5427 = vld [vmem:[%s5304 + $0x3d0] sm:$0xff]
  %v5428 = vld [vmem:[%s5304 + $0x3d8] sm:$0xff]
  %v5429 = vld [vmem:[%s5304 + $0x3e0] sm:$0xff]
  %v5430 = vld [vmem:[%s5304 + $0x3e8] sm:$0xff]
  %v5431 = vld [vmem:[%s5304 + $0x3f0] sm:$0xff]
  %v5432 = vld [vmem:[%s5304 + $0x3f8] sm:$0xff]
  %v5433 = vld [vmem:[%s5304 + $0x400] sm:$0xff]
  %v5434 = vld [vmem:[%s5304 + $0x408] sm:$0xff]
  %v5435 = vld [vmem:[%s5304 + $0x410] sm:$0xff]
  %v5436 = vld [vmem:[%s5304 + $0x418] sm:$0xff]
  %v5438 = vsel %vm98, %v5291, 0
  %v5441 = vsel %vm98, %v5296, 0
  %v5444 = vsel %vm98, %v5301, 0
  %5446 = vmatprep.subr.mxu0 %v5351
  %5447 = vmatpush1.msra.mxu0 %v5350
  %5448 = vmatprep.subr.mxu0 %v5348
  %5449 = vmatpush1.msra.mxu0 %v5347
  %5450 = vmatprep.subr.mxu0 %v5345
  %5451 = vmatpush1.msra.mxu0 %v5344
  %5452 = vmatprep.subr.mxu0 %v5342
  %5453 = vmatpush1.msra.mxu0 %v5341
  %5454 = vmatprep.subr.mxu0 %v5339
  %5455 = vmatpush1.msra.mxu0 %v5338
  %5456 = vmatprep.subr.mxu0 %v5336
  %5457 = vmatpush1.msra.mxu0 %v5335
  %5458 = vmatprep.subr.mxu0 %v5333
  %5459 = vmatpush1.msra.mxu0 %v5332
  %5460 = vmatprep.subr.mxu0 %v5330
  %5461 = vmatpush1.msra.mxu0 %v5329
  %5462 = vmatprep.subr.mxu0 %v5327
  %5463 = vmatpush1.msra.mxu0 %v5326
  %5464 = vmatprep.subr.mxu0 %v5324
  %5465 = vmatpush1.msra.mxu0 %v5323
  %5466 = vmatprep.subr.mxu0 %v5321
  %5467 = vmatpush1.msra.mxu0 %v5320
  %5468 = vmatprep.subr.mxu0 %v5318
  %5469 = vmatpush1.msra.mxu0 %v5317
  %5470 = vmatprep.subr.mxu0 %v5315
  %5471 = vmatpush1.msra.mxu0 %v5314
  %5472 = vmatprep.subr.mxu0 %v5312
  %5473 = vmatpush1.msra.mxu0 %v5311
  %5474 = vmatprep.subr.mxu0 %v5309
  %5475 = vmatpush1.msra.mxu0 %v5308
  %5476 = vmatprep.subr.mxu0 %v5306
  %5477 = vmatpush1.msra.mxu0 %v5305
  %5478 = vmatprep.subr.mxu0 %v5399
  %5479 = vmatpush2.msra.mxu0 %v5398
  %5480 = vmatprep.subr.mxu0 %v5396
  %5481 = vmatpush2.msra.mxu0 %v5395
  %5482 = vmatprep.subr.mxu0 %v5393
  %5483 = vmatpush2.msra.mxu0 %v5392
  %5484 = vmatprep.subr.mxu0 %v5390
  %5485 = vmatpush2.msra.mxu0 %v5389
  %5486 = vmatprep.subr.mxu0 %v5387
  %5487 = vmatpush2.msra.mxu0 %v5386
  %5488 = vmatprep.subr.mxu0 %v5384
  %5489 = vmatpush2.msra.mxu0 %v5383
  %5490 = vmatprep.subr.mxu0 %v5381
  %5491 = vmatpush2.msra.mxu0 %v5380
  %5492 = vmatprep.subr.mxu0 %v5378
  %5493 = vmatpush2.msra.mxu0 %v5377
  %5494 = vmatprep.subr.mxu0 %v5375
  %5495 = vmatpush2.msra.mxu0 %v5374
  %5496 = vmatprep.subr.mxu0 %v5372
  %5497 = vmatpush2.msra.mxu0 %v5371
  %5498 = vmatprep.subr.mxu0 %v5369
  %5499 = vmatpush2.msra.mxu0 %v5368
  %5500 = vmatprep.subr.mxu0 %v5366
  %5501 = vmatpush2.msra.mxu0 %v5365
  %5502 = vmatprep.subr.mxu0 %v5363
  %5503 = vmatpush2.msra.mxu0 %v5362
  %5504 = vmatprep.subr.mxu0 %v5360
  %5505 = vmatpush2.msra.mxu0 %v5359
  %5506 = vmatprep.subr.mxu0 %v5357
  %5507 = vmatpush2.msra.mxu0 %v5356
  %5508 = vmatprep.subr.mxu0 %v5354
  %5509 = vmatpush2.msra.mxu0 %v5353
  %5510 = vmatprep.mubr.f32.mxu0 %v5210
  %5511 = vmatmul.mubr.f32.gmra.mxu0 %v5208
  %v5512 = vpop.f32.mrf.mxu0
  %v5513 = vadd.f32 0.0, %v5512
  %v5514 = vpop.f32.mrf.mxu0
  %v5515 = vadd.f32 0.0, %v5514
  %5516 = vmatprep.mubr.f32.mxu0 %v5216
  %5517 = vmatmul.mubr.f32.gmra.mxu0 %v5214
  %v5518 = vpop.f32.mrf.mxu0
  %v5519 = vadd.f32 0.0, %v5518
  %v5520 = vpop.f32.mrf.mxu0
  %v5521 = vadd.f32 0.0, %v5520
  %5522 = vmatprep.mubr.f32.mxu0 %v5222
  %5523 = vmatmul.mubr.f32.gmra.mxu0 %v5220
  %v5524 = vpop.f32.mrf.mxu0
  %v5525 = vadd.f32 0.0, %v5524
  %v5526 = vpop.f32.mrf.mxu0
  %v5527 = vadd.f32 0.0, %v5526
  %5528 = vdwg.mxu0
  %5529 = vmatprep.subr.mxu0 0.0
  %5530 = vmatpush1.msra.mxu0 0.0
  %5531 = vmatprep.subr.mxu0 0.0
  %5532 = vmatpush1.msra.mxu0 0.0
  %5533 = vmatprep.subr.mxu0 0.0
  %5534 = vmatpush1.msra.mxu0 0.0
  %5535 = vmatprep.subr.mxu0 0.0
  %5536 = vmatpush1.msra.mxu0 0.0
  %5537 = vmatprep.subr.mxu0 %v5435
  %5538 = vmatpush1.msra.mxu0 %v5434
  %5539 = vmatprep.subr.mxu0 %v5432
  %5540 = vmatpush1.msra.mxu0 %v5431
  %5541 = vmatprep.subr.mxu0 %v5429
  %5542 = vmatpush1.msra.mxu0 %v5428
  %5543 = vmatprep.subr.mxu0 %v5426
  %5544 = vmatpush1.msra.mxu0 %v5425
  %5545 = vmatprep.subr.mxu0 %v5423
  %5546 = vmatpush1.msra.mxu0 %v5422
  %5547 = vmatprep.subr.mxu0 %v5420
  %5548 = vmatpush1.msra.mxu0 %v5419
  %5549 = vmatprep.subr.mxu0 %v5417
  %5550 = vmatpush1.msra.mxu0 %v5416
  %5551 = vmatprep.subr.mxu0 %v5414
  %5552 = vmatpush1.msra.mxu0 %v5413
  %5553 = vmatprep.subr.mxu0 %v5411
  %5554 = vmatpush1.msra.mxu0 %v5410
  %5555 = vmatprep.subr.mxu0 %v5408
  %5556 = vmatpush1.msra.mxu0 %v5407
  %5557 = vmatprep.subr.mxu0 %v5405
  %5558 = vmatpush1.msra.mxu0 %v5404
  %5559 = vmatprep.subr.mxu0 %v5402
  %5560 = vmatpush1.msra.mxu0 %v5401
  %5561 = vmatprep.subr.mxu0 0.0
  %5562 = vmatpush2.msra.mxu0 0.0
  %5563 = vmatprep.subr.mxu0 0.0
  %5564 = vmatpush2.msra.mxu0 0.0
  %5565 = vmatprep.subr.mxu0 0.0
  %5566 = vmatpush2.msra.mxu0 0.0
  %5567 = vmatprep.subr.mxu0 0.0
  %5568 = vmatpush2.msra.mxu0 0.0
  %5569 = vmatprep.subr.mxu0 0.0
  %5570 = vmatpush2.msra.mxu0 0.0
  %5571 = vmatprep.subr.mxu0 0.0
  %5572 = vmatpush2.msra.mxu0 0.0
  %5573 = vmatprep.subr.mxu0 0.0
  %5574 = vmatpush2.msra.mxu0 0.0
  %5575 = vmatprep.subr.mxu0 0.0
  %5576 = vmatpush2.msra.mxu0 0.0
  %5577 = vmatprep.subr.mxu0 0.0
  %5578 = vmatpush2.msra.mxu0 0.0
  %5579 = vmatprep.subr.mxu0 0.0
  %5580 = vmatpush2.msra.mxu0 0.0
  %5581 = vmatprep.subr.mxu0 0.0
  %5582 = vmatpush2.msra.mxu0 0.0
  %5583 = vmatprep.subr.mxu0 0.0
  %5584 = vmatpush2.msra.mxu0 0.0
  %5585 = vmatprep.subr.mxu0 0.0
  %5586 = vmatpush2.msra.mxu0 0.0
  %5587 = vmatprep.subr.mxu0 0.0
  %5588 = vmatpush2.msra.mxu0 0.0
  %5589 = vmatprep.subr.mxu0 0.0
  %5590 = vmatpush2.msra.mxu0 0.0
  %5591 = vmatprep.subr.mxu0 0.0
  %5592 = vmatpush2.msra.mxu0 0.0
  %5593 = vmatprep.mubr.f32.mxu0 0.0
  %5594 = vmatmul.mubr.f32.gmra.mxu0 %v5438
  %v5595 = vpop.f32.mrf.mxu0
  %v5596 = vadd.f32 %v5513, %v5595
  %v5597 = vpop.f32.mrf.mxu0
  %v5598 = vadd.f32 %v5515, %v5597
  %5599 = vmatprep.mubr.f32.mxu0 0.0
  %5600 = vmatmul.mubr.f32.gmra.mxu0 %v5441
  %v5601 = vpop.f32.mrf.mxu0
  %v5602 = vadd.f32 %v5519, %v5601
  %v5603 = vpop.f32.mrf.mxu0
  %v5604 = vadd.f32 %v5521, %v5603
  %5605 = vmatprep.mubr.f32.mxu0 0.0
  %5606 = vmatmul.mubr.f32.gmra.mxu0 %v5444
  %v5607 = vpop.f32.mrf.mxu0
  %v5608 = vadd.f32 %v5525, %v5607
  %v5609 = vpop.f32.mrf.mxu0
  %v5610 = vadd.f32 %v5527, %v5609
  %5611 = vdwg.mxu0
  %5612 = vmatprep.subr.mxu0 0.0
  %5613 = vmatpush1.msra.mxu0 %v5352
  %5614 = vmatprep.subr.mxu0 0.0
  %5615 = vmatpush1.msra.mxu0 %v5349
  %5616 = vmatprep.subr.mxu0 0.0
  %5617 = vmatpush1.msra.mxu0 %v5346
  %5618 = vmatprep.subr.mxu0 0.0
  %5619 = vmatpush1.msra.mxu0 %v5343
  %5620 = vmatprep.subr.mxu0 0.0
  %5621 = vmatpush1.msra.mxu0 %v5340
  %5622 = vmatprep.subr.mxu0 0.0
  %5623 = vmatpush1.msra.mxu0 %v5337
  %5624 = vmatprep.subr.mxu0 0.0
  %5625 = vmatpush1.msra.mxu0 %v5334
  %5626 = vmatprep.subr.mxu0 0.0
  %5627 = vmatpush1.msra.mxu0 %v5331
  %5628 = vmatprep.subr.mxu0 0.0
  %5629 = vmatpush1.msra.mxu0 %v5328
  %5630 = vmatprep.subr.mxu0 0.0
  %5631 = vmatpush1.msra.mxu0 %v5325
  %5632 = vmatprep.subr.mxu0 0.0
  %5633 = vmatpush1.msra.mxu0 %v5322
  %5634 = vmatprep.subr.mxu0 0.0
  %5635 = vmatpush1.msra.mxu0 %v5319
  %5636 = vmatprep.subr.mxu0 0.0
  %5637 = vmatpush1.msra.mxu0 %v5316
  %5638 = vmatprep.subr.mxu0 0.0
  %5639 = vmatpush1.msra.mxu0 %v5313
  %5640 = vmatprep.subr.mxu0 0.0
  %5641 = vmatpush1.msra.mxu0 %v5310
  %5642 = vmatprep.subr.mxu0 0.0
  %5643 = vmatpush1.msra.mxu0 %v5307
  %5644 = vmatprep.subr.mxu0 0.0
  %5645 = vmatpush2.msra.mxu0 %v5400
  %5646 = vmatprep.subr.mxu0 0.0
  %5647 = vmatpush2.msra.mxu0 %v5397
  %5648 = vmatprep.subr.mxu0 0.0
  %5649 = vmatpush2.msra.mxu0 %v5394
  %5650 = vmatprep.subr.mxu0 0.0
  %5651 = vmatpush2.msra.mxu0 %v5391
  %5652 = vmatprep.subr.mxu0 0.0
  %5653 = vmatpush2.msra.mxu0 %v5388
  %5654 = vmatprep.subr.mxu0 0.0
  %5655 = vmatpush2.msra.mxu0 %v5385
  %5656 = vmatprep.subr.mxu0 0.0
  %5657 = vmatpush2.msra.mxu0 %v5382
  %5658 = vmatprep.subr.mxu0 0.0
  %5659 = vmatpush2.msra.mxu0 %v5379
  %5660 = vmatprep.subr.mxu0 0.0
  %5661 = vmatpush2.msra.mxu0 %v5376
  %5662 = vmatprep.subr.mxu0 0.0
  %5663 = vmatpush2.msra.mxu0 %v5373
  %5664 = vmatprep.subr.mxu0 0.0
  %5665 = vmatpush2.msra.mxu0 %v5370
  %5666 = vmatprep.subr.mxu0 0.0
  %5667 = vmatpush2.msra.mxu0 %v5367
  %5668 = vmatprep.subr.mxu0 0.0
  %5669 = vmatpush2.msra.mxu0 %v5364
  %5670 = vmatprep.subr.mxu0 0.0
  %5671 = vmatpush2.msra.mxu0 %v5361
  %5672 = vmatprep.subr.mxu0 0.0
  %5673 = vmatpush2.msra.mxu0 %v5358
  %5674 = vmatprep.subr.mxu0 0.0
  %5675 = vmatpush2.msra.mxu0 %v5355
  %5676 = vmatprep.mubr.f32.mxu0 %v5210
  %5677 = vmatmul.mubr.f32.gmra.mxu0 %v5208
  %v5678 = vpop.f32.mrf.mxu0
  %v5679 = vadd.f32 0.0, %v5678
  %v5680 = vpop.f32.mrf.mxu0
  %5681 = vmatprep.mubr.f32.mxu0 %v5216
  %5682 = vmatmul.mubr.f32.gmra.mxu0 %v5214
  %v5683 = vpop.f32.mrf.mxu0
  %v5684 = vadd.f32 0.0, %v5683
  %v5685 = vpop.f32.mrf.mxu0
  %5686 = vmatprep.mubr.f32.mxu0 %v5222
  %5687 = vmatmul.mubr.f32.gmra.mxu0 %v5220
  %v5688 = vpop.f32.mrf.mxu0
  %v5689 = vadd.f32 0.0, %v5688
  %v5690 = vpop.f32.mrf.mxu0
  %5691 = vdwg.mxu0
  %5692 = vmatprep.subr.mxu0 0.0
  %5693 = vmatpush1.msra.mxu0 0.0
  %5694 = vmatprep.subr.mxu0 0.0
  %5695 = vmatpush1.msra.mxu0 0.0
  %5696 = vmatprep.subr.mxu0 0.0
  %5697 = vmatpush1.msra.mxu0 0.0
  %5698 = vmatprep.subr.mxu0 0.0
  %5699 = vmatpush1.msra.mxu0 0.0
  %5700 = vmatprep.subr.mxu0 0.0
  %5701 = vmatpush1.msra.mxu0 %v5436
  %5702 = vmatprep.subr.mxu0 0.0
  %5703 = vmatpush1.msra.mxu0 %v5433
  %5704 = vmatprep.subr.mxu0 0.0
  %5705 = vmatpush1.msra.mxu0 %v5430
  %5706 = vmatprep.subr.mxu0 0.0
  %5707 = vmatpush1.msra.mxu0 %v5427
  %5708 = vmatprep.subr.mxu0 0.0
  %5709 = vmatpush1.msra.mxu0 %v5424
  %5710 = vmatprep.subr.mxu0 0.0
  %5711 = vmatpush1.msra.mxu0 %v5421
  %5712 = vmatprep.subr.mxu0 0.0
  %5713 = vmatpush1.msra.mxu0 %v5418
  %5714 = vmatprep.subr.mxu0 0.0
  %5715 = vmatpush1.msra.mxu0 %v5415
  %5716 = vmatprep.subr.mxu0 0.0
  %5717 = vmatpush1.msra.mxu0 %v5412
  %5718 = vmatprep.subr.mxu0 0.0
  %5719 = vmatpush1.msra.mxu0 %v5409
  %5720 = vmatprep.subr.mxu0 0.0
  %5721 = vmatpush1.msra.mxu0 %v5406
  %5722 = vmatprep.subr.mxu0 0.0
  %5723 = vmatpush1.msra.mxu0 %v5403
  %5724 = vmatprep.subr.mxu0 0.0
  %5725 = vmatpush2.msra.mxu0 0.0
  %5726 = vmatprep.subr.mxu0 0.0
  %5727 = vmatpush2.msra.mxu0 0.0
  %5728 = vmatprep.subr.mxu0 0.0
  %5729 = vmatpush2.msra.mxu0 0.0
  %5730 = vmatprep.subr.mxu0 0.0
  %5731 = vmatpush2.msra.mxu0 0.0
  %5732 = vmatprep.subr.mxu0 0.0
  %5733 = vmatpush2.msra.mxu0 0.0
  %5734 = vmatprep.subr.mxu0 0.0
  %5735 = vmatpush2.msra.mxu0 0.0
  %5736 = vmatprep.subr.mxu0 0.0
  %5737 = vmatpush2.msra.mxu0 0.0
  %5738 = vmatprep.subr.mxu0 0.0
  %5739 = vmatpush2.msra.mxu0 0.0
  %5740 = vmatprep.subr.mxu0 0.0
  %5741 = vmatpush2.msra.mxu0 0.0
  %5742 = vmatprep.subr.mxu0 0.0
  %5743 = vmatpush2.msra.mxu0 0.0
  %5744 = vmatprep.subr.mxu0 0.0
  %5745 = vmatpush2.msra.mxu0 0.0
  %5746 = vmatprep.subr.mxu0 0.0
  %5747 = vmatpush2.msra.mxu0 0.0
  %5748 = vmatprep.subr.mxu0 0.0
  %5749 = vmatpush2.msra.mxu0 0.0
  %5750 = vmatprep.subr.mxu0 0.0
  %5751 = vmatpush2.msra.mxu0 0.0
  %5752 = vmatprep.subr.mxu0 0.0
  %5753 = vmatpush2.msra.mxu0 0.0
  %5754 = vmatprep.subr.mxu0 0.0
  %5755 = vmatpush2.msra.mxu0 0.0
  %5756 = vmatprep.mubr.f32.mxu0 0.0
  %5757 = vmatmul.mubr.f32.gmra.mxu0 %v5438
  %v5758 = vpop.f32.mrf.mxu0
  %v5759 = vadd.f32 %v5679, %v5758
  %v5760 = vpop.f32.mrf.mxu0
  %5761 = vmatprep.mubr.f32.mxu0 0.0
  %5762 = vmatmul.mubr.f32.gmra.mxu0 %v5441
  %v5763 = vpop.f32.mrf.mxu0
  %v5764 = vadd.f32 %v5684, %v5763
  %v5765 = vpop.f32.mrf.mxu0
  %5766 = vmatprep.mubr.f32.mxu0 0.0
  %5767 = vmatmul.mubr.f32.gmra.mxu0 %v5444
  %v5768 = vpop.f32.mrf.mxu0
  %v5769 = vadd.f32 %v5689, %v5768
  %v5770 = vpop.f32.mrf.mxu0
  %5771 = vdwg.mxu0
  %v5772 = vadd.f32 %v5119, %v5596
  %v5773 = vadd.f32 %v5120, %v5598
  %v5774 = vadd.f32 %v5121, %v5759
  %v5775 = vadd.f32 %v5122, %v5602
  %v5776 = vadd.f32 %v5123, %v5604
  %v5777 = vadd.f32 %v5124, %v5764
  %v5778 = vadd.f32 %v5125, %v5608
  %v5779 = vadd.f32 %v5126, %v5610
  %v5780 = vadd.f32 %v5127, %v5769
  %s5781 = scalar_lea.vmem %s6, 96
  %v5782 = vld [vmem:[%s5781] sm:$0xff]
  %v5783 = vld [vmem:[%s5781 + $0x8] sm:$0xff]
  %v5784 = vld [vmem:[%s5781 + $0x10] sm:$0x3]
  %v5786 = vsel %vm3182, %v5782, 0
  %v5789 = vsel %vm3182, %v5783, 0
  %v5792 = vsel %vm3182, %v5784, 0
  %5794 = vmatprep.subr.mxu0 0.0
  %5795 = vmatpush1.msra.mxu0 0.0
  %5796 = vmatprep.subr.mxu0 0.0
  %5797 = vmatpush1.msra.mxu0 0.0
  %5798 = vmatprep.subr.mxu0 0.0
  %5799 = vmatpush1.msra.mxu0 0.0
  %5800 = vmatprep.subr.mxu0 0.0
  %5801 = vmatpush1.msra.mxu0 0.0
  %5802 = vmatprep.subr.mxu0 0.0
  %5803 = vmatpush1.msra.mxu0 0.0
  %5804 = vmatprep.subr.mxu0 0.0
  %5805 = vmatpush1.msra.mxu0 0.0
  %5806 = vmatprep.subr.mxu0 0.0
  %5807 = vmatpush1.msra.mxu0 0.0
  %5808 = vmatprep.subr.mxu0 0.0
  %5809 = vmatpush1.msra.mxu0 0.0
  %5810 = vmatprep.subr.mxu0 0.0
  %5811 = vmatpush1.msra.mxu0 0.0
  %5812 = vmatprep.subr.mxu0 0.0
  %5813 = vmatpush1.msra.mxu0 0.0
  %5814 = vmatprep.subr.mxu0 %v3196
  %5815 = vmatpush1.msra.mxu0 %v3193
  %5816 = vmatprep.subr.mxu0 %v3174
  %5817 = vmatpush1.msra.mxu0 %v3173
  %5818 = vmatprep.subr.mxu0 %v3171
  %5819 = vmatpush1.msra.mxu0 %v3170
  %5820 = vmatprep.subr.mxu0 %v3168
  %5821 = vmatpush1.msra.mxu0 %v3167
  %5822 = vmatprep.subr.mxu0 %v3165
  %5823 = vmatpush1.msra.mxu0 %v3164
  %5824 = vmatprep.subr.mxu0 %v3162
  %5825 = vmatpush1.msra.mxu0 %v3161
  %5826 = vmatprep.subr.mxu0 0.0
  %5827 = vmatpush2.msra.mxu0 0.0
  %5828 = vmatprep.subr.mxu0 0.0
  %5829 = vmatpush2.msra.mxu0 0.0
  %5830 = vmatprep.subr.mxu0 0.0
  %5831 = vmatpush2.msra.mxu0 0.0
  %5832 = vmatprep.subr.mxu0 0.0
  %5833 = vmatpush2.msra.mxu0 0.0
  %5834 = vmatprep.subr.mxu0 0.0
  %5835 = vmatpush2.msra.mxu0 0.0
  %5836 = vmatprep.subr.mxu0 0.0
  %5837 = vmatpush2.msra.mxu0 0.0
  %5838 = vmatprep.subr.mxu0 0.0
  %5839 = vmatpush2.msra.mxu0 0.0
  %5840 = vmatprep.subr.mxu0 0.0
  %5841 = vmatpush2.msra.mxu0 0.0
  %5842 = vmatprep.subr.mxu0 0.0
  %5843 = vmatpush2.msra.mxu0 0.0
  %5844 = vmatprep.subr.mxu0 0.0
  %5845 = vmatpush2.msra.mxu0 0.0
  %5846 = vmatprep.subr.mxu0 0.0
  %5847 = vmatpush2.msra.mxu0 0.0
  %5848 = vmatprep.subr.mxu0 0.0
  %5849 = vmatpush2.msra.mxu0 0.0
  %5850 = vmatprep.subr.mxu0 0.0
  %5851 = vmatpush2.msra.mxu0 0.0
  %5852 = vmatprep.subr.mxu0 0.0
  %5853 = vmatpush2.msra.mxu0 0.0
  %5854 = vmatprep.subr.mxu0 0.0
  %5855 = vmatpush2.msra.mxu0 0.0
  %5856 = vmatprep.subr.mxu0 0.0
  %5857 = vmatpush2.msra.mxu0 0.0
  %5858 = vmatprep.mubr.f32.mxu0 0.0
  %5859 = vmatmul.mubr.f32.gmra.mxu0 %v5786
  %v5860 = vpop.f32.mrf.mxu0
  %v5861 = vadd.f32 0.0, %v5860
  %v5862 = vpop.f32.mrf.mxu0
  %v5863 = vadd.f32 0.0, %v5862
  %5864 = vmatprep.mubr.f32.mxu0 0.0
  %5865 = vmatmul.mubr.f32.gmra.mxu0 %v5789
  %v5866 = vpop.f32.mrf.mxu0
  %v5867 = vadd.f32 0.0, %v5866
  %v5868 = vpop.f32.mrf.mxu0
  %v5869 = vadd.f32 0.0, %v5868
  %5870 = vmatprep.mubr.f32.mxu0 0.0
  %5871 = vmatmul.mubr.f32.gmra.mxu0 %v5792
  %v5872 = vpop.f32.mrf.mxu0
  %v5873 = vadd.f32 0.0, %v5872
  %v5874 = vpop.f32.mrf.mxu0
  %v5875 = vadd.f32 0.0, %v5874
  %5876 = vdwg.mxu0
  %5877 = vmatprep.subr.mxu0 0.0
  %5878 = vmatpush1.msra.mxu0 0.0
  %5879 = vmatprep.subr.mxu0 0.0
  %5880 = vmatpush1.msra.mxu0 0.0
  %5881 = vmatprep.subr.mxu0 0.0
  %5882 = vmatpush1.msra.mxu0 0.0
  %5883 = vmatprep.subr.mxu0 0.0
  %5884 = vmatpush1.msra.mxu0 0.0
  %5885 = vmatprep.subr.mxu0 0.0
  %5886 = vmatpush1.msra.mxu0 0.0
  %5887 = vmatprep.subr.mxu0 0.0
  %5888 = vmatpush1.msra.mxu0 0.0
  %5889 = vmatprep.subr.mxu0 0.0
  %5890 = vmatpush1.msra.mxu0 0.0
  %5891 = vmatprep.subr.mxu0 0.0
  %5892 = vmatpush1.msra.mxu0 0.0
  %5893 = vmatprep.subr.mxu0 0.0
  %5894 = vmatpush1.msra.mxu0 0.0
  %5895 = vmatprep.subr.mxu0 0.0
  %5896 = vmatpush1.msra.mxu0 0.0
  %5897 = vmatprep.subr.mxu0 0.0
  %5898 = vmatpush1.msra.mxu0 %v3199
  %5899 = vmatprep.subr.mxu0 0.0
  %5900 = vmatpush1.msra.mxu0 %v3175
  %5901 = vmatprep.subr.mxu0 0.0
  %5902 = vmatpush1.msra.mxu0 %v3172
  %5903 = vmatprep.subr.mxu0 0.0
  %5904 = vmatpush1.msra.mxu0 %v3169
  %5905 = vmatprep.subr.mxu0 0.0
  %5906 = vmatpush1.msra.mxu0 %v3166
  %5907 = vmatprep.subr.mxu0 0.0
  %5908 = vmatpush1.msra.mxu0 %v3163
  %5909 = vmatprep.subr.mxu0 0.0
  %5910 = vmatpush2.msra.mxu0 0.0
  %5911 = vmatprep.subr.mxu0 0.0
  %5912 = vmatpush2.msra.mxu0 0.0
  %5913 = vmatprep.subr.mxu0 0.0
  %5914 = vmatpush2.msra.mxu0 0.0
  %5915 = vmatprep.subr.mxu0 0.0
  %5916 = vmatpush2.msra.mxu0 0.0
  %5917 = vmatprep.subr.mxu0 0.0
  %5918 = vmatpush2.msra.mxu0 0.0
  %5919 = vmatprep.subr.mxu0 0.0
  %5920 = vmatpush2.msra.mxu0 0.0
  %5921 = vmatprep.subr.mxu0 0.0
  %5922 = vmatpush2.msra.mxu0 0.0
  %5923 = vmatprep.subr.mxu0 0.0
  %5924 = vmatpush2.msra.mxu0 0.0
  %5925 = vmatprep.subr.mxu0 0.0
  %5926 = vmatpush2.msra.mxu0 0.0
  %5927 = vmatprep.subr.mxu0 0.0
  %5928 = vmatpush2.msra.mxu0 0.0
  %5929 = vmatprep.subr.mxu0 0.0
  %5930 = vmatpush2.msra.mxu0 0.0
  %5931 = vmatprep.subr.mxu0 0.0
  %5932 = vmatpush2.msra.mxu0 0.0
  %5933 = vmatprep.subr.mxu0 0.0
  %5934 = vmatpush2.msra.mxu0 0.0
  %5935 = vmatprep.subr.mxu0 0.0
  %5936 = vmatpush2.msra.mxu0 0.0
  %5937 = vmatprep.subr.mxu0 0.0
  %5938 = vmatpush2.msra.mxu0 0.0
  %5939 = vmatprep.subr.mxu0 0.0
  %5940 = vmatpush2.msra.mxu0 0.0
  %5941 = vmatprep.mubr.f32.mxu0 0.0
  %5942 = vmatmul.mubr.f32.gmra.mxu0 %v5786
  %v5943 = vpop.f32.mrf.mxu0
  %v5944 = vadd.f32 0.0, %v5943
  %v5945 = vpop.f32.mrf.mxu0
  %5946 = vmatprep.mubr.f32.mxu0 0.0
  %5947 = vmatmul.mubr.f32.gmra.mxu0 %v5789
  %v5948 = vpop.f32.mrf.mxu0
  %v5949 = vadd.f32 0.0, %v5948
  %v5950 = vpop.f32.mrf.mxu0
  %5951 = vmatprep.mubr.f32.mxu0 0.0
  %5952 = vmatmul.mubr.f32.gmra.mxu0 %v5792
  %v5953 = vpop.f32.mrf.mxu0
  %v5954 = vadd.f32 0.0, %v5953
  %v5955 = vpop.f32.mrf.mxu0
  %5956 = vdwg.mxu0
  %s5957 = scalar_lea.vmem %s7, 4224
  %v5958 = vld [vmem:[%s5957] sm:$0xff]
  %v5959 = vld [vmem:[%s5957 + $0x8] sm:$0xff]
  %v5960 = vld [vmem:[%s5957 + $0x10] sm:$0xff]
  %v5961 = vld [vmem:[%s5957 + $0x18] sm:$0xff]
  %v5962 = vld [vmem:[%s5957 + $0x20] sm:$0xff]
  %v5963 = vld [vmem:[%s5957 + $0x28] sm:$0xff]
  %v5964 = vld [vmem:[%s5957 + $0x30] sm:$0xff]
  %v5965 = vld [vmem:[%s5957 + $0x38] sm:$0xff]
  %v5966 = vld [vmem:[%s5957 + $0x40] sm:$0xff]
  %v5967 = vld [vmem:[%s5957 + $0x48] sm:$0xff]
  %v5968 = vld [vmem:[%s5957 + $0x50] sm:$0xff]
  %v5969 = vld [vmem:[%s5957 + $0x58] sm:$0xff]
  %v5970 = vld [vmem:[%s5957 + $0x60] sm:$0xff]
  %v5971 = vld [vmem:[%s5957 + $0x68] sm:$0xff]
  %v5972 = vld [vmem:[%s5957 + $0x70] sm:$0xff]
  %v5973 = vld [vmem:[%s5957 + $0x78] sm:$0xff]
  %v5974 = vld [vmem:[%s5957 + $0x80] sm:$0xff]
  %v5975 = vld [vmem:[%s5957 + $0x88] sm:$0xff]
  %v5976 = vld [vmem:[%s5957 + $0x90] sm:$0xff]
  %v5977 = vld [vmem:[%s5957 + $0x98] sm:$0xff]
  %v5978 = vld [vmem:[%s5957 + $0xa0] sm:$0xff]
  %v5979 = vld [vmem:[%s5957 + $0xa8] sm:$0xff]
  %v5980 = vld [vmem:[%s5957 + $0xb0] sm:$0xff]
  %v5981 = vld [vmem:[%s5957 + $0xb8] sm:$0xff]
  %v5982 = vld [vmem:[%s5957 + $0xc0] sm:$0xff]
  %v5983 = vld [vmem:[%s5957 + $0xc8] sm:$0xff]
  %v5984 = vld [vmem:[%s5957 + $0xd0] sm:$0xff]
  %v5985 = vld [vmem:[%s5957 + $0xd8] sm:$0xff]
  %v5986 = vld [vmem:[%s5957 + $0xe0] sm:$0xff]
  %v5987 = vld [vmem:[%s5957 + $0xe8] sm:$0xff]
  %v5988 = vld [vmem:[%s5957 + $0xf0] sm:$0xff]
  %v5989 = vld [vmem:[%s5957 + $0xf8] sm:$0xff]
  %v5990 = vld [vmem:[%s5957 + $0x100] sm:$0xff]
  %v5991 = vld [vmem:[%s5957 + $0x108] sm:$0xff]
  %v5992 = vld [vmem:[%s5957 + $0x110] sm:$0xff]
  %v5993 = vld [vmem:[%s5957 + $0x118] sm:$0xff]
  %v5994 = vld [vmem:[%s5957 + $0x120] sm:$0xff]
  %v5995 = vld [vmem:[%s5957 + $0x128] sm:$0xff]
  %v5996 = vld [vmem:[%s5957 + $0x130] sm:$0xff]
  %v5997 = vld [vmem:[%s5957 + $0x138] sm:$0xff]
  %v5998 = vld [vmem:[%s5957 + $0x140] sm:$0xff]
  %v5999 = vld [vmem:[%s5957 + $0x148] sm:$0xff]
  %v6000 = vld [vmem:[%s5957 + $0x150] sm:$0xff]
  %v6001 = vld [vmem:[%s5957 + $0x158] sm:$0xff]
  %v6002 = vld [vmem:[%s5957 + $0x160] sm:$0xff]
  %v6003 = vld [vmem:[%s5957 + $0x168] sm:$0xff]
  %v6004 = vld [vmem:[%s5957 + $0x170] sm:$0xff]
  %v6005 = vld [vmem:[%s5957 + $0x178] sm:$0xff]
  %v6006 = vld [vmem:[%s5957 + $0x180] sm:$0xff]
  %v6007 = vld [vmem:[%s5957 + $0x188] sm:$0xff]
  %v6008 = vld [vmem:[%s5957 + $0x190] sm:$0xff]
  %v6009 = vld [vmem:[%s5957 + $0x198] sm:$0xff]
  %v6010 = vld [vmem:[%s5957 + $0x1a0] sm:$0xff]
  %v6011 = vld [vmem:[%s5957 + $0x1a8] sm:$0xff]
  %v6012 = vld [vmem:[%s5957 + $0x1b0] sm:$0xff]
  %v6013 = vld [vmem:[%s5957 + $0x1b8] sm:$0xff]
  %v6014 = vld [vmem:[%s5957 + $0x1c0] sm:$0xff]
  %v6015 = vld [vmem:[%s5957 + $0x1c8] sm:$0xff]
  %v6016 = vld [vmem:[%s5957 + $0x1d0] sm:$0xff]
  %v6017 = vld [vmem:[%s5957 + $0x1d8] sm:$0xff]
  %v6018 = vld [vmem:[%s5957 + $0x1e0] sm:$0xff]
  %v6019 = vld [vmem:[%s5957 + $0x1e8] sm:$0xff]
  %v6020 = vld [vmem:[%s5957 + $0x1f0] sm:$0xff]
  %v6021 = vld [vmem:[%s5957 + $0x1f8] sm:$0xff]
  %v6022 = vld [vmem:[%s5957 + $0x200] sm:$0xff]
  %v6023 = vld [vmem:[%s5957 + $0x208] sm:$0xff]
  %v6024 = vld [vmem:[%s5957 + $0x210] sm:$0xff]
  %v6025 = vld [vmem:[%s5957 + $0x218] sm:$0xff]
  %v6026 = vld [vmem:[%s5957 + $0x220] sm:$0xff]
  %v6027 = vld [vmem:[%s5957 + $0x228] sm:$0xff]
  %v6028 = vld [vmem:[%s5957 + $0x230] sm:$0xff]
  %v6029 = vld [vmem:[%s5957 + $0x238] sm:$0xff]
  %v6030 = vld [vmem:[%s5957 + $0x240] sm:$0xff]
  %v6031 = vld [vmem:[%s5957 + $0x248] sm:$0xff]
  %v6032 = vld [vmem:[%s5957 + $0x250] sm:$0xff]
  %v6033 = vld [vmem:[%s5957 + $0x258] sm:$0xff]
  %v6034 = vld [vmem:[%s5957 + $0x260] sm:$0xff]
  %v6035 = vld [vmem:[%s5957 + $0x268] sm:$0xff]
  %v6036 = vld [vmem:[%s5957 + $0x270] sm:$0xff]
  %v6037 = vld [vmem:[%s5957 + $0x278] sm:$0xff]
  %v6038 = vld [vmem:[%s5957 + $0x280] sm:$0xff]
  %v6039 = vld [vmem:[%s5957 + $0x288] sm:$0xff]
  %v6040 = vld [vmem:[%s5957 + $0x290] sm:$0xff]
  %v6041 = vld [vmem:[%s5957 + $0x298] sm:$0xff]
  %v6042 = vld [vmem:[%s5957 + $0x2a0] sm:$0xff]
  %v6043 = vld [vmem:[%s5957 + $0x2a8] sm:$0xff]
  %v6044 = vld [vmem:[%s5957 + $0x2b0] sm:$0xff]
  %v6045 = vld [vmem:[%s5957 + $0x2b8] sm:$0xff]
  %v6046 = vld [vmem:[%s5957 + $0x2c0] sm:$0xff]
  %v6047 = vld [vmem:[%s5957 + $0x2c8] sm:$0xff]
  %v6048 = vld [vmem:[%s5957 + $0x2d0] sm:$0xff]
  %v6049 = vld [vmem:[%s5957 + $0x2d8] sm:$0xff]
  %v6050 = vld [vmem:[%s5957 + $0x2e0] sm:$0xff]
  %v6051 = vld [vmem:[%s5957 + $0x2e8] sm:$0xff]
  %v6052 = vld [vmem:[%s5957 + $0x2f0] sm:$0xff]
  %v6053 = vld [vmem:[%s5957 + $0x2f8] sm:$0xff]
  %v6054 = vld [vmem:[%s5957 + $0x300] sm:$0xff]
  %v6055 = vld [vmem:[%s5957 + $0x308] sm:$0xff]
  %v6056 = vld [vmem:[%s5957 + $0x310] sm:$0xff]
  %v6057 = vld [vmem:[%s5957 + $0x318] sm:$0xff]
  %v6058 = vld [vmem:[%s5957 + $0x320] sm:$0xff]
  %v6059 = vld [vmem:[%s5957 + $0x328] sm:$0xff]
  %v6060 = vld [vmem:[%s5957 + $0x330] sm:$0xff]
  %v6061 = vld [vmem:[%s5957 + $0x338] sm:$0xff]
  %v6062 = vld [vmem:[%s5957 + $0x340] sm:$0xff]
  %v6063 = vld [vmem:[%s5957 + $0x348] sm:$0xff]
  %v6064 = vld [vmem:[%s5957 + $0x350] sm:$0xff]
  %v6065 = vld [vmem:[%s5957 + $0x358] sm:$0xff]
  %v6066 = vld [vmem:[%s5957 + $0x360] sm:$0xff]
  %v6067 = vld [vmem:[%s5957 + $0x368] sm:$0xff]
  %v6068 = vld [vmem:[%s5957 + $0x370] sm:$0xff]
  %v6069 = vld [vmem:[%s5957 + $0x378] sm:$0xff]
  %v6070 = vld [vmem:[%s5957 + $0x380] sm:$0xff]
  %v6071 = vld [vmem:[%s5957 + $0x388] sm:$0xff]
  %v6072 = vld [vmem:[%s5957 + $0x390] sm:$0xff]
  %v6073 = vld [vmem:[%s5957 + $0x398] sm:$0xff]
  %v6074 = vld [vmem:[%s5957 + $0x3a0] sm:$0xff]
  %v6075 = vld [vmem:[%s5957 + $0x3a8] sm:$0xff]
  %v6076 = vld [vmem:[%s5957 + $0x3b0] sm:$0xff]
  %v6077 = vld [vmem:[%s5957 + $0x3b8] sm:$0xff]
  %v6078 = vld [vmem:[%s5957 + $0x3c0] sm:$0xff]
  %v6079 = vld [vmem:[%s5957 + $0x3c8] sm:$0xff]
  %v6080 = vld [vmem:[%s5957 + $0x3d0] sm:$0xff]
  %v6081 = vld [vmem:[%s5957 + $0x3d8] sm:$0xff]
  %v6082 = vld [vmem:[%s5957 + $0x3e0] sm:$0xff]
  %v6083 = vld [vmem:[%s5957 + $0x3e8] sm:$0xff]
  %v6084 = vld [vmem:[%s5957 + $0x3f0] sm:$0xff]
  %v6085 = vld [vmem:[%s5957 + $0x3f8] sm:$0xff]
  %v6086 = vld [vmem:[%s5957 + $0x400] sm:$0xff]
  %v6087 = vld [vmem:[%s5957 + $0x408] sm:$0xff]
  %v6088 = vld [vmem:[%s5957 + $0x410] sm:$0xff]
  %v6089 = vld [vmem:[%s5957 + $0x418] sm:$0xff]
  %v6091 = vsel %vm98, %v5944, 0
  %v6094 = vsel %vm98, %v5949, 0
  %v6097 = vsel %vm98, %v5954, 0
  %6099 = vmatprep.subr.mxu0 %v6004
  %6100 = vmatpush1.msra.mxu0 %v6003
  %6101 = vmatprep.subr.mxu0 %v6001
  %6102 = vmatpush1.msra.mxu0 %v6000
  %6103 = vmatprep.subr.mxu0 %v5998
  %6104 = vmatpush1.msra.mxu0 %v5997
  %6105 = vmatprep.subr.mxu0 %v5995
  %6106 = vmatpush1.msra.mxu0 %v5994
  %6107 = vmatprep.subr.mxu0 %v5992
  %6108 = vmatpush1.msra.mxu0 %v5991
  %6109 = vmatprep.subr.mxu0 %v5989
  %6110 = vmatpush1.msra.mxu0 %v5988
  %6111 = vmatprep.subr.mxu0 %v5986
  %6112 = vmatpush1.msra.mxu0 %v5985
  %6113 = vmatprep.subr.mxu0 %v5983
  %6114 = vmatpush1.msra.mxu0 %v5982
  %6115 = vmatprep.subr.mxu0 %v5980
  %6116 = vmatpush1.msra.mxu0 %v5979
  %6117 = vmatprep.subr.mxu0 %v5977
  %6118 = vmatpush1.msra.mxu0 %v5976
  %6119 = vmatprep.subr.mxu0 %v5974
  %6120 = vmatpush1.msra.mxu0 %v5973
  %6121 = vmatprep.subr.mxu0 %v5971
  %6122 = vmatpush1.msra.mxu0 %v5970
  %6123 = vmatprep.subr.mxu0 %v5968
  %6124 = vmatpush1.msra.mxu0 %v5967
  %6125 = vmatprep.subr.mxu0 %v5965
  %6126 = vmatpush1.msra.mxu0 %v5964
  %6127 = vmatprep.subr.mxu0 %v5962
  %6128 = vmatpush1.msra.mxu0 %v5961
  %6129 = vmatprep.subr.mxu0 %v5959
  %6130 = vmatpush1.msra.mxu0 %v5958
  %6131 = vmatprep.subr.mxu0 %v6052
  %6132 = vmatpush2.msra.mxu0 %v6051
  %6133 = vmatprep.subr.mxu0 %v6049
  %6134 = vmatpush2.msra.mxu0 %v6048
  %6135 = vmatprep.subr.mxu0 %v6046
  %6136 = vmatpush2.msra.mxu0 %v6045
  %6137 = vmatprep.subr.mxu0 %v6043
  %6138 = vmatpush2.msra.mxu0 %v6042
  %6139 = vmatprep.subr.mxu0 %v6040
  %6140 = vmatpush2.msra.mxu0 %v6039
  %6141 = vmatprep.subr.mxu0 %v6037
  %6142 = vmatpush2.msra.mxu0 %v6036
  %6143 = vmatprep.subr.mxu0 %v6034
  %6144 = vmatpush2.msra.mxu0 %v6033
  %6145 = vmatprep.subr.mxu0 %v6031
  %6146 = vmatpush2.msra.mxu0 %v6030
  %6147 = vmatprep.subr.mxu0 %v6028
  %6148 = vmatpush2.msra.mxu0 %v6027
  %6149 = vmatprep.subr.mxu0 %v6025
  %6150 = vmatpush2.msra.mxu0 %v6024
  %6151 = vmatprep.subr.mxu0 %v6022
  %6152 = vmatpush2.msra.mxu0 %v6021
  %6153 = vmatprep.subr.mxu0 %v6019
  %6154 = vmatpush2.msra.mxu0 %v6018
  %6155 = vmatprep.subr.mxu0 %v6016
  %6156 = vmatpush2.msra.mxu0 %v6015
  %6157 = vmatprep.subr.mxu0 %v6013
  %6158 = vmatpush2.msra.mxu0 %v6012
  %6159 = vmatprep.subr.mxu0 %v6010
  %6160 = vmatpush2.msra.mxu0 %v6009
  %6161 = vmatprep.subr.mxu0 %v6007
  %6162 = vmatpush2.msra.mxu0 %v6006
  %6163 = vmatprep.mubr.f32.mxu0 %v5863
  %6164 = vmatmul.mubr.f32.gmra.mxu0 %v5861
  %v6165 = vpop.f32.mrf.mxu0
  %v6166 = vadd.f32 0.0, %v6165
  %v6167 = vpop.f32.mrf.mxu0
  %v6168 = vadd.f32 0.0, %v6167
  %6169 = vmatprep.mubr.f32.mxu0 %v5869
  %6170 = vmatmul.mubr.f32.gmra.mxu0 %v5867
  %v6171 = vpop.f32.mrf.mxu0
  %v6172 = vadd.f32 0.0, %v6171
  %v6173 = vpop.f32.mrf.mxu0
  %v6174 = vadd.f32 0.0, %v6173
  %6175 = vmatprep.mubr.f32.mxu0 %v5875
  %6176 = vmatmul.mubr.f32.gmra.mxu0 %v5873
  %v6177 = vpop.f32.mrf.mxu0
  %v6178 = vadd.f32 0.0, %v6177
  %v6179 = vpop.f32.mrf.mxu0
  %v6180 = vadd.f32 0.0, %v6179
  %6181 = vdwg.mxu0
  %6182 = vmatprep.subr.mxu0 0.0
  %6183 = vmatpush1.msra.mxu0 0.0
  %6184 = vmatprep.subr.mxu0 0.0
  %6185 = vmatpush1.msra.mxu0 0.0
  %6186 = vmatprep.subr.mxu0 0.0
  %6187 = vmatpush1.msra.mxu0 0.0
  %6188 = vmatprep.subr.mxu0 0.0
  %6189 = vmatpush1.msra.mxu0 0.0
  %6190 = vmatprep.subr.mxu0 %v6088
  %6191 = vmatpush1.msra.mxu0 %v6087
  %6192 = vmatprep.subr.mxu0 %v6085
  %6193 = vmatpush1.msra.mxu0 %v6084
  %6194 = vmatprep.subr.mxu0 %v6082
  %6195 = vmatpush1.msra.mxu0 %v6081
  %6196 = vmatprep.subr.mxu0 %v6079
  %6197 = vmatpush1.msra.mxu0 %v6078
  %6198 = vmatprep.subr.mxu0 %v6076
  %6199 = vmatpush1.msra.mxu0 %v6075
  %6200 = vmatprep.subr.mxu0 %v6073
  %6201 = vmatpush1.msra.mxu0 %v6072
  %6202 = vmatprep.subr.mxu0 %v6070
  %6203 = vmatpush1.msra.mxu0 %v6069
  %6204 = vmatprep.subr.mxu0 %v6067
  %6205 = vmatpush1.msra.mxu0 %v6066
  %6206 = vmatprep.subr.mxu0 %v6064
  %6207 = vmatpush1.msra.mxu0 %v6063
  %6208 = vmatprep.subr.mxu0 %v6061
  %6209 = vmatpush1.msra.mxu0 %v6060
  %6210 = vmatprep.subr.mxu0 %v6058
  %6211 = vmatpush1.msra.mxu0 %v6057
  %6212 = vmatprep.subr.mxu0 %v6055
  %6213 = vmatpush1.msra.mxu0 %v6054
  %6214 = vmatprep.subr.mxu0 0.0
  %6215 = vmatpush2.msra.mxu0 0.0
  %6216 = vmatprep.subr.mxu0 0.0
  %6217 = vmatpush2.msra.mxu0 0.0
  %6218 = vmatprep.subr.mxu0 0.0
  %6219 = vmatpush2.msra.mxu0 0.0
  %6220 = vmatprep.subr.mxu0 0.0
  %6221 = vmatpush2.msra.mxu0 0.0
  %6222 = vmatprep.subr.mxu0 0.0
  %6223 = vmatpush2.msra.mxu0 0.0
  %6224 = vmatprep.subr.mxu0 0.0
  %6225 = vmatpush2.msra.mxu0 0.0
  %6226 = vmatprep.subr.mxu0 0.0
  %6227 = vmatpush2.msra.mxu0 0.0
  %6228 = vmatprep.subr.mxu0 0.0
  %6229 = vmatpush2.msra.mxu0 0.0
  %6230 = vmatprep.subr.mxu0 0.0
  %6231 = vmatpush2.msra.mxu0 0.0
  %6232 = vmatprep.subr.mxu0 0.0
  %6233 = vmatpush2.msra.mxu0 0.0
  %6234 = vmatprep.subr.mxu0 0.0
  %6235 = vmatpush2.msra.mxu0 0.0
  %6236 = vmatprep.subr.mxu0 0.0
  %6237 = vmatpush2.msra.mxu0 0.0
  %6238 = vmatprep.subr.mxu0 0.0
  %6239 = vmatpush2.msra.mxu0 0.0
  %6240 = vmatprep.subr.mxu0 0.0
  %6241 = vmatpush2.msra.mxu0 0.0
  %6242 = vmatprep.subr.mxu0 0.0
  %6243 = vmatpush2.msra.mxu0 0.0
  %6244 = vmatprep.subr.mxu0 0.0
  %6245 = vmatpush2.msra.mxu0 0.0
  %6246 = vmatprep.mubr.f32.mxu0 0.0
  %6247 = vmatmul.mubr.f32.gmra.mxu0 %v6091
  %v6248 = vpop.f32.mrf.mxu0
  %v6249 = vadd.f32 %v6166, %v6248
  %v6250 = vpop.f32.mrf.mxu0
  %v6251 = vadd.f32 %v6168, %v6250
  %6252 = vmatprep.mubr.f32.mxu0 0.0
  %6253 = vmatmul.mubr.f32.gmra.mxu0 %v6094
  %v6254 = vpop.f32.mrf.mxu0
  %v6255 = vadd.f32 %v6172, %v6254
  %v6256 = vpop.f32.mrf.mxu0
  %v6257 = vadd.f32 %v6174, %v6256
  %6258 = vmatprep.mubr.f32.mxu0 0.0
  %6259 = vmatmul.mubr.f32.gmra.mxu0 %v6097
  %v6260 = vpop.f32.mrf.mxu0
  %v6261 = vadd.f32 %v6178, %v6260
  %v6262 = vpop.f32.mrf.mxu0
  %v6263 = vadd.f32 %v6180, %v6262
  %6264 = vdwg.mxu0
  %6265 = vmatprep.subr.mxu0 0.0
  %6266 = vmatpush1.msra.mxu0 %v6005
  %6267 = vmatprep.subr.mxu0 0.0
  %6268 = vmatpush1.msra.mxu0 %v6002
  %6269 = vmatprep.subr.mxu0 0.0
  %6270 = vmatpush1.msra.mxu0 %v5999
  %6271 = vmatprep.subr.mxu0 0.0
  %6272 = vmatpush1.msra.mxu0 %v5996
  %6273 = vmatprep.subr.mxu0 0.0
  %6274 = vmatpush1.msra.mxu0 %v5993
  %6275 = vmatprep.subr.mxu0 0.0
  %6276 = vmatpush1.msra.mxu0 %v5990
  %6277 = vmatprep.subr.mxu0 0.0
  %6278 = vmatpush1.msra.mxu0 %v5987
  %6279 = vmatprep.subr.mxu0 0.0
  %6280 = vmatpush1.msra.mxu0 %v5984
  %6281 = vmatprep.subr.mxu0 0.0
  %6282 = vmatpush1.msra.mxu0 %v5981
  %6283 = vmatprep.subr.mxu0 0.0
  %6284 = vmatpush1.msra.mxu0 %v5978
  %6285 = vmatprep.subr.mxu0 0.0
  %6286 = vmatpush1.msra.mxu0 %v5975
  %6287 = vmatprep.subr.mxu0 0.0
  %6288 = vmatpush1.msra.mxu0 %v5972
  %6289 = vmatprep.subr.mxu0 0.0
  %6290 = vmatpush1.msra.mxu0 %v5969
  %6291 = vmatprep.subr.mxu0 0.0
  %6292 = vmatpush1.msra.mxu0 %v5966
  %6293 = vmatprep.subr.mxu0 0.0
  %6294 = vmatpush1.msra.mxu0 %v5963
  %6295 = vmatprep.subr.mxu0 0.0
  %6296 = vmatpush1.msra.mxu0 %v5960
  %6297 = vmatprep.subr.mxu0 0.0
  %6298 = vmatpush2.msra.mxu0 %v6053
  %6299 = vmatprep.subr.mxu0 0.0
  %6300 = vmatpush2.msra.mxu0 %v6050
  %6301 = vmatprep.subr.mxu0 0.0
  %6302 = vmatpush2.msra.mxu0 %v6047
  %6303 = vmatprep.subr.mxu0 0.0
  %6304 = vmatpush2.msra.mxu0 %v6044
  %6305 = vmatprep.subr.mxu0 0.0
  %6306 = vmatpush2.msra.mxu0 %v6041
  %6307 = vmatprep.subr.mxu0 0.0
  %6308 = vmatpush2.msra.mxu0 %v6038
  %6309 = vmatprep.subr.mxu0 0.0
  %6310 = vmatpush2.msra.mxu0 %v6035
  %6311 = vmatprep.subr.mxu0 0.0
  %6312 = vmatpush2.msra.mxu0 %v6032
  %6313 = vmatprep.subr.mxu0 0.0
  %6314 = vmatpush2.msra.mxu0 %v6029
  %6315 = vmatprep.subr.mxu0 0.0
  %6316 = vmatpush2.msra.mxu0 %v6026
  %6317 = vmatprep.subr.mxu0 0.0
  %6318 = vmatpush2.msra.mxu0 %v6023
  %6319 = vmatprep.subr.mxu0 0.0
  %6320 = vmatpush2.msra.mxu0 %v6020
  %6321 = vmatprep.subr.mxu0 0.0
  %6322 = vmatpush2.msra.mxu0 %v6017
  %6323 = vmatprep.subr.mxu0 0.0
  %6324 = vmatpush2.msra.mxu0 %v6014
  %6325 = vmatprep.subr.mxu0 0.0
  %6326 = vmatpush2.msra.mxu0 %v6011
  %6327 = vmatprep.subr.mxu0 0.0
  %6328 = vmatpush2.msra.mxu0 %v6008
  %6329 = vmatprep.mubr.f32.mxu0 %v5863
  %6330 = vmatmul.mubr.f32.gmra.mxu0 %v5861
  %v6331 = vpop.f32.mrf.mxu0
  %v6332 = vadd.f32 0.0, %v6331
  %v6333 = vpop.f32.mrf.mxu0
  %6334 = vmatprep.mubr.f32.mxu0 %v5869
  %6335 = vmatmul.mubr.f32.gmra.mxu0 %v5867
  %v6336 = vpop.f32.mrf.mxu0
  %v6337 = vadd.f32 0.0, %v6336
  %v6338 = vpop.f32.mrf.mxu0
  %6339 = vmatprep.mubr.f32.mxu0 %v5875
  %6340 = vmatmul.mubr.f32.gmra.mxu0 %v5873
  %v6341 = vpop.f32.mrf.mxu0
  %v6342 = vadd.f32 0.0, %v6341
  %v6343 = vpop.f32.mrf.mxu0
  %6344 = vdwg.mxu0
  %6345 = vmatprep.subr.mxu0 0.0
  %6346 = vmatpush1.msra.mxu0 0.0
  %6347 = vmatprep.subr.mxu0 0.0
  %6348 = vmatpush1.msra.mxu0 0.0
  %6349 = vmatprep.subr.mxu0 0.0
  %6350 = vmatpush1.msra.mxu0 0.0
  %6351 = vmatprep.subr.mxu0 0.0
  %6352 = vmatpush1.msra.mxu0 0.0
  %6353 = vmatprep.subr.mxu0 0.0
  %6354 = vmatpush1.msra.mxu0 %v6089
  %6355 = vmatprep.subr.mxu0 0.0
  %6356 = vmatpush1.msra.mxu0 %v6086
  %6357 = vmatprep.subr.mxu0 0.0
  %6358 = vmatpush1.msra.mxu0 %v6083
  %6359 = vmatprep.subr.mxu0 0.0
  %6360 = vmatpush1.msra.mxu0 %v6080
  %6361 = vmatprep.subr.mxu0 0.0
  %6362 = vmatpush1.msra.mxu0 %v6077
  %6363 = vmatprep.subr.mxu0 0.0
  %6364 = vmatpush1.msra.mxu0 %v6074
  %6365 = vmatprep.subr.mxu0 0.0
  %6366 = vmatpush1.msra.mxu0 %v6071
  %6367 = vmatprep.subr.mxu0 0.0
  %6368 = vmatpush1.msra.mxu0 %v6068
  %6369 = vmatprep.subr.mxu0 0.0
  %6370 = vmatpush1.msra.mxu0 %v6065
  %6371 = vmatprep.subr.mxu0 0.0
  %6372 = vmatpush1.msra.mxu0 %v6062
  %6373 = vmatprep.subr.mxu0 0.0
  %6374 = vmatpush1.msra.mxu0 %v6059
  %6375 = vmatprep.subr.mxu0 0.0
  %6376 = vmatpush1.msra.mxu0 %v6056
  %6377 = vmatprep.subr.mxu0 0.0
  %6378 = vmatpush2.msra.mxu0 0.0
  %6379 = vmatprep.subr.mxu0 0.0
  %6380 = vmatpush2.msra.mxu0 0.0
  %6381 = vmatprep.subr.mxu0 0.0
  %6382 = vmatpush2.msra.mxu0 0.0
  %6383 = vmatprep.subr.mxu0 0.0
  %6384 = vmatpush2.msra.mxu0 0.0
  %6385 = vmatprep.subr.mxu0 0.0
  %6386 = vmatpush2.msra.mxu0 0.0
  %6387 = vmatprep.subr.mxu0 0.0
  %6388 = vmatpush2.msra.mxu0 0.0
  %6389 = vmatprep.subr.mxu0 0.0
  %6390 = vmatpush2.msra.mxu0 0.0
  %6391 = vmatprep.subr.mxu0 0.0
  %6392 = vmatpush2.msra.mxu0 0.0
  %6393 = vmatprep.subr.mxu0 0.0
  %6394 = vmatpush2.msra.mxu0 0.0
  %6395 = vmatprep.subr.mxu0 0.0
  %6396 = vmatpush2.msra.mxu0 0.0
  %6397 = vmatprep.subr.mxu0 0.0
  %6398 = vmatpush2.msra.mxu0 0.0
  %6399 = vmatprep.subr.mxu0 0.0
  %6400 = vmatpush2.msra.mxu0 0.0
  %6401 = vmatprep.subr.mxu0 0.0
  %6402 = vmatpush2.msra.mxu0 0.0
  %6403 = vmatprep.subr.mxu0 0.0
  %6404 = vmatpush2.msra.mxu0 0.0
  %6405 = vmatprep.subr.mxu0 0.0
  %6406 = vmatpush2.msra.mxu0 0.0
  %6407 = vmatprep.subr.mxu0 0.0
  %6408 = vmatpush2.msra.mxu0 0.0
  %6409 = vmatprep.mubr.f32.mxu0 0.0
  %6410 = vmatmul.mubr.f32.gmra.mxu0 %v6091
  %v6411 = vpop.f32.mrf.mxu0
  %v6412 = vadd.f32 %v6332, %v6411
  %v6413 = vpop.f32.mrf.mxu0
  %6414 = vmatprep.mubr.f32.mxu0 0.0
  %6415 = vmatmul.mubr.f32.gmra.mxu0 %v6094
  %v6416 = vpop.f32.mrf.mxu0
  %v6417 = vadd.f32 %v6337, %v6416
  %v6418 = vpop.f32.mrf.mxu0
  %6419 = vmatprep.mubr.f32.mxu0 0.0
  %6420 = vmatmul.mubr.f32.gmra.mxu0 %v6097
  %v6421 = vpop.f32.mrf.mxu0
  %v6422 = vadd.f32 %v6342, %v6421
  %v6423 = vpop.f32.mrf.mxu0
  %6424 = vdwg.mxu0
  %v6425 = vadd.f32 %v5772, %v6249
  %v6426 = vadd.f32 %v5773, %v6251
  %v6427 = vadd.f32 %v5774, %v6412
  %v6428 = vadd.f32 %v5775, %v6255
  %v6429 = vadd.f32 %v5776, %v6257
  %v6430 = vadd.f32 %v5777, %v6417
  %v6431 = vadd.f32 %v5778, %v6261
  %v6432 = vadd.f32 %v5779, %v6263
  %v6433 = vadd.f32 %v5780, %v6422
  %v6434 = vld [vmem:[%s9] sm:$0xff]
  %v6435 = vld [vmem:[%s9 + $0x8] sm:$0xff]
  %v6436 = vld [vmem:[%s9 + $0x10] sm:$0xff]
  %v6437 = vld [vmem:[%s9 + $0x18] sm:$0xff]
  %v6438 = vld [vmem:[%s9 + $0x20] sm:$0xff]
  %v6439 = vld [vmem:[%s9 + $0x28] sm:$0xff]
  %v6440 = vld [vmem:[%s9 + $0x30] sm:$0xff]
  %v6441 = vld [vmem:[%s9 + $0x38] sm:$0xff]
  %v6442 = vld [vmem:[%s9 + $0x40] sm:$0xff]
  %v6443 = vld [vmem:[%s9 + $0x48] sm:$0xff]
  %v6444 = vld [vmem:[%s9 + $0x50] sm:$0xff]
  %v6445 = vld [vmem:[%s9 + $0x58] sm:$0xff]
  %v6446 = vld [vmem:[%s9 + $0x60] sm:$0xff]
  %v6447 = vld [vmem:[%s9 + $0x68] sm:$0xff]
  %v6448 = vld [vmem:[%s9 + $0x70] sm:$0xff]
  %v6449 = vld [vmem:[%s9 + $0x78] sm:$0xff]
  %v6450 = vld [vmem:[%s9 + $0x80] sm:$0xff]
  %v6451 = vld [vmem:[%s9 + $0x88] sm:$0xff]
  %v6452 = vld [vmem:[%s9 + $0x90] sm:$0xff]
  %v6453 = vld [vmem:[%s9 + $0x98] sm:$0xff]
  %v6454 = vld [vmem:[%s9 + $0xa0] sm:$0xff]
  %v6455 = vld [vmem:[%s9 + $0xa8] sm:$0xff]
  %v6456 = vld [vmem:[%s9 + $0xb0] sm:$0xff]
  %v6457 = vld [vmem:[%s9 + $0xb8] sm:$0xff]
  %v6458 = vld [vmem:[%s9 + $0xc0] sm:$0xff]
  %v6459 = vld [vmem:[%s9 + $0xc8] sm:$0xff]
  %v6460 = vld [vmem:[%s9 + $0xd0] sm:$0xff]
  %v6461 = vld [vmem:[%s9 + $0xd8] sm:$0xff]
  %v6462 = vld [vmem:[%s9 + $0xe0] sm:$0xff]
  %v6463 = vld [vmem:[%s9 + $0xe8] sm:$0xff]
  %v6464 = vld [vmem:[%s9 + $0xf0] sm:$0xff]
  %v6465 = vld [vmem:[%s9 + $0xf8] sm:$0xff]
  %v6466 = vld [vmem:[%s9 + $0x100] sm:$0xff]
  %v6467 = vld [vmem:[%s9 + $0x108] sm:$0xff]
  %v6468 = vld [vmem:[%s9 + $0x110] sm:$0xff]
  %v6469 = vld [vmem:[%s9 + $0x118] sm:$0xff]
  %v6470 = vld [vmem:[%s10] sm:$0xff]
  %v6471 = vld [vmem:[%s10 + $0x8] sm:$0xff]
  %v6472 = vld [vmem:[%s10 + $0x10] sm:$0xff]
  %v6473 = vld [vmem:[%s10 + $0x18] sm:$0xff]
  %v6474 = vld [vmem:[%s10 + $0x20] sm:$0xff]
  %v6475 = vld [vmem:[%s10 + $0x28] sm:$0xff]
  %v6476 = vld [vmem:[%s10 + $0x30] sm:$0xff]
  %v6477 = vld [vmem:[%s10 + $0x38] sm:$0xff]
  %v6478 = vld [vmem:[%s10 + $0x40] sm:$0xff]
  %v6479 = vld [vmem:[%s10 + $0x48] sm:$0xff]
  %v6480 = vld [vmem:[%s10 + $0x50] sm:$0xff]
  %v6481 = vld [vmem:[%s10 + $0x58] sm:$0xff]
  %v6482 = vld [vmem:[%s8] sm:$0x3]
  %v6483 = vadd.f32 %v6425, %v6428
  %vm6484 = vcmask 1041408
  %v6485 = vsel %vm6484, %v6431, 0.0
  %v6486 = vadd.f32 %v6483, %v6485
  %v6487 = vrot.slane %v6486, 4
  %v6488 = vadd.f32 %v6486, %v6487
  %v6489 = vrot.slane %v6488, 2
  %v6490 = vadd.f32 %v6488, %v6489
  %v6491 = vrot.slane %v6490, 1
  %v6492 = vadd.f32 %v6490, %v6491
  %v6493 = vadd.f32 %v6426, %v6429
  %v6494 = vsel %vm6484, %v6432, 0.0
  %v6495 = vadd.f32 %v6493, %v6494
  %v6496 = vrot.slane %v6495, 4
  %v6497 = vadd.f32 %v6495, %v6496
  %v6498 = vrot.slane %v6497, 2
  %v6499 = vadd.f32 %v6497, %v6498
  %v6500 = vrot.slane %v6499, 1
  %v6501 = vadd.f32 %v6499, %v6500
  %vm6502 = vcmask 261120
  %v6503 = vsel %vm6502, %v6427, 0.0
  %v6504 = vsel %vm6502, %v6430, 0.0
  %v6505 = vadd.f32 %v6503, %v6504
  %vm6506 = vcmask 254976
  %v6507 = vsel %vm6506, %v6433, 0.0
  %v6508 = vadd.f32 %v6505, %v6507
  %v6509 = vrot.slane %v6508, 4
  %v6510 = vadd.f32 %v6508, %v6509
  %v6511 = vrot.slane %v6510, 2
  %v6512 = vadd.f32 %v6510, %v6511
  %v6513 = vrot.slane %v6512, 1
  %v6514 = vadd.f32 %v6512, %v6513
  %v6516 = vsel %vm6502, %v6514, 0
  %6518 = vmatprep.subr.mxu0 0.0
  %6519 = vmatpush1.msra.mxu0 %v6449
  %6520 = vmatprep.subr.mxu0 0.0
  %6521 = vmatpush1.msra.mxu0 %v6448
  %6522 = vmatprep.subr.mxu0 0.0
  %6523 = vmatpush1.msra.mxu0 %v6447
  %6524 = vmatprep.subr.mxu0 0.0
  %6525 = vmatpush1.msra.mxu0 %v6446
  %6526 = vmatprep.subr.mxu0 0.0
  %6527 = vmatpush1.msra.mxu0 %v6445
  %6528 = vmatprep.subr.mxu0 0.0
  %6529 = vmatpush1.msra.mxu0 %v6444
  %6530 = vmatprep.subr.mxu0 0.0
  %6531 = vmatpush1.msra.mxu0 %v6443
  %6532 = vmatprep.subr.mxu0 0.0
  %6533 = vmatpush1.msra.mxu0 %v6442
  %6534 = vmatprep.subr.mxu0 0.0
  %6535 = vmatpush1.msra.mxu0 %v6441
  %6536 = vmatprep.subr.mxu0 0.0
  %6537 = vmatpush1.msra.mxu0 %v6440
  %6538 = vmatprep.subr.mxu0 0.0
  %6539 = vmatpush1.msra.mxu0 %v6439
  %6540 = vmatprep.subr.mxu0 0.0
  %6541 = vmatpush1.msra.mxu0 %v6438
  %6542 = vmatprep.subr.mxu0 0.0
  %6543 = vmatpush1.msra.mxu0 %v6437
  %6544 = vmatprep.subr.mxu0 0.0
  %6545 = vmatpush1.msra.mxu0 %v6436
  %6546 = vmatprep.subr.mxu0 0.0
  %6547 = vmatpush1.msra.mxu0 %v6435
  %6548 = vmatprep.subr.mxu0 0.0
  %6549 = vmatpush1.msra.mxu0 %v6434
  %6550 = vmatprep.subr.mxu0 0.0
  %6551 = vmatpush2.msra.mxu0 %v6465
  %6552 = vmatprep.subr.mxu0 0.0
  %6553 = vmatpush2.msra.mxu0 %v6464
  %6554 = vmatprep.subr.mxu0 0.0
  %6555 = vmatpush2.msra.mxu0 %v6463
  %6556 = vmatprep.subr.mxu0 0.0
  %6557 = vmatpush2.msra.mxu0 %v6462
  %6558 = vmatprep.subr.mxu0 0.0
  %6559 = vmatpush2.msra.mxu0 %v6461
  %6560 = vmatprep.subr.mxu0 0.0
  %6561 = vmatpush2.msra.mxu0 %v6460
  %6562 = vmatprep.subr.mxu0 0.0
  %6563 = vmatpush2.msra.mxu0 %v6459
  %6564 = vmatprep.subr.mxu0 0.0
  %6565 = vmatpush2.msra.mxu0 %v6458
  %6566 = vmatprep.subr.mxu0 0.0
  %6567 = vmatpush2.msra.mxu0 %v6457
  %6568 = vmatprep.subr.mxu0 0.0
  %6569 = vmatpush2.msra.mxu0 %v6456
  %6570 = vmatprep.subr.mxu0 0.0
  %6571 = vmatpush2.msra.mxu0 %v6455
  %6572 = vmatprep.subr.mxu0 0.0
  %6573 = vmatpush2.msra.mxu0 %v6454
  %6574 = vmatprep.subr.mxu0 0.0
  %6575 = vmatpush2.msra.mxu0 %v6453
  %6576 = vmatprep.subr.mxu0 0.0
  %6577 = vmatpush2.msra.mxu0 %v6452
  %6578 = vmatprep.subr.mxu0 0.0
  %6579 = vmatpush2.msra.mxu0 %v6451
  %6580 = vmatprep.subr.mxu0 0.0
  %6581 = vmatpush2.msra.mxu0 %v6450
  %6582 = vmatprep.mubr.f32.mxu0 %v6501
  %6583 = vmatmul.mubr.f32.gmra.mxu0 %v6492
  %v6584 = vpop.f32.mrf.mxu0
  %v6585 = vadd.f32 0.0, %v6584
  %v6586 = vpop.f32.mrf.mxu0
  %6587 = vdwg.mxu0
  %6588 = vmatprep.subr.mxu0 0.0
  %6589 = vmatpush1.msra.mxu0 0.0
  %6590 = vmatprep.subr.mxu0 0.0
  %6591 = vmatpush1.msra.mxu0 0.0
  %6592 = vmatprep.subr.mxu0 0.0
  %6593 = vmatpush1.msra.mxu0 0.0
  %6594 = vmatprep.subr.mxu0 0.0
  %6595 = vmatpush1.msra.mxu0 0.0
  %6596 = vmatprep.subr.mxu0 0.0
  %6597 = vmatpush1.msra.mxu0 0.0
  %6598 = vmatprep.subr.mxu0 0.0
  %6599 = vmatpush1.msra.mxu0 0.0
  %6600 = vmatprep.subr.mxu0 0.0
  %6601 = vmatpush1.msra.mxu0 0.0
  %6602 = vmatprep.subr.mxu0 0.0
  %6603 = vmatpush1.msra.mxu0 0.0
  %6604 = vmatprep.subr.mxu0 0.0
  %6605 = vmatpush1.msra.mxu0 0.0
  %6606 = vmatprep.subr.mxu0 0.0
  %6607 = vmatpush1.msra.mxu0 0.0
  %6608 = vmatprep.subr.mxu0 0.0
  %6609 = vmatpush1.msra.mxu0 0.0
  %6610 = vmatprep.subr.mxu0 0.0
  %6611 = vmatpush1.msra.mxu0 0.0
  %6612 = vmatprep.subr.mxu0 0.0
  %6613 = vmatpush1.msra.mxu0 %v6469
  %6614 = vmatprep.subr.mxu0 0.0
  %6615 = vmatpush1.msra.mxu0 %v6468
  %6616 = vmatprep.subr.mxu0 0.0
  %6617 = vmatpush1.msra.mxu0 %v6467
  %6618 = vmatprep.subr.mxu0 0.0
  %6619 = vmatpush1.msra.mxu0 %v6466
  %6620 = vmatprep.subr.mxu0 0.0
  %6621 = vmatpush2.msra.mxu0 0.0
  %6622 = vmatprep.subr.mxu0 0.0
  %6623 = vmatpush2.msra.mxu0 0.0
  %6624 = vmatprep.subr.mxu0 0.0
  %6625 = vmatpush2.msra.mxu0 0.0
  %6626 = vmatprep.subr.mxu0 0.0
  %6627 = vmatpush2.msra.mxu0 0.0
  %6628 = vmatprep.subr.mxu0 0.0
  %6629 = vmatpush2.msra.mxu0 0.0
  %6630 = vmatprep.subr.mxu0 0.0
  %6631 = vmatpush2.msra.mxu0 0.0
  %6632 = vmatprep.subr.mxu0 0.0
  %6633 = vmatpush2.msra.mxu0 0.0
  %6634 = vmatprep.subr.mxu0 0.0
  %6635 = vmatpush2.msra.mxu0 0.0
  %6636 = vmatprep.subr.mxu0 0.0
  %6637 = vmatpush2.msra.mxu0 0.0
  %6638 = vmatprep.subr.mxu0 0.0
  %6639 = vmatpush2.msra.mxu0 0.0
  %6640 = vmatprep.subr.mxu0 0.0
  %6641 = vmatpush2.msra.mxu0 0.0
  %6642 = vmatprep.subr.mxu0 0.0
  %6643 = vmatpush2.msra.mxu0 0.0
  %6644 = vmatprep.subr.mxu0 0.0
  %6645 = vmatpush2.msra.mxu0 0.0
  %6646 = vmatprep.subr.mxu0 0.0
  %6647 = vmatpush2.msra.mxu0 0.0
  %6648 = vmatprep.subr.mxu0 0.0
  %6649 = vmatpush2.msra.mxu0 0.0
  %6650 = vmatprep.subr.mxu0 0.0
  %6651 = vmatpush2.msra.mxu0 0.0
  %6652 = vmatprep.mubr.f32.mxu0 0.0
  %6653 = vmatmul.mubr.f32.gmra.mxu0 %v6516
  %v6654 = vpop.f32.mrf.mxu0
  %v6655 = vadd.f32 %v6585, %v6654
  %v6656 = vpop.f32.mrf.mxu0
  %6657 = vdwg.mxu0
  %v6658 = vmul.f32 %v6655, 0.0061728396
  %v6660 = vsel %vm6502, %v6658, 0
  %6662 = vmatprep.subr.mxu0 0.0
  %6663 = vmatpush1.msra.mxu0 0.0
  %6664 = vmatprep.subr.mxu0 0.0
  %6665 = vmatpush1.msra.mxu0 0.0
  %6666 = vmatprep.subr.mxu0 0.0
  %6667 = vmatpush1.msra.mxu0 0.0
  %6668 = vmatprep.subr.mxu0 0.0
  %6669 = vmatpush1.msra.mxu0 0.0
  %6670 = vmatprep.subr.mxu0 0.0
  %6671 = vmatpush1.msra.mxu0 0.0
  %6672 = vmatprep.subr.mxu0 0.0
  %6673 = vmatpush1.msra.mxu0 0.0
  %6674 = vmatprep.subr.mxu0 0.0
  %6675 = vmatpush1.msra.mxu0 0.0
  %6676 = vmatprep.subr.mxu0 0.0
  %6677 = vmatpush1.msra.mxu0 0.0
  %6678 = vmatprep.subr.mxu0 0.0
  %6679 = vmatpush1.msra.mxu0 0.0
  %6680 = vmatprep.subr.mxu0 0.0
  %6681 = vmatpush1.msra.mxu0 0.0
  %6682 = vmatprep.subr.mxu0 0.0
  %6683 = vmatpush1.msra.mxu0 0.0
  %6684 = vmatprep.subr.mxu0 0.0
  %6685 = vmatpush1.msra.mxu0 0.0
  %6686 = vmatprep.subr.mxu0 %v6480
  %6687 = vmatpush1.msra.mxu0 %v6479
  %6688 = vmatprep.subr.mxu0 %v6477
  %6689 = vmatpush1.msra.mxu0 %v6476
  %6690 = vmatprep.subr.mxu0 %v6474
  %6691 = vmatpush1.msra.mxu0 %v6473
  %6692 = vmatprep.subr.mxu0 %v6471
  %6693 = vmatpush1.msra.mxu0 %v6470
  %6694 = vmatprep.subr.mxu0 0.0
  %6695 = vmatpush2.msra.mxu0 0.0
  %6696 = vmatprep.subr.mxu0 0.0
  %6697 = vmatpush2.msra.mxu0 0.0
  %6698 = vmatprep.subr.mxu0 0.0
  %6699 = vmatpush2.msra.mxu0 0.0
  %6700 = vmatprep.subr.mxu0 0.0
  %6701 = vmatpush2.msra.mxu0 0.0
  %6702 = vmatprep.subr.mxu0 0.0
  %6703 = vmatpush2.msra.mxu0 0.0
  %6704 = vmatprep.subr.mxu0 0.0
  %6705 = vmatpush2.msra.mxu0 0.0
  %6706 = vmatprep.subr.mxu0 0.0
  %6707 = vmatpush2.msra.mxu0 0.0
  %6708 = vmatprep.subr.mxu0 0.0
  %6709 = vmatpush2.msra.mxu0 0.0
  %6710 = vmatprep.subr.mxu0 0.0
  %6711 = vmatpush2.msra.mxu0 0.0
  %6712 = vmatprep.subr.mxu0 0.0
  %6713 = vmatpush2.msra.mxu0 0.0
  %6714 = vmatprep.subr.mxu0 0.0
  %6715 = vmatpush2.msra.mxu0 0.0
  %6716 = vmatprep.subr.mxu0 0.0
  %6717 = vmatpush2.msra.mxu0 0.0
  %6718 = vmatprep.subr.mxu0 0.0
  %6719 = vmatpush2.msra.mxu0 0.0
  %6720 = vmatprep.subr.mxu0 0.0
  %6721 = vmatpush2.msra.mxu0 0.0
  %6722 = vmatprep.subr.mxu0 0.0
  %6723 = vmatpush2.msra.mxu0 0.0
  %6724 = vmatprep.subr.mxu0 0.0
  %6725 = vmatpush2.msra.mxu0 0.0
  %6726 = vmatprep.mubr.f32.mxu0 0.0
  %6727 = vmatmul.mubr.f32.gmra.mxu0 %v6660
  %v6728 = vpop.f32.mrf.mxu0
  %v6729 = vadd.f32 0.0, %v6728
  %v6730 = vpop.f32.mrf.mxu0
  %v6731 = vadd.f32 0.0, %v6730
  %6732 = vdwg.mxu0
  %6733 = vmatprep.subr.mxu0 0.0
  %6734 = vmatpush1.msra.mxu0 0.0
  %6735 = vmatprep.subr.mxu0 0.0
  %6736 = vmatpush1.msra.mxu0 0.0
  %6737 = vmatprep.subr.mxu0 0.0
  %6738 = vmatpush1.msra.mxu0 0.0
  %6739 = vmatprep.subr.mxu0 0.0
  %6740 = vmatpush1.msra.mxu0 0.0
  %6741 = vmatprep.subr.mxu0 0.0
  %6742 = vmatpush1.msra.mxu0 0.0
  %6743 = vmatprep.subr.mxu0 0.0
  %6744 = vmatpush1.msra.mxu0 0.0
  %6745 = vmatprep.subr.mxu0 0.0
  %6746 = vmatpush1.msra.mxu0 0.0
  %6747 = vmatprep.subr.mxu0 0.0
  %6748 = vmatpush1.msra.mxu0 0.0
  %6749 = vmatprep.subr.mxu0 0.0
  %6750 = vmatpush1.msra.mxu0 0.0
  %6751 = vmatprep.subr.mxu0 0.0
  %6752 = vmatpush1.msra.mxu0 0.0
  %6753 = vmatprep.subr.mxu0 0.0
  %6754 = vmatpush1.msra.mxu0 0.0
  %6755 = vmatprep.subr.mxu0 0.0
  %6756 = vmatpush1.msra.mxu0 0.0
  %6757 = vmatprep.subr.mxu0 0.0
  %6758 = vmatpush1.msra.mxu0 %v6481
  %6759 = vmatprep.subr.mxu0 0.0
  %6760 = vmatpush1.msra.mxu0 %v6478
  %6761 = vmatprep.subr.mxu0 0.0
  %6762 = vmatpush1.msra.mxu0 %v6475
  %6763 = vmatprep.subr.mxu0 0.0
  %6764 = vmatpush1.msra.mxu0 %v6472
  %6765 = vmatprep.subr.mxu0 0.0
  %6766 = vmatpush2.msra.mxu0 0.0
  %6767 = vmatprep.subr.mxu0 0.0
  %6768 = vmatpush2.msra.mxu0 0.0
  %6769 = vmatprep.subr.mxu0 0.0
  %6770 = vmatpush2.msra.mxu0 0.0
  %6771 = vmatprep.subr.mxu0 0.0
  %6772 = vmatpush2.msra.mxu0 0.0
  %6773 = vmatprep.subr.mxu0 0.0
  %6774 = vmatpush2.msra.mxu0 0.0
  %6775 = vmatprep.subr.mxu0 0.0
  %6776 = vmatpush2.msra.mxu0 0.0
  %6777 = vmatprep.subr.mxu0 0.0
  %6778 = vmatpush2.msra.mxu0 0.0
  %6779 = vmatprep.subr.mxu0 0.0
  %6780 = vmatpush2.msra.mxu0 0.0
  %6781 = vmatprep.subr.mxu0 0.0
  %6782 = vmatpush2.msra.mxu0 0.0
  %6783 = vmatprep.subr.mxu0 0.0
  %6784 = vmatpush2.msra.mxu0 0.0
  %6785 = vmatprep.subr.mxu0 0.0
  %6786 = vmatpush2.msra.mxu0 0.0
  %6787 = vmatprep.subr.mxu0 0.0
  %6788 = vmatpush2.msra.mxu0 0.0
  %6789 = vmatprep.subr.mxu0 0.0
  %6790 = vmatpush2.msra.mxu0 0.0
  %6791 = vmatprep.subr.mxu0 0.0
  %6792 = vmatpush2.msra.mxu0 0.0
  %6793 = vmatprep.subr.mxu0 0.0
  %6794 = vmatpush2.msra.mxu0 0.0
  %6795 = vmatprep.subr.mxu0 0.0
  %6796 = vmatpush2.msra.mxu0 0.0
  %6797 = vmatprep.mubr.f32.mxu0 0.0
  %6798 = vmatmul.mubr.f32.gmra.mxu0 %v6660
  %v6799 = vpop.f32.mrf.mxu0
  %v6800 = vadd.f32 0.0, %v6799
  %v6801 = vpop.f32.mrf.mxu0
  %6802 = vdwg.mxu0
  %v6803 = vlaneseq
  %v6804 = vshrl.u32 %v6803, 7
  %v6805 = vsub.s32 0, %v6804
  %v6806 = vrot.slane %v6729, %v6805
  %v6807 = vlaneseq
  %v6808 = vshrl.u32 %v6807, 7
  %v6809 = vsub.s32 0, %v6808
  %v6810 = vrot.slane %v6731, %v6809
  %v6811 = vlaneseq
  %v6812 = vshrl.u32 %v6811, 7
  %v6813 = vsub.s32 0, %v6812
  %v6814 = vrot.slane %v6800, %v6813
  %v6815 = vsub.f32 %v6425, %v6806
  %v6816 = vsub.f32 %v6426, %v6810
  %v6817 = vsub.f32 %v6427, %v6814
  %v6818 = vsub.f32 %v6428, %v6806
  %v6819 = vsub.f32 %v6429, %v6810
  %v6820 = vsub.f32 %v6430, %v6814
  %v6821 = vsub.f32 %v6431, %v6806
  %v6822 = vsub.f32 %v6432, %v6810
  %v6823 = vsub.f32 %v6433, %v6814
  %v6824 = vmul.f32 %v6815, %v6815
  %v6825 = vmul.f32 %v6816, %v6816
  %v6826 = vmul.f32 %v6817, %v6817
  %v6827 = vmul.f32 %v6818, %v6818
  %v6828 = vmul.f32 %v6819, %v6819
  %v6829 = vmul.f32 %v6820, %v6820
  %v6830 = vmul.f32 %v6821, %v6821
  %v6831 = vmul.f32 %v6822, %v6822
  %v6832 = vmul.f32 %v6823, %v6823
  %v6833 = vadd.f32 %v6824, %v6827
  %v6834 = vsel %vm6484, %v6830, 0.0
  %v6835 = vadd.f32 %v6833, %v6834
  %v6836 = vrot.slane %v6835, 4
  %v6837 = vadd.f32 %v6835, %v6836
  %v6838 = vrot.slane %v6837, 2
  %v6839 = vadd.f32 %v6837, %v6838
  %v6840 = vrot.slane %v6839, 1
  %v6841 = vadd.f32 %v6839, %v6840
  %v6842 = vadd.f32 %v6825, %v6828
  %v6843 = vsel %vm6484, %v6831, 0.0
  %v6844 = vadd.f32 %v6842, %v6843
  %v6845 = vrot.slane %v6844, 4
  %v6846 = vadd.f32 %v6844, %v6845
  %v6847 = vrot.slane %v6846, 2
  %v6848 = vadd.f32 %v6846, %v6847
  %v6849 = vrot.slane %v6848, 1
  %v6850 = vadd.f32 %v6848, %v6849
  %v6851 = vsel %vm6502, %v6826, 0.0
  %v6852 = vsel %vm6502, %v6829, 0.0
  %v6853 = vadd.f32 %v6851, %v6852
  %v6854 = vsel %vm6506, %v6832, 0.0
  %v6855 = vadd.f32 %v6853, %v6854
  %v6856 = vrot.slane %v6855, 4
  %v6857 = vadd.f32 %v6855, %v6856
  %v6858 = vrot.slane %v6857, 2
  %v6859 = vadd.f32 %v6857, %v6858
  %v6860 = vrot.slane %v6859, 1
  %v6861 = vadd.f32 %v6859, %v6860
  %v6863 = vsel %vm6502, %v6861, 0
  %6865 = vmatprep.subr.mxu0 0.0
  %6866 = vmatpush1.msra.mxu0 %v6449
  %6867 = vmatprep.subr.mxu0 0.0
  %6868 = vmatpush1.msra.mxu0 %v6448
  %6869 = vmatprep.subr.mxu0 0.0
  %6870 = vmatpush1.msra.mxu0 %v6447
  %6871 = vmatprep.subr.mxu0 0.0
  %6872 = vmatpush1.msra.mxu0 %v6446
  %6873 = vmatprep.subr.mxu0 0.0
  %6874 = vmatpush1.msra.mxu0 %v6445
  %6875 = vmatprep.subr.mxu0 0.0
  %6876 = vmatpush1.msra.mxu0 %v6444
  %6877 = vmatprep.subr.mxu0 0.0
  %6878 = vmatpush1.msra.mxu0 %v6443
  %6879 = vmatprep.subr.mxu0 0.0
  %6880 = vmatpush1.msra.mxu0 %v6442
  %6881 = vmatprep.subr.mxu0 0.0
  %6882 = vmatpush1.msra.mxu0 %v6441
  %6883 = vmatprep.subr.mxu0 0.0
  %6884 = vmatpush1.msra.mxu0 %v6440
  %6885 = vmatprep.subr.mxu0 0.0
  %6886 = vmatpush1.msra.mxu0 %v6439
  %6887 = vmatprep.subr.mxu0 0.0
  %6888 = vmatpush1.msra.mxu0 %v6438
  %6889 = vmatprep.subr.mxu0 0.0
  %6890 = vmatpush1.msra.mxu0 %v6437
  %6891 = vmatprep.subr.mxu0 0.0
  %6892 = vmatpush1.msra.mxu0 %v6436
  %6893 = vmatprep.subr.mxu0 0.0
  %6894 = vmatpush1.msra.mxu0 %v6435
  %6895 = vmatprep.subr.mxu0 0.0
  %6896 = vmatpush1.msra.mxu0 %v6434
  %6897 = vmatprep.subr.mxu0 0.0
  %6898 = vmatpush2.msra.mxu0 %v6465
  %6899 = vmatprep.subr.mxu0 0.0
  %6900 = vmatpush2.msra.mxu0 %v6464
  %6901 = vmatprep.subr.mxu0 0.0
  %6902 = vmatpush2.msra.mxu0 %v6463
  %6903 = vmatprep.subr.mxu0 0.0
  %6904 = vmatpush2.msra.mxu0 %v6462
  %6905 = vmatprep.subr.mxu0 0.0
  %6906 = vmatpush2.msra.mxu0 %v6461
  %6907 = vmatprep.subr.mxu0 0.0
  %6908 = vmatpush2.msra.mxu0 %v6460
  %6909 = vmatprep.subr.mxu0 0.0
  %6910 = vmatpush2.msra.mxu0 %v6459
  %6911 = vmatprep.subr.mxu0 0.0
  %6912 = vmatpush2.msra.mxu0 %v6458
  %6913 = vmatprep.subr.mxu0 0.0
  %6914 = vmatpush2.msra.mxu0 %v6457
  %6915 = vmatprep.subr.mxu0 0.0
  %6916 = vmatpush2.msra.mxu0 %v6456
  %6917 = vmatprep.subr.mxu0 0.0
  %6918 = vmatpush2.msra.mxu0 %v6455
  %6919 = vmatprep.subr.mxu0 0.0
  %6920 = vmatpush2.msra.mxu0 %v6454
  %6921 = vmatprep.subr.mxu0 0.0
  %6922 = vmatpush2.msra.mxu0 %v6453
  %6923 = vmatprep.subr.mxu0 0.0
  %6924 = vmatpush2.msra.mxu0 %v6452
  %6925 = vmatprep.subr.mxu0 0.0
  %6926 = vmatpush2.msra.mxu0 %v6451
  %6927 = vmatprep.subr.mxu0 0.0
  %6928 = vmatpush2.msra.mxu0 %v6450
  %6929 = vmatprep.mubr.f32.mxu0 %v6850
  %6930 = vmatmul.mubr.f32.gmra.mxu0 %v6841
  %v6931 = vpop.f32.mrf.mxu0
  %v6932 = vadd.f32 0.0, %v6931
  %v6933 = vpop.f32.mrf.mxu0
  %6934 = vdwg.mxu0
  %6935 = vmatprep.subr.mxu0 0.0
  %6936 = vmatpush1.msra.mxu0 0.0
  %6937 = vmatprep.subr.mxu0 0.0
  %6938 = vmatpush1.msra.mxu0 0.0
  %6939 = vmatprep.subr.mxu0 0.0
  %6940 = vmatpush1.msra.mxu0 0.0
  %6941 = vmatprep.subr.mxu0 0.0
  %6942 = vmatpush1.msra.mxu0 0.0
  %6943 = vmatprep.subr.mxu0 0.0
  %6944 = vmatpush1.msra.mxu0 0.0
  %6945 = vmatprep.subr.mxu0 0.0
  %6946 = vmatpush1.msra.mxu0 0.0
  %6947 = vmatprep.subr.mxu0 0.0
  %6948 = vmatpush1.msra.mxu0 0.0
  %6949 = vmatprep.subr.mxu0 0.0
  %6950 = vmatpush1.msra.mxu0 0.0
  %6951 = vmatprep.subr.mxu0 0.0
  %6952 = vmatpush1.msra.mxu0 0.0
  %6953 = vmatprep.subr.mxu0 0.0
  %6954 = vmatpush1.msra.mxu0 0.0
  %6955 = vmatprep.subr.mxu0 0.0
  %6956 = vmatpush1.msra.mxu0 0.0
  %6957 = vmatprep.subr.mxu0 0.0
  %6958 = vmatpush1.msra.mxu0 0.0
  %6959 = vmatprep.subr.mxu0 0.0
  %6960 = vmatpush1.msra.mxu0 %v6469
  %6961 = vmatprep.subr.mxu0 0.0
  %6962 = vmatpush1.msra.mxu0 %v6468
  %6963 = vmatprep.subr.mxu0 0.0
  %6964 = vmatpush1.msra.mxu0 %v6467
  %6965 = vmatprep.subr.mxu0 0.0
  %6966 = vmatpush1.msra.mxu0 %v6466
  %6967 = vmatprep.subr.mxu0 0.0
  %6968 = vmatpush2.msra.mxu0 0.0
  %6969 = vmatprep.subr.mxu0 0.0
  %6970 = vmatpush2.msra.mxu0 0.0
  %6971 = vmatprep.subr.mxu0 0.0
  %6972 = vmatpush2.msra.mxu0 0.0
  %6973 = vmatprep.subr.mxu0 0.0
  %6974 = vmatpush2.msra.mxu0 0.0
  %6975 = vmatprep.subr.mxu0 0.0
  %6976 = vmatpush2.msra.mxu0 0.0
  %6977 = vmatprep.subr.mxu0 0.0
  %6978 = vmatpush2.msra.mxu0 0.0
  %6979 = vmatprep.subr.mxu0 0.0
  %6980 = vmatpush2.msra.mxu0 0.0
  %6981 = vmatprep.subr.mxu0 0.0
  %6982 = vmatpush2.msra.mxu0 0.0
  %6983 = vmatprep.subr.mxu0 0.0
  %6984 = vmatpush2.msra.mxu0 0.0
  %6985 = vmatprep.subr.mxu0 0.0
  %6986 = vmatpush2.msra.mxu0 0.0
  %6987 = vmatprep.subr.mxu0 0.0
  %6988 = vmatpush2.msra.mxu0 0.0
  %6989 = vmatprep.subr.mxu0 0.0
  %6990 = vmatpush2.msra.mxu0 0.0
  %6991 = vmatprep.subr.mxu0 0.0
  %6992 = vmatpush2.msra.mxu0 0.0
  %6993 = vmatprep.subr.mxu0 0.0
  %6994 = vmatpush2.msra.mxu0 0.0
  %6995 = vmatprep.subr.mxu0 0.0
  %6996 = vmatpush2.msra.mxu0 0.0
  %6997 = vmatprep.subr.mxu0 0.0
  %6998 = vmatpush2.msra.mxu0 0.0
  %6999 = vmatprep.mubr.f32.mxu0 0.0
  %7000 = vmatmul.mubr.f32.gmra.mxu0 %v6863
  %v7001 = vpop.f32.mrf.mxu0
  %v7002 = vadd.f32 %v6932, %v7001
  %v7003 = vpop.f32.mrf.mxu0
  %7004 = vdwg.mxu0
  %v7005 = vmul.f32 %v7002, 0.0061728396
  %v7006 = vadd.f32 %v7005, 1e-05
  %v7007 = vrsqrt.pop %v7006
  %v7008 = vmul.f32 %v6482, %v7007
  %v7010 = vsel %vm6502, %v7008, 0
  %7012 = vmatprep.subr.mxu0 0.0
  %7013 = vmatpush1.msra.mxu0 0.0
  %7014 = vmatprep.subr.mxu0 0.0
  %7015 = vmatpush1.msra.mxu0 0.0
  %7016 = vmatprep.subr.mxu0 0.0
  %7017 = vmatpush1.msra.mxu0 0.0
  %7018 = vmatprep.subr.mxu0 0.0
  %7019 = vmatpush1.msra.mxu0 0.0
  %7020 = vmatprep.subr.mxu0 0.0
  %7021 = vmatpush1.msra.mxu0 0.0
  %7022 = vmatprep.subr.mxu0 0.0
  %7023 = vmatpush1.msra.mxu0 0.0
  %7024 = vmatprep.subr.mxu0 0.0
  %7025 = vmatpush1.msra.mxu0 0.0
  %7026 = vmatprep.subr.mxu0 0.0
  %7027 = vmatpush1.msra.mxu0 0.0
  %7028 = vmatprep.subr.mxu0 0.0
  %7029 = vmatpush1.msra.mxu0 0.0
  %7030 = vmatprep.subr.mxu0 0.0
  %7031 = vmatpush1.msra.mxu0 0.0
  %7032 = vmatprep.subr.mxu0 0.0
  %7033 = vmatpush1.msra.mxu0 0.0
  %7034 = vmatprep.subr.mxu0 0.0
  %7035 = vmatpush1.msra.mxu0 0.0
  %7036 = vmatprep.subr.mxu0 %v6480
  %7037 = vmatpush1.msra.mxu0 %v6479
  %7038 = vmatprep.subr.mxu0 %v6477
  %7039 = vmatpush1.msra.mxu0 %v6476
  %7040 = vmatprep.subr.mxu0 %v6474
  %7041 = vmatpush1.msra.mxu0 %v6473
  %7042 = vmatprep.subr.mxu0 %v6471
  %7043 = vmatpush1.msra.mxu0 %v6470
  %7044 = vmatprep.subr.mxu0 0.0
  %7045 = vmatpush2.msra.mxu0 0.0
  %7046 = vmatprep.subr.mxu0 0.0
  %7047 = vmatpush2.msra.mxu0 0.0
  %7048 = vmatprep.subr.mxu0 0.0
  %7049 = vmatpush2.msra.mxu0 0.0
  %7050 = vmatprep.subr.mxu0 0.0
  %7051 = vmatpush2.msra.mxu0 0.0
  %7052 = vmatprep.subr.mxu0 0.0
  %7053 = vmatpush2.msra.mxu0 0.0
  %7054 = vmatprep.subr.mxu0 0.0
  %7055 = vmatpush2.msra.mxu0 0.0
  %7056 = vmatprep.subr.mxu0 0.0
  %7057 = vmatpush2.msra.mxu0 0.0
  %7058 = vmatprep.subr.mxu0 0.0
  %7059 = vmatpush2.msra.mxu0 0.0
  %7060 = vmatprep.subr.mxu0 0.0
  %7061 = vmatpush2.msra.mxu0 0.0
  %7062 = vmatprep.subr.mxu0 0.0
  %7063 = vmatpush2.msra.mxu0 0.0
  %7064 = vmatprep.subr.mxu0 0.0
  %7065 = vmatpush2.msra.mxu0 0.0
  %7066 = vmatprep.subr.mxu0 0.0
  %7067 = vmatpush2.msra.mxu0 0.0
  %7068 = vmatprep.subr.mxu0 0.0
  %7069 = vmatpush2.msra.mxu0 0.0
  %7070 = vmatprep.subr.mxu0 0.0
  %7071 = vmatpush2.msra.mxu0 0.0
  %7072 = vmatprep.subr.mxu0 0.0
  %7073 = vmatpush2.msra.mxu0 0.0
  %7074 = vmatprep.subr.mxu0 0.0
  %7075 = vmatpush2.msra.mxu0 0.0
  %7076 = vmatprep.mubr.f32.mxu0 0.0
  %7077 = vmatmul.mubr.f32.gmra.mxu0 %v7010
  %v7078 = vpop.f32.mrf.mxu0
  %v7079 = vadd.f32 0.0, %v7078
  %v7080 = vpop.f32.mrf.mxu0
  %v7081 = vadd.f32 0.0, %v7080
  %7082 = vdwg.mxu0
  %7083 = vmatprep.subr.mxu0 0.0
  %7084 = vmatpush1.msra.mxu0 0.0
  %7085 = vmatprep.subr.mxu0 0.0
  %7086 = vmatpush1.msra.mxu0 0.0
  %7087 = vmatprep.subr.mxu0 0.0
  %7088 = vmatpush1.msra.mxu0 0.0
  %7089 = vmatprep.subr.mxu0 0.0
  %7090 = vmatpush1.msra.mxu0 0.0
  %7091 = vmatprep.subr.mxu0 0.0
  %7092 = vmatpush1.msra.mxu0 0.0
  %7093 = vmatprep.subr.mxu0 0.0
  %7094 = vmatpush1.msra.mxu0 0.0
  %7095 = vmatprep.subr.mxu0 0.0
  %7096 = vmatpush1.msra.mxu0 0.0
  %7097 = vmatprep.subr.mxu0 0.0
  %7098 = vmatpush1.msra.mxu0 0.0
  %7099 = vmatprep.subr.mxu0 0.0
  %7100 = vmatpush1.msra.mxu0 0.0
  %7101 = vmatprep.subr.mxu0 0.0
  %7102 = vmatpush1.msra.mxu0 0.0
  %7103 = vmatprep.subr.mxu0 0.0
  %7104 = vmatpush1.msra.mxu0 0.0
  %7105 = vmatprep.subr.mxu0 0.0
  %7106 = vmatpush1.msra.mxu0 0.0
  %7107 = vmatprep.subr.mxu0 0.0
  %7108 = vmatpush1.msra.mxu0 %v6481
  %7109 = vmatprep.subr.mxu0 0.0
  %7110 = vmatpush1.msra.mxu0 %v6478
  %7111 = vmatprep.subr.mxu0 0.0
  %7112 = vmatpush1.msra.mxu0 %v6475
  %7113 = vmatprep.subr.mxu0 0.0
  %7114 = vmatpush1.msra.mxu0 %v6472
  %7115 = vmatprep.subr.mxu0 0.0
  %7116 = vmatpush2.msra.mxu0 0.0
  %7117 = vmatprep.subr.mxu0 0.0
  %7118 = vmatpush2.msra.mxu0 0.0
  %7119 = vmatprep.subr.mxu0 0.0
  %7120 = vmatpush2.msra.mxu0 0.0
  %7121 = vmatprep.subr.mxu0 0.0
  %7122 = vmatpush2.msra.mxu0 0.0
  %7123 = vmatprep.subr.mxu0 0.0
  %7124 = vmatpush2.msra.mxu0 0.0
  %7125 = vmatprep.subr.mxu0 0.0
  %7126 = vmatpush2.msra.mxu0 0.0
  %7127 = vmatprep.subr.mxu0 0.0
  %7128 = vmatpush2.msra.mxu0 0.0
  %7129 = vmatprep.subr.mxu0 0.0
  %7130 = vmatpush2.msra.mxu0 0.0
  %7131 = vmatprep.subr.mxu0 0.0
  %7132 = vmatpush2.msra.mxu0 0.0
  %7133 = vmatprep.subr.mxu0 0.0
  %7134 = vmatpush2.msra.mxu0 0.0
  %7135 = vmatprep.subr.mxu0 0.0
  %7136 = vmatpush2.msra.mxu0 0.0
  %7137 = vmatprep.subr.mxu0 0.0
  %7138 = vmatpush2.msra.mxu0 0.0
  %7139 = vmatprep.subr.mxu0 0.0
  %7140 = vmatpush2.msra.mxu0 0.0
  %7141 = vmatprep.subr.mxu0 0.0
  %7142 = vmatpush2.msra.mxu0 0.0
  %7143 = vmatprep.subr.mxu0 0.0
  %7144 = vmatpush2.msra.mxu0 0.0
  %7145 = vmatprep.subr.mxu0 0.0
  %7146 = vmatpush2.msra.mxu0 0.0
  %7147 = vmatprep.mubr.f32.mxu0 0.0
  %7148 = vmatmul.mubr.f32.gmra.mxu0 %v7010
  %v7149 = vpop.f32.mrf.mxu0
  %v7150 = vadd.f32 0.0, %v7149
  %v7151 = vpop.f32.mrf.mxu0
  %7152 = vdwg.mxu0
  %v7154 = vrot.slane %v6482, 1
  %v7155 = vsel %vm6502, %v7154, 0
  %7157 = vmatprep.subr.mxu0 0.0
  %7158 = vmatpush1.msra.mxu0 0.0
  %7159 = vmatprep.subr.mxu0 0.0
  %7160 = vmatpush1.msra.mxu0 0.0
  %7161 = vmatprep.subr.mxu0 0.0
  %7162 = vmatpush1.msra.mxu0 0.0
  %7163 = vmatprep.subr.mxu0 0.0
  %7164 = vmatpush1.msra.mxu0 0.0
  %7165 = vmatprep.subr.mxu0 0.0
  %7166 = vmatpush1.msra.mxu0 0.0
  %7167 = vmatprep.subr.mxu0 0.0
  %7168 = vmatpush1.msra.mxu0 0.0
  %7169 = vmatprep.subr.mxu0 0.0
  %7170 = vmatpush1.msra.mxu0 0.0
  %7171 = vmatprep.subr.mxu0 0.0
  %7172 = vmatpush1.msra.mxu0 0.0
  %7173 = vmatprep.subr.mxu0 0.0
  %7174 = vmatpush1.msra.mxu0 0.0
  %7175 = vmatprep.subr.mxu0 0.0
  %7176 = vmatpush1.msra.mxu0 0.0
  %7177 = vmatprep.subr.mxu0 0.0
  %7178 = vmatpush1.msra.mxu0 0.0
  %7179 = vmatprep.subr.mxu0 0.0
  %7180 = vmatpush1.msra.mxu0 0.0
  %7181 = vmatprep.subr.mxu0 %v6480
  %7182 = vmatpush1.msra.mxu0 %v6479
  %7183 = vmatprep.subr.mxu0 %v6477
  %7184 = vmatpush1.msra.mxu0 %v6476
  %7185 = vmatprep.subr.mxu0 %v6474
  %7186 = vmatpush1.msra.mxu0 %v6473
  %7187 = vmatprep.subr.mxu0 %v6471
  %7188 = vmatpush1.msra.mxu0 %v6470
  %7189 = vmatprep.subr.mxu0 0.0
  %7190 = vmatpush2.msra.mxu0 0.0
  %7191 = vmatprep.subr.mxu0 0.0
  %7192 = vmatpush2.msra.mxu0 0.0
  %7193 = vmatprep.subr.mxu0 0.0
  %7194 = vmatpush2.msra.mxu0 0.0
  %7195 = vmatprep.subr.mxu0 0.0
  %7196 = vmatpush2.msra.mxu0 0.0
  %7197 = vmatprep.subr.mxu0 0.0
  %7198 = vmatpush2.msra.mxu0 0.0
  %7199 = vmatprep.subr.mxu0 0.0
  %7200 = vmatpush2.msra.mxu0 0.0
  %7201 = vmatprep.subr.mxu0 0.0
  %7202 = vmatpush2.msra.mxu0 0.0
  %7203 = vmatprep.subr.mxu0 0.0
  %7204 = vmatpush2.msra.mxu0 0.0
  %7205 = vmatprep.subr.mxu0 0.0
  %7206 = vmatpush2.msra.mxu0 0.0
  %7207 = vmatprep.subr.mxu0 0.0
  %7208 = vmatpush2.msra.mxu0 0.0
  %7209 = vmatprep.subr.mxu0 0.0
  %7210 = vmatpush2.msra.mxu0 0.0
  %7211 = vmatprep.subr.mxu0 0.0
  %7212 = vmatpush2.msra.mxu0 0.0
  %7213 = vmatprep.subr.mxu0 0.0
  %7214 = vmatpush2.msra.mxu0 0.0
  %7215 = vmatprep.subr.mxu0 0.0
  %7216 = vmatpush2.msra.mxu0 0.0
  %7217 = vmatprep.subr.mxu0 0.0
  %7218 = vmatpush2.msra.mxu0 0.0
  %7219 = vmatprep.subr.mxu0 0.0
  %7220 = vmatpush2.msra.mxu0 0.0
  %7221 = vmatprep.mubr.f32.mxu0 0.0
  %7222 = vmatmul.mubr.f32.gmra.mxu0 %v7155
  %v7223 = vpop.f32.mrf.mxu0
  %v7224 = vadd.f32 0.0, %v7223
  %v7225 = vpop.f32.mrf.mxu0
  %v7226 = vadd.f32 0.0, %v7225
  %7227 = vdwg.mxu0
  %7228 = vmatprep.subr.mxu0 0.0
  %7229 = vmatpush1.msra.mxu0 0.0
  %7230 = vmatprep.subr.mxu0 0.0
  %7231 = vmatpush1.msra.mxu0 0.0
  %7232 = vmatprep.subr.mxu0 0.0
  %7233 = vmatpush1.msra.mxu0 0.0
  %7234 = vmatprep.subr.mxu0 0.0
  %7235 = vmatpush1.msra.mxu0 0.0
  %7236 = vmatprep.subr.mxu0 0.0
  %7237 = vmatpush1.msra.mxu0 0.0
  %7238 = vmatprep.subr.mxu0 0.0
  %7239 = vmatpush1.msra.mxu0 0.0
  %7240 = vmatprep.subr.mxu0 0.0
  %7241 = vmatpush1.msra.mxu0 0.0
  %7242 = vmatprep.subr.mxu0 0.0
  %7243 = vmatpush1.msra.mxu0 0.0
  %7244 = vmatprep.subr.mxu0 0.0
  %7245 = vmatpush1.msra.mxu0 0.0
  %7246 = vmatprep.subr.mxu0 0.0
  %7247 = vmatpush1.msra.mxu0 0.0
  %7248 = vmatprep.subr.mxu0 0.0
  %7249 = vmatpush1.msra.mxu0 0.0
  %7250 = vmatprep.subr.mxu0 0.0
  %7251 = vmatpush1.msra.mxu0 0.0
  %7252 = vmatprep.subr.mxu0 0.0
  %7253 = vmatpush1.msra.mxu0 %v6481
  %7254 = vmatprep.subr.mxu0 0.0
  %7255 = vmatpush1.msra.mxu0 %v6478
  %7256 = vmatprep.subr.mxu0 0.0
  %7257 = vmatpush1.msra.mxu0 %v6475
  %7258 = vmatprep.subr.mxu0 0.0
  %7259 = vmatpush1.msra.mxu0 %v6472
  %7260 = vmatprep.subr.mxu0 0.0
  %7261 = vmatpush2.msra.mxu0 0.0
  %7262 = vmatprep.subr.mxu0 0.0
  %7263 = vmatpush2.msra.mxu0 0.0
  %7264 = vmatprep.subr.mxu0 0.0
  %7265 = vmatpush2.msra.mxu0 0.0
  %7266 = vmatprep.subr.mxu0 0.0
  %7267 = vmatpush2.msra.mxu0 0.0
  %7268 = vmatprep.subr.mxu0 0.0
  %7269 = vmatpush2.msra.mxu0 0.0
  %7270 = vmatprep.subr.mxu0 0.0
  %7271 = vmatpush2.msra.mxu0 0.0
  %7272 = vmatprep.subr.mxu0 0.0
  %7273 = vmatpush2.msra.mxu0 0.0
  %7274 = vmatprep.subr.mxu0 0.0
  %7275 = vmatpush2.msra.mxu0 0.0
  %7276 = vmatprep.subr.mxu0 0.0
  %7277 = vmatpush2.msra.mxu0 0.0
  %7278 = vmatprep.subr.mxu0 0.0
  %7279 = vmatpush2.msra.mxu0 0.0
  %7280 = vmatprep.subr.mxu0 0.0
  %7281 = vmatpush2.msra.mxu0 0.0
  %7282 = vmatprep.subr.mxu0 0.0
  %7283 = vmatpush2.msra.mxu0 0.0
  %7284 = vmatprep.subr.mxu0 0.0
  %7285 = vmatpush2.msra.mxu0 0.0
  %7286 = vmatprep.subr.mxu0 0.0
  %7287 = vmatpush2.msra.mxu0 0.0
  %7288 = vmatprep.subr.mxu0 0.0
  %7289 = vmatpush2.msra.mxu0 0.0
  %7290 = vmatprep.subr.mxu0 0.0
  %7291 = vmatpush2.msra.mxu0 0.0
  %7292 = vmatprep.mubr.f32.mxu0 0.0
  %7293 = vmatmul.mubr.f32.gmra.mxu0 %v7155
  %v7294 = vpop.f32.mrf.mxu0
  %v7295 = vadd.f32 0.0, %v7294
  %v7296 = vpop.f32.mrf.mxu0
  %7297 = vdwg.mxu0
  %v7298 = vlaneseq
  %v7299 = vshrl.u32 %v7298, 7
  %v7300 = vsub.s32 0, %v7299
  %v7301 = vrot.slane %v7079, %v7300
  %v7302 = vlaneseq
  %v7303 = vshrl.u32 %v7302, 7
  %v7304 = vsub.s32 0, %v7303
  %v7305 = vrot.slane %v7081, %v7304
  %v7306 = vlaneseq
  %v7307 = vshrl.u32 %v7306, 7
  %v7308 = vsub.s32 0, %v7307
  %v7309 = vrot.slane %v7150, %v7308
  %v7310 = vmul.f32 %v6815, %v7301
  %v7311 = vmul.f32 %v6816, %v7305
  %v7312 = vmul.f32 %v6817, %v7309
  %v7313 = vmul.f32 %v6818, %v7301
  %v7314 = vmul.f32 %v6819, %v7305
  %v7315 = vmul.f32 %v6820, %v7309
  %v7316 = vmul.f32 %v6821, %v7301
  %v7317 = vmul.f32 %v6822, %v7305
  %v7318 = vmul.f32 %v6823, %v7309
  %v7319 = vlaneseq
  %v7320 = vshrl.u32 %v7319, 7
  %v7321 = vsub.s32 0, %v7320
  %v7322 = vrot.slane %v7224, %v7321
  %v7323 = vlaneseq
  %v7324 = vshrl.u32 %v7323, 7
  %v7325 = vsub.s32 0, %v7324
  %v7326 = vrot.slane %v7226, %v7325
  %v7327 = vlaneseq
  %v7328 = vshrl.u32 %v7327, 7
  %v7329 = vsub.s32 0, %v7328
  %v7330 = vrot.slane %v7295, %v7329
  %v7331 = vadd.f32 %v7310, %v7322
  %v7332 = vadd.f32 %v7311, %v7326
  %v7333 = vadd.f32 %v7312, %v7330
  %v7334 = vadd.f32 %v7313, %v7322
  %v7335 = vadd.f32 %v7314, %v7326
  %v7336 = vadd.f32 %v7315, %v7330
  %v7337 = vadd.f32 %v7316, %v7322
  %v7338 = vadd.f32 %v7317, %v7326
  %v7339 = vadd.f32 %v7318, %v7330
  %v7340 = vld [vmem:[%s11] sm:$0x3f]
  %vm7341 = vcmask 146432
  %v7343 = vsel %vm7341, %v7340, 0
  %v7346 = vsel %vm6484, %v7337, 0
  %v7349 = vsel %vm6484, %v7338, 0
  %v7352 = vsel %vm6484, %v7339, 0
  %7354 = vmatprep.subr.mxu0 0.0
  %7355 = vmatpush1.msra.mxu0 0.0
  %7356 = vmatprep.subr.mxu0 0.0
  %7357 = vmatpush1.msra.mxu0 0.0
  %7358 = vmatprep.subr.mxu0 0.0
  %7359 = vmatpush1.msra.mxu0 0.0
  %7360 = vmatprep.subr.mxu0 0.0
  %7361 = vmatpush1.msra.mxu0 0.0
  %7362 = vmatprep.subr.mxu0 0.0
  %7363 = vmatpush1.msra.mxu0 0.0
  %7364 = vmatprep.subr.mxu0 0.0
  %7365 = vmatpush1.msra.mxu0 0.0
  %7366 = vmatprep.subr.mxu0 0.0
  %7367 = vmatpush1.msra.mxu0 0.0
  %7368 = vmatprep.subr.mxu0 0.0
  %7369 = vmatpush1.msra.mxu0 0.0
  %7370 = vmatprep.subr.mxu0 0.0
  %7371 = vmatpush1.msra.mxu0 0.0
  %7372 = vmatprep.subr.mxu0 0.0
  %7373 = vmatpush1.msra.mxu0 0.0
  %7374 = vmatprep.subr.mxu0 0.0
  %7375 = vmatpush1.msra.mxu0 0.0
  %7376 = vmatprep.subr.mxu0 0.0
  %7377 = vmatpush1.msra.mxu0 0.0
  %7378 = vmatprep.subr.mxu0 0.0
  %7379 = vmatpush1.msra.mxu0 0.0
  %7380 = vmatprep.subr.mxu0 %v7349
  %7381 = vmatpush1.msra.mxu0 %v7346
  %7382 = vmatprep.subr.mxu0 %v7335
  %7383 = vmatpush1.msra.mxu0 %v7334
  %7384 = vmatprep.subr.mxu0 %v7332
  %7385 = vmatpush1.msra.mxu0 %v7331
  %7386 = vmatprep.subr.mxu0 0.0
  %7387 = vmatpush2.msra.mxu0 0.0
  %7388 = vmatprep.subr.mxu0 0.0
  %7389 = vmatpush2.msra.mxu0 0.0
  %7390 = vmatprep.subr.mxu0 0.0
  %7391 = vmatpush2.msra.mxu0 0.0
  %7392 = vmatprep.subr.mxu0 0.0
  %7393 = vmatpush2.msra.mxu0 0.0
  %7394 = vmatprep.subr.mxu0 0.0
  %7395 = vmatpush2.msra.mxu0 0.0
  %7396 = vmatprep.subr.mxu0 0.0
  %7397 = vmatpush2.msra.mxu0 0.0
  %7398 = vmatprep.subr.mxu0 0.0
  %7399 = vmatpush2.msra.mxu0 0.0
  %7400 = vmatprep.subr.mxu0 0.0
  %7401 = vmatpush2.msra.mxu0 0.0
  %7402 = vmatprep.subr.mxu0 0.0
  %7403 = vmatpush2.msra.mxu0 0.0
  %7404 = vmatprep.subr.mxu0 0.0
  %7405 = vmatpush2.msra.mxu0 0.0
  %7406 = vmatprep.subr.mxu0 0.0
  %7407 = vmatpush2.msra.mxu0 0.0
  %7408 = vmatprep.subr.mxu0 0.0
  %7409 = vmatpush2.msra.mxu0 0.0
  %7410 = vmatprep.subr.mxu0 0.0
  %7411 = vmatpush2.msra.mxu0 0.0
  %7412 = vmatprep.subr.mxu0 0.0
  %7413 = vmatpush2.msra.mxu0 0.0
  %7414 = vmatprep.subr.mxu0 0.0
  %7415 = vmatpush2.msra.mxu0 0.0
  %7416 = vmatprep.subr.mxu0 0.0
  %7417 = vmatpush2.msra.mxu0 0.0
  %7418 = vmatprep.mubr.f32.mxu0 0.0
  %7419 = vmatmul.mubr.f32.gmra.mxu0 %v7343
  %v7420 = vpop.f32.mrf.mxu0
  %v7421 = vadd.f32 0.0, %v7420
  %v7422 = vpop.f32.mrf.mxu0
  %v7423 = vadd.f32 0.0, %v7422
  %7424 = vdwg.mxu0
  %7425 = vmatprep.subr.mxu0 0.0
  %7426 = vmatpush1.msra.mxu0 0.0
  %7427 = vmatprep.subr.mxu0 0.0
  %7428 = vmatpush1.msra.mxu0 0.0
  %7429 = vmatprep.subr.mxu0 0.0
  %7430 = vmatpush1.msra.mxu0 0.0
  %7431 = vmatprep.subr.mxu0 0.0
  %7432 = vmatpush1.msra.mxu0 0.0
  %7433 = vmatprep.subr.mxu0 0.0
  %7434 = vmatpush1.msra.mxu0 0.0
  %7435 = vmatprep.subr.mxu0 0.0
  %7436 = vmatpush1.msra.mxu0 0.0
  %7437 = vmatprep.subr.mxu0 0.0
  %7438 = vmatpush1.msra.mxu0 0.0
  %7439 = vmatprep.subr.mxu0 0.0
  %7440 = vmatpush1.msra.mxu0 0.0
  %7441 = vmatprep.subr.mxu0 0.0
  %7442 = vmatpush1.msra.mxu0 0.0
  %7443 = vmatprep.subr.mxu0 0.0
  %7444 = vmatpush1.msra.mxu0 0.0
  %7445 = vmatprep.subr.mxu0 0.0
  %7446 = vmatpush1.msra.mxu0 0.0
  %7447 = vmatprep.subr.mxu0 0.0
  %7448 = vmatpush1.msra.mxu0 0.0
  %7449 = vmatprep.subr.mxu0 0.0
  %7450 = vmatpush1.msra.mxu0 0.0
  %7451 = vmatprep.subr.mxu0 0.0
  %7452 = vmatpush1.msra.mxu0 %v7352
  %7453 = vmatprep.subr.mxu0 0.0
  %7454 = vmatpush1.msra.mxu0 %v7336
  %7455 = vmatprep.subr.mxu0 0.0
  %7456 = vmatpush1.msra.mxu0 %v7333
  %7457 = vmatprep.subr.mxu0 0.0
  %7458 = vmatpush2.msra.mxu0 0.0
  %7459 = vmatprep.subr.mxu0 0.0
  %7460 = vmatpush2.msra.mxu0 0.0
  %7461 = vmatprep.subr.mxu0 0.0
  %7462 = vmatpush2.msra.mxu0 0.0
  %7463 = vmatprep.subr.mxu0 0.0
  %7464 = vmatpush2.msra.mxu0 0.0
  %7465 = vmatprep.subr.mxu0 0.0
  %7466 = vmatpush2.msra.mxu0 0.0
  %7467 = vmatprep.subr.mxu0 0.0
  %7468 = vmatpush2.msra.mxu0 0.0
  %7469 = vmatprep.subr.mxu0 0.0
  %7470 = vmatpush2.msra.mxu0 0.0
  %7471 = vmatprep.subr.mxu0 0.0
  %7472 = vmatpush2.msra.mxu0 0.0
  %7473 = vmatprep.subr.mxu0 0.0
  %7474 = vmatpush2.msra.mxu0 0.0
  %7475 = vmatprep.subr.mxu0 0.0
  %7476 = vmatpush2.msra.mxu0 0.0
  %7477 = vmatprep.subr.mxu0 0.0
  %7478 = vmatpush2.msra.mxu0 0.0
  %7479 = vmatprep.subr.mxu0 0.0
  %7480 = vmatpush2.msra.mxu0 0.0
  %7481 = vmatprep.subr.mxu0 0.0
  %7482 = vmatpush2.msra.mxu0 0.0
  %7483 = vmatprep.subr.mxu0 0.0
  %7484 = vmatpush2.msra.mxu0 0.0
  %7485 = vmatprep.subr.mxu0 0.0
  %7486 = vmatpush2.msra.mxu0 0.0
  %7487 = vmatprep.subr.mxu0 0.0
  %7488 = vmatpush2.msra.mxu0 0.0
  %7489 = vmatprep.mubr.f32.mxu0 0.0
  %7490 = vmatmul.mubr.f32.gmra.mxu0 %v7343
  %v7491 = vpop.f32.mrf.mxu0
  %v7492 = vadd.f32 0.0, %v7491
  %v7493 = vpop.f32.mrf.mxu0
  %7494 = vdwg.mxu0
  %v7495 = vld [vmem:[%s12] sm:$0xff]
  %v7496 = vld [vmem:[%s12 + $0x8] sm:$0xff]
  %v7497 = vld [vmem:[%s12 + $0x10] sm:$0xff]
  %v7498 = vld [vmem:[%s12 + $0x18] sm:$0xff]
  %v7499 = vld [vmem:[%s12 + $0x20] sm:$0xff]
  %v7500 = vld [vmem:[%s12 + $0x28] sm:$0xff]
  %v7501 = vld [vmem:[%s12 + $0x30] sm:$0xff]
  %v7502 = vld [vmem:[%s12 + $0x38] sm:$0xff]
  %v7503 = vld [vmem:[%s12 + $0x40] sm:$0xff]
  %v7504 = vld [vmem:[%s12 + $0x48] sm:$0xff]
  %v7505 = vld [vmem:[%s12 + $0x50] sm:$0xff]
  %v7506 = vld [vmem:[%s12 + $0x58] sm:$0xff]
  %v7507 = vld [vmem:[%s12 + $0x60] sm:$0xff]
  %v7508 = vld [vmem:[%s12 + $0x68] sm:$0xff]
  %v7509 = vld [vmem:[%s12 + $0x70] sm:$0xff]
  %v7510 = vld [vmem:[%s12 + $0x78] sm:$0xff]
  %v7511 = vld [vmem:[%s12 + $0x80] sm:$0xff]
  %v7512 = vld [vmem:[%s12 + $0x88] sm:$0xff]
  %v7513 = vld [vmem:[%s12 + $0x90] sm:$0xff]
  %v7514 = vld [vmem:[%s12 + $0x98] sm:$0xff]
  %v7515 = vld [vmem:[%s12 + $0xa0] sm:$0xff]
  %v7516 = vld [vmem:[%s12 + $0xa8] sm:$0xff]
  %v7517 = vld [vmem:[%s12 + $0xb0] sm:$0xff]
  %v7518 = vld [vmem:[%s12 + $0xb8] sm:$0xff]
  %v7519 = vld [vmem:[%s12 + $0xc0] sm:$0xff]
  %v7520 = vld [vmem:[%s12 + $0xc8] sm:$0xff]
  %v7521 = vld [vmem:[%s12 + $0xd0] sm:$0xff]
  %v7522 = vld [vmem:[%s12 + $0xd8] sm:$0xff]
  %v7523 = vld [vmem:[%s12 + $0xe0] sm:$0xff]
  %v7524 = vld [vmem:[%s12 + $0xe8] sm:$0xff]
  %v7525 = vld [vmem:[%s12 + $0xf0] sm:$0xff]
  %v7526 = vld [vmem:[%s12 + $0xf8] sm:$0xff]
  %v7527 = vld [vmem:[%s12 + $0x100] sm:$0xff]
  %v7528 = vld [vmem:[%s12 + $0x108] sm:$0xff]
  %v7529 = vld [vmem:[%s12 + $0x110] sm:$0xff]
  %v7530 = vld [vmem:[%s12 + $0x118] sm:$0xff]
  %s7531 = scalar_lea.vmem %s11, 8
  %v7532 = vld [vmem:[%s7531] sm:$0x3f]
  %v7534 = vsel %vm7341, %v7532, 0
  %7536 = vmatprep.subr.mxu0 0.0
  %7537 = vmatpush1.msra.mxu0 0.0
  %7538 = vmatprep.subr.mxu0 0.0
  %7539 = vmatpush1.msra.mxu0 0.0
  %7540 = vmatprep.subr.mxu0 0.0
  %7541 = vmatpush1.msra.mxu0 0.0
  %7542 = vmatprep.subr.mxu0 0.0
  %7543 = vmatpush1.msra.mxu0 0.0
  %7544 = vmatprep.subr.mxu0 0.0
  %7545 = vmatpush1.msra.mxu0 0.0
  %7546 = vmatprep.subr.mxu0 0.0
  %7547 = vmatpush1.msra.mxu0 0.0
  %7548 = vmatprep.subr.mxu0 0.0
  %7549 = vmatpush1.msra.mxu0 0.0
  %7550 = vmatprep.subr.mxu0 0.0
  %7551 = vmatpush1.msra.mxu0 0.0
  %7552 = vmatprep.subr.mxu0 0.0
  %7553 = vmatpush1.msra.mxu0 0.0
  %7554 = vmatprep.subr.mxu0 0.0
  %7555 = vmatpush1.msra.mxu0 0.0
  %7556 = vmatprep.subr.mxu0 0.0
  %7557 = vmatpush1.msra.mxu0 0.0
  %7558 = vmatprep.subr.mxu0 0.0
  %7559 = vmatpush1.msra.mxu0 0.0
  %7560 = vmatprep.subr.mxu0 0.0
  %7561 = vmatpush1.msra.mxu0 0.0
  %7562 = vmatprep.subr.mxu0 %v7349
  %7563 = vmatpush1.msra.mxu0 %v7346
  %7564 = vmatprep.subr.mxu0 %v7335
  %7565 = vmatpush1.msra.mxu0 %v7334
  %7566 = vmatprep.subr.mxu0 %v7332
  %7567 = vmatpush1.msra.mxu0 %v7331
  %7568 = vmatprep.subr.mxu0 0.0
  %7569 = vmatpush2.msra.mxu0 0.0
  %7570 = vmatprep.subr.mxu0 0.0
  %7571 = vmatpush2.msra.mxu0 0.0
  %7572 = vmatprep.subr.mxu0 0.0
  %7573 = vmatpush2.msra.mxu0 0.0
  %7574 = vmatprep.subr.mxu0 0.0
  %7575 = vmatpush2.msra.mxu0 0.0
  %7576 = vmatprep.subr.mxu0 0.0
  %7577 = vmatpush2.msra.mxu0 0.0
  %7578 = vmatprep.subr.mxu0 0.0
  %7579 = vmatpush2.msra.mxu0 0.0
  %7580 = vmatprep.subr.mxu0 0.0
  %7581 = vmatpush2.msra.mxu0 0.0
  %7582 = vmatprep.subr.mxu0 0.0
  %7583 = vmatpush2.msra.mxu0 0.0
  %7584 = vmatprep.subr.mxu0 0.0
  %7585 = vmatpush2.msra.mxu0 0.0
  %7586 = vmatprep.subr.mxu0 0.0
  %7587 = vmatpush2.msra.mxu0 0.0
  %7588 = vmatprep.subr.mxu0 0.0
  %7589 = vmatpush2.msra.mxu0 0.0
  %7590 = vmatprep.subr.mxu0 0.0
  %7591 = vmatpush2.msra.mxu0 0.0
  %7592 = vmatprep.subr.mxu0 0.0
  %7593 = vmatpush2.msra.mxu0 0.0
  %7594 = vmatprep.subr.mxu0 0.0
  %7595 = vmatpush2.msra.mxu0 0.0
  %7596 = vmatprep.subr.mxu0 0.0
  %7597 = vmatpush2.msra.mxu0 0.0
  %7598 = vmatprep.subr.mxu0 0.0
  %7599 = vmatpush2.msra.mxu0 0.0
  %7600 = vmatprep.mubr.f32.mxu0 0.0
  %7601 = vmatmul.mubr.f32.gmra.mxu0 %v7534
  %v7602 = vpop.f32.mrf.mxu0
  %v7603 = vadd.f32 0.0, %v7602
  %v7604 = vpop.f32.mrf.mxu0
  %v7605 = vadd.f32 0.0, %v7604
  %7606 = vdwg.mxu0
  %7607 = vmatprep.subr.mxu0 0.0
  %7608 = vmatpush1.msra.mxu0 0.0
  %7609 = vmatprep.subr.mxu0 0.0
  %7610 = vmatpush1.msra.mxu0 0.0
  %7611 = vmatprep.subr.mxu0 0.0
  %7612 = vmatpush1.msra.mxu0 0.0
  %7613 = vmatprep.subr.mxu0 0.0
  %7614 = vmatpush1.msra.mxu0 0.0
  %7615 = vmatprep.subr.mxu0 0.0
  %7616 = vmatpush1.msra.mxu0 0.0
  %7617 = vmatprep.subr.mxu0 0.0
  %7618 = vmatpush1.msra.mxu0 0.0
  %7619 = vmatprep.subr.mxu0 0.0
  %7620 = vmatpush1.msra.mxu0 0.0
  %7621 = vmatprep.subr.mxu0 0.0
  %7622 = vmatpush1.msra.mxu0 0.0
  %7623 = vmatprep.subr.mxu0 0.0
  %7624 = vmatpush1.msra.mxu0 0.0
  %7625 = vmatprep.subr.mxu0 0.0
  %7626 = vmatpush1.msra.mxu0 0.0
  %7627 = vmatprep.subr.mxu0 0.0
  %7628 = vmatpush1.msra.mxu0 0.0
  %7629 = vmatprep.subr.mxu0 0.0
  %7630 = vmatpush1.msra.mxu0 0.0
  %7631 = vmatprep.subr.mxu0 0.0
  %7632 = vmatpush1.msra.mxu0 0.0
  %7633 = vmatprep.subr.mxu0 0.0
  %7634 = vmatpush1.msra.mxu0 %v7352
  %7635 = vmatprep.subr.mxu0 0.0
  %7636 = vmatpush1.msra.mxu0 %v7336
  %7637 = vmatprep.subr.mxu0 0.0
  %7638 = vmatpush1.msra.mxu0 %v7333
  %7639 = vmatprep.subr.mxu0 0.0
  %7640 = vmatpush2.msra.mxu0 0.0
  %7641 = vmatprep.subr.mxu0 0.0
  %7642 = vmatpush2.msra.mxu0 0.0
  %7643 = vmatprep.subr.mxu0 0.0
  %7644 = vmatpush2.msra.mxu0 0.0
  %7645 = vmatprep.subr.mxu0 0.0
  %7646 = vmatpush2.msra.mxu0 0.0
  %7647 = vmatprep.subr.mxu0 0.0
  %7648 = vmatpush2.msra.mxu0 0.0
  %7649 = vmatprep.subr.mxu0 0.0
  %7650 = vmatpush2.msra.mxu0 0.0
  %7651 = vmatprep.subr.mxu0 0.0
  %7652 = vmatpush2.msra.mxu0 0.0
  %7653 = vmatprep.subr.mxu0 0.0
  %7654 = vmatpush2.msra.mxu0 0.0
  %7655 = vmatprep.subr.mxu0 0.0
  %7656 = vmatpush2.msra.mxu0 0.0
  %7657 = vmatprep.subr.mxu0 0.0
  %7658 = vmatpush2.msra.mxu0 0.0
  %7659 = vmatprep.subr.mxu0 0.0
  %7660 = vmatpush2.msra.mxu0 0.0
  %7661 = vmatprep.subr.mxu0 0.0
  %7662 = vmatpush2.msra.mxu0 0.0
  %7663 = vmatprep.subr.mxu0 0.0
  %7664 = vmatpush2.msra.mxu0 0.0
  %7665 = vmatprep.subr.mxu0 0.0
  %7666 = vmatpush2.msra.mxu0 0.0
  %7667 = vmatprep.subr.mxu0 0.0
  %7668 = vmatpush2.msra.mxu0 0.0
  %7669 = vmatprep.subr.mxu0 0.0
  %7670 = vmatpush2.msra.mxu0 0.0
  %7671 = vmatprep.mubr.f32.mxu0 0.0
  %7672 = vmatmul.mubr.f32.gmra.mxu0 %v7534
  %v7673 = vpop.f32.mrf.mxu0
  %v7674 = vadd.f32 0.0, %v7673
  %v7675 = vpop.f32.mrf.mxu0
  %7676 = vdwg.mxu0
  %s7677 = scalar_lea.vmem %s12, 288
  %v7678 = vld [vmem:[%s7677] sm:$0xff]
  %v7679 = vld [vmem:[%s7677 + $0x8] sm:$0xff]
  %v7680 = vld [vmem:[%s7677 + $0x10] sm:$0xff]
  %v7681 = vld [vmem:[%s7677 + $0x18] sm:$0xff]
  %v7682 = vld [vmem:[%s7677 + $0x20] sm:$0xff]
  %v7683 = vld [vmem:[%s7677 + $0x28] sm:$0xff]
  %v7684 = vld [vmem:[%s7677 + $0x30] sm:$0xff]
  %v7685 = vld [vmem:[%s7677 + $0x38] sm:$0xff]
  %v7686 = vld [vmem:[%s7677 + $0x40] sm:$0xff]
  %v7687 = vld [vmem:[%s7677 + $0x48] sm:$0xff]
  %v7688 = vld [vmem:[%s7677 + $0x50] sm:$0xff]
  %v7689 = vld [vmem:[%s7677 + $0x58] sm:$0xff]
  %v7690 = vld [vmem:[%s7677 + $0x60] sm:$0xff]
  %v7691 = vld [vmem:[%s7677 + $0x68] sm:$0xff]
  %v7692 = vld [vmem:[%s7677 + $0x70] sm:$0xff]
  %v7693 = vld [vmem:[%s7677 + $0x78] sm:$0xff]
  %v7694 = vld [vmem:[%s7677 + $0x80] sm:$0xff]
  %v7695 = vld [vmem:[%s7677 + $0x88] sm:$0xff]
  %v7696 = vld [vmem:[%s7677 + $0x90] sm:$0xff]
  %v7697 = vld [vmem:[%s7677 + $0x98] sm:$0xff]
  %v7698 = vld [vmem:[%s7677 + $0xa0] sm:$0xff]
  %v7699 = vld [vmem:[%s7677 + $0xa8] sm:$0xff]
  %v7700 = vld [vmem:[%s7677 + $0xb0] sm:$0xff]
  %v7701 = vld [vmem:[%s7677 + $0xb8] sm:$0xff]
  %v7702 = vld [vmem:[%s7677 + $0xc0] sm:$0xff]
  %v7703 = vld [vmem:[%s7677 + $0xc8] sm:$0xff]
  %v7704 = vld [vmem:[%s7677 + $0xd0] sm:$0xff]
  %v7705 = vld [vmem:[%s7677 + $0xd8] sm:$0xff]
  %v7706 = vld [vmem:[%s7677 + $0xe0] sm:$0xff]
  %v7707 = vld [vmem:[%s7677 + $0xe8] sm:$0xff]
  %v7708 = vld [vmem:[%s7677 + $0xf0] sm:$0xff]
  %v7709 = vld [vmem:[%s7677 + $0xf8] sm:$0xff]
  %v7710 = vld [vmem:[%s7677 + $0x100] sm:$0xff]
  %v7711 = vld [vmem:[%s7677 + $0x108] sm:$0xff]
  %v7712 = vld [vmem:[%s7677 + $0x110] sm:$0xff]
  %v7713 = vld [vmem:[%s7677 + $0x118] sm:$0xff]
  %v7715 = vsel %vm6502, %v7674, 0
  %7717 = vmatprep.subr.mxu0 0.0
  %7718 = vmatpush1.msra.mxu0 %v7693
  %7719 = vmatprep.subr.mxu0 0.0
  %7720 = vmatpush1.msra.mxu0 %v7692
  %7721 = vmatprep.subr.mxu0 0.0
  %7722 = vmatpush1.msra.mxu0 %v7691
  %7723 = vmatprep.subr.mxu0 0.0
  %7724 = vmatpush1.msra.mxu0 %v7690
  %7725 = vmatprep.subr.mxu0 0.0
  %7726 = vmatpush1.msra.mxu0 %v7689
  %7727 = vmatprep.subr.mxu0 0.0
  %7728 = vmatpush1.msra.mxu0 %v7688
  %7729 = vmatprep.subr.mxu0 0.0
  %7730 = vmatpush1.msra.mxu0 %v7687
  %7731 = vmatprep.subr.mxu0 0.0
  %7732 = vmatpush1.msra.mxu0 %v7686
  %7733 = vmatprep.subr.mxu0 0.0
  %7734 = vmatpush1.msra.mxu0 %v7685
  %7735 = vmatprep.subr.mxu0 0.0
  %7736 = vmatpush1.msra.mxu0 %v7684
  %7737 = vmatprep.subr.mxu0 0.0
  %7738 = vmatpush1.msra.mxu0 %v7683
  %7739 = vmatprep.subr.mxu0 0.0
  %7740 = vmatpush1.msra.mxu0 %v7682
  %7741 = vmatprep.subr.mxu0 0.0
  %7742 = vmatpush1.msra.mxu0 %v7681
  %7743 = vmatprep.subr.mxu0 0.0
  %7744 = vmatpush1.msra.mxu0 %v7680
  %7745 = vmatprep.subr.mxu0 0.0
  %7746 = vmatpush1.msra.mxu0 %v7679
  %7747 = vmatprep.subr.mxu0 0.0
  %7748 = vmatpush1.msra.mxu0 %v7678
  %7749 = vmatprep.subr.mxu0 0.0
  %7750 = vmatpush2.msra.mxu0 %v7709
  %7751 = vmatprep.subr.mxu0 0.0
  %7752 = vmatpush2.msra.mxu0 %v7708
  %7753 = vmatprep.subr.mxu0 0.0
  %7754 = vmatpush2.msra.mxu0 %v7707
  %7755 = vmatprep.subr.mxu0 0.0
  %7756 = vmatpush2.msra.mxu0 %v7706
  %7757 = vmatprep.subr.mxu0 0.0
  %7758 = vmatpush2.msra.mxu0 %v7705
  %7759 = vmatprep.subr.mxu0 0.0
  %7760 = vmatpush2.msra.mxu0 %v7704
  %7761 = vmatprep.subr.mxu0 0.0
  %7762 = vmatpush2.msra.mxu0 %v7703
  %7763 = vmatprep.subr.mxu0 0.0
  %7764 = vmatpush2.msra.mxu0 %v7702
  %7765 = vmatprep.subr.mxu0 0.0
  %7766 = vmatpush2.msra.mxu0 %v7701
  %7767 = vmatprep.subr.mxu0 0.0
  %7768 = vmatpush2.msra.mxu0 %v7700
  %7769 = vmatprep.subr.mxu0 0.0
  %7770 = vmatpush2.msra.mxu0 %v7699
  %7771 = vmatprep.subr.mxu0 0.0
  %7772 = vmatpush2.msra.mxu0 %v7698
  %7773 = vmatprep.subr.mxu0 0.0
  %7774 = vmatpush2.msra.mxu0 %v7697
  %7775 = vmatprep.subr.mxu0 0.0
  %7776 = vmatpush2.msra.mxu0 %v7696
  %7777 = vmatprep.subr.mxu0 0.0
  %7778 = vmatpush2.msra.mxu0 %v7695
  %7779 = vmatprep.subr.mxu0 0.0
  %7780 = vmatpush2.msra.mxu0 %v7694
  %7781 = vmatprep.mubr.f32.mxu0 %v7605
  %7782 = vmatmul.mubr.f32.gmra.mxu0 %v7603
  %v7783 = vpop.f32.mrf.mxu0
  %v7784 = vadd.f32 0.0, %v7783
  %v7785 = vpop.f32.mrf.mxu0
  %7786 = vdwg.mxu0
  %7787 = vmatprep.subr.mxu0 0.0
  %7788 = vmatpush1.msra.mxu0 0.0
  %7789 = vmatprep.subr.mxu0 0.0
  %7790 = vmatpush1.msra.mxu0 0.0
  %7791 = vmatprep.subr.mxu0 0.0
  %7792 = vmatpush1.msra.mxu0 0.0
  %7793 = vmatprep.subr.mxu0 0.0
  %7794 = vmatpush1.msra.mxu0 0.0
  %7795 = vmatprep.subr.mxu0 0.0
  %7796 = vmatpush1.msra.mxu0 0.0
  %7797 = vmatprep.subr.mxu0 0.0
  %7798 = vmatpush1.msra.mxu0 0.0
  %7799 = vmatprep.subr.mxu0 0.0
  %7800 = vmatpush1.msra.mxu0 0.0
  %7801 = vmatprep.subr.mxu0 0.0
  %7802 = vmatpush1.msra.mxu0 0.0
  %7803 = vmatprep.subr.mxu0 0.0
  %7804 = vmatpush1.msra.mxu0 0.0
  %7805 = vmatprep.subr.mxu0 0.0
  %7806 = vmatpush1.msra.mxu0 0.0
  %7807 = vmatprep.subr.mxu0 0.0
  %7808 = vmatpush1.msra.mxu0 0.0
  %7809 = vmatprep.subr.mxu0 0.0
  %7810 = vmatpush1.msra.mxu0 0.0
  %7811 = vmatprep.subr.mxu0 0.0
  %7812 = vmatpush1.msra.mxu0 %v7713
  %7813 = vmatprep.subr.mxu0 0.0
  %7814 = vmatpush1.msra.mxu0 %v7712
  %7815 = vmatprep.subr.mxu0 0.0
  %7816 = vmatpush1.msra.mxu0 %v7711
  %7817 = vmatprep.subr.mxu0 0.0
  %7818 = vmatpush1.msra.mxu0 %v7710
  %7819 = vmatprep.subr.mxu0 0.0
  %7820 = vmatpush2.msra.mxu0 0.0
  %7821 = vmatprep.subr.mxu0 0.0
  %7822 = vmatpush2.msra.mxu0 0.0
  %7823 = vmatprep.subr.mxu0 0.0
  %7824 = vmatpush2.msra.mxu0 0.0
  %7825 = vmatprep.subr.mxu0 0.0
  %7826 = vmatpush2.msra.mxu0 0.0
  %7827 = vmatprep.subr.mxu0 0.0
  %7828 = vmatpush2.msra.mxu0 0.0
  %7829 = vmatprep.subr.mxu0 0.0
  %7830 = vmatpush2.msra.mxu0 0.0
  %7831 = vmatprep.subr.mxu0 0.0
  %7832 = vmatpush2.msra.mxu0 0.0
  %7833 = vmatprep.subr.mxu0 0.0
  %7834 = vmatpush2.msra.mxu0 0.0
  %7835 = vmatprep.subr.mxu0 0.0
  %7836 = vmatpush2.msra.mxu0 0.0
  %7837 = vmatprep.subr.mxu0 0.0
  %7838 = vmatpush2.msra.mxu0 0.0
  %7839 = vmatprep.subr.mxu0 0.0
  %7840 = vmatpush2.msra.mxu0 0.0
  %7841 = vmatprep.subr.mxu0 0.0
  %7842 = vmatpush2.msra.mxu0 0.0
  %7843 = vmatprep.subr.mxu0 0.0
  %7844 = vmatpush2.msra.mxu0 0.0
  %7845 = vmatprep.subr.mxu0 0.0
  %7846 = vmatpush2.msra.mxu0 0.0
  %7847 = vmatprep.subr.mxu0 0.0
  %7848 = vmatpush2.msra.mxu0 0.0
  %7849 = vmatprep.subr.mxu0 0.0
  %7850 = vmatpush2.msra.mxu0 0.0
  %7851 = vmatprep.mubr.f32.mxu0 0.0
  %7852 = vmatmul.mubr.f32.gmra.mxu0 %v7715
  %v7853 = vpop.f32.mrf.mxu0
  %v7854 = vadd.f32 %v7784, %v7853
  %v7855 = vpop.f32.mrf.mxu0
  %7856 = vdwg.mxu0
  %v7858 = vsel %vm6502, %v7492, 0
  %7860 = vmatprep.subr.mxu0 0.0
  %7861 = vmatpush1.msra.mxu0 %v7510
  %7862 = vmatprep.subr.mxu0 0.0
  %7863 = vmatpush1.msra.mxu0 %v7509
  %7864 = vmatprep.subr.mxu0 0.0
  %7865 = vmatpush1.msra.mxu0 %v7508
  %7866 = vmatprep.subr.mxu0 0.0
  %7867 = vmatpush1.msra.mxu0 %v7507
  %7868 = vmatprep.subr.mxu0 0.0
  %7869 = vmatpush1.msra.mxu0 %v7506
  %7870 = vmatprep.subr.mxu0 0.0
  %7871 = vmatpush1.msra.mxu0 %v7505
  %7872 = vmatprep.subr.mxu0 0.0
  %7873 = vmatpush1.msra.mxu0 %v7504
  %7874 = vmatprep.subr.mxu0 0.0
  %7875 = vmatpush1.msra.mxu0 %v7503
  %7876 = vmatprep.subr.mxu0 0.0
  %7877 = vmatpush1.msra.mxu0 %v7502
  %7878 = vmatprep.subr.mxu0 0.0
  %7879 = vmatpush1.msra.mxu0 %v7501
  %7880 = vmatprep.subr.mxu0 0.0
  %7881 = vmatpush1.msra.mxu0 %v7500
  %7882 = vmatprep.subr.mxu0 0.0
  %7883 = vmatpush1.msra.mxu0 %v7499
  %7884 = vmatprep.subr.mxu0 0.0
  %7885 = vmatpush1.msra.mxu0 %v7498
  %7886 = vmatprep.subr.mxu0 0.0
  %7887 = vmatpush1.msra.mxu0 %v7497
  %7888 = vmatprep.subr.mxu0 0.0
  %7889 = vmatpush1.msra.mxu0 %v7496
  %7890 = vmatprep.subr.mxu0 0.0
  %7891 = vmatpush1.msra.mxu0 %v7495
  %7892 = vmatprep.subr.mxu0 0.0
  %7893 = vmatpush2.msra.mxu0 %v7526
  %7894 = vmatprep.subr.mxu0 0.0
  %7895 = vmatpush2.msra.mxu0 %v7525
  %7896 = vmatprep.subr.mxu0 0.0
  %7897 = vmatpush2.msra.mxu0 %v7524
  %7898 = vmatprep.subr.mxu0 0.0
  %7899 = vmatpush2.msra.mxu0 %v7523
  %7900 = vmatprep.subr.mxu0 0.0
  %7901 = vmatpush2.msra.mxu0 %v7522
  %7902 = vmatprep.subr.mxu0 0.0
  %7903 = vmatpush2.msra.mxu0 %v7521
  %7904 = vmatprep.subr.mxu0 0.0
  %7905 = vmatpush2.msra.mxu0 %v7520
  %7906 = vmatprep.subr.mxu0 0.0
  %7907 = vmatpush2.msra.mxu0 %v7519
  %7908 = vmatprep.subr.mxu0 0.0
  %7909 = vmatpush2.msra.mxu0 %v7518
  %7910 = vmatprep.subr.mxu0 0.0
  %7911 = vmatpush2.msra.mxu0 %v7517
  %7912 = vmatprep.subr.mxu0 0.0
  %7913 = vmatpush2.msra.mxu0 %v7516
  %7914 = vmatprep.subr.mxu0 0.0
  %7915 = vmatpush2.msra.mxu0 %v7515
  %7916 = vmatprep.subr.mxu0 0.0
  %7917 = vmatpush2.msra.mxu0 %v7514
  %7918 = vmatprep.subr.mxu0 0.0
  %7919 = vmatpush2.msra.mxu0 %v7513
  %7920 = vmatprep.subr.mxu0 0.0
  %7921 = vmatpush2.msra.mxu0 %v7512
  %7922 = vmatprep.subr.mxu0 0.0
  %7923 = vmatpush2.msra.mxu0 %v7511
  %7924 = vmatprep.mubr.f32.mxu0 %v7423
  %7925 = vmatmul.mubr.f32.gmra.mxu0 %v7421
  %v7926 = vpop.f32.mrf.mxu0
  %v7927 = vadd.f32 %v7854, %v7926
  %v7928 = vpop.f32.mrf.mxu0
  %7929 = vdwg.mxu0
  %7930 = vmatprep.subr.mxu0 0.0
  %7931 = vmatpush1.msra.mxu0 0.0
  %7932 = vmatprep.subr.mxu0 0.0
  %7933 = vmatpush1.msra.mxu0 0.0
  %7934 = vmatprep.subr.mxu0 0.0
  %7935 = vmatpush1.msra.mxu0 0.0
  %7936 = vmatprep.subr.mxu0 0.0
  %7937 = vmatpush1.msra.mxu0 0.0
  %7938 = vmatprep.subr.mxu0 0.0
  %7939 = vmatpush1.msra.mxu0 0.0
  %7940 = vmatprep.subr.mxu0 0.0
  %7941 = vmatpush1.msra.mxu0 0.0
  %7942 = vmatprep.subr.mxu0 0.0
  %7943 = vmatpush1.msra.mxu0 0.0
  %7944 = vmatprep.subr.mxu0 0.0
  %7945 = vmatpush1.msra.mxu0 0.0
  %7946 = vmatprep.subr.mxu0 0.0
  %7947 = vmatpush1.msra.mxu0 0.0
  %7948 = vmatprep.subr.mxu0 0.0
  %7949 = vmatpush1.msra.mxu0 0.0
  %7950 = vmatprep.subr.mxu0 0.0
  %7951 = vmatpush1.msra.mxu0 0.0
  %7952 = vmatprep.subr.mxu0 0.0
  %7953 = vmatpush1.msra.mxu0 0.0
  %7954 = vmatprep.subr.mxu0 0.0
  %7955 = vmatpush1.msra.mxu0 %v7530
  %7956 = vmatprep.subr.mxu0 0.0
  %7957 = vmatpush1.msra.mxu0 %v7529
  %7958 = vmatprep.subr.mxu0 0.0
  %7959 = vmatpush1.msra.mxu0 %v7528
  %7960 = vmatprep.subr.mxu0 0.0
  %7961 = vmatpush1.msra.mxu0 %v7527
  %7962 = vmatprep.subr.mxu0 0.0
  %7963 = vmatpush2.msra.mxu0 0.0
  %7964 = vmatprep.subr.mxu0 0.0
  %7965 = vmatpush2.msra.mxu0 0.0
  %7966 = vmatprep.subr.mxu0 0.0
  %7967 = vmatpush2.msra.mxu0 0.0
  %7968 = vmatprep.subr.mxu0 0.0
  %7969 = vmatpush2.msra.mxu0 0.0
  %7970 = vmatprep.subr.mxu0 0.0
  %7971 = vmatpush2.msra.mxu0 0.0
  %7972 = vmatprep.subr.mxu0 0.0
  %7973 = vmatpush2.msra.mxu0 0.0
  %7974 = vmatprep.subr.mxu0 0.0
  %7975 = vmatpush2.msra.mxu0 0.0
  %7976 = vmatprep.subr.mxu0 0.0
  %7977 = vmatpush2.msra.mxu0 0.0
  %7978 = vmatprep.subr.mxu0 0.0
  %7979 = vmatpush2.msra.mxu0 0.0
  %7980 = vmatprep.subr.mxu0 0.0
  %7981 = vmatpush2.msra.mxu0 0.0
  %7982 = vmatprep.subr.mxu0 0.0
  %7983 = vmatpush2.msra.mxu0 0.0
  %7984 = vmatprep.subr.mxu0 0.0
  %7985 = vmatpush2.msra.mxu0 0.0
  %7986 = vmatprep.subr.mxu0 0.0
  %7987 = vmatpush2.msra.mxu0 0.0
  %7988 = vmatprep.subr.mxu0 0.0
  %7989 = vmatpush2.msra.mxu0 0.0
  %7990 = vmatprep.subr.mxu0 0.0
  %7991 = vmatpush2.msra.mxu0 0.0
  %7992 = vmatprep.subr.mxu0 0.0
  %7993 = vmatpush2.msra.mxu0 0.0
  %7994 = vmatprep.mubr.f32.mxu0 0.0
  %7995 = vmatmul.mubr.f32.gmra.mxu0 %v7858
  %v7996 = vpop.f32.mrf.mxu0
  %v7997 = vadd.f32 %v7927, %v7996
  %v7998 = vpop.f32.mrf.mxu0
  %7999 = vdwg.mxu0
  %s8000 = scalar_lea.vmem %s11, 16
  %v8001 = vld [vmem:[%s8000] sm:$0x3f]
  %v8003 = vsel %vm7341, %v8001, 0
  %8005 = vmatprep.subr.mxu0 0.0
  %8006 = vmatpush1.msra.mxu0 0.0
  %8007 = vmatprep.subr.mxu0 0.0
  %8008 = vmatpush1.msra.mxu0 0.0
  %8009 = vmatprep.subr.mxu0 0.0
  %8010 = vmatpush1.msra.mxu0 0.0
  %8011 = vmatprep.subr.mxu0 0.0
  %8012 = vmatpush1.msra.mxu0 0.0
  %8013 = vmatprep.subr.mxu0 0.0
  %8014 = vmatpush1.msra.mxu0 0.0
  %8015 = vmatprep.subr.mxu0 0.0
  %8016 = vmatpush1.msra.mxu0 0.0
  %8017 = vmatprep.subr.mxu0 0.0
  %8018 = vmatpush1.msra.mxu0 0.0
  %8019 = vmatprep.subr.mxu0 0.0
  %8020 = vmatpush1.msra.mxu0 0.0
  %8021 = vmatprep.subr.mxu0 0.0
  %8022 = vmatpush1.msra.mxu0 0.0
  %8023 = vmatprep.subr.mxu0 0.0
  %8024 = vmatpush1.msra.mxu0 0.0
  %8025 = vmatprep.subr.mxu0 0.0
  %8026 = vmatpush1.msra.mxu0 0.0
  %8027 = vmatprep.subr.mxu0 0.0
  %8028 = vmatpush1.msra.mxu0 0.0
  %8029 = vmatprep.subr.mxu0 0.0
  %8030 = vmatpush1.msra.mxu0 0.0
  %8031 = vmatprep.subr.mxu0 %v7349
  %8032 = vmatpush1.msra.mxu0 %v7346
  %8033 = vmatprep.subr.mxu0 %v7335
  %8034 = vmatpush1.msra.mxu0 %v7334
  %8035 = vmatprep.subr.mxu0 %v7332
  %8036 = vmatpush1.msra.mxu0 %v7331
  %8037 = vmatprep.subr.mxu0 0.0
  %8038 = vmatpush2.msra.mxu0 0.0
  %8039 = vmatprep.subr.mxu0 0.0
  %8040 = vmatpush2.msra.mxu0 0.0
  %8041 = vmatprep.subr.mxu0 0.0
  %8042 = vmatpush2.msra.mxu0 0.0
  %8043 = vmatprep.subr.mxu0 0.0
  %8044 = vmatpush2.msra.mxu0 0.0
  %8045 = vmatprep.subr.mxu0 0.0
  %8046 = vmatpush2.msra.mxu0 0.0
  %8047 = vmatprep.subr.mxu0 0.0
  %8048 = vmatpush2.msra.mxu0 0.0
  %8049 = vmatprep.subr.mxu0 0.0
  %8050 = vmatpush2.msra.mxu0 0.0
  %8051 = vmatprep.subr.mxu0 0.0
  %8052 = vmatpush2.msra.mxu0 0.0
  %8053 = vmatprep.subr.mxu0 0.0
  %8054 = vmatpush2.msra.mxu0 0.0
  %8055 = vmatprep.subr.mxu0 0.0
  %8056 = vmatpush2.msra.mxu0 0.0
  %8057 = vmatprep.subr.mxu0 0.0
  %8058 = vmatpush2.msra.mxu0 0.0
  %8059 = vmatprep.subr.mxu0 0.0
  %8060 = vmatpush2.msra.mxu0 0.0
  %8061 = vmatprep.subr.mxu0 0.0
  %8062 = vmatpush2.msra.mxu0 0.0
  %8063 = vmatprep.subr.mxu0 0.0
  %8064 = vmatpush2.msra.mxu0 0.0
  %8065 = vmatprep.subr.mxu0 0.0
  %8066 = vmatpush2.msra.mxu0 0.0
  %8067 = vmatprep.subr.mxu0 0.0
  %8068 = vmatpush2.msra.mxu0 0.0
  %8069 = vmatprep.mubr.f32.mxu0 0.0
  %8070 = vmatmul.mubr.f32.gmra.mxu0 %v8003
  %v8071 = vpop.f32.mrf.mxu0
  %v8072 = vadd.f32 0.0, %v8071
  %v8073 = vpop.f32.mrf.mxu0
  %v8074 = vadd.f32 0.0, %v8073
  %8075 = vdwg.mxu0
  %8076 = vmatprep.subr.mxu0 0.0
  %8077 = vmatpush1.msra.mxu0 0.0
  %8078 = vmatprep.subr.mxu0 0.0
  %8079 = vmatpush1.msra.mxu0 0.0
  %8080 = vmatprep.subr.mxu0 0.0
  %8081 = vmatpush1.msra.mxu0 0.0
  %8082 = vmatprep.subr.mxu0 0.0
  %8083 = vmatpush1.msra.mxu0 0.0
  %8084 = vmatprep.subr.mxu0 0.0
  %8085 = vmatpush1.msra.mxu0 0.0
  %8086 = vmatprep.subr.mxu0 0.0
  %8087 = vmatpush1.msra.mxu0 0.0
  %8088 = vmatprep.subr.mxu0 0.0
  %8089 = vmatpush1.msra.mxu0 0.0
  %8090 = vmatprep.subr.mxu0 0.0
  %8091 = vmatpush1.msra.mxu0 0.0
  %8092 = vmatprep.subr.mxu0 0.0
  %8093 = vmatpush1.msra.mxu0 0.0
  %8094 = vmatprep.subr.mxu0 0.0
  %8095 = vmatpush1.msra.mxu0 0.0
  %8096 = vmatprep.subr.mxu0 0.0
  %8097 = vmatpush1.msra.mxu0 0.0
  %8098 = vmatprep.subr.mxu0 0.0
  %8099 = vmatpush1.msra.mxu0 0.0
  %8100 = vmatprep.subr.mxu0 0.0
  %8101 = vmatpush1.msra.mxu0 0.0
  %8102 = vmatprep.subr.mxu0 0.0
  %8103 = vmatpush1.msra.mxu0 %v7352
  %8104 = vmatprep.subr.mxu0 0.0
  %8105 = vmatpush1.msra.mxu0 %v7336
  %8106 = vmatprep.subr.mxu0 0.0
  %8107 = vmatpush1.msra.mxu0 %v7333
  %8108 = vmatprep.subr.mxu0 0.0
  %8109 = vmatpush2.msra.mxu0 0.0
  %8110 = vmatprep.subr.mxu0 0.0
  %8111 = vmatpush2.msra.mxu0 0.0
  %8112 = vmatprep.subr.mxu0 0.0
  %8113 = vmatpush2.msra.mxu0 0.0
  %8114 = vmatprep.subr.mxu0 0.0
  %8115 = vmatpush2.msra.mxu0 0.0
  %8116 = vmatprep.subr.mxu0 0.0
  %8117 = vmatpush2.msra.mxu0 0.0
  %8118 = vmatprep.subr.mxu0 0.0
  %8119 = vmatpush2.msra.mxu0 0.0
  %8120 = vmatprep.subr.mxu0 0.0
  %8121 = vmatpush2.msra.mxu0 0.0
  %8122 = vmatprep.subr.mxu0 0.0
  %8123 = vmatpush2.msra.mxu0 0.0
  %8124 = vmatprep.subr.mxu0 0.0
  %8125 = vmatpush2.msra.mxu0 0.0
  %8126 = vmatprep.subr.mxu0 0.0
  %8127 = vmatpush2.msra.mxu0 0.0
  %8128 = vmatprep.subr.mxu0 0.0
  %8129 = vmatpush2.msra.mxu0 0.0
  %8130 = vmatprep.subr.mxu0 0.0
  %8131 = vmatpush2.msra.mxu0 0.0
  %8132 = vmatprep.subr.mxu0 0.0
  %8133 = vmatpush2.msra.mxu0 0.0
  %8134 = vmatprep.subr.mxu0 0.0
  %8135 = vmatpush2.msra.mxu0 0.0
  %8136 = vmatprep.subr.mxu0 0.0
  %8137 = vmatpush2.msra.mxu0 0.0
  %8138 = vmatprep.subr.mxu0 0.0
  %8139 = vmatpush2.msra.mxu0 0.0
  %8140 = vmatprep.mubr.f32.mxu0 0.0
  %8141 = vmatmul.mubr.f32.gmra.mxu0 %v8003
  %v8142 = vpop.f32.mrf.mxu0
  %v8143 = vadd.f32 0.0, %v8142
  %v8144 = vpop.f32.mrf.mxu0
  %8145 = vdwg.mxu0
  %s8146 = scalar_lea.vmem %s12, 576
  %v8147 = vld [vmem:[%s8146] sm:$0xff]
  %v8148 = vld [vmem:[%s8146 + $0x8] sm:$0xff]
  %v8149 = vld [vmem:[%s8146 + $0x10] sm:$0xff]
  %v8150 = vld [vmem:[%s8146 + $0x18] sm:$0xff]
  %v8151 = vld [vmem:[%s8146 + $0x20] sm:$0xff]
  %v8152 = vld [vmem:[%s8146 + $0x28] sm:$0xff]
  %v8153 = vld [vmem:[%s8146 + $0x30] sm:$0xff]
  %v8154 = vld [vmem:[%s8146 + $0x38] sm:$0xff]
  %v8155 = vld [vmem:[%s8146 + $0x40] sm:$0xff]
  %v8156 = vld [vmem:[%s8146 + $0x48] sm:$0xff]
  %v8157 = vld [vmem:[%s8146 + $0x50] sm:$0xff]
  %v8158 = vld [vmem:[%s8146 + $0x58] sm:$0xff]
  %v8159 = vld [vmem:[%s8146 + $0x60] sm:$0xff]
  %v8160 = vld [vmem:[%s8146 + $0x68] sm:$0xff]
  %v8161 = vld [vmem:[%s8146 + $0x70] sm:$0xff]
  %v8162 = vld [vmem:[%s8146 + $0x78] sm:$0xff]
  %v8163 = vld [vmem:[%s8146 + $0x80] sm:$0xff]
  %v8164 = vld [vmem:[%s8146 + $0x88] sm:$0xff]
  %v8165 = vld [vmem:[%s8146 + $0x90] sm:$0xff]
  %v8166 = vld [vmem:[%s8146 + $0x98] sm:$0xff]
  %v8167 = vld [vmem:[%s8146 + $0xa0] sm:$0xff]
  %v8168 = vld [vmem:[%s8146 + $0xa8] sm:$0xff]
  %v8169 = vld [vmem:[%s8146 + $0xb0] sm:$0xff]
  %v8170 = vld [vmem:[%s8146 + $0xb8] sm:$0xff]
  %v8171 = vld [vmem:[%s8146 + $0xc0] sm:$0xff]
  %v8172 = vld [vmem:[%s8146 + $0xc8] sm:$0xff]
  %v8173 = vld [vmem:[%s8146 + $0xd0] sm:$0xff]
  %v8174 = vld [vmem:[%s8146 + $0xd8] sm:$0xff]
  %v8175 = vld [vmem:[%s8146 + $0xe0] sm:$0xff]
  %v8176 = vld [vmem:[%s8146 + $0xe8] sm:$0xff]
  %v8177 = vld [vmem:[%s8146 + $0xf0] sm:$0xff]
  %v8178 = vld [vmem:[%s8146 + $0xf8] sm:$0xff]
  %v8179 = vld [vmem:[%s8146 + $0x100] sm:$0xff]
  %v8180 = vld [vmem:[%s8146 + $0x108] sm:$0xff]
  %v8181 = vld [vmem:[%s8146 + $0x110] sm:$0xff]
  %v8182 = vld [vmem:[%s8146 + $0x118] sm:$0xff]
  %v8184 = vsel %vm6502, %v8143, 0
  %8186 = vmatprep.subr.mxu0 0.0
  %8187 = vmatpush1.msra.mxu0 %v8162
  %8188 = vmatprep.subr.mxu0 0.0
  %8189 = vmatpush1.msra.mxu0 %v8161
  %8190 = vmatprep.subr.mxu0 0.0
  %8191 = vmatpush1.msra.mxu0 %v8160
  %8192 = vmatprep.subr.mxu0 0.0
  %8193 = vmatpush1.msra.mxu0 %v8159
  %8194 = vmatprep.subr.mxu0 0.0
  %8195 = vmatpush1.msra.mxu0 %v8158
  %8196 = vmatprep.subr.mxu0 0.0
  %8197 = vmatpush1.msra.mxu0 %v8157
  %8198 = vmatprep.subr.mxu0 0.0
  %8199 = vmatpush1.msra.mxu0 %v8156
  %8200 = vmatprep.subr.mxu0 0.0
  %8201 = vmatpush1.msra.mxu0 %v8155
  %8202 = vmatprep.subr.mxu0 0.0
  %8203 = vmatpush1.msra.mxu0 %v8154
  %8204 = vmatprep.subr.mxu0 0.0
  %8205 = vmatpush1.msra.mxu0 %v8153
  %8206 = vmatprep.subr.mxu0 0.0
  %8207 = vmatpush1.msra.mxu0 %v8152
  %8208 = vmatprep.subr.mxu0 0.0
  %8209 = vmatpush1.msra.mxu0 %v8151
  %8210 = vmatprep.subr.mxu0 0.0
  %8211 = vmatpush1.msra.mxu0 %v8150
  %8212 = vmatprep.subr.mxu0 0.0
  %8213 = vmatpush1.msra.mxu0 %v8149
  %8214 = vmatprep.subr.mxu0 0.0
  %8215 = vmatpush1.msra.mxu0 %v8148
  %8216 = vmatprep.subr.mxu0 0.0
  %8217 = vmatpush1.msra.mxu0 %v8147
  %8218 = vmatprep.subr.mxu0 0.0
  %8219 = vmatpush2.msra.mxu0 %v8178
  %8220 = vmatprep.subr.mxu0 0.0
  %8221 = vmatpush2.msra.mxu0 %v8177
  %8222 = vmatprep.subr.mxu0 0.0
  %8223 = vmatpush2.msra.mxu0 %v8176
  %8224 = vmatprep.subr.mxu0 0.0
  %8225 = vmatpush2.msra.mxu0 %v8175
  %8226 = vmatprep.subr.mxu0 0.0
  %8227 = vmatpush2.msra.mxu0 %v8174
  %8228 = vmatprep.subr.mxu0 0.0
  %8229 = vmatpush2.msra.mxu0 %v8173
  %8230 = vmatprep.subr.mxu0 0.0
  %8231 = vmatpush2.msra.mxu0 %v8172
  %8232 = vmatprep.subr.mxu0 0.0
  %8233 = vmatpush2.msra.mxu0 %v8171
  %8234 = vmatprep.subr.mxu0 0.0
  %8235 = vmatpush2.msra.mxu0 %v8170
  %8236 = vmatprep.subr.mxu0 0.0
  %8237 = vmatpush2.msra.mxu0 %v8169
  %8238 = vmatprep.subr.mxu0 0.0
  %8239 = vmatpush2.msra.mxu0 %v8168
  %8240 = vmatprep.subr.mxu0 0.0
  %8241 = vmatpush2.msra.mxu0 %v8167
  %8242 = vmatprep.subr.mxu0 0.0
  %8243 = vmatpush2.msra.mxu0 %v8166
  %8244 = vmatprep.subr.mxu0 0.0
  %8245 = vmatpush2.msra.mxu0 %v8165
  %8246 = vmatprep.subr.mxu0 0.0
  %8247 = vmatpush2.msra.mxu0 %v8164
  %8248 = vmatprep.subr.mxu0 0.0
  %8249 = vmatpush2.msra.mxu0 %v8163
  %8250 = vmatprep.mubr.f32.mxu0 %v8074
  %8251 = vmatmul.mubr.f32.gmra.mxu0 %v8072
  %v8252 = vpop.f32.mrf.mxu0
  %v8253 = vadd.f32 0.0, %v8252
  %v8254 = vpop.f32.mrf.mxu0
  %8255 = vdwg.mxu0
  %8256 = vmatprep.subr.mxu0 0.0
  %8257 = vmatpush1.msra.mxu0 0.0
  %8258 = vmatprep.subr.mxu0 0.0
  %8259 = vmatpush1.msra.mxu0 0.0
  %8260 = vmatprep.subr.mxu0 0.0
  %8261 = vmatpush1.msra.mxu0 0.0
  %8262 = vmatprep.subr.mxu0 0.0
  %8263 = vmatpush1.msra.mxu0 0.0
  %8264 = vmatprep.subr.mxu0 0.0
  %8265 = vmatpush1.msra.mxu0 0.0
  %8266 = vmatprep.subr.mxu0 0.0
  %8267 = vmatpush1.msra.mxu0 0.0
  %8268 = vmatprep.subr.mxu0 0.0
  %8269 = vmatpush1.msra.mxu0 0.0
  %8270 = vmatprep.subr.mxu0 0.0
  %8271 = vmatpush1.msra.mxu0 0.0
  %8272 = vmatprep.subr.mxu0 0.0
  %8273 = vmatpush1.msra.mxu0 0.0
  %8274 = vmatprep.subr.mxu0 0.0
  %8275 = vmatpush1.msra.mxu0 0.0
  %8276 = vmatprep.subr.mxu0 0.0
  %8277 = vmatpush1.msra.mxu0 0.0
  %8278 = vmatprep.subr.mxu0 0.0
  %8279 = vmatpush1.msra.mxu0 0.0
  %8280 = vmatprep.subr.mxu0 0.0
  %8281 = vmatpush1.msra.mxu0 %v8182
  %8282 = vmatprep.subr.mxu0 0.0
  %8283 = vmatpush1.msra.mxu0 %v8181
  %8284 = vmatprep.subr.mxu0 0.0
  %8285 = vmatpush1.msra.mxu0 %v8180
  %8286 = vmatprep.subr.mxu0 0.0
  %8287 = vmatpush1.msra.mxu0 %v8179
  %8288 = vmatprep.subr.mxu0 0.0
  %8289 = vmatpush2.msra.mxu0 0.0
  %8290 = vmatprep.subr.mxu0 0.0
  %8291 = vmatpush2.msra.mxu0 0.0
  %8292 = vmatprep.subr.mxu0 0.0
  %8293 = vmatpush2.msra.mxu0 0.0
  %8294 = vmatprep.subr.mxu0 0.0
  %8295 = vmatpush2.msra.mxu0 0.0
  %8296 = vmatprep.subr.mxu0 0.0
  %8297 = vmatpush2.msra.mxu0 0.0
  %8298 = vmatprep.subr.mxu0 0.0
  %8299 = vmatpush2.msra.mxu0 0.0
  %8300 = vmatprep.subr.mxu0 0.0
  %8301 = vmatpush2.msra.mxu0 0.0
  %8302 = vmatprep.subr.mxu0 0.0
  %8303 = vmatpush2.msra.mxu0 0.0
  %8304 = vmatprep.subr.mxu0 0.0
  %8305 = vmatpush2.msra.mxu0 0.0
  %8306 = vmatprep.subr.mxu0 0.0
  %8307 = vmatpush2.msra.mxu0 0.0
  %8308 = vmatprep.subr.mxu0 0.0
  %8309 = vmatpush2.msra.mxu0 0.0
  %8310 = vmatprep.subr.mxu0 0.0
  %8311 = vmatpush2.msra.mxu0 0.0
  %8312 = vmatprep.subr.mxu0 0.0
  %8313 = vmatpush2.msra.mxu0 0.0
  %8314 = vmatprep.subr.mxu0 0.0
  %8315 = vmatpush2.msra.mxu0 0.0
  %8316 = vmatprep.subr.mxu0 0.0
  %8317 = vmatpush2.msra.mxu0 0.0
  %8318 = vmatprep.subr.mxu0 0.0
  %8319 = vmatpush2.msra.mxu0 0.0
  %8320 = vmatprep.mubr.f32.mxu0 0.0
  %8321 = vmatmul.mubr.f32.gmra.mxu0 %v8184
  %v8322 = vpop.f32.mrf.mxu0
  %v8323 = vadd.f32 %v8253, %v8322
  %v8324 = vpop.f32.mrf.mxu0
  %8325 = vdwg.mxu0
  %v8326 = vadd.f32 %v7997, %v8323
  %s8327 = scalar_lea.vmem %s11, 24
  %v8328 = vld [vmem:[%s8327] sm:$0x3f]
  %v8330 = vsel %vm7341, %v8328, 0
  %8332 = vmatprep.subr.mxu0 0.0
  %8333 = vmatpush1.msra.mxu0 0.0
  %8334 = vmatprep.subr.mxu0 0.0
  %8335 = vmatpush1.msra.mxu0 0.0
  %8336 = vmatprep.subr.mxu0 0.0
  %8337 = vmatpush1.msra.mxu0 0.0
  %8338 = vmatprep.subr.mxu0 0.0
  %8339 = vmatpush1.msra.mxu0 0.0
  %8340 = vmatprep.subr.mxu0 0.0
  %8341 = vmatpush1.msra.mxu0 0.0
  %8342 = vmatprep.subr.mxu0 0.0
  %8343 = vmatpush1.msra.mxu0 0.0
  %8344 = vmatprep.subr.mxu0 0.0
  %8345 = vmatpush1.msra.mxu0 0.0
  %8346 = vmatprep.subr.mxu0 0.0
  %8347 = vmatpush1.msra.mxu0 0.0
  %8348 = vmatprep.subr.mxu0 0.0
  %8349 = vmatpush1.msra.mxu0 0.0
  %8350 = vmatprep.subr.mxu0 0.0
  %8351 = vmatpush1.msra.mxu0 0.0
  %8352 = vmatprep.subr.mxu0 0.0
  %8353 = vmatpush1.msra.mxu0 0.0
  %8354 = vmatprep.subr.mxu0 0.0
  %8355 = vmatpush1.msra.mxu0 0.0
  %8356 = vmatprep.subr.mxu0 0.0
  %8357 = vmatpush1.msra.mxu0 0.0
  %8358 = vmatprep.subr.mxu0 %v7349
  %8359 = vmatpush1.msra.mxu0 %v7346
  %8360 = vmatprep.subr.mxu0 %v7335
  %8361 = vmatpush1.msra.mxu0 %v7334
  %8362 = vmatprep.subr.mxu0 %v7332
  %8363 = vmatpush1.msra.mxu0 %v7331
  %8364 = vmatprep.subr.mxu0 0.0
  %8365 = vmatpush2.msra.mxu0 0.0
  %8366 = vmatprep.subr.mxu0 0.0
  %8367 = vmatpush2.msra.mxu0 0.0
  %8368 = vmatprep.subr.mxu0 0.0
  %8369 = vmatpush2.msra.mxu0 0.0
  %8370 = vmatprep.subr.mxu0 0.0
  %8371 = vmatpush2.msra.mxu0 0.0
  %8372 = vmatprep.subr.mxu0 0.0
  %8373 = vmatpush2.msra.mxu0 0.0
  %8374 = vmatprep.subr.mxu0 0.0
  %8375 = vmatpush2.msra.mxu0 0.0
  %8376 = vmatprep.subr.mxu0 0.0
  %8377 = vmatpush2.msra.mxu0 0.0
  %8378 = vmatprep.subr.mxu0 0.0
  %8379 = vmatpush2.msra.mxu0 0.0
  %8380 = vmatprep.subr.mxu0 0.0
  %8381 = vmatpush2.msra.mxu0 0.0
  %8382 = vmatprep.subr.mxu0 0.0
  %8383 = vmatpush2.msra.mxu0 0.0
  %8384 = vmatprep.subr.mxu0 0.0
  %8385 = vmatpush2.msra.mxu0 0.0
  %8386 = vmatprep.subr.mxu0 0.0
  %8387 = vmatpush2.msra.mxu0 0.0
  %8388 = vmatprep.subr.mxu0 0.0
  %8389 = vmatpush2.msra.mxu0 0.0
  %8390 = vmatprep.subr.mxu0 0.0
  %8391 = vmatpush2.msra.mxu0 0.0
  %8392 = vmatprep.subr.mxu0 0.0
  %8393 = vmatpush2.msra.mxu0 0.0
  %8394 = vmatprep.subr.mxu0 0.0
  %8395 = vmatpush2.msra.mxu0 0.0
  %8396 = vmatprep.mubr.f32.mxu0 0.0
  %8397 = vmatmul.mubr.f32.gmra.mxu0 %v8330
  %v8398 = vpop.f32.mrf.mxu0
  %v8399 = vadd.f32 0.0, %v8398
  %v8400 = vpop.f32.mrf.mxu0
  %v8401 = vadd.f32 0.0, %v8400
  %8402 = vdwg.mxu0
  %8403 = vmatprep.subr.mxu0 0.0
  %8404 = vmatpush1.msra.mxu0 0.0
  %8405 = vmatprep.subr.mxu0 0.0
  %8406 = vmatpush1.msra.mxu0 0.0
  %8407 = vmatprep.subr.mxu0 0.0
  %8408 = vmatpush1.msra.mxu0 0.0
  %8409 = vmatprep.subr.mxu0 0.0
  %8410 = vmatpush1.msra.mxu0 0.0
  %8411 = vmatprep.subr.mxu0 0.0
  %8412 = vmatpush1.msra.mxu0 0.0
  %8413 = vmatprep.subr.mxu0 0.0
  %8414 = vmatpush1.msra.mxu0 0.0
  %8415 = vmatprep.subr.mxu0 0.0
  %8416 = vmatpush1.msra.mxu0 0.0
  %8417 = vmatprep.subr.mxu0 0.0
  %8418 = vmatpush1.msra.mxu0 0.0
  %8419 = vmatprep.subr.mxu0 0.0
  %8420 = vmatpush1.msra.mxu0 0.0
  %8421 = vmatprep.subr.mxu0 0.0
  %8422 = vmatpush1.msra.mxu0 0.0
  %8423 = vmatprep.subr.mxu0 0.0
  %8424 = vmatpush1.msra.mxu0 0.0
  %8425 = vmatprep.subr.mxu0 0.0
  %8426 = vmatpush1.msra.mxu0 0.0
  %8427 = vmatprep.subr.mxu0 0.0
  %8428 = vmatpush1.msra.mxu0 0.0
  %8429 = vmatprep.subr.mxu0 0.0
  %8430 = vmatpush1.msra.mxu0 %v7352
  %8431 = vmatprep.subr.mxu0 0.0
  %8432 = vmatpush1.msra.mxu0 %v7336
  %8433 = vmatprep.subr.mxu0 0.0
  %8434 = vmatpush1.msra.mxu0 %v7333
  %8435 = vmatprep.subr.mxu0 0.0
  %8436 = vmatpush2.msra.mxu0 0.0
  %8437 = vmatprep.subr.mxu0 0.0
  %8438 = vmatpush2.msra.mxu0 0.0
  %8439 = vmatprep.subr.mxu0 0.0
  %8440 = vmatpush2.msra.mxu0 0.0
  %8441 = vmatprep.subr.mxu0 0.0
  %8442 = vmatpush2.msra.mxu0 0.0
  %8443 = vmatprep.subr.mxu0 0.0
  %8444 = vmatpush2.msra.mxu0 0.0
  %8445 = vmatprep.subr.mxu0 0.0
  %8446 = vmatpush2.msra.mxu0 0.0
  %8447 = vmatprep.subr.mxu0 0.0
  %8448 = vmatpush2.msra.mxu0 0.0
  %8449 = vmatprep.subr.mxu0 0.0
  %8450 = vmatpush2.msra.mxu0 0.0
  %8451 = vmatprep.subr.mxu0 0.0
  %8452 = vmatpush2.msra.mxu0 0.0
  %8453 = vmatprep.subr.mxu0 0.0
  %8454 = vmatpush2.msra.mxu0 0.0
  %8455 = vmatprep.subr.mxu0 0.0
  %8456 = vmatpush2.msra.mxu0 0.0
  %8457 = vmatprep.subr.mxu0 0.0
  %8458 = vmatpush2.msra.mxu0 0.0
  %8459 = vmatprep.subr.mxu0 0.0
  %8460 = vmatpush2.msra.mxu0 0.0
  %8461 = vmatprep.subr.mxu0 0.0
  %8462 = vmatpush2.msra.mxu0 0.0
  %8463 = vmatprep.subr.mxu0 0.0
  %8464 = vmatpush2.msra.mxu0 0.0
  %8465 = vmatprep.subr.mxu0 0.0
  %8466 = vmatpush2.msra.mxu0 0.0
  %8467 = vmatprep.mubr.f32.mxu0 0.0
  %8468 = vmatmul.mubr.f32.gmra.mxu0 %v8330
  %v8469 = vpop.f32.mrf.mxu0
  %v8470 = vadd.f32 0.0, %v8469
  %v8471 = vpop.f32.mrf.mxu0
  %8472 = vdwg.mxu0
  %s8473 = scalar_lea.vmem %s12, 864
  %v8474 = vld [vmem:[%s8473] sm:$0xff]
  %v8475 = vld [vmem:[%s8473 + $0x8] sm:$0xff]
  %v8476 = vld [vmem:[%s8473 + $0x10] sm:$0xff]
  %v8477 = vld [vmem:[%s8473 + $0x18] sm:$0xff]
  %v8478 = vld [vmem:[%s8473 + $0x20] sm:$0xff]
  %v8479 = vld [vmem:[%s8473 + $0x28] sm:$0xff]
  %v8480 = vld [vmem:[%s8473 + $0x30] sm:$0xff]
  %v8481 = vld [vmem:[%s8473 + $0x38] sm:$0xff]
  %v8482 = vld [vmem:[%s8473 + $0x40] sm:$0xff]
  %v8483 = vld [vmem:[%s8473 + $0x48] sm:$0xff]
  %v8484 = vld [vmem:[%s8473 + $0x50] sm:$0xff]
  %v8485 = vld [vmem:[%s8473 + $0x58] sm:$0xff]
  %v8486 = vld [vmem:[%s8473 + $0x60] sm:$0xff]
  %v8487 = vld [vmem:[%s8473 + $0x68] sm:$0xff]
  %v8488 = vld [vmem:[%s8473 + $0x70] sm:$0xff]
  %v8489 = vld [vmem:[%s8473 + $0x78] sm:$0xff]
  %v8490 = vld [vmem:[%s8473 + $0x80] sm:$0xff]
  %v8491 = vld [vmem:[%s8473 + $0x88] sm:$0xff]
  %v8492 = vld [vmem:[%s8473 + $0x90] sm:$0xff]
  %v8493 = vld [vmem:[%s8473 + $0x98] sm:$0xff]
  %v8494 = vld [vmem:[%s8473 + $0xa0] sm:$0xff]
  %v8495 = vld [vmem:[%s8473 + $0xa8] sm:$0xff]
  %v8496 = vld [vmem:[%s8473 + $0xb0] sm:$0xff]
  %v8497 = vld [vmem:[%s8473 + $0xb8] sm:$0xff]
  %v8498 = vld [vmem:[%s8473 + $0xc0] sm:$0xff]
  %v8499 = vld [vmem:[%s8473 + $0xc8] sm:$0xff]
  %v8500 = vld [vmem:[%s8473 + $0xd0] sm:$0xff]
  %v8501 = vld [vmem:[%s8473 + $0xd8] sm:$0xff]
  %v8502 = vld [vmem:[%s8473 + $0xe0] sm:$0xff]
  %v8503 = vld [vmem:[%s8473 + $0xe8] sm:$0xff]
  %v8504 = vld [vmem:[%s8473 + $0xf0] sm:$0xff]
  %v8505 = vld [vmem:[%s8473 + $0xf8] sm:$0xff]
  %v8506 = vld [vmem:[%s8473 + $0x100] sm:$0xff]
  %v8507 = vld [vmem:[%s8473 + $0x108] sm:$0xff]
  %v8508 = vld [vmem:[%s8473 + $0x110] sm:$0xff]
  %v8509 = vld [vmem:[%s8473 + $0x118] sm:$0xff]
  %v8511 = vsel %vm6502, %v8470, 0
  %8513 = vmatprep.subr.mxu0 0.0
  %8514 = vmatpush1.msra.mxu0 %v8489
  %8515 = vmatprep.subr.mxu0 0.0
  %8516 = vmatpush1.msra.mxu0 %v8488
  %8517 = vmatprep.subr.mxu0 0.0
  %8518 = vmatpush1.msra.mxu0 %v8487
  %8519 = vmatprep.subr.mxu0 0.0
  %8520 = vmatpush1.msra.mxu0 %v8486
  %8521 = vmatprep.subr.mxu0 0.0
  %8522 = vmatpush1.msra.mxu0 %v8485
  %8523 = vmatprep.subr.mxu0 0.0
  %8524 = vmatpush1.msra.mxu0 %v8484
  %8525 = vmatprep.subr.mxu0 0.0
  %8526 = vmatpush1.msra.mxu0 %v8483
  %8527 = vmatprep.subr.mxu0 0.0
  %8528 = vmatpush1.msra.mxu0 %v8482
  %8529 = vmatprep.subr.mxu0 0.0
  %8530 = vmatpush1.msra.mxu0 %v8481
  %8531 = vmatprep.subr.mxu0 0.0
  %8532 = vmatpush1.msra.mxu0 %v8480
  %8533 = vmatprep.subr.mxu0 0.0
  %8534 = vmatpush1.msra.mxu0 %v8479
  %8535 = vmatprep.subr.mxu0 0.0
  %8536 = vmatpush1.msra.mxu0 %v8478
  %8537 = vmatprep.subr.mxu0 0.0
  %8538 = vmatpush1.msra.mxu0 %v8477
  %8539 = vmatprep.subr.mxu0 0.0
  %8540 = vmatpush1.msra.mxu0 %v8476
  %8541 = vmatprep.subr.mxu0 0.0
  %8542 = vmatpush1.msra.mxu0 %v8475
  %8543 = vmatprep.subr.mxu0 0.0
  %8544 = vmatpush1.msra.mxu0 %v8474
  %8545 = vmatprep.subr.mxu0 0.0
  %8546 = vmatpush2.msra.mxu0 %v8505
  %8547 = vmatprep.subr.mxu0 0.0
  %8548 = vmatpush2.msra.mxu0 %v8504
  %8549 = vmatprep.subr.mxu0 0.0
  %8550 = vmatpush2.msra.mxu0 %v8503
  %8551 = vmatprep.subr.mxu0 0.0
  %8552 = vmatpush2.msra.mxu0 %v8502
  %8553 = vmatprep.subr.mxu0 0.0
  %8554 = vmatpush2.msra.mxu0 %v8501
  %8555 = vmatprep.subr.mxu0 0.0
  %8556 = vmatpush2.msra.mxu0 %v8500
  %8557 = vmatprep.subr.mxu0 0.0
  %8558 = vmatpush2.msra.mxu0 %v8499
  %8559 = vmatprep.subr.mxu0 0.0
  %8560 = vmatpush2.msra.mxu0 %v8498
  %8561 = vmatprep.subr.mxu0 0.0
  %8562 = vmatpush2.msra.mxu0 %v8497
  %8563 = vmatprep.subr.mxu0 0.0
  %8564 = vmatpush2.msra.mxu0 %v8496
  %8565 = vmatprep.subr.mxu0 0.0
  %8566 = vmatpush2.msra.mxu0 %v8495
  %8567 = vmatprep.subr.mxu0 0.0
  %8568 = vmatpush2.msra.mxu0 %v8494
  %8569 = vmatprep.subr.mxu0 0.0
  %8570 = vmatpush2.msra.mxu0 %v8493
  %8571 = vmatprep.subr.mxu0 0.0
  %8572 = vmatpush2.msra.mxu0 %v8492
  %8573 = vmatprep.subr.mxu0 0.0
  %8574 = vmatpush2.msra.mxu0 %v8491
  %8575 = vmatprep.subr.mxu0 0.0
  %8576 = vmatpush2.msra.mxu0 %v8490
  %8577 = vmatprep.mubr.f32.mxu0 %v8401
  %8578 = vmatmul.mubr.f32.gmra.mxu0 %v8399
  %v8579 = vpop.f32.mrf.mxu0
  %v8580 = vadd.f32 0.0, %v8579
  %v8581 = vpop.f32.mrf.mxu0
  %8582 = vdwg.mxu0
  %8583 = vmatprep.subr.mxu0 0.0
  %8584 = vmatpush1.msra.mxu0 0.0
  %8585 = vmatprep.subr.mxu0 0.0
  %8586 = vmatpush1.msra.mxu0 0.0
  %8587 = vmatprep.subr.mxu0 0.0
  %8588 = vmatpush1.msra.mxu0 0.0
  %8589 = vmatprep.subr.mxu0 0.0
  %8590 = vmatpush1.msra.mxu0 0.0
  %8591 = vmatprep.subr.mxu0 0.0
  %8592 = vmatpush1.msra.mxu0 0.0
  %8593 = vmatprep.subr.mxu0 0.0
  %8594 = vmatpush1.msra.mxu0 0.0
  %8595 = vmatprep.subr.mxu0 0.0
  %8596 = vmatpush1.msra.mxu0 0.0
  %8597 = vmatprep.subr.mxu0 0.0
  %8598 = vmatpush1.msra.mxu0 0.0
  %8599 = vmatprep.subr.mxu0 0.0
  %8600 = vmatpush1.msra.mxu0 0.0
  %8601 = vmatprep.subr.mxu0 0.0
  %8602 = vmatpush1.msra.mxu0 0.0
  %8603 = vmatprep.subr.mxu0 0.0
  %8604 = vmatpush1.msra.mxu0 0.0
  %8605 = vmatprep.subr.mxu0 0.0
  %8606 = vmatpush1.msra.mxu0 0.0
  %8607 = vmatprep.subr.mxu0 0.0
  %8608 = vmatpush1.msra.mxu0 %v8509
  %8609 = vmatprep.subr.mxu0 0.0
  %8610 = vmatpush1.msra.mxu0 %v8508
  %8611 = vmatprep.subr.mxu0 0.0
  %8612 = vmatpush1.msra.mxu0 %v8507
  %8613 = vmatprep.subr.mxu0 0.0
  %8614 = vmatpush1.msra.mxu0 %v8506
  %8615 = vmatprep.subr.mxu0 0.0
  %8616 = vmatpush2.msra.mxu0 0.0
  %8617 = vmatprep.subr.mxu0 0.0
  %8618 = vmatpush2.msra.mxu0 0.0
  %8619 = vmatprep.subr.mxu0 0.0
  %8620 = vmatpush2.msra.mxu0 0.0
  %8621 = vmatprep.subr.mxu0 0.0
  %8622 = vmatpush2.msra.mxu0 0.0
  %8623 = vmatprep.subr.mxu0 0.0
  %8624 = vmatpush2.msra.mxu0 0.0
  %8625 = vmatprep.subr.mxu0 0.0
  %8626 = vmatpush2.msra.mxu0 0.0
  %8627 = vmatprep.subr.mxu0 0.0
  %8628 = vmatpush2.msra.mxu0 0.0
  %8629 = vmatprep.subr.mxu0 0.0
  %8630 = vmatpush2.msra.mxu0 0.0
  %8631 = vmatprep.subr.mxu0 0.0
  %8632 = vmatpush2.msra.mxu0 0.0
  %8633 = vmatprep.subr.mxu0 0.0
  %8634 = vmatpush2.msra.mxu0 0.0
  %8635 = vmatprep.subr.mxu0 0.0
  %8636 = vmatpush2.msra.mxu0 0.0
  %8637 = vmatprep.subr.mxu0 0.0
  %8638 = vmatpush2.msra.mxu0 0.0
  %8639 = vmatprep.subr.mxu0 0.0
  %8640 = vmatpush2.msra.mxu0 0.0
  %8641 = vmatprep.subr.mxu0 0.0
  %8642 = vmatpush2.msra.mxu0 0.0
  %8643 = vmatprep.subr.mxu0 0.0
  %8644 = vmatpush2.msra.mxu0 0.0
  %8645 = vmatprep.subr.mxu0 0.0
  %8646 = vmatpush2.msra.mxu0 0.0
  %8647 = vmatprep.mubr.f32.mxu0 0.0
  %8648 = vmatmul.mubr.f32.gmra.mxu0 %v8511
  %v8649 = vpop.f32.mrf.mxu0
  %v8650 = vadd.f32 %v8580, %v8649
  %v8651 = vpop.f32.mrf.mxu0
  %8652 = vdwg.mxu0
  %v8653 = vadd.f32 %v8326, %v8650
  %s8654 = scalar_lea.vmem %s11, 32
  %v8655 = vld [vmem:[%s8654] sm:$0x3f]
  %v8657 = vsel %vm7341, %v8655, 0
  %8659 = vmatprep.subr.mxu0 0.0
  %8660 = vmatpush1.msra.mxu0 0.0
  %8661 = vmatprep.subr.mxu0 0.0
  %8662 = vmatpush1.msra.mxu0 0.0
  %8663 = vmatprep.subr.mxu0 0.0
  %8664 = vmatpush1.msra.mxu0 0.0
  %8665 = vmatprep.subr.mxu0 0.0
  %8666 = vmatpush1.msra.mxu0 0.0
  %8667 = vmatprep.subr.mxu0 0.0
  %8668 = vmatpush1.msra.mxu0 0.0
  %8669 = vmatprep.subr.mxu0 0.0
  %8670 = vmatpush1.msra.mxu0 0.0
  %8671 = vmatprep.subr.mxu0 0.0
  %8672 = vmatpush1.msra.mxu0 0.0
  %8673 = vmatprep.subr.mxu0 0.0
  %8674 = vmatpush1.msra.mxu0 0.0
  %8675 = vmatprep.subr.mxu0 0.0
  %8676 = vmatpush1.msra.mxu0 0.0
  %8677 = vmatprep.subr.mxu0 0.0
  %8678 = vmatpush1.msra.mxu0 0.0
  %8679 = vmatprep.subr.mxu0 0.0
  %8680 = vmatpush1.msra.mxu0 0.0
  %8681 = vmatprep.subr.mxu0 0.0
  %8682 = vmatpush1.msra.mxu0 0.0
  %8683 = vmatprep.subr.mxu0 0.0
  %8684 = vmatpush1.msra.mxu0 0.0
  %8685 = vmatprep.subr.mxu0 %v7349
  %8686 = vmatpush1.msra.mxu0 %v7346
  %8687 = vmatprep.subr.mxu0 %v7335
  %8688 = vmatpush1.msra.mxu0 %v7334
  %8689 = vmatprep.subr.mxu0 %v7332
  %8690 = vmatpush1.msra.mxu0 %v7331
  %8691 = vmatprep.subr.mxu0 0.0
  %8692 = vmatpush2.msra.mxu0 0.0
  %8693 = vmatprep.subr.mxu0 0.0
  %8694 = vmatpush2.msra.mxu0 0.0
  %8695 = vmatprep.subr.mxu0 0.0
  %8696 = vmatpush2.msra.mxu0 0.0
  %8697 = vmatprep.subr.mxu0 0.0
  %8698 = vmatpush2.msra.mxu0 0.0
  %8699 = vmatprep.subr.mxu0 0.0
  %8700 = vmatpush2.msra.mxu0 0.0
  %8701 = vmatprep.subr.mxu0 0.0
  %8702 = vmatpush2.msra.mxu0 0.0
  %8703 = vmatprep.subr.mxu0 0.0
  %8704 = vmatpush2.msra.mxu0 0.0
  %8705 = vmatprep.subr.mxu0 0.0
  %8706 = vmatpush2.msra.mxu0 0.0
  %8707 = vmatprep.subr.mxu0 0.0
  %8708 = vmatpush2.msra.mxu0 0.0
  %8709 = vmatprep.subr.mxu0 0.0
  %8710 = vmatpush2.msra.mxu0 0.0
  %8711 = vmatprep.subr.mxu0 0.0
  %8712 = vmatpush2.msra.mxu0 0.0
  %8713 = vmatprep.subr.mxu0 0.0
  %8714 = vmatpush2.msra.mxu0 0.0
  %8715 = vmatprep.subr.mxu0 0.0
  %8716 = vmatpush2.msra.mxu0 0.0
  %8717 = vmatprep.subr.mxu0 0.0
  %8718 = vmatpush2.msra.mxu0 0.0
  %8719 = vmatprep.subr.mxu0 0.0
  %8720 = vmatpush2.msra.mxu0 0.0
  %8721 = vmatprep.subr.mxu0 0.0
  %8722 = vmatpush2.msra.mxu0 0.0
  %8723 = vmatprep.mubr.f32.mxu0 0.0
  %8724 = vmatmul.mubr.f32.gmra.mxu0 %v8657
  %v8725 = vpop.f32.mrf.mxu0
  %v8726 = vadd.f32 0.0, %v8725
  %v8727 = vpop.f32.mrf.mxu0
  %v8728 = vadd.f32 0.0, %v8727
  %8729 = vdwg.mxu0
  %8730 = vmatprep.subr.mxu0 0.0
  %8731 = vmatpush1.msra.mxu0 0.0
  %8732 = vmatprep.subr.mxu0 0.0
  %8733 = vmatpush1.msra.mxu0 0.0
  %8734 = vmatprep.subr.mxu0 0.0
  %8735 = vmatpush1.msra.mxu0 0.0
  %8736 = vmatprep.subr.mxu0 0.0
  %8737 = vmatpush1.msra.mxu0 0.0
  %8738 = vmatprep.subr.mxu0 0.0
  %8739 = vmatpush1.msra.mxu0 0.0
  %8740 = vmatprep.subr.mxu0 0.0
  %8741 = vmatpush1.msra.mxu0 0.0
  %8742 = vmatprep.subr.mxu0 0.0
  %8743 = vmatpush1.msra.mxu0 0.0
  %8744 = vmatprep.subr.mxu0 0.0
  %8745 = vmatpush1.msra.mxu0 0.0
  %8746 = vmatprep.subr.mxu0 0.0
  %8747 = vmatpush1.msra.mxu0 0.0
  %8748 = vmatprep.subr.mxu0 0.0
  %8749 = vmatpush1.msra.mxu0 0.0
  %8750 = vmatprep.subr.mxu0 0.0
  %8751 = vmatpush1.msra.mxu0 0.0
  %8752 = vmatprep.subr.mxu0 0.0
  %8753 = vmatpush1.msra.mxu0 0.0
  %8754 = vmatprep.subr.mxu0 0.0
  %8755 = vmatpush1.msra.mxu0 0.0
  %8756 = vmatprep.subr.mxu0 0.0
  %8757 = vmatpush1.msra.mxu0 %v7352
  %8758 = vmatprep.subr.mxu0 0.0
  %8759 = vmatpush1.msra.mxu0 %v7336
  %8760 = vmatprep.subr.mxu0 0.0
  %8761 = vmatpush1.msra.mxu0 %v7333
  %8762 = vmatprep.subr.mxu0 0.0
  %8763 = vmatpush2.msra.mxu0 0.0
  %8764 = vmatprep.subr.mxu0 0.0
  %8765 = vmatpush2.msra.mxu0 0.0
  %8766 = vmatprep.subr.mxu0 0.0
  %8767 = vmatpush2.msra.mxu0 0.0
  %8768 = vmatprep.subr.mxu0 0.0
  %8769 = vmatpush2.msra.mxu0 0.0
  %8770 = vmatprep.subr.mxu0 0.0
  %8771 = vmatpush2.msra.mxu0 0.0
  %8772 = vmatprep.subr.mxu0 0.0
  %8773 = vmatpush2.msra.mxu0 0.0
  %8774 = vmatprep.subr.mxu0 0.0
  %8775 = vmatpush2.msra.mxu0 0.0
  %8776 = vmatprep.subr.mxu0 0.0
  %8777 = vmatpush2.msra.mxu0 0.0
  %8778 = vmatprep.subr.mxu0 0.0
  %8779 = vmatpush2.msra.mxu0 0.0
  %8780 = vmatprep.subr.mxu0 0.0
  %8781 = vmatpush2.msra.mxu0 0.0
  %8782 = vmatprep.subr.mxu0 0.0
  %8783 = vmatpush2.msra.mxu0 0.0
  %8784 = vmatprep.subr.mxu0 0.0
  %8785 = vmatpush2.msra.mxu0 0.0
  %8786 = vmatprep.subr.mxu0 0.0
  %8787 = vmatpush2.msra.mxu0 0.0
  %8788 = vmatprep.subr.mxu0 0.0
  %8789 = vmatpush2.msra.mxu0 0.0
  %8790 = vmatprep.subr.mxu0 0.0
  %8791 = vmatpush2.msra.mxu0 0.0
  %8792 = vmatprep.subr.mxu0 0.0
  %8793 = vmatpush2.msra.mxu0 0.0
  %8794 = vmatprep.mubr.f32.mxu0 0.0
  %8795 = vmatmul.mubr.f32.gmra.mxu0 %v8657
  %v8796 = vpop.f32.mrf.mxu0
  %v8797 = vadd.f32 0.0, %v8796
  %v8798 = vpop.f32.mrf.mxu0
  %8799 = vdwg.mxu0
  %s8800 = scalar_lea.vmem %s12, 1152
  %v8801 = vld [vmem:[%s8800] sm:$0xff]
  %v8802 = vld [vmem:[%s8800 + $0x8] sm:$0xff]
  %v8803 = vld [vmem:[%s8800 + $0x10] sm:$0xff]
  %v8804 = vld [vmem:[%s8800 + $0x18] sm:$0xff]
  %v8805 = vld [vmem:[%s8800 + $0x20] sm:$0xff]
  %v8806 = vld [vmem:[%s8800 + $0x28] sm:$0xff]
  %v8807 = vld [vmem:[%s8800 + $0x30] sm:$0xff]
  %v8808 = vld [vmem:[%s8800 + $0x38] sm:$0xff]
  %v8809 = vld [vmem:[%s8800 + $0x40] sm:$0xff]
  %v8810 = vld [vmem:[%s8800 + $0x48] sm:$0xff]
  %v8811 = vld [vmem:[%s8800 + $0x50] sm:$0xff]
  %v8812 = vld [vmem:[%s8800 + $0x58] sm:$0xff]
  %v8813 = vld [vmem:[%s8800 + $0x60] sm:$0xff]
  %v8814 = vld [vmem:[%s8800 + $0x68] sm:$0xff]
  %v8815 = vld [vmem:[%s8800 + $0x70] sm:$0xff]
  %v8816 = vld [vmem:[%s8800 + $0x78] sm:$0xff]
  %v8817 = vld [vmem:[%s8800 + $0x80] sm:$0xff]
  %v8818 = vld [vmem:[%s8800 + $0x88] sm:$0xff]
  %v8819 = vld [vmem:[%s8800 + $0x90] sm:$0xff]
  %v8820 = vld [vmem:[%s8800 + $0x98] sm:$0xff]
  %v8821 = vld [vmem:[%s8800 + $0xa0] sm:$0xff]
  %v8822 = vld [vmem:[%s8800 + $0xa8] sm:$0xff]
  %v8823 = vld [vmem:[%s8800 + $0xb0] sm:$0xff]
  %v8824 = vld [vmem:[%s8800 + $0xb8] sm:$0xff]
  %v8825 = vld [vmem:[%s8800 + $0xc0] sm:$0xff]
  %v8826 = vld [vmem:[%s8800 + $0xc8] sm:$0xff]
  %v8827 = vld [vmem:[%s8800 + $0xd0] sm:$0xff]
  %v8828 = vld [vmem:[%s8800 + $0xd8] sm:$0xff]
  %v8829 = vld [vmem:[%s8800 + $0xe0] sm:$0xff]
  %v8830 = vld [vmem:[%s8800 + $0xe8] sm:$0xff]
  %v8831 = vld [vmem:[%s8800 + $0xf0] sm:$0xff]
  %v8832 = vld [vmem:[%s8800 + $0xf8] sm:$0xff]
  %v8833 = vld [vmem:[%s8800 + $0x100] sm:$0xff]
  %v8834 = vld [vmem:[%s8800 + $0x108] sm:$0xff]
  %v8835 = vld [vmem:[%s8800 + $0x110] sm:$0xff]
  %v8836 = vld [vmem:[%s8800 + $0x118] sm:$0xff]
  %v8838 = vsel %vm6502, %v8797, 0
  %8840 = vmatprep.subr.mxu0 0.0
  %8841 = vmatpush1.msra.mxu0 %v8816
  %8842 = vmatprep.subr.mxu0 0.0
  %8843 = vmatpush1.msra.mxu0 %v8815
  %8844 = vmatprep.subr.mxu0 0.0
  %8845 = vmatpush1.msra.mxu0 %v8814
  %8846 = vmatprep.subr.mxu0 0.0
  %8847 = vmatpush1.msra.mxu0 %v8813
  %8848 = vmatprep.subr.mxu0 0.0
  %8849 = vmatpush1.msra.mxu0 %v8812
  %8850 = vmatprep.subr.mxu0 0.0
  %8851 = vmatpush1.msra.mxu0 %v8811
  %8852 = vmatprep.subr.mxu0 0.0
  %8853 = vmatpush1.msra.mxu0 %v8810
  %8854 = vmatprep.subr.mxu0 0.0
  %8855 = vmatpush1.msra.mxu0 %v8809
  %8856 = vmatprep.subr.mxu0 0.0
  %8857 = vmatpush1.msra.mxu0 %v8808
  %8858 = vmatprep.subr.mxu0 0.0
  %8859 = vmatpush1.msra.mxu0 %v8807
  %8860 = vmatprep.subr.mxu0 0.0
  %8861 = vmatpush1.msra.mxu0 %v8806
  %8862 = vmatprep.subr.mxu0 0.0
  %8863 = vmatpush1.msra.mxu0 %v8805
  %8864 = vmatprep.subr.mxu0 0.0
  %8865 = vmatpush1.msra.mxu0 %v8804
  %8866 = vmatprep.subr.mxu0 0.0
  %8867 = vmatpush1.msra.mxu0 %v8803
  %8868 = vmatprep.subr.mxu0 0.0
  %8869 = vmatpush1.msra.mxu0 %v8802
  %8870 = vmatprep.subr.mxu0 0.0
  %8871 = vmatpush1.msra.mxu0 %v8801
  %8872 = vmatprep.subr.mxu0 0.0
  %8873 = vmatpush2.msra.mxu0 %v8832
  %8874 = vmatprep.subr.mxu0 0.0
  %8875 = vmatpush2.msra.mxu0 %v8831
  %8876 = vmatprep.subr.mxu0 0.0
  %8877 = vmatpush2.msra.mxu0 %v8830
  %8878 = vmatprep.subr.mxu0 0.0
  %8879 = vmatpush2.msra.mxu0 %v8829
  %8880 = vmatprep.subr.mxu0 0.0
  %8881 = vmatpush2.msra.mxu0 %v8828
  %8882 = vmatprep.subr.mxu0 0.0
  %8883 = vmatpush2.msra.mxu0 %v8827
  %8884 = vmatprep.subr.mxu0 0.0
  %8885 = vmatpush2.msra.mxu0 %v8826
  %8886 = vmatprep.subr.mxu0 0.0
  %8887 = vmatpush2.msra.mxu0 %v8825
  %8888 = vmatprep.subr.mxu0 0.0
  %8889 = vmatpush2.msra.mxu0 %v8824
  %8890 = vmatprep.subr.mxu0 0.0
  %8891 = vmatpush2.msra.mxu0 %v8823
  %8892 = vmatprep.subr.mxu0 0.0
  %8893 = vmatpush2.msra.mxu0 %v8822
  %8894 = vmatprep.subr.mxu0 0.0
  %8895 = vmatpush2.msra.mxu0 %v8821
  %8896 = vmatprep.subr.mxu0 0.0
  %8897 = vmatpush2.msra.mxu0 %v8820
  %8898 = vmatprep.subr.mxu0 0.0
  %8899 = vmatpush2.msra.mxu0 %v8819
  %8900 = vmatprep.subr.mxu0 0.0
  %8901 = vmatpush2.msra.mxu0 %v8818
  %8902 = vmatprep.subr.mxu0 0.0
  %8903 = vmatpush2.msra.mxu0 %v8817
  %8904 = vmatprep.mubr.f32.mxu0 %v8728
  %8905 = vmatmul.mubr.f32.gmra.mxu0 %v8726
  %v8906 = vpop.f32.mrf.mxu0
  %v8907 = vadd.f32 0.0, %v8906
  %v8908 = vpop.f32.mrf.mxu0
  %8909 = vdwg.mxu0
  %8910 = vmatprep.subr.mxu0 0.0
  %8911 = vmatpush1.msra.mxu0 0.0
  %8912 = vmatprep.subr.mxu0 0.0
  %8913 = vmatpush1.msra.mxu0 0.0
  %8914 = vmatprep.subr.mxu0 0.0
  %8915 = vmatpush1.msra.mxu0 0.0
  %8916 = vmatprep.subr.mxu0 0.0
  %8917 = vmatpush1.msra.mxu0 0.0
  %8918 = vmatprep.subr.mxu0 0.0
  %8919 = vmatpush1.msra.mxu0 0.0
  %8920 = vmatprep.subr.mxu0 0.0
  %8921 = vmatpush1.msra.mxu0 0.0
  %8922 = vmatprep.subr.mxu0 0.0
  %8923 = vmatpush1.msra.mxu0 0.0
  %8924 = vmatprep.subr.mxu0 0.0
  %8925 = vmatpush1.msra.mxu0 0.0
  %8926 = vmatprep.subr.mxu0 0.0
  %8927 = vmatpush1.msra.mxu0 0.0
  %8928 = vmatprep.subr.mxu0 0.0
  %8929 = vmatpush1.msra.mxu0 0.0
  %8930 = vmatprep.subr.mxu0 0.0
  %8931 = vmatpush1.msra.mxu0 0.0
  %8932 = vmatprep.subr.mxu0 0.0
  %8933 = vmatpush1.msra.mxu0 0.0
  %8934 = vmatprep.subr.mxu0 0.0
  %8935 = vmatpush1.msra.mxu0 %v8836
  %8936 = vmatprep.subr.mxu0 0.0
  %8937 = vmatpush1.msra.mxu0 %v8835
  %8938 = vmatprep.subr.mxu0 0.0
  %8939 = vmatpush1.msra.mxu0 %v8834
  %8940 = vmatprep.subr.mxu0 0.0
  %8941 = vmatpush1.msra.mxu0 %v8833
  %8942 = vmatprep.subr.mxu0 0.0
  %8943 = vmatpush2.msra.mxu0 0.0
  %8944 = vmatprep.subr.mxu0 0.0
  %8945 = vmatpush2.msra.mxu0 0.0
  %8946 = vmatprep.subr.mxu0 0.0
  %8947 = vmatpush2.msra.mxu0 0.0
  %8948 = vmatprep.subr.mxu0 0.0
  %8949 = vmatpush2.msra.mxu0 0.0
  %8950 = vmatprep.subr.mxu0 0.0
  %8951 = vmatpush2.msra.mxu0 0.0
  %8952 = vmatprep.subr.mxu0 0.0
  %8953 = vmatpush2.msra.mxu0 0.0
  %8954 = vmatprep.subr.mxu0 0.0
  %8955 = vmatpush2.msra.mxu0 0.0
  %8956 = vmatprep.subr.mxu0 0.0
  %8957 = vmatpush2.msra.mxu0 0.0
  %8958 = vmatprep.subr.mxu0 0.0
  %8959 = vmatpush2.msra.mxu0 0.0
  %8960 = vmatprep.subr.mxu0 0.0
  %8961 = vmatpush2.msra.mxu0 0.0
  %8962 = vmatprep.subr.mxu0 0.0
  %8963 = vmatpush2.msra.mxu0 0.0
  %8964 = vmatprep.subr.mxu0 0.0
  %8965 = vmatpush2.msra.mxu0 0.0
  %8966 = vmatprep.subr.mxu0 0.0
  %8967 = vmatpush2.msra.mxu0 0.0
  %8968 = vmatprep.subr.mxu0 0.0
  %8969 = vmatpush2.msra.mxu0 0.0
  %8970 = vmatprep.subr.mxu0 0.0
  %8971 = vmatpush2.msra.mxu0 0.0
  %8972 = vmatprep.subr.mxu0 0.0
  %8973 = vmatpush2.msra.mxu0 0.0
  %8974 = vmatprep.mubr.f32.mxu0 0.0
  %8975 = vmatmul.mubr.f32.gmra.mxu0 %v8838
  %v8976 = vpop.f32.mrf.mxu0
  %v8977 = vadd.f32 %v8907, %v8976
  %v8978 = vpop.f32.mrf.mxu0
  %8979 = vdwg.mxu0
  %v8980 = vadd.f32 %v8653, %v8977
  %v8981 = vld [vmem:[%s14] sm:$0xff]
  %v8982 = vld [vmem:[%s14 + $0x8] sm:$0xff]
  %v8983 = vld [vmem:[%s14 + $0x10] sm:$0xff]
  %v8984 = vld [vmem:[%s14 + $0x18] sm:$0xff]
  %v8985 = vld [vmem:[%s14 + $0x20] sm:$0xff]
  %v8986 = vld [vmem:[%s14 + $0x28] sm:$0xff]
  %v8987 = vld [vmem:[%s14 + $0x30] sm:$0xff]
  %v8988 = vld [vmem:[%s14 + $0x38] sm:$0xff]
  %v8989 = vld [vmem:[%s14 + $0x40] sm:$0xff]
  %v8990 = vld [vmem:[%s14 + $0x48] sm:$0xff]
  %v8991 = vld [vmem:[%s14 + $0x50] sm:$0xff]
  %v8992 = vld [vmem:[%s14 + $0x58] sm:$0xff]
  %v8993 = vld [vmem:[%s15] sm:$0xff]
  %v8994 = vld [vmem:[%s15 + $0x8] sm:$0xff]
  %v8995 = vld [vmem:[%s15 + $0x10] sm:$0xff]
  %v8996 = vld [vmem:[%s15 + $0x18] sm:$0xff]
  %v8997 = vld [vmem:[%s13] sm:$0x3]
  %vm8998 = vcmask 783360
  %v8999 = vsel %vm8998, %v8980, 0.0
  %v9000 = vrot.slane %v8999, 4
  %v9001 = vadd.f32 %v8999, %v9000
  %v9002 = vrot.slane %v9001, 2
  %v9003 = vadd.f32 %v9001, %v9002
  %v9004 = vrot.slane %v9003, 1
  %v9005 = vadd.f32 %v9003, %v9004
  %v9007 = vsel %vm98, %v9005, 0
  %9009 = vmatprep.subr.mxu0 0.0
  %9010 = vmatpush1.msra.mxu0 0.0
  %9011 = vmatprep.subr.mxu0 0.0
  %9012 = vmatpush1.msra.mxu0 0.0
  %9013 = vmatprep.subr.mxu0 0.0
  %9014 = vmatpush1.msra.mxu0 0.0
  %9015 = vmatprep.subr.mxu0 0.0
  %9016 = vmatpush1.msra.mxu0 0.0
  %9017 = vmatprep.subr.mxu0 0.0
  %9018 = vmatpush1.msra.mxu0 %v8992
  %9019 = vmatprep.subr.mxu0 0.0
  %9020 = vmatpush1.msra.mxu0 %v8991
  %9021 = vmatprep.subr.mxu0 0.0
  %9022 = vmatpush1.msra.mxu0 %v8990
  %9023 = vmatprep.subr.mxu0 0.0
  %9024 = vmatpush1.msra.mxu0 %v8989
  %9025 = vmatprep.subr.mxu0 0.0
  %9026 = vmatpush1.msra.mxu0 %v8988
  %9027 = vmatprep.subr.mxu0 0.0
  %9028 = vmatpush1.msra.mxu0 %v8987
  %9029 = vmatprep.subr.mxu0 0.0
  %9030 = vmatpush1.msra.mxu0 %v8986
  %9031 = vmatprep.subr.mxu0 0.0
  %9032 = vmatpush1.msra.mxu0 %v8985
  %9033 = vmatprep.subr.mxu0 0.0
  %9034 = vmatpush1.msra.mxu0 %v8984
  %9035 = vmatprep.subr.mxu0 0.0
  %9036 = vmatpush1.msra.mxu0 %v8983
  %9037 = vmatprep.subr.mxu0 0.0
  %9038 = vmatpush1.msra.mxu0 %v8982
  %9039 = vmatprep.subr.mxu0 0.0
  %9040 = vmatpush1.msra.mxu0 %v8981
  %9041 = vmatprep.subr.mxu0 0.0
  %9042 = vmatpush2.msra.mxu0 0.0
  %9043 = vmatprep.subr.mxu0 0.0
  %9044 = vmatpush2.msra.mxu0 0.0
  %9045 = vmatprep.subr.mxu0 0.0
  %9046 = vmatpush2.msra.mxu0 0.0
  %9047 = vmatprep.subr.mxu0 0.0
  %9048 = vmatpush2.msra.mxu0 0.0
  %9049 = vmatprep.subr.mxu0 0.0
  %9050 = vmatpush2.msra.mxu0 0.0
  %9051 = vmatprep.subr.mxu0 0.0
  %9052 = vmatpush2.msra.mxu0 0.0
  %9053 = vmatprep.subr.mxu0 0.0
  %9054 = vmatpush2.msra.mxu0 0.0
  %9055 = vmatprep.subr.mxu0 0.0
  %9056 = vmatpush2.msra.mxu0 0.0
  %9057 = vmatprep.subr.mxu0 0.0
  %9058 = vmatpush2.msra.mxu0 0.0
  %9059 = vmatprep.subr.mxu0 0.0
  %9060 = vmatpush2.msra.mxu0 0.0
  %9061 = vmatprep.subr.mxu0 0.0
  %9062 = vmatpush2.msra.mxu0 0.0
  %9063 = vmatprep.subr.mxu0 0.0
  %9064 = vmatpush2.msra.mxu0 0.0
  %9065 = vmatprep.subr.mxu0 0.0
  %9066 = vmatpush2.msra.mxu0 0.0
  %9067 = vmatprep.subr.mxu0 0.0
  %9068 = vmatpush2.msra.mxu0 0.0
  %9069 = vmatprep.subr.mxu0 0.0
  %9070 = vmatpush2.msra.mxu0 0.0
  %9071 = vmatprep.subr.mxu0 0.0
  %9072 = vmatpush2.msra.mxu0 0.0
  %9073 = vmatprep.mubr.f32.mxu0 0.0
  %9074 = vmatmul.mubr.f32.gmra.mxu0 %v9007
  %v9075 = vpop.f32.mrf.mxu0
  %v9076 = vadd.f32 0.0, %v9075
  %v9077 = vpop.f32.mrf.mxu0
  %9078 = vdwg.mxu0
  %v9079 = vmul.f32 %v9076, 0.055555556
  %v9081 = vsel %vm6502, %v9079, 0
  %9083 = vmatprep.subr.mxu0 0.0
  %9084 = vmatpush1.msra.mxu0 0.0
  %9085 = vmatprep.subr.mxu0 0.0
  %9086 = vmatpush1.msra.mxu0 0.0
  %9087 = vmatprep.subr.mxu0 0.0
  %9088 = vmatpush1.msra.mxu0 0.0
  %9089 = vmatprep.subr.mxu0 0.0
  %9090 = vmatpush1.msra.mxu0 0.0
  %9091 = vmatprep.subr.mxu0 0.0
  %9092 = vmatpush1.msra.mxu0 0.0
  %9093 = vmatprep.subr.mxu0 0.0
  %9094 = vmatpush1.msra.mxu0 0.0
  %9095 = vmatprep.subr.mxu0 0.0
  %9096 = vmatpush1.msra.mxu0 0.0
  %9097 = vmatprep.subr.mxu0 0.0
  %9098 = vmatpush1.msra.mxu0 0.0
  %9099 = vmatprep.subr.mxu0 0.0
  %9100 = vmatpush1.msra.mxu0 0.0
  %9101 = vmatprep.subr.mxu0 0.0
  %9102 = vmatpush1.msra.mxu0 0.0
  %9103 = vmatprep.subr.mxu0 0.0
  %9104 = vmatpush1.msra.mxu0 0.0
  %9105 = vmatprep.subr.mxu0 0.0
  %9106 = vmatpush1.msra.mxu0 0.0
  %9107 = vmatprep.subr.mxu0 0.0
  %9108 = vmatpush1.msra.mxu0 %v8996
  %9109 = vmatprep.subr.mxu0 0.0
  %9110 = vmatpush1.msra.mxu0 %v8995
  %9111 = vmatprep.subr.mxu0 0.0
  %9112 = vmatpush1.msra.mxu0 %v8994
  %9113 = vmatprep.subr.mxu0 0.0
  %9114 = vmatpush1.msra.mxu0 %v8993
  %9115 = vmatprep.subr.mxu0 0.0
  %9116 = vmatpush2.msra.mxu0 0.0
  %9117 = vmatprep.subr.mxu0 0.0
  %9118 = vmatpush2.msra.mxu0 0.0
  %9119 = vmatprep.subr.mxu0 0.0
  %9120 = vmatpush2.msra.mxu0 0.0
  %9121 = vmatprep.subr.mxu0 0.0
  %9122 = vmatpush2.msra.mxu0 0.0
  %9123 = vmatprep.subr.mxu0 0.0
  %9124 = vmatpush2.msra.mxu0 0.0
  %9125 = vmatprep.subr.mxu0 0.0
  %9126 = vmatpush2.msra.mxu0 0.0
  %9127 = vmatprep.subr.mxu0 0.0
  %9128 = vmatpush2.msra.mxu0 0.0
  %9129 = vmatprep.subr.mxu0 0.0
  %9130 = vmatpush2.msra.mxu0 0.0
  %9131 = vmatprep.subr.mxu0 0.0
  %9132 = vmatpush2.msra.mxu0 0.0
  %9133 = vmatprep.subr.mxu0 0.0
  %9134 = vmatpush2.msra.mxu0 0.0
  %9135 = vmatprep.subr.mxu0 0.0
  %9136 = vmatpush2.msra.mxu0 0.0
  %9137 = vmatprep.subr.mxu0 0.0
  %9138 = vmatpush2.msra.mxu0 0.0
  %9139 = vmatprep.subr.mxu0 0.0
  %9140 = vmatpush2.msra.mxu0 0.0
  %9141 = vmatprep.subr.mxu0 0.0
  %9142 = vmatpush2.msra.mxu0 0.0
  %9143 = vmatprep.subr.mxu0 0.0
  %9144 = vmatpush2.msra.mxu0 0.0
  %9145 = vmatprep.subr.mxu0 0.0
  %9146 = vmatpush2.msra.mxu0 0.0
  %9147 = vmatprep.mubr.f32.mxu0 0.0
  %9148 = vmatmul.mubr.f32.gmra.mxu0 %v9081
  %v9149 = vpop.f32.mrf.mxu0
  %v9150 = vadd.f32 0.0, %v9149
  %v9151 = vpop.f32.mrf.mxu0
  %9152 = vdwg.mxu0
  %v9153 = vlaneseq
  %v9154 = vshrl.u32 %v9153, 7
  %v9155 = vsub.s32 0, %v9154
  %v9156 = vrot.slane %v9150, %v9155
  %v9157 = vsub.f32 %v8980, %v9156
  %v9158 = vmul.f32 %v9157, %v9157
  %v9159 = vsel %vm8998, %v9158, 0.0
  %v9160 = vrot.slane %v9159, 4
  %v9161 = vadd.f32 %v9159, %v9160
  %v9162 = vrot.slane %v9161, 2
  %v9163 = vadd.f32 %v9161, %v9162
  %v9164 = vrot.slane %v9163, 1
  %v9165 = vadd.f32 %v9163, %v9164
  %v9167 = vsel %vm98, %v9165, 0
  %9169 = vmatprep.subr.mxu0 0.0
  %9170 = vmatpush1.msra.mxu0 0.0
  %9171 = vmatprep.subr.mxu0 0.0
  %9172 = vmatpush1.msra.mxu0 0.0
  %9173 = vmatprep.subr.mxu0 0.0
  %9174 = vmatpush1.msra.mxu0 0.0
  %9175 = vmatprep.subr.mxu0 0.0
  %9176 = vmatpush1.msra.mxu0 0.0
  %9177 = vmatprep.subr.mxu0 0.0
  %9178 = vmatpush1.msra.mxu0 %v8992
  %9179 = vmatprep.subr.mxu0 0.0
  %9180 = vmatpush1.msra.mxu0 %v8991
  %9181 = vmatprep.subr.mxu0 0.0
  %9182 = vmatpush1.msra.mxu0 %v8990
  %9183 = vmatprep.subr.mxu0 0.0
  %9184 = vmatpush1.msra.mxu0 %v8989
  %9185 = vmatprep.subr.mxu0 0.0
  %9186 = vmatpush1.msra.mxu0 %v8988
  %9187 = vmatprep.subr.mxu0 0.0
  %9188 = vmatpush1.msra.mxu0 %v8987
  %9189 = vmatprep.subr.mxu0 0.0
  %9190 = vmatpush1.msra.mxu0 %v8986
  %9191 = vmatprep.subr.mxu0 0.0
  %9192 = vmatpush1.msra.mxu0 %v8985
  %9193 = vmatprep.subr.mxu0 0.0
  %9194 = vmatpush1.msra.mxu0 %v8984
  %9195 = vmatprep.subr.mxu0 0.0
  %9196 = vmatpush1.msra.mxu0 %v8983
  %9197 = vmatprep.subr.mxu0 0.0
  %9198 = vmatpush1.msra.mxu0 %v8982
  %9199 = vmatprep.subr.mxu0 0.0
  %9200 = vmatpush1.msra.mxu0 %v8981
  %9201 = vmatprep.subr.mxu0 0.0
  %9202 = vmatpush2.msra.mxu0 0.0
  %9203 = vmatprep.subr.mxu0 0.0
  %9204 = vmatpush2.msra.mxu0 0.0
  %9205 = vmatprep.subr.mxu0 0.0
  %9206 = vmatpush2.msra.mxu0 0.0
  %9207 = vmatprep.subr.mxu0 0.0
  %9208 = vmatpush2.msra.mxu0 0.0
  %9209 = vmatprep.subr.mxu0 0.0
  %9210 = vmatpush2.msra.mxu0 0.0
  %9211 = vmatprep.subr.mxu0 0.0
  %9212 = vmatpush2.msra.mxu0 0.0
  %9213 = vmatprep.subr.mxu0 0.0
  %9214 = vmatpush2.msra.mxu0 0.0
  %9215 = vmatprep.subr.mxu0 0.0
  %9216 = vmatpush2.msra.mxu0 0.0
  %9217 = vmatprep.subr.mxu0 0.0
  %9218 = vmatpush2.msra.mxu0 0.0
  %9219 = vmatprep.subr.mxu0 0.0
  %9220 = vmatpush2.msra.mxu0 0.0
  %9221 = vmatprep.subr.mxu0 0.0
  %9222 = vmatpush2.msra.mxu0 0.0
  %9223 = vmatprep.subr.mxu0 0.0
  %9224 = vmatpush2.msra.mxu0 0.0
  %9225 = vmatprep.subr.mxu0 0.0
  %9226 = vmatpush2.msra.mxu0 0.0
  %9227 = vmatprep.subr.mxu0 0.0
  %9228 = vmatpush2.msra.mxu0 0.0
  %9229 = vmatprep.subr.mxu0 0.0
  %9230 = vmatpush2.msra.mxu0 0.0
  %9231 = vmatprep.subr.mxu0 0.0
  %9232 = vmatpush2.msra.mxu0 0.0
  %9233 = vmatprep.mubr.f32.mxu0 0.0
  %9234 = vmatmul.mubr.f32.gmra.mxu0 %v9167
  %v9235 = vpop.f32.mrf.mxu0
  %v9236 = vadd.f32 0.0, %v9235
  %v9237 = vpop.f32.mrf.mxu0
  %9238 = vdwg.mxu0
  %v9239 = vmul.f32 %v9236, 0.055555556
  %v9240 = vadd.f32 %v9239, 1e-05
  %v9241 = vrsqrt.pop %v9240
  %v9242 = vmul.f32 %v8997, %v9241
  %v9244 = vsel %vm6502, %v9242, 0
  %9246 = vmatprep.subr.mxu0 0.0
  %9247 = vmatpush1.msra.mxu0 0.0
  %9248 = vmatprep.subr.mxu0 0.0
  %9249 = vmatpush1.msra.mxu0 0.0
  %9250 = vmatprep.subr.mxu0 0.0
  %9251 = vmatpush1.msra.mxu0 0.0
  %9252 = vmatprep.subr.mxu0 0.0
  %9253 = vmatpush1.msra.mxu0 0.0
  %9254 = vmatprep.subr.mxu0 0.0
  %9255 = vmatpush1.msra.mxu0 0.0
  %9256 = vmatprep.subr.mxu0 0.0
  %9257 = vmatpush1.msra.mxu0 0.0
  %9258 = vmatprep.subr.mxu0 0.0
  %9259 = vmatpush1.msra.mxu0 0.0
  %9260 = vmatprep.subr.mxu0 0.0
  %9261 = vmatpush1.msra.mxu0 0.0
  %9262 = vmatprep.subr.mxu0 0.0
  %9263 = vmatpush1.msra.mxu0 0.0
  %9264 = vmatprep.subr.mxu0 0.0
  %9265 = vmatpush1.msra.mxu0 0.0
  %9266 = vmatprep.subr.mxu0 0.0
  %9267 = vmatpush1.msra.mxu0 0.0
  %9268 = vmatprep.subr.mxu0 0.0
  %9269 = vmatpush1.msra.mxu0 0.0
  %9270 = vmatprep.subr.mxu0 0.0
  %9271 = vmatpush1.msra.mxu0 %v8996
  %9272 = vmatprep.subr.mxu0 0.0
  %9273 = vmatpush1.msra.mxu0 %v8995
  %9274 = vmatprep.subr.mxu0 0.0
  %9275 = vmatpush1.msra.mxu0 %v8994
  %9276 = vmatprep.subr.mxu0 0.0
  %9277 = vmatpush1.msra.mxu0 %v8993
  %9278 = vmatprep.subr.mxu0 0.0
  %9279 = vmatpush2.msra.mxu0 0.0
  %9280 = vmatprep.subr.mxu0 0.0
  %9281 = vmatpush2.msra.mxu0 0.0
  %9282 = vmatprep.subr.mxu0 0.0
  %9283 = vmatpush2.msra.mxu0 0.0
  %9284 = vmatprep.subr.mxu0 0.0
  %9285 = vmatpush2.msra.mxu0 0.0
  %9286 = vmatprep.subr.mxu0 0.0
  %9287 = vmatpush2.msra.mxu0 0.0
  %9288 = vmatprep.subr.mxu0 0.0
  %9289 = vmatpush2.msra.mxu0 0.0
  %9290 = vmatprep.subr.mxu0 0.0
  %9291 = vmatpush2.msra.mxu0 0.0
  %9292 = vmatprep.subr.mxu0 0.0
  %9293 = vmatpush2.msra.mxu0 0.0
  %9294 = vmatprep.subr.mxu0 0.0
  %9295 = vmatpush2.msra.mxu0 0.0
  %9296 = vmatprep.subr.mxu0 0.0
  %9297 = vmatpush2.msra.mxu0 0.0
  %9298 = vmatprep.subr.mxu0 0.0
  %9299 = vmatpush2.msra.mxu0 0.0
  %9300 = vmatprep.subr.mxu0 0.0
  %9301 = vmatpush2.msra.mxu0 0.0
  %9302 = vmatprep.subr.mxu0 0.0
  %9303 = vmatpush2.msra.mxu0 0.0
  %9304 = vmatprep.subr.mxu0 0.0
  %9305 = vmatpush2.msra.mxu0 0.0
  %9306 = vmatprep.subr.mxu0 0.0
  %9307 = vmatpush2.msra.mxu0 0.0
  %9308 = vmatprep.subr.mxu0 0.0
  %9309 = vmatpush2.msra.mxu0 0.0
  %9310 = vmatprep.mubr.f32.mxu0 0.0
  %9311 = vmatmul.mubr.f32.gmra.mxu0 %v9244
  %v9312 = vpop.f32.mrf.mxu0
  %v9313 = vadd.f32 0.0, %v9312
  %v9314 = vpop.f32.mrf.mxu0
  %9315 = vdwg.mxu0
  %v9317 = vrot.slane %v8997, 1
  %v9318 = vsel %vm6502, %v9317, 0
  %9320 = vmatprep.subr.mxu0 0.0
  %9321 = vmatpush1.msra.mxu0 0.0
  %9322 = vmatprep.subr.mxu0 0.0
  %9323 = vmatpush1.msra.mxu0 0.0
  %9324 = vmatprep.subr.mxu0 0.0
  %9325 = vmatpush1.msra.mxu0 0.0
  %9326 = vmatprep.subr.mxu0 0.0
  %9327 = vmatpush1.msra.mxu0 0.0
  %9328 = vmatprep.subr.mxu0 0.0
  %9329 = vmatpush1.msra.mxu0 0.0
  %9330 = vmatprep.subr.mxu0 0.0
  %9331 = vmatpush1.msra.mxu0 0.0
  %9332 = vmatprep.subr.mxu0 0.0
  %9333 = vmatpush1.msra.mxu0 0.0
  %9334 = vmatprep.subr.mxu0 0.0
  %9335 = vmatpush1.msra.mxu0 0.0
  %9336 = vmatprep.subr.mxu0 0.0
  %9337 = vmatpush1.msra.mxu0 0.0
  %9338 = vmatprep.subr.mxu0 0.0
  %9339 = vmatpush1.msra.mxu0 0.0
  %9340 = vmatprep.subr.mxu0 0.0
  %9341 = vmatpush1.msra.mxu0 0.0
  %9342 = vmatprep.subr.mxu0 0.0
  %9343 = vmatpush1.msra.mxu0 0.0
  %9344 = vmatprep.subr.mxu0 0.0
  %9345 = vmatpush1.msra.mxu0 %v8996
  %9346 = vmatprep.subr.mxu0 0.0
  %9347 = vmatpush1.msra.mxu0 %v8995
  %9348 = vmatprep.subr.mxu0 0.0
  %9349 = vmatpush1.msra.mxu0 %v8994
  %9350 = vmatprep.subr.mxu0 0.0
  %9351 = vmatpush1.msra.mxu0 %v8993
  %9352 = vmatprep.subr.mxu0 0.0
  %9353 = vmatpush2.msra.mxu0 0.0
  %9354 = vmatprep.subr.mxu0 0.0
  %9355 = vmatpush2.msra.mxu0 0.0
  %9356 = vmatprep.subr.mxu0 0.0
  %9357 = vmatpush2.msra.mxu0 0.0
  %9358 = vmatprep.subr.mxu0 0.0
  %9359 = vmatpush2.msra.mxu0 0.0
  %9360 = vmatprep.subr.mxu0 0.0
  %9361 = vmatpush2.msra.mxu0 0.0
  %9362 = vmatprep.subr.mxu0 0.0
  %9363 = vmatpush2.msra.mxu0 0.0
  %9364 = vmatprep.subr.mxu0 0.0
  %9365 = vmatpush2.msra.mxu0 0.0
  %9366 = vmatprep.subr.mxu0 0.0
  %9367 = vmatpush2.msra.mxu0 0.0
  %9368 = vmatprep.subr.mxu0 0.0
  %9369 = vmatpush2.msra.mxu0 0.0
  %9370 = vmatprep.subr.mxu0 0.0
  %9371 = vmatpush2.msra.mxu0 0.0
  %9372 = vmatprep.subr.mxu0 0.0
  %9373 = vmatpush2.msra.mxu0 0.0
  %9374 = vmatprep.subr.mxu0 0.0
  %9375 = vmatpush2.msra.mxu0 0.0
  %9376 = vmatprep.subr.mxu0 0.0
  %9377 = vmatpush2.msra.mxu0 0.0
  %9378 = vmatprep.subr.mxu0 0.0
  %9379 = vmatpush2.msra.mxu0 0.0
  %9380 = vmatprep.subr.mxu0 0.0
  %9381 = vmatpush2.msra.mxu0 0.0
  %9382 = vmatprep.subr.mxu0 0.0
  %9383 = vmatpush2.msra.mxu0 0.0
  %9384 = vmatprep.mubr.f32.mxu0 0.0
  %9385 = vmatmul.mubr.f32.gmra.mxu0 %v9318
  %v9386 = vpop.f32.mrf.mxu0
  %v9387 = vadd.f32 0.0, %v9386
  %v9388 = vpop.f32.mrf.mxu0
  %9389 = vdwg.mxu0
  %v9390 = vlaneseq
  %v9391 = vshrl.u32 %v9390, 7
  %v9392 = vsub.s32 0, %v9391
  %v9393 = vrot.slane %v9313, %v9392
  %v9394 = vmul.f32 %v9157, %v9393
  %v9395 = vlaneseq
  %v9396 = vshrl.u32 %v9395, 7
  %v9397 = vsub.s32 0, %v9396
  %v9398 = vrot.slane %v9387, %v9397
  %v9399 = vadd.f32 %v9394, %v9398
  %v9400 = vld [vmem:[%s16] sm:$0x3]
  %vm9401 = vcmask 48128
  %v9403 = vsel %vm9401, %v9400, 0
  %vm9405 = vcmask 1045504
  %v9407 = vsel %vm9405, %v9399, 0
  %9409 = vmatprep.subr.mxu0 0.0
  %9410 = vmatpush1.msra.mxu0 0.0
  %9411 = vmatprep.subr.mxu0 0.0
  %9412 = vmatpush1.msra.mxu0 0.0
  %9413 = vmatprep.subr.mxu0 0.0
  %9414 = vmatpush1.msra.mxu0 0.0
  %9415 = vmatprep.subr.mxu0 0.0
  %9416 = vmatpush1.msra.mxu0 0.0
  %9417 = vmatprep.subr.mxu0 0.0
  %9418 = vmatpush1.msra.mxu0 0.0
  %9419 = vmatprep.subr.mxu0 0.0
  %9420 = vmatpush1.msra.mxu0 0.0
  %9421 = vmatprep.subr.mxu0 0.0
  %9422 = vmatpush1.msra.mxu0 0.0
  %9423 = vmatprep.subr.mxu0 0.0
  %9424 = vmatpush1.msra.mxu0 0.0
  %9425 = vmatprep.subr.mxu0 0.0
  %9426 = vmatpush1.msra.mxu0 0.0
  %9427 = vmatprep.subr.mxu0 0.0
  %9428 = vmatpush1.msra.mxu0 0.0
  %9429 = vmatprep.subr.mxu0 0.0
  %9430 = vmatpush1.msra.mxu0 0.0
  %9431 = vmatprep.subr.mxu0 0.0
  %9432 = vmatpush1.msra.mxu0 0.0
  %9433 = vmatprep.subr.mxu0 0.0
  %9434 = vmatpush1.msra.mxu0 0.0
  %9435 = vmatprep.subr.mxu0 0.0
  %9436 = vmatpush1.msra.mxu0 0.0
  %9437 = vmatprep.subr.mxu0 0.0
  %9438 = vmatpush1.msra.mxu0 0.0
  %9439 = vmatprep.subr.mxu0 0.0
  %9440 = vmatpush1.msra.mxu0 %v9407
  %9441 = vmatprep.subr.mxu0 0.0
  %9442 = vmatpush2.msra.mxu0 0.0
  %9443 = vmatprep.subr.mxu0 0.0
  %9444 = vmatpush2.msra.mxu0 0.0
  %9445 = vmatprep.subr.mxu0 0.0
  %9446 = vmatpush2.msra.mxu0 0.0
  %9447 = vmatprep.subr.mxu0 0.0
  %9448 = vmatpush2.msra.mxu0 0.0
  %9449 = vmatprep.subr.mxu0 0.0
  %9450 = vmatpush2.msra.mxu0 0.0
  %9451 = vmatprep.subr.mxu0 0.0
  %9452 = vmatpush2.msra.mxu0 0.0
  %9453 = vmatprep.subr.mxu0 0.0
  %9454 = vmatpush2.msra.mxu0 0.0
  %9455 = vmatprep.subr.mxu0 0.0
  %9456 = vmatpush2.msra.mxu0 0.0
  %9457 = vmatprep.subr.mxu0 0.0
  %9458 = vmatpush2.msra.mxu0 0.0
  %9459 = vmatprep.subr.mxu0 0.0
  %9460 = vmatpush2.msra.mxu0 0.0
  %9461 = vmatprep.subr.mxu0 0.0
  %9462 = vmatpush2.msra.mxu0 0.0
  %9463 = vmatprep.subr.mxu0 0.0
  %9464 = vmatpush2.msra.mxu0 0.0
  %9465 = vmatprep.subr.mxu0 0.0
  %9466 = vmatpush2.msra.mxu0 0.0
  %9467 = vmatprep.subr.mxu0 0.0
  %9468 = vmatpush2.msra.mxu0 0.0
  %9469 = vmatprep.subr.mxu0 0.0
  %9470 = vmatpush2.msra.mxu0 0.0
  %9471 = vmatprep.subr.mxu0 0.0
  %9472 = vmatpush2.msra.mxu0 0.0
  %9473 = vmatprep.mubr.f32.mxu0 0.0
  %9474 = vmatmul.mubr.f32.gmra.mxu0 %v9403
  %v9475 = vpop.f32.mrf.mxu0
  %v9476 = vadd.f32 0.0, %v9475
  %v9477 = vpop.f32.mrf.mxu0
  %9478 = vdwg.mxu0
  %v9479 = vld [vmem:[%s17] sm:$0xff]
  %v9480 = vld [vmem:[%s17 + $0x8] sm:$0xff]
  %v9481 = vld [vmem:[%s17 + $0x10] sm:$0xff]
  %v9482 = vld [vmem:[%s17 + $0x18] sm:$0xff]
  %v9483 = vld [vmem:[%s17 + $0x20] sm:$0xff]
  %v9484 = vld [vmem:[%s17 + $0x28] sm:$0xff]
  %v9485 = vld [vmem:[%s17 + $0x30] sm:$0xff]
  %v9486 = vld [vmem:[%s17 + $0x38] sm:$0xff]
  %v9487 = vld [vmem:[%s17 + $0x40] sm:$0xff]
  %v9488 = vld [vmem:[%s17 + $0x48] sm:$0xff]
  %v9489 = vld [vmem:[%s17 + $0x50] sm:$0xff]
  %v9490 = vld [vmem:[%s17 + $0x58] sm:$0xff]
  %s9491 = scalar_lea.vmem %s16, 2
  %v9492 = vld [vmem:[%s9491] sm:$0x3]
  %v9494 = vsel %vm9401, %v9492, 0
  %9496 = vmatprep.subr.mxu0 0.0
  %9497 = vmatpush1.msra.mxu0 0.0
  %9498 = vmatprep.subr.mxu0 0.0
  %9499 = vmatpush1.msra.mxu0 0.0
  %9500 = vmatprep.subr.mxu0 0.0
  %9501 = vmatpush1.msra.mxu0 0.0
  %9502 = vmatprep.subr.mxu0 0.0
  %9503 = vmatpush1.msra.mxu0 0.0
  %9504 = vmatprep.subr.mxu0 0.0
  %9505 = vmatpush1.msra.mxu0 0.0
  %9506 = vmatprep.subr.mxu0 0.0
  %9507 = vmatpush1.msra.mxu0 0.0
  %9508 = vmatprep.subr.mxu0 0.0
  %9509 = vmatpush1.msra.mxu0 0.0
  %9510 = vmatprep.subr.mxu0 0.0
  %9511 = vmatpush1.msra.mxu0 0.0
  %9512 = vmatprep.subr.mxu0 0.0
  %9513 = vmatpush1.msra.mxu0 0.0
  %9514 = vmatprep.subr.mxu0 0.0
  %9515 = vmatpush1.msra.mxu0 0.0
  %9516 = vmatprep.subr.mxu0 0.0
  %9517 = vmatpush1.msra.mxu0 0.0
  %9518 = vmatprep.subr.mxu0 0.0
  %9519 = vmatpush1.msra.mxu0 0.0
  %9520 = vmatprep.subr.mxu0 0.0
  %9521 = vmatpush1.msra.mxu0 0.0
  %9522 = vmatprep.subr.mxu0 0.0
  %9523 = vmatpush1.msra.mxu0 0.0
  %9524 = vmatprep.subr.mxu0 0.0
  %9525 = vmatpush1.msra.mxu0 0.0
  %9526 = vmatprep.subr.mxu0 0.0
  %9527 = vmatpush1.msra.mxu0 %v9407
  %9528 = vmatprep.subr.mxu0 0.0
  %9529 = vmatpush2.msra.mxu0 0.0
  %9530 = vmatprep.subr.mxu0 0.0
  %9531 = vmatpush2.msra.mxu0 0.0
  %9532 = vmatprep.subr.mxu0 0.0
  %9533 = vmatpush2.msra.mxu0 0.0
  %9534 = vmatprep.subr.mxu0 0.0
  %9535 = vmatpush2.msra.mxu0 0.0
  %9536 = vmatprep.subr.mxu0 0.0
  %9537 = vmatpush2.msra.mxu0 0.0
  %9538 = vmatprep.subr.mxu0 0.0
  %9539 = vmatpush2.msra.mxu0 0.0
  %9540 = vmatprep.subr.mxu0 0.0
  %9541 = vmatpush2.msra.mxu0 0.0
  %9542 = vmatprep.subr.mxu0 0.0
  %9543 = vmatpush2.msra.mxu0 0.0
  %9544 = vmatprep.subr.mxu0 0.0
  %9545 = vmatpush2.msra.mxu0 0.0
  %9546 = vmatprep.subr.mxu0 0.0
  %9547 = vmatpush2.msra.mxu0 0.0
  %9548 = vmatprep.subr.mxu0 0.0
  %9549 = vmatpush2.msra.mxu0 0.0
  %9550 = vmatprep.subr.mxu0 0.0
  %9551 = vmatpush2.msra.mxu0 0.0
  %9552 = vmatprep.subr.mxu0 0.0
  %9553 = vmatpush2.msra.mxu0 0.0
  %9554 = vmatprep.subr.mxu0 0.0
  %9555 = vmatpush2.msra.mxu0 0.0
  %9556 = vmatprep.subr.mxu0 0.0
  %9557 = vmatpush2.msra.mxu0 0.0
  %9558 = vmatprep.subr.mxu0 0.0
  %9559 = vmatpush2.msra.mxu0 0.0
  %9560 = vmatprep.mubr.f32.mxu0 0.0
  %9561 = vmatmul.mubr.f32.gmra.mxu0 %v9494
  %v9562 = vpop.f32.mrf.mxu0
  %v9563 = vadd.f32 0.0, %v9562
  %v9564 = vpop.f32.mrf.mxu0
  %9565 = vdwg.mxu0
  %s9566 = scalar_lea.vmem %s17, 96
  %v9567 = vld [vmem:[%s9566] sm:$0xff]
  %v9568 = vld [vmem:[%s9566 + $0x8] sm:$0xff]
  %v9569 = vld [vmem:[%s9566 + $0x10] sm:$0xff]
  %v9570 = vld [vmem:[%s9566 + $0x18] sm:$0xff]
  %v9571 = vld [vmem:[%s9566 + $0x20] sm:$0xff]
  %v9572 = vld [vmem:[%s9566 + $0x28] sm:$0xff]
  %v9573 = vld [vmem:[%s9566 + $0x30] sm:$0xff]
  %v9574 = vld [vmem:[%s9566 + $0x38] sm:$0xff]
  %v9575 = vld [vmem:[%s9566 + $0x40] sm:$0xff]
  %v9576 = vld [vmem:[%s9566 + $0x48] sm:$0xff]
  %v9577 = vld [vmem:[%s9566 + $0x50] sm:$0xff]
  %v9578 = vld [vmem:[%s9566 + $0x58] sm:$0xff]
  %v9580 = vsel %vm98, %v9563, 0
  %9582 = vmatprep.subr.mxu0 0.0
  %9583 = vmatpush1.msra.mxu0 0.0
  %9584 = vmatprep.subr.mxu0 0.0
  %9585 = vmatpush1.msra.mxu0 0.0
  %9586 = vmatprep.subr.mxu0 0.0
  %9587 = vmatpush1.msra.mxu0 0.0
  %9588 = vmatprep.subr.mxu0 0.0
  %9589 = vmatpush1.msra.mxu0 0.0
  %9590 = vmatprep.subr.mxu0 0.0
  %9591 = vmatpush1.msra.mxu0 %v9578
  %9592 = vmatprep.subr.mxu0 0.0
  %9593 = vmatpush1.msra.mxu0 %v9577
  %9594 = vmatprep.subr.mxu0 0.0
  %9595 = vmatpush1.msra.mxu0 %v9576
  %9596 = vmatprep.subr.mxu0 0.0
  %9597 = vmatpush1.msra.mxu0 %v9575
  %9598 = vmatprep.subr.mxu0 0.0
  %9599 = vmatpush1.msra.mxu0 %v9574
  %9600 = vmatprep.subr.mxu0 0.0
  %9601 = vmatpush1.msra.mxu0 %v9573
  %9602 = vmatprep.subr.mxu0 0.0
  %9603 = vmatpush1.msra.mxu0 %v9572
  %9604 = vmatprep.subr.mxu0 0.0
  %9605 = vmatpush1.msra.mxu0 %v9571
  %9606 = vmatprep.subr.mxu0 0.0
  %9607 = vmatpush1.msra.mxu0 %v9570
  %9608 = vmatprep.subr.mxu0 0.0
  %9609 = vmatpush1.msra.mxu0 %v9569
  %9610 = vmatprep.subr.mxu0 0.0
  %9611 = vmatpush1.msra.mxu0 %v9568
  %9612 = vmatprep.subr.mxu0 0.0
  %9613 = vmatpush1.msra.mxu0 %v9567
  %9614 = vmatprep.subr.mxu0 0.0
  %9615 = vmatpush2.msra.mxu0 0.0
  %9616 = vmatprep.subr.mxu0 0.0
  %9617 = vmatpush2.msra.mxu0 0.0
  %9618 = vmatprep.subr.mxu0 0.0
  %9619 = vmatpush2.msra.mxu0 0.0
  %9620 = vmatprep.subr.mxu0 0.0
  %9621 = vmatpush2.msra.mxu0 0.0
  %9622 = vmatprep.subr.mxu0 0.0
  %9623 = vmatpush2.msra.mxu0 0.0
  %9624 = vmatprep.subr.mxu0 0.0
  %9625 = vmatpush2.msra.mxu0 0.0
  %9626 = vmatprep.subr.mxu0 0.0
  %9627 = vmatpush2.msra.mxu0 0.0
  %9628 = vmatprep.subr.mxu0 0.0
  %9629 = vmatpush2.msra.mxu0 0.0
  %9630 = vmatprep.subr.mxu0 0.0
  %9631 = vmatpush2.msra.mxu0 0.0
  %9632 = vmatprep.subr.mxu0 0.0
  %9633 = vmatpush2.msra.mxu0 0.0
  %9634 = vmatprep.subr.mxu0 0.0
  %9635 = vmatpush2.msra.mxu0 0.0
  %9636 = vmatprep.subr.mxu0 0.0
  %9637 = vmatpush2.msra.mxu0 0.0
  %9638 = vmatprep.subr.mxu0 0.0
  %9639 = vmatpush2.msra.mxu0 0.0
  %9640 = vmatprep.subr.mxu0 0.0
  %9641 = vmatpush2.msra.mxu0 0.0
  %9642 = vmatprep.subr.mxu0 0.0
  %9643 = vmatpush2.msra.mxu0 0.0
  %9644 = vmatprep.subr.mxu0 0.0
  %9645 = vmatpush2.msra.mxu0 0.0
  %9646 = vmatprep.mubr.f32.mxu0 0.0
  %9647 = vmatmul.mubr.f32.gmra.mxu0 %v9580
  %v9648 = vpop.f32.mrf.mxu0
  %v9649 = vadd.f32 0.0, %v9648
  %v9650 = vpop.f32.mrf.mxu0
  %9651 = vdwg.mxu0
  %v9653 = vsel %vm98, %v9476, 0
  %9655 = vmatprep.subr.mxu0 0.0
  %9656 = vmatpush1.msra.mxu0 0.0
  %9657 = vmatprep.subr.mxu0 0.0
  %9658 = vmatpush1.msra.mxu0 0.0
  %9659 = vmatprep.subr.mxu0 0.0
  %9660 = vmatpush1.msra.mxu0 0.0
  %9661 = vmatprep.subr.mxu0 0.0
  %9662 = vmatpush1.msra.mxu0 0.0
  %9663 = vmatprep.subr.mxu0 0.0
  %9664 = vmatpush1.msra.mxu0 %v9490
  %9665 = vmatprep.subr.mxu0 0.0
  %9666 = vmatpush1.msra.mxu0 %v9489
  %9667 = vmatprep.subr.mxu0 0.0
  %9668 = vmatpush1.msra.mxu0 %v9488
  %9669 = vmatprep.subr.mxu0 0.0
  %9670 = vmatpush1.msra.mxu0 %v9487
  %9671 = vmatprep.subr.mxu0 0.0
  %9672 = vmatpush1.msra.mxu0 %v9486
  %9673 = vmatprep.subr.mxu0 0.0
  %9674 = vmatpush1.msra.mxu0 %v9485
  %9675 = vmatprep.subr.mxu0 0.0
  %9676 = vmatpush1.msra.mxu0 %v9484
  %9677 = vmatprep.subr.mxu0 0.0
  %9678 = vmatpush1.msra.mxu0 %v9483
  %9679 = vmatprep.subr.mxu0 0.0
  %9680 = vmatpush1.msra.mxu0 %v9482
  %9681 = vmatprep.subr.mxu0 0.0
  %9682 = vmatpush1.msra.mxu0 %v9481
  %9683 = vmatprep.subr.mxu0 0.0
  %9684 = vmatpush1.msra.mxu0 %v9480
  %9685 = vmatprep.subr.mxu0 0.0
  %9686 = vmatpush1.msra.mxu0 %v9479
  %9687 = vmatprep.subr.mxu0 0.0
  %9688 = vmatpush2.msra.mxu0 0.0
  %9689 = vmatprep.subr.mxu0 0.0
  %9690 = vmatpush2.msra.mxu0 0.0
  %9691 = vmatprep.subr.mxu0 0.0
  %9692 = vmatpush2.msra.mxu0 0.0
  %9693 = vmatprep.subr.mxu0 0.0
  %9694 = vmatpush2.msra.mxu0 0.0
  %9695 = vmatprep.subr.mxu0 0.0
  %9696 = vmatpush2.msra.mxu0 0.0
  %9697 = vmatprep.subr.mxu0 0.0
  %9698 = vmatpush2.msra.mxu0 0.0
  %9699 = vmatprep.subr.mxu0 0.0
  %9700 = vmatpush2.msra.mxu0 0.0
  %9701 = vmatprep.subr.mxu0 0.0
  %9702 = vmatpush2.msra.mxu0 0.0
  %9703 = vmatprep.subr.mxu0 0.0
  %9704 = vmatpush2.msra.mxu0 0.0
  %9705 = vmatprep.subr.mxu0 0.0
  %9706 = vmatpush2.msra.mxu0 0.0
  %9707 = vmatprep.subr.mxu0 0.0
  %9708 = vmatpush2.msra.mxu0 0.0
  %9709 = vmatprep.subr.mxu0 0.0
  %9710 = vmatpush2.msra.mxu0 0.0
  %9711 = vmatprep.subr.mxu0 0.0
  %9712 = vmatpush2.msra.mxu0 0.0
  %9713 = vmatprep.subr.mxu0 0.0
  %9714 = vmatpush2.msra.mxu0 0.0
  %9715 = vmatprep.subr.mxu0 0.0
  %9716 = vmatpush2.msra.mxu0 0.0
  %9717 = vmatprep.subr.mxu0 0.0
  %9718 = vmatpush2.msra.mxu0 0.0
  %9719 = vmatprep.mubr.f32.mxu0 0.0
  %9720 = vmatmul.mubr.f32.gmra.mxu0 %v9653
  %v9721 = vpop.f32.mrf.mxu0
  %v9722 = vadd.f32 %v9649, %v9721
  %v9723 = vpop.f32.mrf.mxu0
  %9724 = vdwg.mxu0
  %s9725 = scalar_lea.vmem %s16, 4
  %v9726 = vld [vmem:[%s9725] sm:$0x3]
  %v9728 = vsel %vm9401, %v9726, 0
  %9730 = vmatprep.subr.mxu0 0.0
  %9731 = vmatpush1.msra.mxu0 0.0
  %9732 = vmatprep.subr.mxu0 0.0
  %9733 = vmatpush1.msra.mxu0 0.0
  %9734 = vmatprep.subr.mxu0 0.0
  %9735 = vmatpush1.msra.mxu0 0.0
  %9736 = vmatprep.subr.mxu0 0.0
  %9737 = vmatpush1.msra.mxu0 0.0
  %9738 = vmatprep.subr.mxu0 0.0
  %9739 = vmatpush1.msra.mxu0 0.0
  %9740 = vmatprep.subr.mxu0 0.0
  %9741 = vmatpush1.msra.mxu0 0.0
  %9742 = vmatprep.subr.mxu0 0.0
  %9743 = vmatpush1.msra.mxu0 0.0
  %9744 = vmatprep.subr.mxu0 0.0
  %9745 = vmatpush1.msra.mxu0 0.0
  %9746 = vmatprep.subr.mxu0 0.0
  %9747 = vmatpush1.msra.mxu0 0.0
  %9748 = vmatprep.subr.mxu0 0.0
  %9749 = vmatpush1.msra.mxu0 0.0
  %9750 = vmatprep.subr.mxu0 0.0
  %9751 = vmatpush1.msra.mxu0 0.0
  %9752 = vmatprep.subr.mxu0 0.0
  %9753 = vmatpush1.msra.mxu0 0.0
  %9754 = vmatprep.subr.mxu0 0.0
  %9755 = vmatpush1.msra.mxu0 0.0
  %9756 = vmatprep.subr.mxu0 0.0
  %9757 = vmatpush1.msra.mxu0 0.0
  %9758 = vmatprep.subr.mxu0 0.0
  %9759 = vmatpush1.msra.mxu0 0.0
  %9760 = vmatprep.subr.mxu0 0.0
  %9761 = vmatpush1.msra.mxu0 %v9407
  %9762 = vmatprep.subr.mxu0 0.0
  %9763 = vmatpush2.msra.mxu0 0.0
  %9764 = vmatprep.subr.mxu0 0.0
  %9765 = vmatpush2.msra.mxu0 0.0
  %9766 = vmatprep.subr.mxu0 0.0
  %9767 = vmatpush2.msra.mxu0 0.0
  %9768 = vmatprep.subr.mxu0 0.0
  %9769 = vmatpush2.msra.mxu0 0.0
  %9770 = vmatprep.subr.mxu0 0.0
  %9771 = vmatpush2.msra.mxu0 0.0
  %9772 = vmatprep.subr.mxu0 0.0
  %9773 = vmatpush2.msra.mxu0 0.0
  %9774 = vmatprep.subr.mxu0 0.0
  %9775 = vmatpush2.msra.mxu0 0.0
  %9776 = vmatprep.subr.mxu0 0.0
  %9777 = vmatpush2.msra.mxu0 0.0
  %9778 = vmatprep.subr.mxu0 0.0
  %9779 = vmatpush2.msra.mxu0 0.0
  %9780 = vmatprep.subr.mxu0 0.0
  %9781 = vmatpush2.msra.mxu0 0.0
  %9782 = vmatprep.subr.mxu0 0.0
  %9783 = vmatpush2.msra.mxu0 0.0
  %9784 = vmatprep.subr.mxu0 0.0
  %9785 = vmatpush2.msra.mxu0 0.0
  %9786 = vmatprep.subr.mxu0 0.0
  %9787 = vmatpush2.msra.mxu0 0.0
  %9788 = vmatprep.subr.mxu0 0.0
  %9789 = vmatpush2.msra.mxu0 0.0
  %9790 = vmatprep.subr.mxu0 0.0
  %9791 = vmatpush2.msra.mxu0 0.0
  %9792 = vmatprep.subr.mxu0 0.0
  %9793 = vmatpush2.msra.mxu0 0.0
  %9794 = vmatprep.mubr.f32.mxu0 0.0
  %9795 = vmatmul.mubr.f32.gmra.mxu0 %v9728
  %v9796 = vpop.f32.mrf.mxu0
  %v9797 = vadd.f32 0.0, %v9796
  %v9798 = vpop.f32.mrf.mxu0
  %9799 = vdwg.mxu0
  %s9800 = scalar_lea.vmem %s17, 192
  %v9801 = vld [vmem:[%s9800] sm:$0xff]
  %v9802 = vld [vmem:[%s9800 + $0x8] sm:$0xff]
  %v9803 = vld [vmem:[%s9800 + $0x10] sm:$0xff]
  %v9804 = vld [vmem:[%s9800 + $0x18] sm:$0xff]
  %v9805 = vld [vmem:[%s9800 + $0x20] sm:$0xff]
  %v9806 = vld [vmem:[%s9800 + $0x28] sm:$0xff]
  %v9807 = vld [vmem:[%s9800 + $0x30] sm:$0xff]
  %v9808 = vld [vmem:[%s9800 + $0x38] sm:$0xff]
  %v9809 = vld [vmem:[%s9800 + $0x40] sm:$0xff]
  %v9810 = vld [vmem:[%s9800 + $0x48] sm:$0xff]
  %v9811 = vld [vmem:[%s9800 + $0x50] sm:$0xff]
  %v9812 = vld [vmem:[%s9800 + $0x58] sm:$0xff]
  %v9814 = vsel %vm98, %v9797, 0
  %9816 = vmatprep.subr.mxu0 0.0
  %9817 = vmatpush1.msra.mxu0 0.0
  %9818 = vmatprep.subr.mxu0 0.0
  %9819 = vmatpush1.msra.mxu0 0.0
  %9820 = vmatprep.subr.mxu0 0.0
  %9821 = vmatpush1.msra.mxu0 0.0
  %9822 = vmatprep.subr.mxu0 0.0
  %9823 = vmatpush1.msra.mxu0 0.0
  %9824 = vmatprep.subr.mxu0 0.0
  %9825 = vmatpush1.msra.mxu0 %v9812
  %9826 = vmatprep.subr.mxu0 0.0
  %9827 = vmatpush1.msra.mxu0 %v9811
  %9828 = vmatprep.subr.mxu0 0.0
  %9829 = vmatpush1.msra.mxu0 %v9810
  %9830 = vmatprep.subr.mxu0 0.0
  %9831 = vmatpush1.msra.mxu0 %v9809
  %9832 = vmatprep.subr.mxu0 0.0
  %9833 = vmatpush1.msra.mxu0 %v9808
  %9834 = vmatprep.subr.mxu0 0.0
  %9835 = vmatpush1.msra.mxu0 %v9807
  %9836 = vmatprep.subr.mxu0 0.0
  %9837 = vmatpush1.msra.mxu0 %v9806
  %9838 = vmatprep.subr.mxu0 0.0
  %9839 = vmatpush1.msra.mxu0 %v9805
  %9840 = vmatprep.subr.mxu0 0.0
  %9841 = vmatpush1.msra.mxu0 %v9804
  %9842 = vmatprep.subr.mxu0 0.0
  %9843 = vmatpush1.msra.mxu0 %v9803
  %9844 = vmatprep.subr.mxu0 0.0
  %9845 = vmatpush1.msra.mxu0 %v9802
  %9846 = vmatprep.subr.mxu0 0.0
  %9847 = vmatpush1.msra.mxu0 %v9801
  %9848 = vmatprep.subr.mxu0 0.0
  %9849 = vmatpush2.msra.mxu0 0.0
  %9850 = vmatprep.subr.mxu0 0.0
  %9851 = vmatpush2.msra.mxu0 0.0
  %9852 = vmatprep.subr.mxu0 0.0
  %9853 = vmatpush2.msra.mxu0 0.0
  %9854 = vmatprep.subr.mxu0 0.0
  %9855 = vmatpush2.msra.mxu0 0.0
  %9856 = vmatprep.subr.mxu0 0.0
  %9857 = vmatpush2.msra.mxu0 0.0
  %9858 = vmatprep.subr.mxu0 0.0
  %9859 = vmatpush2.msra.mxu0 0.0
  %9860 = vmatprep.subr.mxu0 0.0
  %9861 = vmatpush2.msra.mxu0 0.0
  %9862 = vmatprep.subr.mxu0 0.0
  %9863 = vmatpush2.msra.mxu0 0.0
  %9864 = vmatprep.subr.mxu0 0.0
  %9865 = vmatpush2.msra.mxu0 0.0
  %9866 = vmatprep.subr.mxu0 0.0
  %9867 = vmatpush2.msra.mxu0 0.0
  %9868 = vmatprep.subr.mxu0 0.0
  %9869 = vmatpush2.msra.mxu0 0.0
  %9870 = vmatprep.subr.mxu0 0.0
  %9871 = vmatpush2.msra.mxu0 0.0
  %9872 = vmatprep.subr.mxu0 0.0
  %9873 = vmatpush2.msra.mxu0 0.0
  %9874 = vmatprep.subr.mxu0 0.0
  %9875 = vmatpush2.msra.mxu0 0.0
  %9876 = vmatprep.subr.mxu0 0.0
  %9877 = vmatpush2.msra.mxu0 0.0
  %9878 = vmatprep.subr.mxu0 0.0
  %9879 = vmatpush2.msra.mxu0 0.0
  %9880 = vmatprep.mubr.f32.mxu0 0.0
  %9881 = vmatmul.mubr.f32.gmra.mxu0 %v9814
  %v9882 = vpop.f32.mrf.mxu0
  %v9883 = vadd.f32 0.0, %v9882
  %v9884 = vpop.f32.mrf.mxu0
  %9885 = vdwg.mxu0
  %v9886 = vadd.f32 %v9722, %v9883
  %v9887 = vld [vmem:[%s18] sm:$0x1]
  %v9889 = vlaneseq
  %v9890 = vshrl.u32 %v9889, 7
  %v9891 = vsub.s32 0, %v9890
  %v9892 = vrot.slane %v9887, %v9891
  %v9894 = vadd.f32 %v9886, %v9892
  %v9895 = vmax.f32 %v9894, 0.0
  %v9896 = vld [vmem:[%s19] sm:$0xff]
  %v9897 = vld [vmem:[%s19 + $0x8] sm:$0xff]
  %v9898 = vld [vmem:[%s19 + $0x10] sm:$0xff]
  %v9899 = vld [vmem:[%s19 + $0x18] sm:$0xff]
  %v9900 = vld [vmem:[%s19 + $0x20] sm:$0xff]
  %v9901 = vld [vmem:[%s19 + $0x28] sm:$0xff]
  %v9902 = vld [vmem:[%s19 + $0x30] sm:$0xff]
  %v9903 = vld [vmem:[%s19 + $0x38] sm:$0xff]
  %v9904 = vld [vmem:[%s19 + $0x40] sm:$0xff]
  %v9905 = vld [vmem:[%s19 + $0x48] sm:$0xff]
  %v9906 = vld [vmem:[%s19 + $0x50] sm:$0xff]
  %v9907 = vld [vmem:[%s19 + $0x58] sm:$0xff]
  %v9908 = vld [vmem:[%s19 + $0x60] sm:$0xff]
  %v9909 = vld [vmem:[%s19 + $0x68] sm:$0xff]
  %v9910 = vld [vmem:[%s19 + $0x70] sm:$0xff]
  %v9911 = vld [vmem:[%s19 + $0x78] sm:$0xff]
  %v9912 = vld [vmem:[%s20] sm:$0x1]
  %v9914 = vlaneseq
  %v9915 = vshrl.u32 %v9914, 7
  %v9916 = vsub.s32 0, %v9915
  %v9917 = vrot.slane %v9912, %v9916
  %9919 = vmatprep.subr.mxu0 0.0
  %9920 = vmatpush1.msra.mxu0 %v9911
  %9921 = vmatprep.subr.mxu0 0.0
  %9922 = vmatpush1.msra.mxu0 %v9910
  %9923 = vmatprep.subr.mxu0 0.0
  %9924 = vmatpush1.msra.mxu0 %v9909
  %9925 = vmatprep.subr.mxu0 0.0
  %9926 = vmatpush1.msra.mxu0 %v9908
  %9927 = vmatprep.subr.mxu0 0.0
  %9928 = vmatpush1.msra.mxu0 %v9907
  %9929 = vmatprep.subr.mxu0 0.0
  %9930 = vmatpush1.msra.mxu0 %v9906
  %9931 = vmatprep.subr.mxu0 0.0
  %9932 = vmatpush1.msra.mxu0 %v9905
  %9933 = vmatprep.subr.mxu0 0.0
  %9934 = vmatpush1.msra.mxu0 %v9904
  %9935 = vmatprep.subr.mxu0 0.0
  %9936 = vmatpush1.msra.mxu0 %v9903
  %9937 = vmatprep.subr.mxu0 0.0
  %9938 = vmatpush1.msra.mxu0 %v9902
  %9939 = vmatprep.subr.mxu0 0.0
  %9940 = vmatpush1.msra.mxu0 %v9901
  %9941 = vmatprep.subr.mxu0 0.0
  %9942 = vmatpush1.msra.mxu0 %v9900
  %9943 = vmatprep.subr.mxu0 0.0
  %9944 = vmatpush1.msra.mxu0 %v9899
  %9945 = vmatprep.subr.mxu0 0.0
  %9946 = vmatpush1.msra.mxu0 %v9898
  %9947 = vmatprep.subr.mxu0 0.0
  %9948 = vmatpush1.msra.mxu0 %v9897
  %9949 = vmatprep.subr.mxu0 0.0
  %9950 = vmatpush1.msra.mxu0 %v9896
  %9951 = vmatprep.subr.mxu0 0.0
  %9952 = vmatpush2.msra.mxu0 0.0
  %9953 = vmatprep.subr.mxu0 0.0
  %9954 = vmatpush2.msra.mxu0 0.0
  %9955 = vmatprep.subr.mxu0 0.0
  %9956 = vmatpush2.msra.mxu0 0.0
  %9957 = vmatprep.subr.mxu0 0.0
  %9958 = vmatpush2.msra.mxu0 0.0
  %9959 = vmatprep.subr.mxu0 0.0
  %9960 = vmatpush2.msra.mxu0 0.0
  %9961 = vmatprep.subr.mxu0 0.0
  %9962 = vmatpush2.msra.mxu0 0.0
  %9963 = vmatprep.subr.mxu0 0.0
  %9964 = vmatpush2.msra.mxu0 0.0
  %9965 = vmatprep.subr.mxu0 0.0
  %9966 = vmatpush2.msra.mxu0 0.0
  %9967 = vmatprep.subr.mxu0 0.0
  %9968 = vmatpush2.msra.mxu0 0.0
  %9969 = vmatprep.subr.mxu0 0.0
  %9970 = vmatpush2.msra.mxu0 0.0
  %9971 = vmatprep.subr.mxu0 0.0
  %9972 = vmatpush2.msra.mxu0 0.0
  %9973 = vmatprep.subr.mxu0 0.0
  %9974 = vmatpush2.msra.mxu0 0.0
  %9975 = vmatprep.subr.mxu0 0.0
  %9976 = vmatpush2.msra.mxu0 0.0
  %9977 = vmatprep.subr.mxu0 0.0
  %9978 = vmatpush2.msra.mxu0 0.0
  %9979 = vmatprep.subr.mxu0 0.0
  %9980 = vmatpush2.msra.mxu0 0.0
  %9981 = vmatprep.subr.mxu0 0.0
  %9982 = vmatpush2.msra.mxu0 0.0
  %9983 = vmatprep.mubr.f32.mxu0 0.0
  %9984 = vmatmul.mubr.f32.gmra.mxu0 %v9895
  %v9985 = vpop.f32.mrf.mxu0
  %v9986 = vadd.f32 %v9917, %v9985
  %v9987 = vpop.f32.mrf.mxu0
  %9988 = vdwg.mxu0
  %9989 = vst [vmem:[%s21] sm:$0x3] %v9986
  // Predicated region
  $region86: #{actor_critic_forward.1} parent=0 // pred_check
    _
  $region87: #{actor_critic_forward.1} parent=0 // pred_check_branch
    %9991 = sbr.rel (0) target = $region89
  $region88: #{actor_critic_forward.1} parent=0 // pred_region
    _
  $region89: #{actor_critic_forward.1} parent=0 // pred_fallthru
    _
  // Predicated region
  $region90: #{actor_critic_forward.1} parent=0 // pred_check
    _
  $region91: #{actor_critic_forward.1} parent=0 // pred_check_branch
    %9993 = sbr.rel (0) target = $region93
  $region92: #{actor_critic_forward.1} parent=0 // pred_region
    _
  $region93: #{actor_critic_forward.1} parent=0 // pred_fallthru
    _

</llo_original>
